<compile_context>
chip_gen: v7x
topology: tpu7x:2x2x1
jax: 0.10.0
libtpu: 0.0.40
codegen_flags: <defaults>
</compile_context>

<pallas_src>
from functools import partial

import numpy as np
import jax
import jax.numpy as jnp
from jax.experimental import pallas as pl
from jax.experimental.pallas import tpu as pltpu

EPS = 1e-5       # nn.BatchNorm2d default eps
SLOPE = 0.01     # nn.LeakyReLU default negative_slope

LANE = 128
SUBLANE = 8
VMEM_CAP_BYTES = 48 * 1024 * 1024        # safe on v7x (64 MiB) and v5e/v6e (128 MiB)


def _round_up(v, m):
    return (v + m - 1) // m * m


def _fold_bn(w, conv_bias, gamma, beta, mean, var):
    """Fold eval-mode BN into the conv weight (scale) and a per-channel shift."""
    scale = gamma / jnp.sqrt(var + EPS)
    return w * scale, beta + scale * (conv_bias - mean)


# ----------------------------- fused Pallas kernel ----------------------------- #

def _fused_block_pallas(x_in, xs_ext, mask, w1, b1, w2, ws, b2t, *,
                        m1, wp, cinp, cp, cout, mh, fuse_taps):
    """One pallas_call per residual block, gridded over the batch dimension.

    x_in  : stride==1 -> (N, (H+2)*(W+2)+2, Cinp) flattened, W/H/guard padded, bf16
            stride>1  -> (N, M1, 9*Cinp) strided im2col slab in the extended layout
    xs_ext: (N, M1, Cinp) shortcut input in the extended (W-padded) layout, bf16
    mask  : (M1, 1) f32, zeroes the junk W-pad columns of the stage-1 output
    w1    : (9*Cinp, Cp) bf16 conv1 weights (BN1 folded), per-tap row blocks
    w2    : (9*Cp,  Cp) bf16 conv2 weights (BN2 folded), per-tap row blocks
    ws    : (Cinp, Cp)  bf16 shortcut weights (BNs folded, or identity)
    b1,b2t: (1, Cp) f32 folded shifts (b2t = conv2 shift + shortcut shift)
    """
    n = x_in.shape[0]

    def kernel(x_ref, xs_ref, mask_ref, w1_ref, b1_ref, w2_ref, ws_ref, b2_ref,
               o_ref, h_ref):
        # ---- stage 1: conv3x3(stride) + BN1 (folded) + LeakyReLU -> VMEM scratch ----
        if fuse_taps:                                   # stride == 1: flat-shift taps
            acc = jnp.zeros((m1, cp), jnp.float32)
            for t in range(9):
                dy, dx = divmod(t, 3)
                off = dy * wp + dx
                acc = acc + jnp.dot(
                    x_ref[0, off:off + m1, :],
                    w1_ref[t * cinp:(t + 1) * cinp, :],
                    preferred_element_type=jnp.float32)
            del off
        else:                                           # stride > 1: pre-built slab
            acc = jnp.dot(x_ref[0], w1_ref[...], preferred_element_type=jnp.float32)

        y1 = acc + b1_ref[...]
        y1 = jnp.where(y1 >= 0, y1, SLOPE * y1)
        y1 = y1 * mask_ref[...]                         # zero junk W-pad columns

        # zero halo ring + guards every step (scratch is per-TensorCore under
        # "parallel" semantics, so do not rely on a program_id==0 init).
        zeros_edge = jnp.zeros((wp + 1, cp), dtype=h_ref.dtype)
        h_ref[0:wp + 1, :] = zeros_edge
        h_ref[wp + 1 + m1:mh, :] = zeros_edge
        h_ref[wp + 1:wp + 1 + m1, :] = y1.astype(h_ref.dtype)

        # ---- stage 2: conv3x3(1) + BN2 + shortcut + add + LeakyReLU -> output ----
        acc2 = jnp.dot(xs_ref[0], ws_ref[...], preferred_element_type=jnp.float32)
        for t in range(9):
            dy, dx = divmod(t, 3)
            off = dy * wp + dx
            acc2 = acc2 + jnp.dot(
                h_ref[off:off + m1, :],
                w2_ref[t * cp:(t + 1) * cp, :],
                preferred_element_type=jnp.float32)
        y2 = acc2 + b2_ref[...]
        y2 = jnp.where(y2 >= 0, y2, SLOPE * y2)
        o_ref[0] = y2[:, :cout].astype(o_ref.dtype)     # store true channels only

    def full_spec(arr, batched):
        if batched:
            tail = (0,) * (arr.ndim - 1)
            return pl.BlockSpec((1,) + tuple(arr.shape[1:]), lambda b: (b,) + tail)
        zeros = (0,) * arr.ndim
        return pl.BlockSpec(tuple(arr.shape), lambda b: zeros)

    # VMEM footprint: 2x buffers for every pipelined block (grid-invariant weights
    # included), 1x scratch, slack for in-kernel f32 accumulators/temporaries.
    itemsize = 2  # bf16 activations / weights
    vmem_bytes = (
        2 * x_in.shape[1] * x_in.shape[2] * itemsize
        + 2 * m1 * cinp * itemsize
        + 2 * m1 * 4
        + 2 * (w1.size + w2.size + ws.size) * itemsize
        + 2 * 2 * cp * 4
        + 2 * m1 * cout * 4
        + mh * cp * itemsize
        + 6 * m1 * cp * 4
    )
    vmem_limit = int(min(max(2 * vmem_bytes, 32 * 1024 * 1024), VMEM_CAP_BYTES))

    flops = 2 * n * m1 * (9 * cinp * cp + 9 * cp * cp + cinp * cp)
    bytes_accessed = (x_in.size + xs_ext.size + w1.size + w2.size + ws.size) * itemsize \
        + (mask.size + 2 * cp) * 4 + 4 * n * m1 * cout

    out = pl.pallas_call(
        kernel,
        out_shape=jax.ShapeDtypeStruct((n, m1, cout), jnp.float32),
        grid=(n,),
        in_specs=[
            full_spec(x_in, True),
            full_spec(xs_ext, True),
            full_spec(mask, False),
            full_spec(w1, False),
            full_spec(b1, False),
            full_spec(w2, False),
            full_spec(ws, False),
            full_spec(b2t, False),
        ],
        out_specs=pl.BlockSpec((1, m1, cout), lambda b: (b, 0, 0)),
        scratch_shapes=[pltpu.VMEM((mh, cp), jnp.bfloat16)],   # resident h1 (never HBM)
        compiler_params=pltpu.CompilerParams(
            dimension_semantics=("parallel",),                 # batch over both TCs
            vmem_limit_bytes=vmem_limit,
        ),
        cost_estimate=pl.CostEstimate(flops=flops, transcendentals=0,
                                      bytes_accessed=bytes_accessed),
    )(x_in, xs_ext, mask, w1, b1, w2, ws, b2t)
    return out


# --------------------------------- JAX glue ------------------------------------ #

def residual_block_nhwc(x, p, stride=1):
    """NHWC residual block.  Keep stacked blocks in NHWC; transpose only at the model
    boundary (see residual_block_forward)."""
    n, h, w, cin = x.shape
    cout = p["conv1_w"].shape[-1]
    cp = _round_up(cout, LANE)          # padded output channels (MXU / lane layout)
    cinp = _round_up(cin, SUBLANE)      # padded input channels (sublane-clean K)
    ho = (h - 1) // stride + 1
    wo = (w - 1) // stride + 1
    wp = wo + 2                          # extended (W-padded) output width
    m1 = ho * wp                         # rows of the extended output grid
    mh = (ho + 2) * wp + 2               # h1 scratch rows (halo ring + 2 guards)
    projection = (stride != 1) or (cin != cout)
    fuse_taps = (stride == 1)

    xb = x.astype(jnp.bfloat16)

    # fold eval-mode BN into conv weights / per-channel shifts (f32, cast after)
    w1f, b1f = _fold_bn(p["conv1_w"], p["conv1_b"], p["bn1_gamma"], p["bn1_beta"],
                        p["bn1_mean"], p["bn1_var"])
    w2f, b2f = _fold_bn(p["conv2_w"], p["conv2_b"], p["bn2_gamma"], p["bn2_beta"],
                        p["bn2_mean"], p["bn2_var"])
    if projection:
        wsf, bsf = _fold_bn(p["convs_w"][0, 0], p["convs_b"], p["bns_gamma"],
                            p["bns_beta"], p["bns_mean"], p["bns_var"])
    else:
        wsf = jnp.eye(cin, dtype=jnp.float32)
        bsf = jnp.zeros((cout,), jnp.float32)

    # channel padding: per-tap K blocks to 8, output channels to 128
    w1p = jnp.pad(w1f, ((0, 0), (0, 0), (0, cinp - cin), (0, cp - cout)))
    w1p = w1p.reshape(9 * cinp, cp).astype(jnp.bfloat16)
    w2p = jnp.pad(w2f, ((0, 0), (0, 0), (0, cp - cout), (0, cp - cout)))
    w2p = w2p.reshape(9 * cp, cp).astype(jnp.bfloat16)
    wsp = jnp.pad(wsf, ((0, cinp - cin), (0, cp - cout))).astype(jnp.bfloat16)
    b1p = jnp.pad(b1f, (0, cp - cout)).reshape(1, cp).astype(jnp.float32)
    b2p = jnp.pad(b2f + bsf, (0, cp - cout)).reshape(1, cp).astype(jnp.float32)

    # stage-1 activation slab
    xpad = jnp.pad(xb, ((0, 0), (1, 1), (1, 1), (0, cinp - cin)))
    if fuse_taps:
        # flattened, guard-padded image: 3x3 taps become contiguous row slices in-kernel
        x_in = xpad.reshape(n, (h + 2) * (w + 2), cinp)
        x_in = jnp.pad(x_in, ((0, 0), (1, 1), (0, 0)))
    else:
        # strided conv1 only: wrapper builds its im2col slab in the extended layout
        cols = [xpad[:, dy:dy + (ho - 1) * stride + 1:stride,
                     dx:dx + (wo - 1) * stride + 1:stride, :]
                for dy in range(3) for dx in range(3)]
        slab = jnp.concatenate(cols, axis=-1)                       # (n, ho, wo, 9*cinp)
        slab = jnp.pad(slab, ((0, 0), (0, 0), (1, 1), (0, 0)))      # junk W columns
        x_in = slab.reshape(n, m1, 9 * cinp)

    # shortcut input (strided x) in the same extended layout
    xs = xb[:, ::stride, ::stride, :]
    xs = jnp.pad(xs, ((0, 0), (0, 0), (1, 1), (0, cinp - cin)))
    xs_ext = xs.reshape(n, m1, cinp)

    # mask that zeroes the junk W-pad columns of the stage-1 output
    col = jnp.arange(m1, dtype=jnp.int32) % wp
    mask = ((col >= 1) & (col <= wo)).astype(jnp.float32).reshape(m1, 1)

    out = _fused_block_pallas(x_in, xs_ext, mask, w1p, b1p, w2p, wsp, b2p,
                              m1=m1, wp=wp, cinp=cinp, cp=cp, cout=cout,
                              mh=mh, fuse_taps=fuse_taps)
    return out.reshape(n, ho, wp, cout)[:, :, 1:1 + wo, :]


@partial(jax.jit, static_argnames=("stride",))
def residual_block_forward(x_nchw, p, stride=1):
    x = jnp.transpose(x_nchw, (0, 2, 3, 1)).astype(jnp.float32)     # NHWC
    y = residual_block_nhwc(x, p, stride=stride)
    return jnp.transpose(y, (0, 3, 1, 2))                           # back to NCHW


# ------------------------ deterministic parameter init ------------------------- #

def init_params(key, cin, cout):
    ks = jax.random.split(key, 18)

    def conv_w(k, kh, kw, ci, co):
        fan_in = kh * kw * ci
        return jax.random.normal(k, (kh, kw, ci, co), jnp.float32) / np.sqrt(fan_in)

    def bn(k0, k1, k2, k3, c):
        return dict(
            gamma=1.0 + 0.1 * jax.random.normal(k0, (c,), jnp.float32),
            beta=0.1 * jax.random.normal(k1, (c,), jnp.float32),
            mean=0.1 * jax.random.normal(k2, (c,), jnp.float32),
            var=jax.random.uniform(k3, (c,), jnp.float32, 0.5, 1.5),
        )

    bn1 = bn(ks[2], ks[3], ks[4], ks[5], cout)
    bn2 = bn(ks[8], ks[9], ks[10], ks[11], cout)
    bns = bn(ks[14], ks[15], ks[16], ks[17], cout)
    return {
        "conv1_w": conv_w(ks[0], 3, 3, cin, cout),
        "conv1_b": 0.1 * jax.random.normal(ks[1], (cout,), jnp.float32),
        "bn1_gamma": bn1["gamma"], "bn1_beta": bn1["beta"],
        "bn1_mean": bn1["mean"], "bn1_var": bn1["var"],
        "conv2_w": conv_w(ks[6], 3, 3, cout, cout),
        "conv2_b": 0.1 * jax.random.normal(ks[7], (cout,), jnp.float32),
        "bn2_gamma": bn2["gamma"], "bn2_beta": bn2["beta"],
        "bn2_mean": bn2["mean"], "bn2_var": bn2["var"],
        "convs_w": conv_w(ks[12], 1, 1, cin, cout),
        "convs_b": 0.1 * jax.random.normal(ks[13], (cout,), jnp.float32),
        "bns_gamma": bns["gamma"], "bns_beta": bns["beta"],
        "bns_mean": bns["mean"], "bns_var": bns["var"],
    }


# ------------------------------ pure-JAX reference ------------------------------ #

def reference_forward(x, p, stride=1):
    def conv(xx, w_hwio, b, s, pad):
        w = jnp.transpose(w_hwio, (3, 2, 0, 1))  # OIHW
        y = jax.lax.conv_general_dilated(xx, w, (s, s), [(pad, pad), (pad, pad)],
                                         dimension_numbers=("NCHW", "OIHW", "NCHW"))
        return y + b[None, :, None, None]

    def bn(xx, g, b, m, v):
        return (xx - m[None, :, None, None]) * (g / jnp.sqrt(v + EPS))[None, :, None, None] \
            + b[None, :, None, None]

    def lrelu(xx):
        return jnp.where(xx >= 0, xx, SLOPE * xx)

    cin, cout = p["conv1_w"].shape[2], p["conv1_w"].shape[3]
    h = lrelu(bn(conv(x, p["conv1_w"], p["conv1_b"], stride, 1),
                 p["bn1_gamma"], p["bn1_beta"], p["bn1_mean"], p["bn1_var"]))
    h = bn(conv(h, p["conv2_w"], p["conv2_b"], 1, 1),
           p["bn2_gamma"], p["bn2_beta"], p["bn2_mean"], p["bn2_var"])
    if stride != 1 or cin != cout:
        s = bn(conv(x, p["convs_w"], p["convs_b"], stride, 0),
               p["bns_gamma"], p["bns_beta"], p["bns_mean"], p["bns_var"])
    else:
        s = x
    return lrelu(h + s)


# ------------------------------------ main -------------------------------------- #

if __name__ == "__main__":
    key = jax.random.PRNGKey(0)
    kx, kp = jax.random.split(key)

    N, CIN, COUT, H, W = 2, 4, 8, 16, 16
    x = jax.random.normal(kx, (N, CIN, H, W), jnp.float32)
    params = init_params(kp, CIN, COUT)

    # bf16 MXU inputs -> relaxed tolerance vs the f32 XLA-conv reference
    RTOL, ATOL = 5e-2, 7e-2

    # projection shortcut (cin != cout), stride 1 (fully fused, in-kernel im2col)
    out = jax.block_until_ready(residual_block_forward(x, params, stride=1))
    ref = reference_forward(x, params, stride=1)
    np.testing.assert_allclose(np.asarray(out), np.asarray(ref), rtol=RTOL, atol=ATOL)
    assert out.shape == (N, COUT, H, W)

    # projection shortcut, stride 2 (conv1 slab built by wrapper, rest fused)
    out2 = jax.block_until_ready(residual_block_forward(x, params, stride=2))
    ref2 = reference_forward(x, params, stride=2)
    np.testing.assert_allclose(np.asarray(out2), np.asarray(ref2), rtol=RTOL, atol=ATOL)
    assert out2.shape == (N, COUT, H // 2, W // 2)

    # identity shortcut (cin == cout, stride 1)
    params_id = init_params(kp, COUT, COUT)
    x_id = jax.random.normal(kx, (N, COUT, H, W), jnp.float32)
    out3 = jax.block_until_ready(residual_block_forward(x_id, params_id, stride=1))
    ref3 = reference_forward(x_id, params_id, stride=1)
    np.testing.assert_allclose(np.asarray(out3), np.asarray(ref3), rtol=RTOL, atol=ATOL)

    print("KERNEL_OK")
</pallas_src>

<mosaic_0001>
module attributes {stable_mosaic.version = 11 : i64} {
  func.func @kernel(%arg0: i32, %arg1: memref<1x326x8xbf16, #tpu.memory_space<vmem>>, %arg2: memref<1x288x8xbf16, #tpu.memory_space<vmem>>, %arg3: memref<288x1xf32, #tpu.memory_space<vmem>>, %arg4: memref<72x128xbf16, #tpu.memory_space<vmem>>, %arg5: memref<1x128xf32, #tpu.memory_space<vmem>>, %arg6: memref<1152x128xbf16, #tpu.memory_space<vmem>>, %arg7: memref<8x128xbf16, #tpu.memory_space<vmem>>, %arg8: memref<1x128xf32, #tpu.memory_space<vmem>>, %arg9: memref<1x288x8xf32, #tpu.memory_space<vmem>>, %arg10: memref<326x128xbf16, #tpu.memory_space<vmem>>) attributes {dimension_semantics = [#tpu.dimension_semantics<parallel>], iteration_bounds = array<i64: 2>, scalar_prefetch = 0 : i64, scratch_operands = 1 : i64, tpu.core_type = #tpu.core_type<tc>, window_params = [{transform_indices = @transform_0, window_bounds = array<i64: 1, 326, 8>}, {transform_indices = @transform_1, window_bounds = array<i64: 1, 288, 8>}, {pipeline_mode = #tpu.pipeline_mode<synchronous>, transform_indices = @transform_2, window_bounds = array<i64: 288, 1>}, {pipeline_mode = #tpu.pipeline_mode<synchronous>, transform_indices = @transform_3, window_bounds = array<i64: 72, 128>}, {pipeline_mode = #tpu.pipeline_mode<synchronous>, transform_indices = @transform_4, window_bounds = array<i64: 1, 128>}, {pipeline_mode = #tpu.pipeline_mode<synchronous>, transform_indices = @transform_5, window_bounds = array<i64: 1152, 128>}, {pipeline_mode = #tpu.pipeline_mode<synchronous>, transform_indices = @transform_6, window_bounds = array<i64: 8, 128>}, {pipeline_mode = #tpu.pipeline_mode<synchronous>, transform_indices = @transform_7, window_bounds = array<i64: 1, 128>}, {transform_indices = @transform_8, window_bounds = array<i64: 1, 288, 8>}]} {
    %cst = arith.constant 0.000000e+00 : f32
    %0 = vector.broadcast %cst : f32 to vector<288x128xf32>
    %c0 = arith.constant 0 : index
    %c0_0 = arith.constant 0 : index
    %c0_1 = arith.constant 0 : index
    %1 = vector.load %arg1[%c0, %c0_0, %c0_1] : memref<1x326x8xbf16, #tpu.memory_space<vmem>>, vector<1x288x8xbf16>
    %2 = vector.shape_cast %1 : vector<1x288x8xbf16> to vector<288x8xbf16>
    %c0_2 = arith.constant 0 : index
    %c0_3 = arith.constant 0 : index
    %3 = vector.load %arg4[%c0_2, %c0_3] : memref<72x128xbf16, #tpu.memory_space<vmem>>, vector<8x128xbf16>
    %cst_4 = arith.constant dense<0.000000e+00> : vector<288x128xf32>
    %4 = tpu.matmul %2, %3, %cst_4 {dimension_numbers = #tpu.dot_dimension_numbers<[1], [0], [0], [1], [0, 0, 1, 1], [], []>} : vector<288x8xbf16>, vector<8x128xbf16>, vector<288x128xf32> -> vector<288x128xf32>
    %5 = arith.addf %0, %4 : vector<288x128xf32>
    %c0_5 = arith.constant 0 : index
    %c1 = arith.constant 1 : index
    %c0_6 = arith.constant 0 : index
    %6 = vector.load %arg1[%c0_5, %c1, %c0_6] : memref<1x326x8xbf16, #tpu.memory_space<vmem>>, vector<1x288x8xbf16>
    %7 = vector.shape_cast %6 : vector<1x288x8xbf16> to vector<288x8xbf16>
    %c8 = arith.constant 8 : index
    %c0_7 = arith.constant 0 : index
    %8 = vector.load %arg4[%c8, %c0_7] : memref<72x128xbf16, #tpu.memory_space<vmem>>, vector<8x128xbf16>
    %cst_8 = arith.constant dense<0.000000e+00> : vector<288x128xf32>
    %9 = tpu.matmul %7, %8, %cst_8 {dimension_numbers = #tpu.dot_dimension_numbers<[1], [0], [0], [1], [0, 0, 1, 1], [], []>} : vector<288x8xbf16>, vector<8x128xbf16>, vector<288x128xf32> -> vector<288x128xf32>
    %10 = arith.addf %5, %9 : vector<288x128xf32>
    %c0_9 = arith.constant 0 : index
    %c2 = arith.constant 2 : index
    %c0_10 = arith.constant 0 : index
    %11 = vector.load %arg1[%c0_9, %c2, %c0_10] : memref<1x326x8xbf16, #tpu.memory_space<vmem>>, vector<1x288x8xbf16>
    %12 = vector.shape_cast %11 : vector<1x288x8xbf16> to vector<288x8xbf16>
    %c16 = arith.constant 16 : index
    %c0_11 = arith.constant 0 : index
    %13 = vector.load %arg4[%c16, %c0_11] : memref<72x128xbf16, #tpu.memory_space<vmem>>, vector<8x128xbf16>
    %cst_12 = arith.constant dense<0.000000e+00> : vector<288x128xf32>
    %14 = tpu.matmul %12, %13, %cst_12 {dimension_numbers = #tpu.dot_dimension_numbers<[1], [0], [0], [1], [0, 0, 1, 1], [], []>} : vector<288x8xbf16>, vector<8x128xbf16>, vector<288x128xf32> -> vector<288x128xf32>
    %15 = arith.addf %10, %14 : vector<288x128xf32>
    %c0_13 = arith.constant 0 : index
    %c18 = arith.constant 18 : index
    %c0_14 = arith.constant 0 : index
    %16 = vector.load %arg1[%c0_13, %c18, %c0_14] : memref<1x326x8xbf16, #tpu.memory_space<vmem>>, vector<1x288x8xbf16>
    %17 = vector.shape_cast %16 : vector<1x288x8xbf16> to vector<288x8xbf16>
    %c24 = arith.constant 24 : index
    %c0_15 = arith.constant 0 : index
    %18 = vector.load %arg4[%c24, %c0_15] : memref<72x128xbf16, #tpu.memory_space<vmem>>, vector<8x128xbf16>
    %cst_16 = arith.constant dense<0.000000e+00> : vector<288x128xf32>
    %19 = tpu.matmul %17, %18, %cst_16 {dimension_numbers = #tpu.dot_dimension_numbers<[1], [0], [0], [1], [0, 0, 1, 1], [], []>} : vector<288x8xbf16>, vector<8x128xbf16>, vector<288x128xf32> -> vector<288x128xf32>
    %20 = arith.addf %15, %19 : vector<288x128xf32>
    %c0_17 = arith.constant 0 : index
    %c19 = arith.constant 19 : index
    %c0_18 = arith.constant 0 : index
    %21 = vector.load %arg1[%c0_17, %c19, %c0_18] : memref<1x326x8xbf16, #tpu.memory_space<vmem>>, vector<1x288x8xbf16>
    %22 = vector.shape_cast %21 : vector<1x288x8xbf16> to vector<288x8xbf16>
    %c32 = arith.constant 32 : index
    %c0_19 = arith.constant 0 : index
    %23 = vector.load %arg4[%c32, %c0_19] : memref<72x128xbf16, #tpu.memory_space<vmem>>, vector<8x128xbf16>
    %cst_20 = arith.constant dense<0.000000e+00> : vector<288x128xf32>
    %24 = tpu.matmul %22, %23, %cst_20 {dimension_numbers = #tpu.dot_dimension_numbers<[1], [0], [0], [1], [0, 0, 1, 1], [], []>} : vector<288x8xbf16>, vector<8x128xbf16>, vector<288x128xf32> -> vector<288x128xf32>
    %25 = arith.addf %20, %24 : vector<288x128xf32>
    %c0_21 = arith.constant 0 : index
    %c20 = arith.constant 20 : index
    %c0_22 = arith.constant 0 : index
    %26 = vector.load %arg1[%c0_21, %c20, %c0_22] : memref<1x326x8xbf16, #tpu.memory_space<vmem>>, vector<1x288x8xbf16>
    %27 = vector.shape_cast %26 : vector<1x288x8xbf16> to vector<288x8xbf16>
    %c40 = arith.constant 40 : index
    %c0_23 = arith.constant 0 : index
    %28 = vector.load %arg4[%c40, %c0_23] : memref<72x128xbf16, #tpu.memory_space<vmem>>, vector<8x128xbf16>
    %cst_24 = arith.constant dense<0.000000e+00> : vector<288x128xf32>
    %29 = tpu.matmul %27, %28, %cst_24 {dimension_numbers = #tpu.dot_dimension_numbers<[1], [0], [0], [1], [0, 0, 1, 1], [], []>} : vector<288x8xbf16>, vector<8x128xbf16>, vector<288x128xf32> -> vector<288x128xf32>
    %30 = arith.addf %25, %29 : vector<288x128xf32>
    %c0_25 = arith.constant 0 : index
    %c36 = arith.constant 36 : index
    %c0_26 = arith.constant 0 : index
    %31 = vector.load %arg1[%c0_25, %c36, %c0_26] : memref<1x326x8xbf16, #tpu.memory_space<vmem>>, vector<1x288x8xbf16>
    %32 = vector.shape_cast %31 : vector<1x288x8xbf16> to vector<288x8xbf16>
    %c48 = arith.constant 48 : index
    %c0_27 = arith.constant 0 : index
    %33 = vector.load %arg4[%c48, %c0_27] : memref<72x128xbf16, #tpu.memory_space<vmem>>, vector<8x128xbf16>
    %cst_28 = arith.constant dense<0.000000e+00> : vector<288x128xf32>
    %34 = tpu.matmul %32, %33, %cst_28 {dimension_numbers = #tpu.dot_dimension_numbers<[1], [0], [0], [1], [0, 0, 1, 1], [], []>} : vector<288x8xbf16>, vector<8x128xbf16>, vector<288x128xf32> -> vector<288x128xf32>
    %35 = arith.addf %30, %34 : vector<288x128xf32>
    %c0_29 = arith.constant 0 : index
    %c37 = arith.constant 37 : index
    %c0_30 = arith.constant 0 : index
    %36 = vector.load %arg1[%c0_29, %c37, %c0_30] : memref<1x326x8xbf16, #tpu.memory_space<vmem>>, vector<1x288x8xbf16>
    %37 = vector.shape_cast %36 : vector<1x288x8xbf16> to vector<288x8xbf16>
    %c56 = arith.constant 56 : index
    %c0_31 = arith.constant 0 : index
    %38 = vector.load %arg4[%c56, %c0_31] : memref<72x128xbf16, #tpu.memory_space<vmem>>, vector<8x128xbf16>
    %cst_32 = arith.constant dense<0.000000e+00> : vector<288x128xf32>
    %39 = tpu.matmul %37, %38, %cst_32 {dimension_numbers = #tpu.dot_dimension_numbers<[1], [0], [0], [1], [0, 0, 1, 1], [], []>} : vector<288x8xbf16>, vector<8x128xbf16>, vector<288x128xf32> -> vector<288x128xf32>
    %40 = arith.addf %35, %39 : vector<288x128xf32>
    %c0_33 = arith.constant 0 : index
    %c38 = arith.constant 38 : index
    %c0_34 = arith.constant 0 : index
    %41 = vector.load %arg1[%c0_33, %c38, %c0_34] : memref<1x326x8xbf16, #tpu.memory_space<vmem>>, vector<1x288x8xbf16>
    %42 = vector.shape_cast %41 : vector<1x288x8xbf16> to vector<288x8xbf16>
    %c64 = arith.constant 64 : index
    %c0_35 = arith.constant 0 : index
    %43 = vector.load %arg4[%c64, %c0_35] : memref<72x128xbf16, #tpu.memory_space<vmem>>, vector<8x128xbf16>
    %cst_36 = arith.constant dense<0.000000e+00> : vector<288x128xf32>
    %44 = tpu.matmul %42, %43, %cst_36 {dimension_numbers = #tpu.dot_dimension_numbers<[1], [0], [0], [1], [0, 0, 1, 1], [], []>} : vector<288x8xbf16>, vector<8x128xbf16>, vector<288x128xf32> -> vector<288x128xf32>
    %45 = arith.addf %40, %44 : vector<288x128xf32>
    %c0_37 = arith.constant 0 : index
    %c0_38 = arith.constant 0 : index
    %46 = vector.load %arg5[%c0_37, %c0_38] : memref<1x128xf32, #tpu.memory_space<vmem>>, vector<1x128xf32>
    %47 = vector.broadcast %46 : vector<1x128xf32> to vector<288x128xf32>
    %48 = arith.addf %45, %47 : vector<288x128xf32>
    %cst_39 = arith.constant 0.000000e+00 : f32
    %49 = vector.broadcast %cst_39 : f32 to vector<288x128xf32>
    %50 = arith.cmpf oge, %48, %49 : vector<288x128xf32>
    %cst_40 = arith.constant 0.00999999977 : f32
    %51 = vector.broadcast %cst_40 : f32 to vector<288x128xf32>
    %52 = arith.mulf %51, %48 : vector<288x128xf32>
    %53 = arith.select %50, %48, %52 : vector<288x128xi1>, vector<288x128xf32>
    %c0_41 = arith.constant 0 : index
    %c0_42 = arith.constant 0 : index
    %54 = vector.load %arg3[%c0_41, %c0_42] : memref<288x1xf32, #tpu.memory_space<vmem>>, vector<288x1xf32>
    %55 = vector.broadcast %54 : vector<288x1xf32> to vector<288x128xf32>
    %56 = arith.mulf %53, %55 : vector<288x128xf32>
    %cst_43 = arith.constant 0.000000e+00 : bf16
    %57 = vector.broadcast %cst_43 : bf16 to vector<19x128xbf16>
    %c0_44 = arith.constant 0 : index
    %c0_45 = arith.constant 0 : index
    %58 = vector.load %arg10[%c0_44, %c0_45] : memref<326x128xbf16, #tpu.memory_space<vmem>>, vector<19x128xbf16>
    tpu.vector_store %arg10[%c0_44, %c0_45], %57 {strides = array<i32>} : memref<326x128xbf16, #tpu.memory_space<vmem>>, vector<19x128xbf16>,
    %c307 = arith.constant 307 : index
    %c0_46 = arith.constant 0 : index
    %59 = vector.load %arg10[%c307, %c0_46] : memref<326x128xbf16, #tpu.memory_space<vmem>>, vector<19x128xbf16>
    tpu.vector_store %arg10[%c307, %c0_46], %57 {strides = array<i32>} : memref<326x128xbf16, #tpu.memory_space<vmem>>, vector<19x128xbf16>,
    %60 = arith.truncf %56 : vector<288x128xf32> to vector<288x128xbf16>
    %c19_47 = arith.constant 19 : index
    %c0_48 = arith.constant 0 : index
    %61 = vector.load %arg10[%c19_47, %c0_48] : memref<326x128xbf16, #tpu.memory_space<vmem>>, vector<288x128xbf16>
    tpu.vector_store %arg10[%c19_47, %c0_48], %60 {strides = array<i32>} : memref<326x128xbf16, #tpu.memory_space<vmem>>, vector<288x128xbf16>,
    %c0_49 = arith.constant 0 : index
    %c0_50 = arith.constant 0 : index
    %c0_51 = arith.constant 0 : index
    %62 = vector.load %arg2[%c0_49, %c0_50, %c0_51] : memref<1x288x8xbf16, #tpu.memory_space<vmem>>, vector<1x288x8xbf16>
    %63 = vector.shape_cast %62 : vector<1x288x8xbf16> to vector<288x8xbf16>
    %c0_52 = arith.constant 0 : index
    %c0_53 = arith.constant 0 : index
    %64 = vector.load %arg7[%c0_52, %c0_53] : memref<8x128xbf16, #tpu.memory_space<vmem>>, vector<8x128xbf16>
    %cst_54 = arith.constant dense<0.000000e+00> : vector<288x128xf32>
    %65 = tpu.matmul %63, %64, %cst_54 {dimension_numbers = #tpu.dot_dimension_numbers<[1], [0], [0], [1], [0, 0, 1, 1], [], []>} : vector<288x8xbf16>, vector<8x128xbf16>, vector<288x128xf32> -> vector<288x128xf32>
    %c0_55 = arith.constant 0 : index
    %c0_56 = arith.constant 0 : index
    %66 = vector.load %arg10[%c0_55, %c0_56] : memref<326x128xbf16, #tpu.memory_space<vmem>>, vector<288x128xbf16>
    %c0_57 = arith.constant 0 : index
    %c0_58 = arith.constant 0 : index
    %67 = vector.load %arg6[%c0_57, %c0_58] : memref<1152x128xbf16, #tpu.memory_space<vmem>>, vector<128x128xbf16>
    %cst_59 = arith.constant dense<0.000000e+00> : vector<288x128xf32>
    %68 = tpu.matmul %66, %67, %cst_59 {dimension_numbers = #tpu.dot_dimension_numbers<[1], [0], [0], [1], [0, 0, 1, 1], [], []>} : vector<288x128xbf16>, vector<128x128xbf16>, vector<288x128xf32> -> vector<288x128xf32>
    %69 = arith.addf %65, %68 : vector<288x128xf32>
    %c1_60 = arith.constant 1 : index
    %c0_61 = arith.constant 0 : index
    %70 = vector.load %arg10[%c1_60, %c0_61] : memref<326x128xbf16, #tpu.memory_space<vmem>>, vector<288x128xbf16>
    %c128 = arith.constant 128 : index
    %c0_62 = arith.constant 0 : index
    %71 = vector.load %arg6[%c128, %c0_62] : memref<1152x128xbf16, #tpu.memory_space<vmem>>, vector<128x128xbf16>
    %cst_63 = arith.constant dense<0.000000e+00> : vector<288x128xf32>
    %72 = tpu.matmul %70, %71, %cst_63 {dimension_numbers = #tpu.dot_dimension_numbers<[1], [0], [0], [1], [0, 0, 1, 1], [], []>} : vector<288x128xbf16>, vector<128x128xbf16>, vector<288x128xf32> -> vector<288x128xf32>
    %73 = arith.addf %69, %72 : vector<288x128xf32>
    %c2_64 = arith.constant 2 : index
    %c0_65 = arith.constant 0 : index
    %74 = vector.load %arg10[%c2_64, %c0_65] : memref<326x128xbf16, #tpu.memory_space<vmem>>, vector<288x128xbf16>
    %c256 = arith.constant 256 : index
    %c0_66 = arith.constant 0 : index
    %75 = vector.load %arg6[%c256, %c0_66] : memref<1152x128xbf16, #tpu.memory_space<vmem>>, vector<128x128xbf16>
    %cst_67 = arith.constant dense<0.000000e+00> : vector<288x128xf32>
    %76 = tpu.matmul %74, %75, %cst_67 {dimension_numbers = #tpu.dot_dimension_numbers<[1], [0], [0], [1], [0, 0, 1, 1], [], []>} : vector<288x128xbf16>, vector<128x128xbf16>, vector<288x128xf32> -> vector<288x128xf32>
    %77 = arith.addf %73, %76 : vector<288x128xf32>
    %c18_68 = arith.constant 18 : index
    %c0_69 = arith.constant 0 : index
    %78 = vector.load %arg10[%c18_68, %c0_69] : memref<326x128xbf16, #tpu.memory_space<vmem>>, vector<288x128xbf16>
    %c384 = arith.constant 384 : index
    %c0_70 = arith.constant 0 : index
    %79 = vector.load %arg6[%c384, %c0_70] : memref<1152x128xbf16, #tpu.memory_space<vmem>>, vector<128x128xbf16>
    %cst_71 = arith.constant dense<0.000000e+00> : vector<288x128xf32>
    %80 = tpu.matmul %78, %79, %cst_71 {dimension_numbers = #tpu.dot_dimension_numbers<[1], [0], [0], [1], [0, 0, 1, 1], [], []>} : vector<288x128xbf16>, vector<128x128xbf16>, vector<288x128xf32> -> vector<288x128xf32>
    %81 = arith.addf %77, %80 : vector<288x128xf32>
    %c19_72 = arith.constant 19 : index
    %c0_73 = arith.constant 0 : index
    %82 = vector.load %arg10[%c19_72, %c0_73] : memref<326x128xbf16, #tpu.memory_space<vmem>>, vector<288x128xbf16>
    %c512 = arith.constant 512 : index
    %c0_74 = arith.constant 0 : index
    %83 = vector.load %arg6[%c512, %c0_74] : memref<1152x128xbf16, #tpu.memory_space<vmem>>, vector<128x128xbf16>
    %cst_75 = arith.constant dense<0.000000e+00> : vector<288x128xf32>
    %84 = tpu.matmul %82, %83, %cst_75 {dimension_numbers = #tpu.dot_dimension_numbers<[1], [0], [0], [1], [0, 0, 1, 1], [], []>} : vector<288x128xbf16>, vector<128x128xbf16>, vector<288x128xf32> -> vector<288x128xf32>
    %85 = arith.addf %81, %84 : vector<288x128xf32>
    %c20_76 = arith.constant 20 : index
    %c0_77 = arith.constant 0 : index
    %86 = vector.load %arg10[%c20_76, %c0_77] : memref<326x128xbf16, #tpu.memory_space<vmem>>, vector<288x128xbf16>
    %c640 = arith.constant 640 : index
    %c0_78 = arith.constant 0 : index
    %87 = vector.load %arg6[%c640, %c0_78] : memref<1152x128xbf16, #tpu.memory_space<vmem>>, vector<128x128xbf16>
    %cst_79 = arith.constant dense<0.000000e+00> : vector<288x128xf32>
    %88 = tpu.matmul %86, %87, %cst_79 {dimension_numbers = #tpu.dot_dimension_numbers<[1], [0], [0], [1], [0, 0, 1, 1], [], []>} : vector<288x128xbf16>, vector<128x128xbf16>, vector<288x128xf32> -> vector<288x128xf32>
    %89 = arith.addf %85, %88 : vector<288x128xf32>
    %c36_80 = arith.constant 36 : index
    %c0_81 = arith.constant 0 : index
    %90 = vector.load %arg10[%c36_80, %c0_81] : memref<326x128xbf16, #tpu.memory_space<vmem>>, vector<288x128xbf16>
    %c768 = arith.constant 768 : index
    %c0_82 = arith.constant 0 : index
    %91 = vector.load %arg6[%c768, %c0_82] : memref<1152x128xbf16, #tpu.memory_space<vmem>>, vector<128x128xbf16>
    %cst_83 = arith.constant dense<0.000000e+00> : vector<288x128xf32>
    %92 = tpu.matmul %90, %91, %cst_83 {dimension_numbers = #tpu.dot_dimension_numbers<[1], [0], [0], [1], [0, 0, 1, 1], [], []>} : vector<288x128xbf16>, vector<128x128xbf16>, vector<288x128xf32> -> vector<288x128xf32>
    %93 = arith.addf %89, %92 : vector<288x128xf32>
    %c37_84 = arith.constant 37 : index
    %c0_85 = arith.constant 0 : index
    %94 = vector.load %arg10[%c37_84, %c0_85] : memref<326x128xbf16, #tpu.memory_space<vmem>>, vector<288x128xbf16>
    %c896 = arith.constant 896 : index
    %c0_86 = arith.constant 0 : index
    %95 = vector.load %arg6[%c896, %c0_86] : memref<1152x128xbf16, #tpu.memory_space<vmem>>, vector<128x128xbf16>
    %cst_87 = arith.constant dense<0.000000e+00> : vector<288x128xf32>
    %96 = tpu.matmul %94, %95, %cst_87 {dimension_numbers = #tpu.dot_dimension_numbers<[1], [0], [0], [1], [0, 0, 1, 1], [], []>} : vector<288x128xbf16>, vector<128x128xbf16>, vector<288x128xf32> -> vector<288x128xf32>
    %97 = arith.addf %93, %96 : vector<288x128xf32>
    %c38_88 = arith.constant 38 : index
    %c0_89 = arith.constant 0 : index
    %98 = vector.load %arg10[%c38_88, %c0_89] : memref<326x128xbf16, #tpu.memory_space<vmem>>, vector<288x128xbf16>
    %c1024 = arith.constant 1024 : index
    %c0_90 = arith.constant 0 : index
    %99 = vector.load %arg6[%c1024, %c0_90] : memref<1152x128xbf16, #tpu.memory_space<vmem>>, vector<128x128xbf16>
    %cst_91 = arith.constant dense<0.000000e+00> : vector<288x128xf32>
    %100 = tpu.matmul %98, %99, %cst_91 {dimension_numbers = #tpu.dot_dimension_numbers<[1], [0], [0], [1], [0, 0, 1, 1], [], []>} : vector<288x128xbf16>, vector<128x128xbf16>, vector<288x128xf32> -> vector<288x128xf32>
    %101 = arith.addf %97, %100 : vector<288x128xf32>
    %c0_92 = arith.constant 0 : index
    %c0_93 = arith.constant 0 : index
    %102 = vector.load %arg8[%c0_92, %c0_93] : memref<1x128xf32, #tpu.memory_space<vmem>>, vector<1x128xf32>
    %103 = vector.broadcast %102 : vector<1x128xf32> to vector<288x128xf32>
    %104 = arith.addf %101, %103 : vector<288x128xf32>
    %cst_94 = arith.constant 0.000000e+00 : f32
    %105 = vector.broadcast %cst_94 : f32 to vector<288x128xf32>
    %106 = arith.cmpf oge, %104, %105 : vector<288x128xf32>
    %cst_95 = arith.constant 0.00999999977 : f32
    %107 = vector.broadcast %cst_95 : f32 to vector<288x128xf32>
    %108 = arith.mulf %107, %104 : vector<288x128xf32>
    %109 = arith.select %106, %104, %108 : vector<288x128xi1>, vector<288x128xf32>
    %110 = vector.extract_strided_slice %109 {offsets = [0, 0], sizes = [288, 8], strides = [1, 1]} : vector<288x128xf32> to vector<288x8xf32>
    %c0_96 = arith.constant 0 : index
    %c0_97 = arith.constant 0 : index
    %c0_98 = arith.constant 0 : index
    %111 = vector.load %arg9[%c0_96, %c0_97, %c0_98] : memref<1x288x8xf32, #tpu.memory_space<vmem>>, vector<1x288x8xf32>
    %112 = vector.shape_cast %111 : vector<1x288x8xf32> to vector<288x8xf32>
    %113 = vector.shape_cast %110 : vector<288x8xf32> to vector<1x288x8xf32>
    tpu.vector_store %arg9[%c0_96, %c0_97, %c0_98], %113 {strides = array<i32>} : memref<1x288x8xf32, #tpu.memory_space<vmem>>, vector<1x288x8xf32>,
    return
  }
  func.func @transform_0(%arg0: i32) -> (i32, i32, i32) {
    %c0_i32 = arith.constant 0 : i32
    %c0_i32_0 = arith.constant 0 : i32
    %c0_i32_1 = arith.constant 0 : i32
    return %arg0, %c0_i32, %c0_i32_0 : i32, i32, i32
  }
  func.func @transform_1(%arg0: i32) -> (i32, i32, i32) {
    %c0_i32 = arith.constant 0 : i32
    %c0_i32_0 = arith.constant 0 : i32
    %c0_i32_1 = arith.constant 0 : i32
    return %arg0, %c0_i32, %c0_i32_0 : i32, i32, i32
  }
  func.func @transform_2(%arg0: i32) -> (i32, i32) {
    %c0_i32 = arith.constant 0 : i32
    %c0_i32_0 = arith.constant 0 : i32
    %c0_i32_1 = arith.constant 0 : i32
    return %c0_i32, %c0_i32_0 : i32, i32
  }
  func.func @transform_3(%arg0: i32) -> (i32, i32) {
    %c0_i32 = arith.constant 0 : i32
    %c0_i32_0 = arith.constant 0 : i32
    %c0_i32_1 = arith.constant 0 : i32
    return %c0_i32, %c0_i32_0 : i32, i32
  }
  func.func @transform_4(%arg0: i32) -> (i32, i32) {
    %c0_i32 = arith.constant 0 : i32
    %c0_i32_0 = arith.constant 0 : i32
    %c0_i32_1 = arith.constant 0 : i32
    return %c0_i32, %c0_i32_0 : i32, i32
  }
  func.func @transform_5(%arg0: i32) -> (i32, i32) {
    %c0_i32 = arith.constant 0 : i32
    %c0_i32_0 = arith.constant 0 : i32
    %c0_i32_1 = arith.constant 0 : i32
    return %c0_i32, %c0_i32_0 : i32, i32
  }
  func.func @transform_6(%arg0: i32) -> (i32, i32) {
    %c0_i32 = arith.constant 0 : i32
    %c0_i32_0 = arith.constant 0 : i32
    %c0_i32_1 = arith.constant 0 : i32
    return %c0_i32, %c0_i32_0 : i32, i32
  }
  func.func @transform_7(%arg0: i32) -> (i32, i32) {
    %c0_i32 = arith.constant 0 : i32
    %c0_i32_0 = arith.constant 0 : i32
    %c0_i32_1 = arith.constant 0 : i32
    return %c0_i32, %c0_i32_0 : i32, i32
  }
  func.func @transform_8(%arg0: i32) -> (i32, i32, i32) {
    %c0_i32 = arith.constant 0 : i32
    %c0_i32_0 = arith.constant 0 : i32
    %c0_i32_1 = arith.constant 0 : i32
    return %arg0, %c0_i32, %c0_i32_0 : i32, i32, i32
  }
}

</mosaic_0001>

<llo_original>
// kernel: residual_block_forward.1
$region0: #{residual_block_forward.1}
  #allocation0 [shape = 'u32[]', space=smem, size = 0x4, offset = 0x4, fixed_abs, tag = 'smem constant byte address 0x4 - core index']
  #allocation1 [shape = 'u32[144,128]{1,0:T(1,128)}', space=vmem, size = 0x12000, scoped, tag = 'internal scratch']
  #allocation2 [shape = 'bf16[326,128]{1,0:T(8,128)(2,1)}', space=vmem, size = 0x14800, scoped, tag = 'scratch operand']
  %s0 = inlined_call_operand.vmem [shape: bf16[2,326,8], index: 0, kind: input, shape index: {}]
  %s1 = inlined_call_operand.vmem [shape: bf16[2,288,8], index: 1, kind: input, shape index: {}]
  %s2 = inlined_call_operand.vmem [shape: f32[288,1], index: 2, kind: input, shape index: {}]
  %s3 = inlined_call_operand.vmem [shape: bf16[72,128], index: 3, kind: input, shape index: {}]
  %s4 = inlined_call_operand.vmem [shape: f32[1,128], index: 4, kind: input, shape index: {}]
  %s5 = inlined_call_operand.vmem [shape: bf16[1152,128], index: 5, kind: input, shape index: {}]
  %s6 = inlined_call_operand.vmem [shape: bf16[8,128], index: 6, kind: input, shape index: {}]
  %s7 = inlined_call_operand.vmem [shape: f32[1,128], index: 7, kind: input, shape index: {}]
  %s8 = inlined_call_operand.vmem [shape: f32[2,288,8], index: 8, kind: output, shape index: {}]
  %s9 = sld [smem:[#allocation0]]
  $region65: #{residual_block_forward.1} parent=0
    _
  %s11 = ssub.s32 1, %s9
  %s12 = scalar_select 0, %s11, %s9
  loop: start=0, step=1, limit=4
  $region2: #{residual_block_forward.1} parent=0 // loop_pre_header
    _
  $region3: #{residual_block_forward.1} parent=0 // loop_header
    %s14 = sphi 0, %s18
    %p15 = scmp.ge.s32.totalorder %s14, 4
    %s24 = sphi 0, %s26
    %s27 = sphi 0, %s24
    %s28 = sphi 0, %s27
    %s44 = sphi 0, %s28
    %s50 = sphi 0, %s52
    %s53 = sphi 0, %s50
    %s54 = sphi 0, %s53
    %s70 = sphi 0, %s54
    %s74 = sphi 0, %s74
    %s76 = sphi 0, %s74
    %s77 = sphi 0, %s76
    %s91 = sphi 0, %s77
    %s95 = sphi 0, %s95
    %s97 = sphi 0, %s95
    %s98 = sphi 0, %s97
    %s112 = sphi 0, %s98
    %s116 = sphi 0, %s116
    %s118 = sphi 0, %s116
    %s119 = sphi 0, %s118
    %s133 = sphi 0, %s119
    %s137 = sphi 0, %s137
    %s139 = sphi 0, %s137
    %s140 = sphi 0, %s139
    %s154 = sphi 0, %s140
    %s158 = sphi 0, %s158
    %s160 = sphi 0, %s158
    %s161 = sphi 0, %s160
    %s175 = sphi 0, %s161
    %s179 = sphi 0, %s179
    %s181 = sphi 0, %s179
    %s182 = sphi 0, %s181
    %s196 = sphi 0, %s182
    %s202 = sphi 0, %s204
    %s205 = sphi 0, %s202
    %s206 = sphi 0, %s205
    %s222 = sphi 0, %s206
  $region4: #{residual_block_forward.1} parent=0 // loop_header_branch
    %17 = sbr.rel (%p15) target = $region8
  $region5: #{residual_block_forward.1} parent=0 // loop_body
    %s19 = ssub.s32 %s14, 1
    %s20 = ssub.s32 %s14, 2
    %s21 = sadd.s32 %s14, 1
    %s22 = ssub.s32 %s14, %s21
    %p23 = scmp.eq.s32.totalorder %s22, 0
    %s25 = sadd.s32 %s24, 1
    %s26 = scalar_select %p23, %s24, %s25
    %p29 = pneg %p23
    %p30 = scmp.eq.s32.totalorder %s14, 1
    %p31 = por %p29, %p30
    %p32 = scmp.ne.s32.totalorder %s24, %s27
    %p33 = scmp.eq.s32.totalorder %s14, 0
    %p34 = por %p32, %p33
    %p35 = scmp.ne.s32.totalorder %s24, %s27
    %p36 = scmp.eq.s32.totalorder %s19, 1
    %p37 = por %p35, %p36
    %p38 = scmp.ne.s32.totalorder %s27, %s28
    %p39 = scmp.eq.s32.totalorder %s19, 0
    %p40 = por %p38, %p39
    %p41 = scmp.ne.s32.totalorder %s27, %s28
    %p42 = scmp.eq.s32.totalorder %s20, 1
    %p43 = por %p41, %p42
    %p45 = scmp.ne.s32.totalorder %s28, %s44
    %p46 = scmp.eq.s32.totalorder %s20, 0
    %p47 = por %p45, %p46
    %s48 = ssub.s32 %s14, %s21
    %p49 = scmp.eq.s32.totalorder %s48, 0
    %s51 = sadd.s32 %s50, 1
    %s52 = scalar_select %p49, %s50, %s51
    %p55 = pneg %p49
    %p56 = scmp.eq.s32.totalorder %s14, 1
    %p57 = por %p55, %p56
    %p58 = scmp.ne.s32.totalorder %s50, %s53
    %p59 = scmp.eq.s32.totalorder %s14, 0
    %p60 = por %p58, %p59
    %p61 = scmp.ne.s32.totalorder %s50, %s53
    %p62 = scmp.eq.s32.totalorder %s19, 1
    %p63 = por %p61, %p62
    %p64 = scmp.ne.s32.totalorder %s53, %s54
    %p65 = scmp.eq.s32.totalorder %s19, 0
    %p66 = por %p64, %p65
    %p67 = scmp.ne.s32.totalorder %s53, %s54
    %p68 = scmp.eq.s32.totalorder %s20, 1
    %p69 = por %p67, %p68
    %p71 = scmp.ne.s32.totalorder %s54, %s70
    %p72 = scmp.eq.s32.totalorder %s20, 0
    %p73 = por %p71, %p72
    %s75 = sadd.s32 %s74, 1
    %p78 = scmp.eq.s32.totalorder %s14, 1
    %p79 = scmp.ne.s32.totalorder %s74, %s76
    %p80 = scmp.eq.s32.totalorder %s14, 0
    %p81 = por %p79, %p80
    %p82 = scmp.ne.s32.totalorder %s74, %s76
    %p83 = scmp.eq.s32.totalorder %s19, 1
    %p84 = por %p82, %p83
    %p85 = scmp.ne.s32.totalorder %s76, %s77
    %p86 = scmp.eq.s32.totalorder %s19, 0
    %p87 = por %p85, %p86
    %p88 = scmp.ne.s32.totalorder %s76, %s77
    %p89 = scmp.eq.s32.totalorder %s20, 1
    %p90 = por %p88, %p89
    %p92 = scmp.ne.s32.totalorder %s77, %s91
    %p93 = scmp.eq.s32.totalorder %s20, 0
    %p94 = por %p92, %p93
    %s96 = sadd.s32 %s95, 1
    %p99 = scmp.eq.s32.totalorder %s14, 1
    %p100 = scmp.ne.s32.totalorder %s95, %s97
    %p101 = scmp.eq.s32.totalorder %s14, 0
    %p102 = por %p100, %p101
    %p103 = scmp.ne.s32.totalorder %s95, %s97
    %p104 = scmp.eq.s32.totalorder %s19, 1
    %p105 = por %p103, %p104
    %p106 = scmp.ne.s32.totalorder %s97, %s98
    %p107 = scmp.eq.s32.totalorder %s19, 0
    %p108 = por %p106, %p107
    %p109 = scmp.ne.s32.totalorder %s97, %s98
    %p110 = scmp.eq.s32.totalorder %s20, 1
    %p111 = por %p109, %p110
    %p113 = scmp.ne.s32.totalorder %s98, %s112
    %p114 = scmp.eq.s32.totalorder %s20, 0
    %p115 = por %p113, %p114
    %s117 = sadd.s32 %s116, 1
    %p120 = scmp.eq.s32.totalorder %s14, 1
    %p121 = scmp.ne.s32.totalorder %s116, %s118
    %p122 = scmp.eq.s32.totalorder %s14, 0
    %p123 = por %p121, %p122
    %p124 = scmp.ne.s32.totalorder %s116, %s118
    %p125 = scmp.eq.s32.totalorder %s19, 1
    %p126 = por %p124, %p125
    %p127 = scmp.ne.s32.totalorder %s118, %s119
    %p128 = scmp.eq.s32.totalorder %s19, 0
    %p129 = por %p127, %p128
    %p130 = scmp.ne.s32.totalorder %s118, %s119
    %p131 = scmp.eq.s32.totalorder %s20, 1
    %p132 = por %p130, %p131
    %p134 = scmp.ne.s32.totalorder %s119, %s133
    %p135 = scmp.eq.s32.totalorder %s20, 0
    %p136 = por %p134, %p135
    %s138 = sadd.s32 %s137, 1
    %p141 = scmp.eq.s32.totalorder %s14, 1
    %p142 = scmp.ne.s32.totalorder %s137, %s139
    %p143 = scmp.eq.s32.totalorder %s14, 0
    %p144 = por %p142, %p143
    %p145 = scmp.ne.s32.totalorder %s137, %s139
    %p146 = scmp.eq.s32.totalorder %s19, 1
    %p147 = por %p145, %p146
    %p148 = scmp.ne.s32.totalorder %s139, %s140
    %p149 = scmp.eq.s32.totalorder %s19, 0
    %p150 = por %p148, %p149
    %p151 = scmp.ne.s32.totalorder %s139, %s140
    %p152 = scmp.eq.s32.totalorder %s20, 1
    %p153 = por %p151, %p152
    %p155 = scmp.ne.s32.totalorder %s140, %s154
    %p156 = scmp.eq.s32.totalorder %s20, 0
    %p157 = por %p155, %p156
    %s159 = sadd.s32 %s158, 1
    %p162 = scmp.eq.s32.totalorder %s14, 1
    %p163 = scmp.ne.s32.totalorder %s158, %s160
    %p164 = scmp.eq.s32.totalorder %s14, 0
    %p165 = por %p163, %p164
    %p166 = scmp.ne.s32.totalorder %s158, %s160
    %p167 = scmp.eq.s32.totalorder %s19, 1
    %p168 = por %p166, %p167
    %p169 = scmp.ne.s32.totalorder %s160, %s161
    %p170 = scmp.eq.s32.totalorder %s19, 0
    %p171 = por %p169, %p170
    %p172 = scmp.ne.s32.totalorder %s160, %s161
    %p173 = scmp.eq.s32.totalorder %s20, 1
    %p174 = por %p172, %p173
    %p176 = scmp.ne.s32.totalorder %s161, %s175
    %p177 = scmp.eq.s32.totalorder %s20, 0
    %p178 = por %p176, %p177
    %s180 = sadd.s32 %s179, 1
    %p183 = scmp.eq.s32.totalorder %s14, 1
    %p184 = scmp.ne.s32.totalorder %s179, %s181
    %p185 = scmp.eq.s32.totalorder %s14, 0
    %p186 = por %p184, %p185
    %p187 = scmp.ne.s32.totalorder %s179, %s181
    %p188 = scmp.eq.s32.totalorder %s19, 1
    %p189 = por %p187, %p188
    %p190 = scmp.ne.s32.totalorder %s181, %s182
    %p191 = scmp.eq.s32.totalorder %s19, 0
    %p192 = por %p190, %p191
    %p193 = scmp.ne.s32.totalorder %s181, %s182
    %p194 = scmp.eq.s32.totalorder %s20, 1
    %p195 = por %p193, %p194
    %p197 = scmp.ne.s32.totalorder %s182, %s196
    %p198 = scmp.eq.s32.totalorder %s20, 0
    %p199 = por %p197, %p198
    %s200 = ssub.s32 %s14, %s21
    %p201 = scmp.eq.s32.totalorder %s200, 0
    %s203 = sadd.s32 %s202, 1
    %s204 = scalar_select %p201, %s202, %s203
    %p207 = pneg %p201
    %p208 = scmp.eq.s32.totalorder %s14, 1
    %p209 = por %p207, %p208
    %p210 = scmp.ne.s32.totalorder %s202, %s205
    %p211 = scmp.eq.s32.totalorder %s14, 0
    %p212 = por %p210, %p211
    %p213 = scmp.ne.s32.totalorder %s202, %s205
    %p214 = scmp.eq.s32.totalorder %s19, 1
    %p215 = por %p213, %p214
    %p216 = scmp.ne.s32.totalorder %s205, %s206
    %p217 = scmp.eq.s32.totalorder %s19, 0
    %p218 = por %p216, %p217
    %p219 = scmp.ne.s32.totalorder %s205, %s206
    %p220 = scmp.eq.s32.totalorder %s20, 1
    %p221 = por %p219, %p220
    %p223 = scmp.ne.s32.totalorder %s206, %s222
    %p224 = scmp.eq.s32.totalorder %s20, 0
    %p225 = por %p223, %p224
    %p226 = scmp.le.s32.totalorder 1, %s14
    %p227 = scmp.lt.s32.totalorder %s14, 3
    %p228 = pnand %p226, %p227
    %p229 = pneg %p228
    // Predicated region
    $region9: #{residual_block_forward.1} parent=5 // pred_check
      _
    $region10: #{residual_block_forward.1} parent=5 // pred_check_branch
      %231 = sbr.rel (%p228) target = $region12
    $region11: #{residual_block_forward.1} parent=5 // pred_region
      %s232 = ssub.s32 %s14, 1
      // Predicated region
      $region13: #{residual_block_forward.1} parent=11 // pred_check
        %p233 = pneg %p87
      $region14: #{residual_block_forward.1} parent=11 // pred_check_branch
        %235 = sbr.rel (%p233) target = $region16
      $region15: #{residual_block_forward.1} parent=11 // pred_region
        _
      $region16: #{residual_block_forward.1} parent=11 // pred_fallthru
        _
      // Predicated region
      $region17: #{residual_block_forward.1} parent=11 // pred_check
        %p236 = pneg %p108
      $region18: #{residual_block_forward.1} parent=11 // pred_check_branch
        %238 = sbr.rel (%p236) target = $region20
      $region19: #{residual_block_forward.1} parent=11 // pred_region
        _
      $region20: #{residual_block_forward.1} parent=11 // pred_fallthru
        _
      // Predicated region
      $region21: #{residual_block_forward.1} parent=11 // pred_check
        %p239 = pneg %p129
      $region22: #{residual_block_forward.1} parent=11 // pred_check_branch
        %241 = sbr.rel (%p239) target = $region24
      $region23: #{residual_block_forward.1} parent=11 // pred_region
        _
      $region24: #{residual_block_forward.1} parent=11 // pred_fallthru
        _
      // Predicated region
      $region25: #{residual_block_forward.1} parent=11 // pred_check
        %p242 = pneg %p150
      $region26: #{residual_block_forward.1} parent=11 // pred_check_branch
        %244 = sbr.rel (%p242) target = $region28
      $region27: #{residual_block_forward.1} parent=11 // pred_region
        _
      $region28: #{residual_block_forward.1} parent=11 // pred_fallthru
        _
      // Predicated region
      $region29: #{residual_block_forward.1} parent=11 // pred_check
        %p245 = pneg %p171
      $region30: #{residual_block_forward.1} parent=11 // pred_check_branch
        %247 = sbr.rel (%p245) target = $region32
      $region31: #{residual_block_forward.1} parent=11 // pred_region
        _
      $region32: #{residual_block_forward.1} parent=11 // pred_fallthru
        _
      // Predicated region
      $region33: #{residual_block_forward.1} parent=11 // pred_check
        %p248 = pneg %p192
      $region34: #{residual_block_forward.1} parent=11 // pred_check_branch
        %250 = sbr.rel (%p248) target = $region36
      $region35: #{residual_block_forward.1} parent=11 // pred_region
        _
      $region36: #{residual_block_forward.1} parent=11 // pred_fallthru
        _
    $region12: #{residual_block_forward.1} parent=5 // pred_fallthru
      _
    %p251 = scmp.lt.s32.totalorder %s14, 2
    // Predicated region
    $region37: #{residual_block_forward.1} parent=5 // pred_check
      %p252 = pneg %p251
    $region38: #{residual_block_forward.1} parent=5 // pred_check_branch
      %254 = sbr.rel (%p252) target = $region40
    $region39: #{residual_block_forward.1} parent=5 // pred_region
      // Predicated region
      $region41: #{residual_block_forward.1} parent=39 // pred_check
        %p255 = pneg %p34
      $region42: #{residual_block_forward.1} parent=39 // pred_check_branch
        %257 = sbr.rel (%p255) target = $region44
      $region43: #{residual_block_forward.1} parent=39 // pred_region
        %p258 = scmp.lt.s32.totalorder %s14, 1
        %s259 = scalar_select %p258, %s14, 1
        %s260 = smul.addr %s259, 41
        %s261 = smul.addr %s260, 4
        %s262 = scalar_lea.vmem %s0, %s261
      $region44: #{residual_block_forward.1} parent=39 // pred_fallthru
        _
      // Predicated region
      $region45: #{residual_block_forward.1} parent=39 // pred_check
        %p263 = pneg %p60
      $region46: #{residual_block_forward.1} parent=39 // pred_check_branch
        %265 = sbr.rel (%p263) target = $region48
      $region47: #{residual_block_forward.1} parent=39 // pred_region
        %p266 = scmp.lt.s32.totalorder %s14, 1
        %s267 = scalar_select %p266, %s14, 1
        %s268 = smul.addr %s267, 36
        %s269 = smul.addr %s268, 4
        %s270 = scalar_lea.vmem %s1, %s269
      $region48: #{residual_block_forward.1} parent=39 // pred_fallthru
        _
    $region40: #{residual_block_forward.1} parent=5 // pred_fallthru
      _
    %p271 = scmp.le.s32.totalorder 1, %s14
    %p272 = scmp.lt.s32.totalorder %s14, 3
    %p273 = pnand %p271, %p272
    %p274 = pneg %p273
    // Predicated region
    $region49: #{residual_block_forward.1} parent=5 // pred_check
      _
    $region50: #{residual_block_forward.1} parent=5 // pred_check_branch
      %276 = sbr.rel (%p273) target = $region52
    $region51: #{residual_block_forward.1} parent=5 // pred_region
      %s277 = ssub.s32 %s14, 1
      %p278 = scmp.lt.s32.totalorder %s19, 1
      %s279 = scalar_select %p278, %s19, 1
      %s280 = smul.addr %s279, 41
      %s281 = smul.addr %s280, 4
      %s282 = scalar_lea.vmem %s0, %s281
      %p283 = pneg %p40
      %p284 = pneg %p37
      %p285 = scmp.lt.s32.totalorder %s19, 1
      %s286 = scalar_select %p285, %s19, 1
      %s287 = smul.addr %s286, 36
      %s288 = smul.addr %s287, 4
      %s289 = scalar_lea.vmem %s1, %s288
      %p290 = pneg %p66
      %p291 = pneg %p63
      %p292 = pneg %p87
      %p293 = pneg %p84
      %p294 = pneg %p108
      %p295 = pneg %p105
      %p296 = pneg %p129
      %p297 = pneg %p126
      %p298 = pneg %p150
      %p299 = pneg %p147
      %p300 = pneg %p171
      %p301 = pneg %p168
      %p302 = pneg %p192
      %p303 = pneg %p189
      %p304 = pneg %p218
      %p305 = pneg %p215
      %p306 = scmp.lt.s32.totalorder %s19, 1
      %s307 = scalar_select %p306, %s19, 1
      %s308 = smul.addr %s307, 36
      %s309 = smul.addr %s308, 8
      %s310 = scalar_lea.vmem %s8, %s309
      %p311 = scmp.lt.s32.totalorder %s19, 1
      %s312 = scalar_select %p311, %s19, 1
      %s313 = smul.addr %s312, 41
      %s314 = smul.addr %s313, 4
      %s315 = scalar_lea.vmem %s0, %s314
      %p316 = scmp.lt.s32.totalorder %s19, 1
      %s317 = scalar_select %p316, %s19, 1
      %s318 = smul.addr %s317, 36
      %s319 = smul.addr %s318, 4
      %s320 = scalar_lea.vmem %s1, %s319
      %p321 = scmp.lt.s32.totalorder %s19, 1
      %s322 = scalar_select %p321, %s19, 1
      %s323 = smul.addr %s322, 36
      %s324 = smul.addr %s323, 8
      %s325 = scalar_lea.vmem %s8, %s324
      %v327 = vld [vmem:[%s315] sm:$0xf]
      %v328 = vld [vmem:[%s315 + $0x4] sm:$0xf]
      %v329 = vld [vmem:[%s315 + $0x8] sm:$0xf]
      %v330 = vld [vmem:[%s315 + $0xc] sm:$0xf]
      %v331 = vld [vmem:[%s315 + $0x10] sm:$0xf]
      %v332 = vld [vmem:[%s315 + $0x14] sm:$0xf]
      %v333 = vld [vmem:[%s315 + $0x18] sm:$0xf]
      %v334 = vld [vmem:[%s315 + $0x1c] sm:$0xf]
      %v335 = vld [vmem:[%s315 + $0x20] sm:$0xf]
      %v336 = vld [vmem:[%s315 + $0x24] sm:$0xf]
      %v337 = vld [vmem:[%s315 + $0x28] sm:$0xf]
      %v338 = vld [vmem:[%s315 + $0x2c] sm:$0xf]
      %v339 = vld [vmem:[%s315 + $0x30] sm:$0xf]
      %v340 = vld [vmem:[%s315 + $0x34] sm:$0xf]
      %v341 = vld [vmem:[%s315 + $0x38] sm:$0xf]
      %v342 = vld [vmem:[%s315 + $0x3c] sm:$0xf]
      %v343 = vld [vmem:[%s315 + $0x40] sm:$0xf]
      %v344 = vld [vmem:[%s315 + $0x44] sm:$0xf]
      %v345 = vld [vmem:[%s315 + $0x48] sm:$0xf]
      %v346 = vld [vmem:[%s315 + $0x4c] sm:$0xf]
      %v347 = vld [vmem:[%s315 + $0x50] sm:$0xf]
      %v348 = vld [vmem:[%s315 + $0x54] sm:$0xf]
      %v349 = vld [vmem:[%s315 + $0x58] sm:$0xf]
      %v350 = vld [vmem:[%s315 + $0x5c] sm:$0xf]
      %v351 = vld [vmem:[%s315 + $0x60] sm:$0xf]
      %v352 = vld [vmem:[%s315 + $0x64] sm:$0xf]
      %v353 = vld [vmem:[%s315 + $0x68] sm:$0xf]
      %v354 = vld [vmem:[%s315 + $0x6c] sm:$0xf]
      %v355 = vld [vmem:[%s315 + $0x70] sm:$0xf]
      %v356 = vld [vmem:[%s315 + $0x74] sm:$0xf]
      %v357 = vld [vmem:[%s315 + $0x78] sm:$0xf]
      %v358 = vld [vmem:[%s315 + $0x7c] sm:$0xf]
      %v359 = vld [vmem:[%s315 + $0x80] sm:$0xf]
      %v360 = vld [vmem:[%s315 + $0x84] sm:$0xf]
      %v361 = vld [vmem:[%s315 + $0x88] sm:$0xf]
      %v362 = vld [vmem:[%s315 + $0x8c] sm:$0xf]
      %v363 = vld [vmem:[%s3] sm:$0xf]
      %v364 = vld [vmem:[%s315 + $0x90] sm:$0x1]
      %v365 = vld [vmem:[%s3 + $0x4] sm:$0xf]
      %v403 = vunpack.c.l.b16 %v327
      %v404 = vunpack.c.l.b16 %v328
      %v405 = vunpack.c.l.b16 %v329
      %v406 = vunpack.c.l.b16 %v330
      %v407 = vunpack.c.l.b16 %v331
      %v408 = vunpack.c.l.b16 %v332
      %v409 = vunpack.c.l.b16 %v333
      %v410 = vunpack.c.l.b16 %v334
      %v411 = vunpack.c.l.b16 %v335
      %v412 = vunpack.c.l.b16 %v336
      %v413 = vunpack.c.l.b16 %v337
      %v414 = vunpack.c.l.b16 %v338
      %v415 = vunpack.c.l.b16 %v339
      %v416 = vunpack.c.l.b16 %v340
      %v417 = vunpack.c.l.b16 %v341
      %v418 = vunpack.c.l.b16 %v342
      %v419 = vunpack.c.l.b16 %v343
      %v420 = vunpack.c.l.b16 %v344
      %v421 = vunpack.c.l.b16 %v345
      %v422 = vunpack.c.l.b16 %v346
      %v423 = vunpack.c.l.b16 %v347
      %v424 = vunpack.c.l.b16 %v348
      %v425 = vunpack.c.l.b16 %v349
      %v426 = vunpack.c.l.b16 %v350
      %v427 = vunpack.c.l.b16 %v351
      %v428 = vunpack.c.l.b16 %v352
      %v429 = vunpack.c.l.b16 %v353
      %v430 = vunpack.c.l.b16 %v354
      %v431 = vunpack.c.l.b16 %v355
      %v432 = vunpack.c.l.b16 %v356
      %v433 = vunpack.c.l.b16 %v357
      %v434 = vunpack.c.l.b16 %v358
      %v435 = vunpack.c.l.b16 %v359
      %v436 = vunpack.c.l.b16 %v360
      %v437 = vunpack.c.l.b16 %v361
      %v438 = vunpack.c.l.b16 %v362
      %v439 = vunpack.c.l.b16 %v364
      %v440 = vpack.c.b16 %v404, %v403
      %v441 = vpack.c.b16 %v406, %v405
      %v442 = vpack.c.b16 %v408, %v407
      %v443 = vpack.c.b16 %v410, %v409
      %v444 = vpack.c.b16 %v412, %v411
      %v445 = vpack.c.b16 %v414, %v413
      %v446 = vpack.c.b16 %v416, %v415
      %v447 = vpack.c.b16 %v418, %v417
      %v448 = vpack.c.b16 %v420, %v419
      %v449 = vpack.c.b16 %v422, %v421
      %v450 = vpack.c.b16 %v424, %v423
      %v451 = vpack.c.b16 %v426, %v425
      %v452 = vpack.c.b16 %v428, %v427
      %v453 = vpack.c.b16 %v430, %v429
      %v454 = vpack.c.b16 %v432, %v431
      %v455 = vpack.c.b16 %v434, %v433
      %v456 = vpack.c.b16 %v436, %v435
      %v457 = vpack.c.b16 %v438, %v437
      %v458 = vpack.c.b16 %v439, %v439
      %vm459 = vsmask.f32 7424
      %v461 = vshrl.u32 %v440, 16
      %v463 = vshll.u32 %v440, 16
      %v465 = vrot.slane %v463, 1
      %v466 = vor.u32 %v461, %v465
      %v468 = vshll.u32 %v441, 16
      %v470 = vrot.slane %v468, 1
      %v471 = vsel %vm459, %v466, %v470
      %v472 = vshrl.u32 %v441, 16
      %v474 = vor.u32 %v472, %v470
      %v476 = vshll.u32 %v442, 16
      %v478 = vrot.slane %v476, 1
      %v479 = vsel %vm459, %v474, %v478
      %v480 = vshrl.u32 %v442, 16
      %v482 = vor.u32 %v480, %v478
      %v484 = vshll.u32 %v443, 16
      %v486 = vrot.slane %v484, 1
      %v487 = vsel %vm459, %v482, %v486
      %v488 = vshrl.u32 %v443, 16
      %v490 = vor.u32 %v488, %v486
      %v492 = vshll.u32 %v444, 16
      %v494 = vrot.slane %v492, 1
      %v495 = vsel %vm459, %v490, %v494
      %v496 = vshrl.u32 %v444, 16
      %v498 = vor.u32 %v496, %v494
      %v500 = vshll.u32 %v445, 16
      %v502 = vrot.slane %v500, 1
      %v503 = vsel %vm459, %v498, %v502
      %v504 = vshrl.u32 %v445, 16
      %v506 = vor.u32 %v504, %v502
      %v508 = vshll.u32 %v446, 16
      %v510 = vrot.slane %v508, 1
      %v511 = vsel %vm459, %v506, %v510
      %v512 = vshrl.u32 %v446, 16
      %v514 = vor.u32 %v512, %v510
      %v516 = vshll.u32 %v447, 16
      %v518 = vrot.slane %v516, 1
      %v519 = vsel %vm459, %v514, %v518
      %v520 = vshrl.u32 %v447, 16
      %v522 = vor.u32 %v520, %v518
      %v524 = vshll.u32 %v448, 16
      %v526 = vrot.slane %v524, 1
      %v527 = vsel %vm459, %v522, %v526
      %v528 = vshrl.u32 %v448, 16
      %v530 = vor.u32 %v528, %v526
      %v532 = vshll.u32 %v449, 16
      %v534 = vrot.slane %v532, 1
      %v535 = vsel %vm459, %v530, %v534
      %v536 = vshrl.u32 %v449, 16
      %v538 = vor.u32 %v536, %v534
      %v540 = vshll.u32 %v450, 16
      %v542 = vrot.slane %v540, 1
      %v543 = vsel %vm459, %v538, %v542
      %v544 = vshrl.u32 %v450, 16
      %v546 = vor.u32 %v544, %v542
      %v548 = vshll.u32 %v451, 16
      %v550 = vrot.slane %v548, 1
      %v551 = vsel %vm459, %v546, %v550
      %v552 = vshrl.u32 %v451, 16
      %v554 = vor.u32 %v552, %v550
      %v556 = vshll.u32 %v452, 16
      %v558 = vrot.slane %v556, 1
      %v559 = vsel %vm459, %v554, %v558
      %v560 = vshrl.u32 %v452, 16
      %v562 = vor.u32 %v560, %v558
      %v564 = vshll.u32 %v453, 16
      %v566 = vrot.slane %v564, 1
      %v567 = vsel %vm459, %v562, %v566
      %v568 = vshrl.u32 %v453, 16
      %v570 = vor.u32 %v568, %v566
      %v572 = vshll.u32 %v454, 16
      %v574 = vrot.slane %v572, 1
      %v575 = vsel %vm459, %v570, %v574
      %v576 = vshrl.u32 %v454, 16
      %v578 = vor.u32 %v576, %v574
      %v580 = vshll.u32 %v455, 16
      %v582 = vrot.slane %v580, 1
      %v583 = vsel %vm459, %v578, %v582
      %v584 = vshrl.u32 %v455, 16
      %v586 = vor.u32 %v584, %v582
      %v588 = vshll.u32 %v456, 16
      %v590 = vrot.slane %v588, 1
      %v591 = vsel %vm459, %v586, %v590
      %v592 = vshrl.u32 %v456, 16
      %v594 = vor.u32 %v592, %v590
      %v596 = vshll.u32 %v457, 16
      %v598 = vrot.slane %v596, 1
      %v599 = vsel %vm459, %v594, %v598
      %v600 = vshrl.u32 %v457, 16
      %v602 = vor.u32 %v600, %v598
      %v604 = vshll.u32 %v458, 16
      %v606 = vrot.slane %v604, 1
      %v607 = vsel %vm459, %v602, %v606
      %vm608 = vcmask 64512
      %v610 = vsel %vm608, %v471, 0
      %v613 = vsel %vm608, %v479, 0
      %v616 = vsel %vm608, %v487, 0
      %v619 = vsel %vm608, %v495, 0
      %v622 = vsel %vm608, %v503, 0
      %v625 = vsel %vm608, %v511, 0
      %v628 = vsel %vm608, %v519, 0
      %v631 = vsel %vm608, %v527, 0
      %v634 = vsel %vm608, %v535, 0
      %v637 = vsel %vm608, %v543, 0
      %v640 = vsel %vm608, %v551, 0
      %v643 = vsel %vm608, %v559, 0
      %v646 = vsel %vm608, %v567, 0
      %v649 = vsel %vm608, %v575, 0
      %v652 = vsel %vm608, %v583, 0
      %v655 = vsel %vm608, %v591, 0
      %v658 = vsel %vm608, %v599, 0
      %v661 = vsel %vm608, %v607, 0
      %vm663 = vcmask 1043456
      %v665 = vsel %vm663, %v365, 0
      %667 = vmatprep.subr.bf16.mxu0 0
      %668 = vmatpush1.bf16.msra.mxu0 %v665
      %669 = vmatprep.subr.bf16.mxu0 0
      %670 = vmatpush1.bf16.msra.mxu0 0
      %671 = vmatprep.subr.bf16.mxu0 0
      %672 = vmatpush1.bf16.msra.mxu0 0
      %673 = vmatprep.subr.bf16.mxu0 0
      %674 = vmatpush1.bf16.msra.mxu0 0
      %675 = vmatprep.subr.bf16.mxu0 0
      %676 = vmatpush1.bf16.msra.mxu0 0
      %677 = vmatprep.subr.bf16.mxu0 0
      %678 = vmatpush1.bf16.msra.mxu0 0
      %679 = vmatprep.subr.bf16.mxu0 0
      %680 = vmatpush1.bf16.msra.mxu0 0
      %681 = vmatprep.subr.bf16.mxu0 0
      %682 = vmatpush1.bf16.msra.mxu0 0
      %683 = vmatprep.subr.bf16.mxu0 0
      %684 = vmatpush1.bf16.msra.mxu0 0
      %685 = vmatprep.subr.bf16.mxu0 0
      %686 = vmatpush1.bf16.msra.mxu0 0
      %687 = vmatprep.subr.bf16.mxu0 0
      %688 = vmatpush1.bf16.msra.mxu0 0
      %689 = vmatprep.subr.bf16.mxu0 0
      %690 = vmatpush1.bf16.msra.mxu0 0
      %691 = vmatprep.subr.bf16.mxu0 0
      %692 = vmatpush1.bf16.msra.mxu0 0
      %693 = vmatprep.subr.bf16.mxu0 0
      %694 = vmatpush1.bf16.msra.mxu0 0
      %695 = vmatprep.subr.bf16.mxu0 0
      %696 = vmatpush1.bf16.msra.mxu0 0
      %697 = vmatprep.subr.bf16.mxu0 0
      %698 = vmatpush1.bf16.msra.mxu0 0
      %699 = vmatprep.mubr.bf16.mxu0 0
      %700 = vmatmul.mubr.bf16.gmra.mrb[0].mxu0 %v610
      %v701 = vpop.f32.mrb[0].mxu0
      %v702 = vadd.f32 0.0, %v701
      %v703 = vpop.f32.mrb[0].mxu0
      %v704 = vpop.f32.mrb[0].mxu0
      %v705 = vadd.f32 0.0, %v704
      %v706 = vpop.f32.mrb[0].mxu0
      %707 = vmatprep.mubr.bf16.mxu0 0
      %708 = vmatmul.mubr.bf16.gmra.mrb[0].mxu0 %v613
      %v709 = vpop.f32.mrb[0].mxu0
      %v710 = vadd.f32 0.0, %v709
      %v711 = vpop.f32.mrb[0].mxu0
      %v712 = vpop.f32.mrb[0].mxu0
      %v713 = vadd.f32 0.0, %v712
      %v714 = vpop.f32.mrb[0].mxu0
      %715 = vmatprep.mubr.bf16.mxu0 0
      %716 = vmatmul.mubr.bf16.gmra.mrb[0].mxu0 %v616
      %v717 = vpop.f32.mrb[0].mxu0
      %v718 = vadd.f32 0.0, %v717
      %v719 = vpop.f32.mrb[0].mxu0
      %v720 = vpop.f32.mrb[0].mxu0
      %v721 = vadd.f32 0.0, %v720
      %v722 = vpop.f32.mrb[0].mxu0
      %723 = vmatprep.mubr.bf16.mxu0 0
      %724 = vmatmul.mubr.bf16.gmra.mrb[0].mxu0 %v619
      %v725 = vpop.f32.mrb[0].mxu0
      %v726 = vadd.f32 0.0, %v725
      %v727 = vpop.f32.mrb[0].mxu0
      %v728 = vpop.f32.mrb[0].mxu0
      %v729 = vadd.f32 0.0, %v728
      %v730 = vpop.f32.mrb[0].mxu0
      %731 = vmatprep.mubr.bf16.mxu0 0
      %732 = vmatmul.mubr.bf16.gmra.mrb[0].mxu0 %v622
      %v733 = vpop.f32.mrb[0].mxu0
      %v734 = vadd.f32 0.0, %v733
      %v735 = vpop.f32.mrb[0].mxu0
      %v736 = vpop.f32.mrb[0].mxu0
      %v737 = vadd.f32 0.0, %v736
      %v738 = vpop.f32.mrb[0].mxu0
      %739 = vmatprep.mubr.bf16.mxu0 0
      %740 = vmatmul.mubr.bf16.gmra.mrb[0].mxu0 %v625
      %v741 = vpop.f32.mrb[0].mxu0
      %v742 = vadd.f32 0.0, %v741
      %v743 = vpop.f32.mrb[0].mxu0
      %v744 = vpop.f32.mrb[0].mxu0
      %v745 = vadd.f32 0.0, %v744
      %v746 = vpop.f32.mrb[0].mxu0
      %747 = vmatprep.mubr.bf16.mxu0 0
      %748 = vmatmul.mubr.bf16.gmra.mrb[0].mxu0 %v628
      %v749 = vpop.f32.mrb[0].mxu0
      %v750 = vadd.f32 0.0, %v749
      %v751 = vpop.f32.mrb[0].mxu0
      %v752 = vpop.f32.mrb[0].mxu0
      %v753 = vadd.f32 0.0, %v752
      %v754 = vpop.f32.mrb[0].mxu0
      %755 = vmatprep.mubr.bf16.mxu0 0
      %756 = vmatmul.mubr.bf16.gmra.mrb[0].mxu0 %v631
      %v757 = vpop.f32.mrb[0].mxu0
      %v758 = vadd.f32 0.0, %v757
      %v759 = vpop.f32.mrb[0].mxu0
      %v760 = vpop.f32.mrb[0].mxu0
      %v761 = vadd.f32 0.0, %v760
      %v762 = vpop.f32.mrb[0].mxu0
      %763 = vmatprep.mubr.bf16.mxu0 0
      %764 = vmatmul.mubr.bf16.gmra.mrb[0].mxu0 %v634
      %v765 = vpop.f32.mrb[0].mxu0
      %v766 = vadd.f32 0.0, %v765
      %v767 = vpop.f32.mrb[0].mxu0
      %v768 = vpop.f32.mrb[0].mxu0
      %v769 = vadd.f32 0.0, %v768
      %v770 = vpop.f32.mrb[0].mxu0
      %771 = vmatprep.mubr.bf16.mxu0 0
      %772 = vmatmul.mubr.bf16.gmra.mrb[0].mxu0 %v637
      %v773 = vpop.f32.mrb[0].mxu0
      %v774 = vadd.f32 0.0, %v773
      %v775 = vpop.f32.mrb[0].mxu0
      %v776 = vpop.f32.mrb[0].mxu0
      %v777 = vadd.f32 0.0, %v776
      %v778 = vpop.f32.mrb[0].mxu0
      %779 = vmatprep.mubr.bf16.mxu0 0
      %780 = vmatmul.mubr.bf16.gmra.mrb[0].mxu0 %v640
      %v781 = vpop.f32.mrb[0].mxu0
      %v782 = vadd.f32 0.0, %v781
      %v783 = vpop.f32.mrb[0].mxu0
      %v784 = vpop.f32.mrb[0].mxu0
      %v785 = vadd.f32 0.0, %v784
      %v786 = vpop.f32.mrb[0].mxu0
      %787 = vmatprep.mubr.bf16.mxu0 0
      %788 = vmatmul.mubr.bf16.gmra.mrb[0].mxu0 %v643
      %v789 = vpop.f32.mrb[0].mxu0
      %v790 = vadd.f32 0.0, %v789
      %v791 = vpop.f32.mrb[0].mxu0
      %v792 = vpop.f32.mrb[0].mxu0
      %v793 = vadd.f32 0.0, %v792
      %v794 = vpop.f32.mrb[0].mxu0
      %795 = vmatprep.mubr.bf16.mxu0 0
      %796 = vmatmul.mubr.bf16.gmra.mrb[0].mxu0 %v646
      %v797 = vpop.f32.mrb[0].mxu0
      %v798 = vadd.f32 0.0, %v797
      %v799 = vpop.f32.mrb[0].mxu0
      %v800 = vpop.f32.mrb[0].mxu0
      %v801 = vadd.f32 0.0, %v800
      %v802 = vpop.f32.mrb[0].mxu0
      %803 = vmatprep.mubr.bf16.mxu0 0
      %804 = vmatmul.mubr.bf16.gmra.mrb[0].mxu0 %v649
      %v805 = vpop.f32.mrb[0].mxu0
      %v806 = vadd.f32 0.0, %v805
      %v807 = vpop.f32.mrb[0].mxu0
      %v808 = vpop.f32.mrb[0].mxu0
      %v809 = vadd.f32 0.0, %v808
      %v810 = vpop.f32.mrb[0].mxu0
      %811 = vmatprep.mubr.bf16.mxu0 0
      %812 = vmatmul.mubr.bf16.gmra.mrb[0].mxu0 %v652
      %v813 = vpop.f32.mrb[0].mxu0
      %v814 = vadd.f32 0.0, %v813
      %v815 = vpop.f32.mrb[0].mxu0
      %v816 = vpop.f32.mrb[0].mxu0
      %v817 = vadd.f32 0.0, %v816
      %v818 = vpop.f32.mrb[0].mxu0
      %819 = vmatprep.mubr.bf16.mxu0 0
      %820 = vmatmul.mubr.bf16.gmra.mrb[0].mxu0 %v655
      %v821 = vpop.f32.mrb[0].mxu0
      %v822 = vadd.f32 0.0, %v821
      %v823 = vpop.f32.mrb[0].mxu0
      %v824 = vpop.f32.mrb[0].mxu0
      %v825 = vadd.f32 0.0, %v824
      %v826 = vpop.f32.mrb[0].mxu0
      %827 = vmatprep.mubr.bf16.mxu0 0
      %828 = vmatmul.mubr.bf16.gmra.mrb[0].mxu0 %v658
      %v829 = vpop.f32.mrb[0].mxu0
      %v830 = vadd.f32 0.0, %v829
      %v831 = vpop.f32.mrb[0].mxu0
      %v832 = vpop.f32.mrb[0].mxu0
      %v833 = vadd.f32 0.0, %v832
      %v834 = vpop.f32.mrb[0].mxu0
      %835 = vmatprep.mubr.bf16.mxu0 0
      %836 = vmatmul.mubr.bf16.gmra.mrb[0].mxu0 %v661
      %v837 = vpop.f32.mrb[0].mxu0
      %v838 = vadd.f32 0.0, %v837
      %v839 = vpop.f32.mrb[0].mxu0
      %v840 = vpop.f32.mrb[0].mxu0
      %v841 = vadd.f32 0.0, %v840
      %v842 = vpop.f32.mrb[0].mxu0
      %843 = vdwg.mxu0
      %v844 = vsel %vm608, %v440, 0
      %v846 = vsel %vm608, %v441, 0
      %v848 = vsel %vm608, %v442, 0
      %v850 = vsel %vm608, %v443, 0
      %v852 = vsel %vm608, %v444, 0
      %v854 = vsel %vm608, %v445, 0
      %v856 = vsel %vm608, %v446, 0
      %v858 = vsel %vm608, %v447, 0
      %v860 = vsel %vm608, %v448, 0
      %v862 = vsel %vm608, %v449, 0
      %v864 = vsel %vm608, %v450, 0
      %v866 = vsel %vm608, %v451, 0
      %v868 = vsel %vm608, %v452, 0
      %v870 = vsel %vm608, %v453, 0
      %v872 = vsel %vm608, %v454, 0
      %v874 = vsel %vm608, %v455, 0
      %v876 = vsel %vm608, %v456, 0
      %v878 = vsel %vm608, %v457, 0
      %v881 = vsel %vm663, %v363, 0
      %883 = vmatprep.subr.bf16.mxu0 0
      %884 = vmatpush1.bf16.msra.mxu0 %v881
      %885 = vmatprep.subr.bf16.mxu0 0
      %886 = vmatpush1.bf16.msra.mxu0 0
      %887 = vmatprep.subr.bf16.mxu0 0
      %888 = vmatpush1.bf16.msra.mxu0 0
      %889 = vmatprep.subr.bf16.mxu0 0
      %890 = vmatpush1.bf16.msra.mxu0 0
      %891 = vmatprep.subr.bf16.mxu0 0
      %892 = vmatpush1.bf16.msra.mxu0 0
      %893 = vmatprep.subr.bf16.mxu0 0
      %894 = vmatpush1.bf16.msra.mxu0 0
      %895 = vmatprep.subr.bf16.mxu0 0
      %896 = vmatpush1.bf16.msra.mxu0 0
      %897 = vmatprep.subr.bf16.mxu0 0
      %898 = vmatpush1.bf16.msra.mxu0 0
      %899 = vmatprep.subr.bf16.mxu0 0
      %900 = vmatpush1.bf16.msra.mxu0 0
      %901 = vmatprep.subr.bf16.mxu0 0
      %902 = vmatpush1.bf16.msra.mxu0 0
      %903 = vmatprep.subr.bf16.mxu0 0
      %904 = vmatpush1.bf16.msra.mxu0 0
      %905 = vmatprep.subr.bf16.mxu0 0
      %906 = vmatpush1.bf16.msra.mxu0 0
      %907 = vmatprep.subr.bf16.mxu0 0
      %908 = vmatpush1.bf16.msra.mxu0 0
      %909 = vmatprep.subr.bf16.mxu0 0
      %910 = vmatpush1.bf16.msra.mxu0 0
      %911 = vmatprep.subr.bf16.mxu0 0
      %912 = vmatpush1.bf16.msra.mxu0 0
      %913 = vmatprep.subr.bf16.mxu0 0
      %914 = vmatpush1.bf16.msra.mxu0 0
      %915 = vmatprep.mubr.bf16.mxu0 0
      %916 = vmatmul.mubr.bf16.gmra.mrb[0].mxu0 %v844
      %v917 = vpop.f32.mrb[0].mxu0
      %v918 = vadd.f32 %v702, %v917
      %v919 = vpop.f32.mrb[0].mxu0
      %v920 = vpop.f32.mrb[0].mxu0
      %v921 = vadd.f32 %v705, %v920
      %v922 = vpop.f32.mrb[0].mxu0
      %923 = vmatprep.mubr.bf16.mxu0 0
      %924 = vmatmul.mubr.bf16.gmra.mrb[0].mxu0 %v846
      %v925 = vpop.f32.mrb[0].mxu0
      %v926 = vadd.f32 %v710, %v925
      %v927 = vpop.f32.mrb[0].mxu0
      %v928 = vpop.f32.mrb[0].mxu0
      %v929 = vadd.f32 %v713, %v928
      %v930 = vpop.f32.mrb[0].mxu0
      %931 = vmatprep.mubr.bf16.mxu0 0
      %932 = vmatmul.mubr.bf16.gmra.mrb[0].mxu0 %v848
      %v933 = vpop.f32.mrb[0].mxu0
      %v934 = vadd.f32 %v718, %v933
      %v935 = vpop.f32.mrb[0].mxu0
      %v936 = vpop.f32.mrb[0].mxu0
      %v937 = vadd.f32 %v721, %v936
      %v938 = vpop.f32.mrb[0].mxu0
      %939 = vmatprep.mubr.bf16.mxu0 0
      %940 = vmatmul.mubr.bf16.gmra.mrb[0].mxu0 %v850
      %v941 = vpop.f32.mrb[0].mxu0
      %v942 = vadd.f32 %v726, %v941
      %v943 = vpop.f32.mrb[0].mxu0
      %v944 = vpop.f32.mrb[0].mxu0
      %v945 = vadd.f32 %v729, %v944
      %v946 = vpop.f32.mrb[0].mxu0
      %947 = vmatprep.mubr.bf16.mxu0 0
      %948 = vmatmul.mubr.bf16.gmra.mrb[0].mxu0 %v852
      %v949 = vpop.f32.mrb[0].mxu0
      %v950 = vadd.f32 %v734, %v949
      %v951 = vpop.f32.mrb[0].mxu0
      %v952 = vpop.f32.mrb[0].mxu0
      %v953 = vadd.f32 %v737, %v952
      %v954 = vpop.f32.mrb[0].mxu0
      %955 = vmatprep.mubr.bf16.mxu0 0
      %956 = vmatmul.mubr.bf16.gmra.mrb[0].mxu0 %v854
      %v957 = vpop.f32.mrb[0].mxu0
      %v958 = vadd.f32 %v742, %v957
      %v959 = vpop.f32.mrb[0].mxu0
      %v960 = vpop.f32.mrb[0].mxu0
      %v961 = vadd.f32 %v745, %v960
      %v962 = vpop.f32.mrb[0].mxu0
      %963 = vmatprep.mubr.bf16.mxu0 0
      %964 = vmatmul.mubr.bf16.gmra.mrb[0].mxu0 %v856
      %v965 = vpop.f32.mrb[0].mxu0
      %v966 = vadd.f32 %v750, %v965
      %v967 = vpop.f32.mrb[0].mxu0
      %v968 = vpop.f32.mrb[0].mxu0
      %v969 = vadd.f32 %v753, %v968
      %v970 = vpop.f32.mrb[0].mxu0
      %971 = vmatprep.mubr.bf16.mxu0 0
      %972 = vmatmul.mubr.bf16.gmra.mrb[0].mxu0 %v858
      %v973 = vpop.f32.mrb[0].mxu0
      %v974 = vadd.f32 %v758, %v973
      %v975 = vpop.f32.mrb[0].mxu0
      %v976 = vpop.f32.mrb[0].mxu0
      %v977 = vadd.f32 %v761, %v976
      %v978 = vpop.f32.mrb[0].mxu0
      %979 = vmatprep.mubr.bf16.mxu0 0
      %980 = vmatmul.mubr.bf16.gmra.mrb[0].mxu0 %v860
      %v981 = vpop.f32.mrb[0].mxu0
      %v982 = vadd.f32 %v766, %v981
      %v983 = vpop.f32.mrb[0].mxu0
      %v984 = vpop.f32.mrb[0].mxu0
      %v985 = vadd.f32 %v769, %v984
      %v986 = vpop.f32.mrb[0].mxu0
      %987 = vmatprep.mubr.bf16.mxu0 0
      %988 = vmatmul.mubr.bf16.gmra.mrb[0].mxu0 %v862
      %v989 = vpop.f32.mrb[0].mxu0
      %v990 = vadd.f32 %v774, %v989
      %v991 = vpop.f32.mrb[0].mxu0
      %v992 = vpop.f32.mrb[0].mxu0
      %v993 = vadd.f32 %v777, %v992
      %v994 = vpop.f32.mrb[0].mxu0
      %995 = vmatprep.mubr.bf16.mxu0 0
      %996 = vmatmul.mubr.bf16.gmra.mrb[0].mxu0 %v864
      %v997 = vpop.f32.mrb[0].mxu0
      %v998 = vadd.f32 %v782, %v997
      %v999 = vpop.f32.mrb[0].mxu0
      %v1000 = vpop.f32.mrb[0].mxu0
      %v1001 = vadd.f32 %v785, %v1000
      %v1002 = vpop.f32.mrb[0].mxu0
      %1003 = vmatprep.mubr.bf16.mxu0 0
      %1004 = vmatmul.mubr.bf16.gmra.mrb[0].mxu0 %v866
      %v1005 = vpop.f32.mrb[0].mxu0
      %v1006 = vadd.f32 %v790, %v1005
      %v1007 = vpop.f32.mrb[0].mxu0
      %v1008 = vpop.f32.mrb[0].mxu0
      %v1009 = vadd.f32 %v793, %v1008
      %v1010 = vpop.f32.mrb[0].mxu0
      %1011 = vmatprep.mubr.bf16.mxu0 0
      %1012 = vmatmul.mubr.bf16.gmra.mrb[0].mxu0 %v868
      %v1013 = vpop.f32.mrb[0].mxu0
      %v1014 = vadd.f32 %v798, %v1013
      %v1015 = vpop.f32.mrb[0].mxu0
      %v1016 = vpop.f32.mrb[0].mxu0
      %v1017 = vadd.f32 %v801, %v1016
      %v1018 = vpop.f32.mrb[0].mxu0
      %1019 = vmatprep.mubr.bf16.mxu0 0
      %1020 = vmatmul.mubr.bf16.gmra.mrb[0].mxu0 %v870
      %v1021 = vpop.f32.mrb[0].mxu0
      %v1022 = vadd.f32 %v806, %v1021
      %v1023 = vpop.f32.mrb[0].mxu0
      %v1024 = vpop.f32.mrb[0].mxu0
      %v1025 = vadd.f32 %v809, %v1024
      %v1026 = vpop.f32.mrb[0].mxu0
      %1027 = vmatprep.mubr.bf16.mxu0 0
      %1028 = vmatmul.mubr.bf16.gmra.mrb[0].mxu0 %v872
      %v1029 = vpop.f32.mrb[0].mxu0
      %v1030 = vadd.f32 %v814, %v1029
      %v1031 = vpop.f32.mrb[0].mxu0
      %v1032 = vpop.f32.mrb[0].mxu0
      %v1033 = vadd.f32 %v817, %v1032
      %v1034 = vpop.f32.mrb[0].mxu0
      %1035 = vmatprep.mubr.bf16.mxu0 0
      %1036 = vmatmul.mubr.bf16.gmra.mrb[0].mxu0 %v874
      %v1037 = vpop.f32.mrb[0].mxu0
      %v1038 = vadd.f32 %v822, %v1037
      %v1039 = vpop.f32.mrb[0].mxu0
      %v1040 = vpop.f32.mrb[0].mxu0
      %v1041 = vadd.f32 %v825, %v1040
      %v1042 = vpop.f32.mrb[0].mxu0
      %1043 = vmatprep.mubr.bf16.mxu0 0
      %1044 = vmatmul.mubr.bf16.gmra.mrb[0].mxu0 %v876
      %v1045 = vpop.f32.mrb[0].mxu0
      %v1046 = vadd.f32 %v830, %v1045
      %v1047 = vpop.f32.mrb[0].mxu0
      %v1048 = vpop.f32.mrb[0].mxu0
      %v1049 = vadd.f32 %v833, %v1048
      %v1050 = vpop.f32.mrb[0].mxu0
      %1051 = vmatprep.mubr.bf16.mxu0 0
      %1052 = vmatmul.mubr.bf16.gmra.mrb[0].mxu0 %v878
      %v1053 = vpop.f32.mrb[0].mxu0
      %v1054 = vadd.f32 %v838, %v1053
      %v1055 = vpop.f32.mrb[0].mxu0
      %v1056 = vpop.f32.mrb[0].mxu0
      %v1057 = vadd.f32 %v841, %v1056
      %v1058 = vpop.f32.mrb[0].mxu0
      %1059 = vdwg.mxu0
      %v1060 = vld [vmem:[%s315] sm:$0xe]
      %v1061 = vld [vmem:[%s3 + $0x8] sm:$0xf]
      %v1063 = vunpack.c.l.b16 %v1060
      %v1064 = vpack.c.b16 %v404, %v1063
      %vm1065 = vcmask 1046528
      %v1066 = vrot.slane %v1064, 1
      %v1067 = vrot.slane %v441, 1
      %v1068 = vsel %vm1065, %v1066, %v1067
      %v1069 = vrot.slane %v442, 1
      %v1070 = vsel %vm1065, %v1067, %v1069
      %v1071 = vrot.slane %v443, 1
      %v1072 = vsel %vm1065, %v1069, %v1071
      %v1073 = vrot.slane %v444, 1
      %v1074 = vsel %vm1065, %v1071, %v1073
      %v1075 = vrot.slane %v445, 1
      %v1076 = vsel %vm1065, %v1073, %v1075
      %v1077 = vrot.slane %v446, 1
      %v1078 = vsel %vm1065, %v1075, %v1077
      %v1079 = vrot.slane %v447, 1
      %v1080 = vsel %vm1065, %v1077, %v1079
      %v1081 = vrot.slane %v448, 1
      %v1082 = vsel %vm1065, %v1079, %v1081
      %v1083 = vrot.slane %v449, 1
      %v1084 = vsel %vm1065, %v1081, %v1083
      %v1085 = vrot.slane %v450, 1
      %v1086 = vsel %vm1065, %v1083, %v1085
      %v1087 = vrot.slane %v451, 1
      %v1088 = vsel %vm1065, %v1085, %v1087
      %v1089 = vrot.slane %v452, 1
      %v1090 = vsel %vm1065, %v1087, %v1089
      %v1091 = vrot.slane %v453, 1
      %v1092 = vsel %vm1065, %v1089, %v1091
      %v1093 = vrot.slane %v454, 1
      %v1094 = vsel %vm1065, %v1091, %v1093
      %v1095 = vrot.slane %v455, 1
      %v1096 = vsel %vm1065, %v1093, %v1095
      %v1097 = vrot.slane %v456, 1
      %v1098 = vsel %vm1065, %v1095, %v1097
      %v1099 = vrot.slane %v457, 1
      %v1100 = vsel %vm1065, %v1097, %v1099
      %v1101 = vrot.slane %v458, 1
      %v1102 = vsel %vm1065, %v1099, %v1101
      %v1104 = vsel %vm608, %v1068, 0
      %v1107 = vsel %vm608, %v1070, 0
      %v1110 = vsel %vm608, %v1072, 0
      %v1113 = vsel %vm608, %v1074, 0
      %v1116 = vsel %vm608, %v1076, 0
      %v1119 = vsel %vm608, %v1078, 0
      %v1122 = vsel %vm608, %v1080, 0
      %v1125 = vsel %vm608, %v1082, 0
      %v1128 = vsel %vm608, %v1084, 0
      %v1131 = vsel %vm608, %v1086, 0
      %v1134 = vsel %vm608, %v1088, 0
      %v1137 = vsel %vm608, %v1090, 0
      %v1140 = vsel %vm608, %v1092, 0
      %v1143 = vsel %vm608, %v1094, 0
      %v1146 = vsel %vm608, %v1096, 0
      %v1149 = vsel %vm608, %v1098, 0
      %v1152 = vsel %vm608, %v1100, 0
      %v1155 = vsel %vm608, %v1102, 0
      %v1158 = vsel %vm663, %v1061, 0
      %1160 = vmatprep.subr.bf16.mxu0 0
      %1161 = vmatpush1.bf16.msra.mxu0 %v1158
      %1162 = vmatprep.subr.bf16.mxu0 0
      %1163 = vmatpush1.bf16.msra.mxu0 0
      %1164 = vmatprep.subr.bf16.mxu0 0
      %1165 = vmatpush1.bf16.msra.mxu0 0
      %1166 = vmatprep.subr.bf16.mxu0 0
      %1167 = vmatpush1.bf16.msra.mxu0 0
      %1168 = vmatprep.subr.bf16.mxu0 0
      %1169 = vmatpush1.bf16.msra.mxu0 0
      %1170 = vmatprep.subr.bf16.mxu0 0
      %1171 = vmatpush1.bf16.msra.mxu0 0
      %1172 = vmatprep.subr.bf16.mxu0 0
      %1173 = vmatpush1.bf16.msra.mxu0 0
      %1174 = vmatprep.subr.bf16.mxu0 0
      %1175 = vmatpush1.bf16.msra.mxu0 0
      %1176 = vmatprep.subr.bf16.mxu0 0
      %1177 = vmatpush1.bf16.msra.mxu0 0
      %1178 = vmatprep.subr.bf16.mxu0 0
      %1179 = vmatpush1.bf16.msra.mxu0 0
      %1180 = vmatprep.subr.bf16.mxu0 0
      %1181 = vmatpush1.bf16.msra.mxu0 0
      %1182 = vmatprep.subr.bf16.mxu0 0
      %1183 = vmatpush1.bf16.msra.mxu0 0
      %1184 = vmatprep.subr.bf16.mxu0 0
      %1185 = vmatpush1.bf16.msra.mxu0 0
      %1186 = vmatprep.subr.bf16.mxu0 0
      %1187 = vmatpush1.bf16.msra.mxu0 0
      %1188 = vmatprep.subr.bf16.mxu0 0
      %1189 = vmatpush1.bf16.msra.mxu0 0
      %1190 = vmatprep.subr.bf16.mxu0 0
      %1191 = vmatpush1.bf16.msra.mxu0 0
      %1192 = vmatprep.mubr.bf16.mxu0 0
      %1193 = vmatmul.mubr.bf16.gmra.mrb[0].mxu0 %v1104
      %v1194 = vpop.f32.mrb[0].mxu0
      %v1195 = vadd.f32 0.0, %v1194
      %v1196 = vpop.f32.mrb[0].mxu0
      %v1197 = vpop.f32.mrb[0].mxu0
      %v1198 = vadd.f32 0.0, %v1197
      %v1199 = vpop.f32.mrb[0].mxu0
      %1200 = vmatprep.mubr.bf16.mxu0 0
      %1201 = vmatmul.mubr.bf16.gmra.mrb[0].mxu0 %v1107
      %v1202 = vpop.f32.mrb[0].mxu0
      %v1203 = vadd.f32 0.0, %v1202
      %v1204 = vpop.f32.mrb[0].mxu0
      %v1205 = vpop.f32.mrb[0].mxu0
      %v1206 = vadd.f32 0.0, %v1205
      %v1207 = vpop.f32.mrb[0].mxu0
      %1208 = vmatprep.mubr.bf16.mxu0 0
      %1209 = vmatmul.mubr.bf16.gmra.mrb[0].mxu0 %v1110
      %v1210 = vpop.f32.mrb[0].mxu0
      %v1211 = vadd.f32 0.0, %v1210
      %v1212 = vpop.f32.mrb[0].mxu0
      %v1213 = vpop.f32.mrb[0].mxu0
      %v1214 = vadd.f32 0.0, %v1213
      %v1215 = vpop.f32.mrb[0].mxu0
      %1216 = vmatprep.mubr.bf16.mxu0 0
      %1217 = vmatmul.mubr.bf16.gmra.mrb[0].mxu0 %v1113
      %v1218 = vpop.f32.mrb[0].mxu0
      %v1219 = vadd.f32 0.0, %v1218
      %v1220 = vpop.f32.mrb[0].mxu0
      %v1221 = vpop.f32.mrb[0].mxu0
      %v1222 = vadd.f32 0.0, %v1221
      %v1223 = vpop.f32.mrb[0].mxu0
      %1224 = vmatprep.mubr.bf16.mxu0 0
      %1225 = vmatmul.mubr.bf16.gmra.mrb[0].mxu0 %v1116
      %v1226 = vpop.f32.mrb[0].mxu0
      %v1227 = vadd.f32 0.0, %v1226
      %v1228 = vpop.f32.mrb[0].mxu0
      %v1229 = vpop.f32.mrb[0].mxu0
      %v1230 = vadd.f32 0.0, %v1229
      %v1231 = vpop.f32.mrb[0].mxu0
      %1232 = vmatprep.mubr.bf16.mxu0 0
      %1233 = vmatmul.mubr.bf16.gmra.mrb[0].mxu0 %v1119
      %v1234 = vpop.f32.mrb[0].mxu0
      %v1235 = vadd.f32 0.0, %v1234
      %v1236 = vpop.f32.mrb[0].mxu0
      %v1237 = vpop.f32.mrb[0].mxu0
      %v1238 = vadd.f32 0.0, %v1237
      %v1239 = vpop.f32.mrb[0].mxu0
      %1240 = vmatprep.mubr.bf16.mxu0 0
      %1241 = vmatmul.mubr.bf16.gmra.mrb[0].mxu0 %v1122
      %v1242 = vpop.f32.mrb[0].mxu0
      %v1243 = vadd.f32 0.0, %v1242
      %v1244 = vpop.f32.mrb[0].mxu0
      %v1245 = vpop.f32.mrb[0].mxu0
      %v1246 = vadd.f32 0.0, %v1245
      %v1247 = vpop.f32.mrb[0].mxu0
      %1248 = vmatprep.mubr.bf16.mxu0 0
      %1249 = vmatmul.mubr.bf16.gmra.mrb[0].mxu0 %v1125
      %v1250 = vpop.f32.mrb[0].mxu0
      %v1251 = vadd.f32 0.0, %v1250
      %v1252 = vpop.f32.mrb[0].mxu0
      %v1253 = vpop.f32.mrb[0].mxu0
      %v1254 = vadd.f32 0.0, %v1253
      %v1255 = vpop.f32.mrb[0].mxu0
      %1256 = vmatprep.mubr.bf16.mxu0 0
      %1257 = vmatmul.mubr.bf16.gmra.mrb[0].mxu0 %v1128
      %v1258 = vpop.f32.mrb[0].mxu0
      %v1259 = vadd.f32 0.0, %v1258
      %v1260 = vpop.f32.mrb[0].mxu0
      %v1261 = vpop.f32.mrb[0].mxu0
      %v1262 = vadd.f32 0.0, %v1261
      %v1263 = vpop.f32.mrb[0].mxu0
      %1264 = vmatprep.mubr.bf16.mxu0 0
      %1265 = vmatmul.mubr.bf16.gmra.mrb[0].mxu0 %v1131
      %v1266 = vpop.f32.mrb[0].mxu0
      %v1267 = vadd.f32 0.0, %v1266
      %v1268 = vpop.f32.mrb[0].mxu0
      %v1269 = vpop.f32.mrb[0].mxu0
      %v1270 = vadd.f32 0.0, %v1269
      %v1271 = vpop.f32.mrb[0].mxu0
      %1272 = vmatprep.mubr.bf16.mxu0 0
      %1273 = vmatmul.mubr.bf16.gmra.mrb[0].mxu0 %v1134
      %v1274 = vpop.f32.mrb[0].mxu0
      %v1275 = vadd.f32 0.0, %v1274
      %v1276 = vpop.f32.mrb[0].mxu0
      %v1277 = vpop.f32.mrb[0].mxu0
      %v1278 = vadd.f32 0.0, %v1277
      %v1279 = vpop.f32.mrb[0].mxu0
      %1280 = vmatprep.mubr.bf16.mxu0 0
      %1281 = vmatmul.mubr.bf16.gmra.mrb[0].mxu0 %v1137
      %v1282 = vpop.f32.mrb[0].mxu0
      %v1283 = vadd.f32 0.0, %v1282
      %v1284 = vpop.f32.mrb[0].mxu0
      %v1285 = vpop.f32.mrb[0].mxu0
      %v1286 = vadd.f32 0.0, %v1285
      %v1287 = vpop.f32.mrb[0].mxu0
      %1288 = vmatprep.mubr.bf16.mxu0 0
      %1289 = vmatmul.mubr.bf16.gmra.mrb[0].mxu0 %v1140
      %v1290 = vpop.f32.mrb[0].mxu0
      %v1291 = vadd.f32 0.0, %v1290
      %v1292 = vpop.f32.mrb[0].mxu0
      %v1293 = vpop.f32.mrb[0].mxu0
      %v1294 = vadd.f32 0.0, %v1293
      %v1295 = vpop.f32.mrb[0].mxu0
      %1296 = vmatprep.mubr.bf16.mxu0 0
      %1297 = vmatmul.mubr.bf16.gmra.mrb[0].mxu0 %v1143
      %v1298 = vpop.f32.mrb[0].mxu0
      %v1299 = vadd.f32 0.0, %v1298
      %v1300 = vpop.f32.mrb[0].mxu0
      %v1301 = vpop.f32.mrb[0].mxu0
      %v1302 = vadd.f32 0.0, %v1301
      %v1303 = vpop.f32.mrb[0].mxu0
      %1304 = vmatprep.mubr.bf16.mxu0 0
      %1305 = vmatmul.mubr.bf16.gmra.mrb[0].mxu0 %v1146
      %v1306 = vpop.f32.mrb[0].mxu0
      %v1307 = vadd.f32 0.0, %v1306
      %v1308 = vpop.f32.mrb[0].mxu0
      %v1309 = vpop.f32.mrb[0].mxu0
      %v1310 = vadd.f32 0.0, %v1309
      %v1311 = vpop.f32.mrb[0].mxu0
      %1312 = vmatprep.mubr.bf16.mxu0 0
      %1313 = vmatmul.mubr.bf16.gmra.mrb[0].mxu0 %v1149
      %v1314 = vpop.f32.mrb[0].mxu0
      %v1315 = vadd.f32 0.0, %v1314
      %v1316 = vpop.f32.mrb[0].mxu0
      %v1317 = vpop.f32.mrb[0].mxu0
      %v1318 = vadd.f32 0.0, %v1317
      %v1319 = vpop.f32.mrb[0].mxu0
      %1320 = vmatprep.mubr.bf16.mxu0 0
      %1321 = vmatmul.mubr.bf16.gmra.mrb[0].mxu0 %v1152
      %v1322 = vpop.f32.mrb[0].mxu0
      %v1323 = vadd.f32 0.0, %v1322
      %v1324 = vpop.f32.mrb[0].mxu0
      %v1325 = vpop.f32.mrb[0].mxu0
      %v1326 = vadd.f32 0.0, %v1325
      %v1327 = vpop.f32.mrb[0].mxu0
      %1328 = vmatprep.mubr.bf16.mxu0 0
      %1329 = vmatmul.mubr.bf16.gmra.mrb[0].mxu0 %v1155
      %v1330 = vpop.f32.mrb[0].mxu0
      %v1331 = vadd.f32 0.0, %v1330
      %v1332 = vpop.f32.mrb[0].mxu0
      %v1333 = vpop.f32.mrb[0].mxu0
      %v1334 = vadd.f32 0.0, %v1333
      %v1335 = vpop.f32.mrb[0].mxu0
      %1336 = vdwg.mxu0
      %v1337 = vadd.f32 %v918, %v1195
      %v1338 = vadd.f32 %v921, %v1198
      %v1339 = vadd.f32 %v926, %v1203
      %v1340 = vadd.f32 %v929, %v1206
      %v1341 = vadd.f32 %v934, %v1211
      %v1342 = vadd.f32 %v937, %v1214
      %v1343 = vadd.f32 %v942, %v1219
      %v1344 = vadd.f32 %v945, %v1222
      %v1345 = vadd.f32 %v950, %v1227
      %v1346 = vadd.f32 %v953, %v1230
      %v1347 = vadd.f32 %v958, %v1235
      %v1348 = vadd.f32 %v961, %v1238
      %v1349 = vadd.f32 %v966, %v1243
      %v1350 = vadd.f32 %v969, %v1246
      %v1351 = vadd.f32 %v974, %v1251
      %v1352 = vadd.f32 %v977, %v1254
      %v1353 = vadd.f32 %v982, %v1259
      %v1354 = vadd.f32 %v985, %v1262
      %v1355 = vadd.f32 %v990, %v1267
      %v1356 = vadd.f32 %v993, %v1270
      %v1357 = vadd.f32 %v998, %v1275
      %v1358 = vadd.f32 %v1001, %v1278
      %v1359 = vadd.f32 %v1006, %v1283
      %v1360 = vadd.f32 %v1009, %v1286
      %v1361 = vadd.f32 %v1014, %v1291
      %v1362 = vadd.f32 %v1017, %v1294
      %v1363 = vadd.f32 %v1022, %v1299
      %v1364 = vadd.f32 %v1025, %v1302
      %v1365 = vadd.f32 %v1030, %v1307
      %v1366 = vadd.f32 %v1033, %v1310
      %v1367 = vadd.f32 %v1038, %v1315
      %v1368 = vadd.f32 %v1041, %v1318
      %v1369 = vadd.f32 %v1046, %v1323
      %v1370 = vadd.f32 %v1049, %v1326
      %v1371 = vadd.f32 %v1054, %v1331
      %v1372 = vadd.f32 %v1057, %v1334
      %v1373 = vld [vmem:[%s315 + $0x8] sm:$0xe]
      %v1374 = vld [vmem:[%s315 + $0xc] sm:$0xf]
      %v1375 = vld [vmem:[%s315 + $0x10] sm:$0xf]
      %v1376 = vld [vmem:[%s315 + $0x14] sm:$0xf]
      %v1377 = vld [vmem:[%s315 + $0x18] sm:$0xf]
      %v1378 = vld [vmem:[%s315 + $0x1c] sm:$0xf]
      %v1379 = vld [vmem:[%s315 + $0x20] sm:$0xf]
      %v1380 = vld [vmem:[%s315 + $0x24] sm:$0xf]
      %v1381 = vld [vmem:[%s315 + $0x28] sm:$0xf]
      %v1382 = vld [vmem:[%s315 + $0x2c] sm:$0xf]
      %v1383 = vld [vmem:[%s315 + $0x30] sm:$0xf]
      %v1384 = vld [vmem:[%s315 + $0x34] sm:$0xf]
      %v1385 = vld [vmem:[%s315 + $0x38] sm:$0xf]
      %v1386 = vld [vmem:[%s315 + $0x3c] sm:$0xf]
      %v1387 = vld [vmem:[%s315 + $0x40] sm:$0xf]
      %v1388 = vld [vmem:[%s315 + $0x44] sm:$0xf]
      %v1389 = vld [vmem:[%s315 + $0x48] sm:$0xf]
      %v1390 = vld [vmem:[%s315 + $0x4c] sm:$0xf]
      %v1391 = vld [vmem:[%s315 + $0x50] sm:$0xf]
      %v1392 = vld [vmem:[%s315 + $0x54] sm:$0xf]
      %v1393 = vld [vmem:[%s315 + $0x58] sm:$0xf]
      %v1394 = vld [vmem:[%s315 + $0x5c] sm:$0xf]
      %v1395 = vld [vmem:[%s315 + $0x60] sm:$0xf]
      %v1396 = vld [vmem:[%s315 + $0x64] sm:$0xf]
      %v1397 = vld [vmem:[%s315 + $0x68] sm:$0xf]
      %v1398 = vld [vmem:[%s315 + $0x6c] sm:$0xf]
      %v1399 = vld [vmem:[%s315 + $0x70] sm:$0xf]
      %v1400 = vld [vmem:[%s315 + $0x74] sm:$0xf]
      %v1401 = vld [vmem:[%s315 + $0x78] sm:$0xf]
      %v1402 = vld [vmem:[%s315 + $0x7c] sm:$0xf]
      %v1403 = vld [vmem:[%s315 + $0x80] sm:$0xf]
      %v1404 = vld [vmem:[%s315 + $0x84] sm:$0xf]
      %v1405 = vld [vmem:[%s315 + $0x88] sm:$0xf]
      %v1406 = vld [vmem:[%s315 + $0x8c] sm:$0xf]
      %v1407 = vld [vmem:[%s315 + $0x90] sm:$0xf]
      %v1408 = vld [vmem:[%s315 + $0x94] sm:$0xf]
      %v1409 = vld [vmem:[%s315 + $0x98] sm:$0x1]
      %v1410 = vld [vmem:[%s3 + $0xc] sm:$0xf]
      %v1448 = vunpack.c.l.b16 %v1373
      %v1449 = vunpack.c.l.b16 %v1374
      %v1450 = vunpack.c.l.b16 %v1375
      %v1451 = vunpack.c.l.b16 %v1376
      %v1452 = vunpack.c.l.b16 %v1377
      %v1453 = vunpack.c.l.b16 %v1378
      %v1454 = vunpack.c.l.b16 %v1379
      %v1455 = vunpack.c.l.b16 %v1380
      %v1456 = vunpack.c.l.b16 %v1381
      %v1457 = vunpack.c.l.b16 %v1382
      %v1458 = vunpack.c.l.b16 %v1383
      %v1459 = vunpack.c.l.b16 %v1384
      %v1460 = vunpack.c.l.b16 %v1385
      %v1461 = vunpack.c.l.b16 %v1386
      %v1462 = vunpack.c.l.b16 %v1387
      %v1463 = vunpack.c.l.b16 %v1388
      %v1464 = vunpack.c.l.b16 %v1389
      %v1465 = vunpack.c.l.b16 %v1390
      %v1466 = vunpack.c.l.b16 %v1391
      %v1467 = vunpack.c.l.b16 %v1392
      %v1468 = vunpack.c.l.b16 %v1393
      %v1469 = vunpack.c.l.b16 %v1394
      %v1470 = vunpack.c.l.b16 %v1395
      %v1471 = vunpack.c.l.b16 %v1396
      %v1472 = vunpack.c.l.b16 %v1397
      %v1473 = vunpack.c.l.b16 %v1398
      %v1474 = vunpack.c.l.b16 %v1399
      %v1475 = vunpack.c.l.b16 %v1400
      %v1476 = vunpack.c.l.b16 %v1401
      %v1477 = vunpack.c.l.b16 %v1402
      %v1478 = vunpack.c.l.b16 %v1403
      %v1479 = vunpack.c.l.b16 %v1404
      %v1480 = vunpack.c.l.b16 %v1405
      %v1481 = vunpack.c.l.b16 %v1406
      %v1482 = vunpack.c.l.b16 %v1407
      %v1483 = vunpack.c.l.b16 %v1408
      %v1484 = vunpack.c.l.b16 %v1409
      %v1485 = vpack.c.b16 %v1449, %v1448
      %v1486 = vpack.c.b16 %v1451, %v1450
      %v1487 = vpack.c.b16 %v1453, %v1452
      %v1488 = vpack.c.b16 %v1455, %v1454
      %v1489 = vpack.c.b16 %v1457, %v1456
      %v1490 = vpack.c.b16 %v1459, %v1458
      %v1491 = vpack.c.b16 %v1461, %v1460
      %v1492 = vpack.c.b16 %v1463, %v1462
      %v1493 = vpack.c.b16 %v1465, %v1464
      %v1494 = vpack.c.b16 %v1467, %v1466
      %v1495 = vpack.c.b16 %v1469, %v1468
      %v1496 = vpack.c.b16 %v1471, %v1470
      %v1497 = vpack.c.b16 %v1473, %v1472
      %v1498 = vpack.c.b16 %v1475, %v1474
      %v1499 = vpack.c.b16 %v1477, %v1476
      %v1500 = vpack.c.b16 %v1479, %v1478
      %v1501 = vpack.c.b16 %v1481, %v1480
      %v1502 = vpack.c.b16 %v1483, %v1482
      %v1503 = vpack.c.b16 %v1484, %v1484
      %v1504 = vrot.slane %v1485, 1
      %v1505 = vrot.slane %v1486, 1
      %v1506 = vsel %vm1065, %v1504, %v1505
      %v1507 = vrot.slane %v1487, 1
      %v1508 = vsel %vm1065, %v1505, %v1507
      %v1509 = vrot.slane %v1488, 1
      %v1510 = vsel %vm1065, %v1507, %v1509
      %v1511 = vrot.slane %v1489, 1
      %v1512 = vsel %vm1065, %v1509, %v1511
      %v1513 = vrot.slane %v1490, 1
      %v1514 = vsel %vm1065, %v1511, %v1513
      %v1515 = vrot.slane %v1491, 1
      %v1516 = vsel %vm1065, %v1513, %v1515
      %v1517 = vrot.slane %v1492, 1
      %v1518 = vsel %vm1065, %v1515, %v1517
      %v1519 = vrot.slane %v1493, 1
      %v1520 = vsel %vm1065, %v1517, %v1519
      %v1521 = vrot.slane %v1494, 1
      %v1522 = vsel %vm1065, %v1519, %v1521
      %v1523 = vrot.slane %v1495, 1
      %v1524 = vsel %vm1065, %v1521, %v1523
      %v1525 = vrot.slane %v1496, 1
      %v1526 = vsel %vm1065, %v1523, %v1525
      %v1527 = vrot.slane %v1497, 1
      %v1528 = vsel %vm1065, %v1525, %v1527
      %v1529 = vrot.slane %v1498, 1
      %v1530 = vsel %vm1065, %v1527, %v1529
      %v1531 = vrot.slane %v1499, 1
      %v1532 = vsel %vm1065, %v1529, %v1531
      %v1533 = vrot.slane %v1500, 1
      %v1534 = vsel %vm1065, %v1531, %v1533
      %v1535 = vrot.slane %v1501, 1
      %v1536 = vsel %vm1065, %v1533, %v1535
      %v1537 = vrot.slane %v1502, 1
      %v1538 = vsel %vm1065, %v1535, %v1537
      %v1539 = vrot.slane %v1503, 1
      %v1540 = vsel %vm1065, %v1537, %v1539
      %v1542 = vsel %vm608, %v1506, 0
      %v1545 = vsel %vm608, %v1508, 0
      %v1548 = vsel %vm608, %v1510, 0
      %v1551 = vsel %vm608, %v1512, 0
      %v1554 = vsel %vm608, %v1514, 0
      %v1557 = vsel %vm608, %v1516, 0
      %v1560 = vsel %vm608, %v1518, 0
      %v1563 = vsel %vm608, %v1520, 0
      %v1566 = vsel %vm608, %v1522, 0
      %v1569 = vsel %vm608, %v1524, 0
      %v1572 = vsel %vm608, %v1526, 0
      %v1575 = vsel %vm608, %v1528, 0
      %v1578 = vsel %vm608, %v1530, 0
      %v1581 = vsel %vm608, %v1532, 0
      %v1584 = vsel %vm608, %v1534, 0
      %v1587 = vsel %vm608, %v1536, 0
      %v1590 = vsel %vm608, %v1538, 0
      %v1593 = vsel %vm608, %v1540, 0
      %v1596 = vsel %vm663, %v1410, 0
      %1598 = vmatprep.subr.bf16.mxu0 0
      %1599 = vmatpush1.bf16.msra.mxu0 %v1596
      %1600 = vmatprep.subr.bf16.mxu0 0
      %1601 = vmatpush1.bf16.msra.mxu0 0
      %1602 = vmatprep.subr.bf16.mxu0 0
      %1603 = vmatpush1.bf16.msra.mxu0 0
      %1604 = vmatprep.subr.bf16.mxu0 0
      %1605 = vmatpush1.bf16.msra.mxu0 0
      %1606 = vmatprep.subr.bf16.mxu0 0
      %1607 = vmatpush1.bf16.msra.mxu0 0
      %1608 = vmatprep.subr.bf16.mxu0 0
      %1609 = vmatpush1.bf16.msra.mxu0 0
      %1610 = vmatprep.subr.bf16.mxu0 0
      %1611 = vmatpush1.bf16.msra.mxu0 0
      %1612 = vmatprep.subr.bf16.mxu0 0
      %1613 = vmatpush1.bf16.msra.mxu0 0
      %1614 = vmatprep.subr.bf16.mxu0 0
      %1615 = vmatpush1.bf16.msra.mxu0 0
      %1616 = vmatprep.subr.bf16.mxu0 0
      %1617 = vmatpush1.bf16.msra.mxu0 0
      %1618 = vmatprep.subr.bf16.mxu0 0
      %1619 = vmatpush1.bf16.msra.mxu0 0
      %1620 = vmatprep.subr.bf16.mxu0 0
      %1621 = vmatpush1.bf16.msra.mxu0 0
      %1622 = vmatprep.subr.bf16.mxu0 0
      %1623 = vmatpush1.bf16.msra.mxu0 0
      %1624 = vmatprep.subr.bf16.mxu0 0
      %1625 = vmatpush1.bf16.msra.mxu0 0
      %1626 = vmatprep.subr.bf16.mxu0 0
      %1627 = vmatpush1.bf16.msra.mxu0 0
      %1628 = vmatprep.subr.bf16.mxu0 0
      %1629 = vmatpush1.bf16.msra.mxu0 0
      %1630 = vmatprep.mubr.bf16.mxu0 0
      %1631 = vmatmul.mubr.bf16.gmra.mrb[0].mxu0 %v1542
      %v1632 = vpop.f32.mrb[0].mxu0
      %v1633 = vadd.f32 0.0, %v1632
      %v1634 = vpop.f32.mrb[0].mxu0
      %v1635 = vpop.f32.mrb[0].mxu0
      %v1636 = vadd.f32 0.0, %v1635
      %v1637 = vpop.f32.mrb[0].mxu0
      %1638 = vmatprep.mubr.bf16.mxu0 0
      %1639 = vmatmul.mubr.bf16.gmra.mrb[0].mxu0 %v1545
      %v1640 = vpop.f32.mrb[0].mxu0
      %v1641 = vadd.f32 0.0, %v1640
      %v1642 = vpop.f32.mrb[0].mxu0
      %v1643 = vpop.f32.mrb[0].mxu0
      %v1644 = vadd.f32 0.0, %v1643
      %v1645 = vpop.f32.mrb[0].mxu0
      %1646 = vmatprep.mubr.bf16.mxu0 0
      %1647 = vmatmul.mubr.bf16.gmra.mrb[0].mxu0 %v1548
      %v1648 = vpop.f32.mrb[0].mxu0
      %v1649 = vadd.f32 0.0, %v1648
      %v1650 = vpop.f32.mrb[0].mxu0
      %v1651 = vpop.f32.mrb[0].mxu0
      %v1652 = vadd.f32 0.0, %v1651
      %v1653 = vpop.f32.mrb[0].mxu0
      %1654 = vmatprep.mubr.bf16.mxu0 0
      %1655 = vmatmul.mubr.bf16.gmra.mrb[0].mxu0 %v1551
      %v1656 = vpop.f32.mrb[0].mxu0
      %v1657 = vadd.f32 0.0, %v1656
      %v1658 = vpop.f32.mrb[0].mxu0
      %v1659 = vpop.f32.mrb[0].mxu0
      %v1660 = vadd.f32 0.0, %v1659
      %v1661 = vpop.f32.mrb[0].mxu0
      %1662 = vmatprep.mubr.bf16.mxu0 0
      %1663 = vmatmul.mubr.bf16.gmra.mrb[0].mxu0 %v1554
      %v1664 = vpop.f32.mrb[0].mxu0
      %v1665 = vadd.f32 0.0, %v1664
      %v1666 = vpop.f32.mrb[0].mxu0
      %v1667 = vpop.f32.mrb[0].mxu0
      %v1668 = vadd.f32 0.0, %v1667
      %v1669 = vpop.f32.mrb[0].mxu0
      %1670 = vmatprep.mubr.bf16.mxu0 0
      %1671 = vmatmul.mubr.bf16.gmra.mrb[0].mxu0 %v1557
      %v1672 = vpop.f32.mrb[0].mxu0
      %v1673 = vadd.f32 0.0, %v1672
      %v1674 = vpop.f32.mrb[0].mxu0
      %v1675 = vpop.f32.mrb[0].mxu0
      %v1676 = vadd.f32 0.0, %v1675
      %v1677 = vpop.f32.mrb[0].mxu0
      %1678 = vmatprep.mubr.bf16.mxu0 0
      %1679 = vmatmul.mubr.bf16.gmra.mrb[0].mxu0 %v1560
      %v1680 = vpop.f32.mrb[0].mxu0
      %v1681 = vadd.f32 0.0, %v1680
      %v1682 = vpop.f32.mrb[0].mxu0
      %v1683 = vpop.f32.mrb[0].mxu0
      %v1684 = vadd.f32 0.0, %v1683
      %v1685 = vpop.f32.mrb[0].mxu0
      %1686 = vmatprep.mubr.bf16.mxu0 0
      %1687 = vmatmul.mubr.bf16.gmra.mrb[0].mxu0 %v1563
      %v1688 = vpop.f32.mrb[0].mxu0
      %v1689 = vadd.f32 0.0, %v1688
      %v1690 = vpop.f32.mrb[0].mxu0
      %v1691 = vpop.f32.mrb[0].mxu0
      %v1692 = vadd.f32 0.0, %v1691
      %v1693 = vpop.f32.mrb[0].mxu0
      %1694 = vmatprep.mubr.bf16.mxu0 0
      %1695 = vmatmul.mubr.bf16.gmra.mrb[0].mxu0 %v1566
      %v1696 = vpop.f32.mrb[0].mxu0
      %v1697 = vadd.f32 0.0, %v1696
      %v1698 = vpop.f32.mrb[0].mxu0
      %v1699 = vpop.f32.mrb[0].mxu0
      %v1700 = vadd.f32 0.0, %v1699
      %v1701 = vpop.f32.mrb[0].mxu0
      %1702 = vmatprep.mubr.bf16.mxu0 0
      %1703 = vmatmul.mubr.bf16.gmra.mrb[0].mxu0 %v1569
      %v1704 = vpop.f32.mrb[0].mxu0
      %v1705 = vadd.f32 0.0, %v1704
      %v1706 = vpop.f32.mrb[0].mxu0
      %v1707 = vpop.f32.mrb[0].mxu0
      %v1708 = vadd.f32 0.0, %v1707
      %v1709 = vpop.f32.mrb[0].mxu0
      %1710 = vmatprep.mubr.bf16.mxu0 0
      %1711 = vmatmul.mubr.bf16.gmra.mrb[0].mxu0 %v1572
      %v1712 = vpop.f32.mrb[0].mxu0
      %v1713 = vadd.f32 0.0, %v1712
      %v1714 = vpop.f32.mrb[0].mxu0
      %v1715 = vpop.f32.mrb[0].mxu0
      %v1716 = vadd.f32 0.0, %v1715
      %v1717 = vpop.f32.mrb[0].mxu0
      %1718 = vmatprep.mubr.bf16.mxu0 0
      %1719 = vmatmul.mubr.bf16.gmra.mrb[0].mxu0 %v1575
      %v1720 = vpop.f32.mrb[0].mxu0
      %v1721 = vadd.f32 0.0, %v1720
      %v1722 = vpop.f32.mrb[0].mxu0
      %v1723 = vpop.f32.mrb[0].mxu0
      %v1724 = vadd.f32 0.0, %v1723
      %v1725 = vpop.f32.mrb[0].mxu0
      %1726 = vmatprep.mubr.bf16.mxu0 0
      %1727 = vmatmul.mubr.bf16.gmra.mrb[0].mxu0 %v1578
      %v1728 = vpop.f32.mrb[0].mxu0
      %v1729 = vadd.f32 0.0, %v1728
      %v1730 = vpop.f32.mrb[0].mxu0
      %v1731 = vpop.f32.mrb[0].mxu0
      %v1732 = vadd.f32 0.0, %v1731
      %v1733 = vpop.f32.mrb[0].mxu0
      %1734 = vmatprep.mubr.bf16.mxu0 0
      %1735 = vmatmul.mubr.bf16.gmra.mrb[0].mxu0 %v1581
      %v1736 = vpop.f32.mrb[0].mxu0
      %v1737 = vadd.f32 0.0, %v1736
      %v1738 = vpop.f32.mrb[0].mxu0
      %v1739 = vpop.f32.mrb[0].mxu0
      %v1740 = vadd.f32 0.0, %v1739
      %v1741 = vpop.f32.mrb[0].mxu0
      %1742 = vmatprep.mubr.bf16.mxu0 0
      %1743 = vmatmul.mubr.bf16.gmra.mrb[0].mxu0 %v1584
      %v1744 = vpop.f32.mrb[0].mxu0
      %v1745 = vadd.f32 0.0, %v1744
      %v1746 = vpop.f32.mrb[0].mxu0
      %v1747 = vpop.f32.mrb[0].mxu0
      %v1748 = vadd.f32 0.0, %v1747
      %v1749 = vpop.f32.mrb[0].mxu0
      %1750 = vmatprep.mubr.bf16.mxu0 0
      %1751 = vmatmul.mubr.bf16.gmra.mrb[0].mxu0 %v1587
      %v1752 = vpop.f32.mrb[0].mxu0
      %v1753 = vadd.f32 0.0, %v1752
      %v1754 = vpop.f32.mrb[0].mxu0
      %v1755 = vpop.f32.mrb[0].mxu0
      %v1756 = vadd.f32 0.0, %v1755
      %v1757 = vpop.f32.mrb[0].mxu0
      %1758 = vmatprep.mubr.bf16.mxu0 0
      %1759 = vmatmul.mubr.bf16.gmra.mrb[0].mxu0 %v1590
      %v1760 = vpop.f32.mrb[0].mxu0
      %v1761 = vadd.f32 0.0, %v1760
      %v1762 = vpop.f32.mrb[0].mxu0
      %v1763 = vpop.f32.mrb[0].mxu0
      %v1764 = vadd.f32 0.0, %v1763
      %v1765 = vpop.f32.mrb[0].mxu0
      %1766 = vmatprep.mubr.bf16.mxu0 0
      %1767 = vmatmul.mubr.bf16.gmra.mrb[0].mxu0 %v1593
      %v1768 = vpop.f32.mrb[0].mxu0
      %v1769 = vadd.f32 0.0, %v1768
      %v1770 = vpop.f32.mrb[0].mxu0
      %v1771 = vpop.f32.mrb[0].mxu0
      %v1772 = vadd.f32 0.0, %v1771
      %v1773 = vpop.f32.mrb[0].mxu0
      %1774 = vdwg.mxu0
      %v1775 = vadd.f32 %v1337, %v1633
      %v1776 = vadd.f32 %v1338, %v1636
      %v1777 = vadd.f32 %v1339, %v1641
      %v1778 = vadd.f32 %v1340, %v1644
      %v1779 = vadd.f32 %v1341, %v1649
      %v1780 = vadd.f32 %v1342, %v1652
      %v1781 = vadd.f32 %v1343, %v1657
      %v1782 = vadd.f32 %v1344, %v1660
      %v1783 = vadd.f32 %v1345, %v1665
      %v1784 = vadd.f32 %v1346, %v1668
      %v1785 = vadd.f32 %v1347, %v1673
      %v1786 = vadd.f32 %v1348, %v1676
      %v1787 = vadd.f32 %v1349, %v1681
      %v1788 = vadd.f32 %v1350, %v1684
      %v1789 = vadd.f32 %v1351, %v1689
      %v1790 = vadd.f32 %v1352, %v1692
      %v1791 = vadd.f32 %v1353, %v1697
      %v1792 = vadd.f32 %v1354, %v1700
      %v1793 = vadd.f32 %v1355, %v1705
      %v1794 = vadd.f32 %v1356, %v1708
      %v1795 = vadd.f32 %v1357, %v1713
      %v1796 = vadd.f32 %v1358, %v1716
      %v1797 = vadd.f32 %v1359, %v1721
      %v1798 = vadd.f32 %v1360, %v1724
      %v1799 = vadd.f32 %v1361, %v1729
      %v1800 = vadd.f32 %v1362, %v1732
      %v1801 = vadd.f32 %v1363, %v1737
      %v1802 = vadd.f32 %v1364, %v1740
      %v1803 = vadd.f32 %v1365, %v1745
      %v1804 = vadd.f32 %v1366, %v1748
      %v1805 = vadd.f32 %v1367, %v1753
      %v1806 = vadd.f32 %v1368, %v1756
      %v1807 = vadd.f32 %v1369, %v1761
      %v1808 = vadd.f32 %v1370, %v1764
      %v1809 = vadd.f32 %v1371, %v1769
      %v1810 = vadd.f32 %v1372, %v1772
      %v1811 = vld [vmem:[%s315 + $0x98] sm:$0x3]
      %v1812 = vld [vmem:[%s3 + $0x10] sm:$0xf]
      %v1814 = vunpack.c.l.b16 %v1811
      %v1815 = vpack.c.b16 %v1814, %v1814
      %vm1816 = vsmask.f32 6400
      %v1818 = vshrl.u32 %v1485, 16
      %v1820 = vrot.slane %v1818, 1
      %v1821 = vshll.u32 %v1485, 16
      %v1823 = vrot.slane %v1821, 2
      %v1824 = vor.u32 %v1820, %v1823
      %v1826 = vshrl.u32 %v1486, 16
      %v1828 = vrot.slane %v1826, 1
      %v1829 = vshll.u32 %v1486, 16
      %v1831 = vrot.slane %v1829, 2
      %v1832 = vor.u32 %v1828, %v1831
      %v1833 = vsel %vm1816, %v1824, %v1832
      %v1835 = vshrl.u32 %v1487, 16
      %v1837 = vrot.slane %v1835, 1
      %v1838 = vshll.u32 %v1487, 16
      %v1840 = vrot.slane %v1838, 2
      %v1841 = vor.u32 %v1837, %v1840
      %v1842 = vsel %vm1816, %v1832, %v1841
      %v1844 = vshrl.u32 %v1488, 16
      %v1846 = vrot.slane %v1844, 1
      %v1847 = vshll.u32 %v1488, 16
      %v1849 = vrot.slane %v1847, 2
      %v1850 = vor.u32 %v1846, %v1849
      %v1851 = vsel %vm1816, %v1841, %v1850
      %v1853 = vshrl.u32 %v1489, 16
      %v1855 = vrot.slane %v1853, 1
      %v1856 = vshll.u32 %v1489, 16
      %v1858 = vrot.slane %v1856, 2
      %v1859 = vor.u32 %v1855, %v1858
      %v1860 = vsel %vm1816, %v1850, %v1859
      %v1862 = vshrl.u32 %v1490, 16
      %v1864 = vrot.slane %v1862, 1
      %v1865 = vshll.u32 %v1490, 16
      %v1867 = vrot.slane %v1865, 2
      %v1868 = vor.u32 %v1864, %v1867
      %v1869 = vsel %vm1816, %v1859, %v1868
      %v1871 = vshrl.u32 %v1491, 16
      %v1873 = vrot.slane %v1871, 1
      %v1874 = vshll.u32 %v1491, 16
      %v1876 = vrot.slane %v1874, 2
      %v1877 = vor.u32 %v1873, %v1876
      %v1878 = vsel %vm1816, %v1868, %v1877
      %v1880 = vshrl.u32 %v1492, 16
      %v1882 = vrot.slane %v1880, 1
      %v1883 = vshll.u32 %v1492, 16
      %v1885 = vrot.slane %v1883, 2
      %v1886 = vor.u32 %v1882, %v1885
      %v1887 = vsel %vm1816, %v1877, %v1886
      %v1889 = vshrl.u32 %v1493, 16
      %v1891 = vrot.slane %v1889, 1
      %v1892 = vshll.u32 %v1493, 16
      %v1894 = vrot.slane %v1892, 2
      %v1895 = vor.u32 %v1891, %v1894
      %v1896 = vsel %vm1816, %v1886, %v1895
      %v1898 = vshrl.u32 %v1494, 16
      %v1900 = vrot.slane %v1898, 1
      %v1901 = vshll.u32 %v1494, 16
      %v1903 = vrot.slane %v1901, 2
      %v1904 = vor.u32 %v1900, %v1903
      %v1905 = vsel %vm1816, %v1895, %v1904
      %v1907 = vshrl.u32 %v1495, 16
      %v1909 = vrot.slane %v1907, 1
      %v1910 = vshll.u32 %v1495, 16
      %v1912 = vrot.slane %v1910, 2
      %v1913 = vor.u32 %v1909, %v1912
      %v1914 = vsel %vm1816, %v1904, %v1913
      %v1916 = vshrl.u32 %v1496, 16
      %v1918 = vrot.slane %v1916, 1
      %v1919 = vshll.u32 %v1496, 16
      %v1921 = vrot.slane %v1919, 2
      %v1922 = vor.u32 %v1918, %v1921
      %v1923 = vsel %vm1816, %v1913, %v1922
      %v1925 = vshrl.u32 %v1497, 16
      %v1927 = vrot.slane %v1925, 1
      %v1928 = vshll.u32 %v1497, 16
      %v1930 = vrot.slane %v1928, 2
      %v1931 = vor.u32 %v1927, %v1930
      %v1932 = vsel %vm1816, %v1922, %v1931
      %v1934 = vshrl.u32 %v1498, 16
      %v1936 = vrot.slane %v1934, 1
      %v1937 = vshll.u32 %v1498, 16
      %v1939 = vrot.slane %v1937, 2
      %v1940 = vor.u32 %v1936, %v1939
      %v1941 = vsel %vm1816, %v1931, %v1940
      %v1943 = vshrl.u32 %v1499, 16
      %v1945 = vrot.slane %v1943, 1
      %v1946 = vshll.u32 %v1499, 16
      %v1948 = vrot.slane %v1946, 2
      %v1949 = vor.u32 %v1945, %v1948
      %v1950 = vsel %vm1816, %v1940, %v1949
      %v1952 = vshrl.u32 %v1500, 16
      %v1954 = vrot.slane %v1952, 1
      %v1955 = vshll.u32 %v1500, 16
      %v1957 = vrot.slane %v1955, 2
      %v1958 = vor.u32 %v1954, %v1957
      %v1959 = vsel %vm1816, %v1949, %v1958
      %v1961 = vshrl.u32 %v1501, 16
      %v1963 = vrot.slane %v1961, 1
      %v1964 = vshll.u32 %v1501, 16
      %v1966 = vrot.slane %v1964, 2
      %v1967 = vor.u32 %v1963, %v1966
      %v1968 = vsel %vm1816, %v1958, %v1967
      %v1970 = vshrl.u32 %v1502, 16
      %v1972 = vrot.slane %v1970, 1
      %v1973 = vshll.u32 %v1502, 16
      %v1975 = vrot.slane %v1973, 2
      %v1976 = vor.u32 %v1972, %v1975
      %v1977 = vsel %vm1816, %v1967, %v1976
      %v1979 = vshrl.u32 %v1815, 16
      %v1981 = vrot.slane %v1979, 1
      %v1982 = vshll.u32 %v1815, 16
      %v1984 = vrot.slane %v1982, 2
      %v1985 = vor.u32 %v1981, %v1984
      %v1986 = vsel %vm1816, %v1976, %v1985
      %v1988 = vsel %vm608, %v1833, 0
      %v1991 = vsel %vm608, %v1842, 0
      %v1994 = vsel %vm608, %v1851, 0
      %v1997 = vsel %vm608, %v1860, 0
      %v2000 = vsel %vm608, %v1869, 0
      %v2003 = vsel %vm608, %v1878, 0
      %v2006 = vsel %vm608, %v1887, 0
      %v2009 = vsel %vm608, %v1896, 0
      %v2012 = vsel %vm608, %v1905, 0
      %v2015 = vsel %vm608, %v1914, 0
      %v2018 = vsel %vm608, %v1923, 0
      %v2021 = vsel %vm608, %v1932, 0
      %v2024 = vsel %vm608, %v1941, 0
      %v2027 = vsel %vm608, %v1950, 0
      %v2030 = vsel %vm608, %v1959, 0
      %v2033 = vsel %vm608, %v1968, 0
      %v2036 = vsel %vm608, %v1977, 0
      %v2039 = vsel %vm608, %v1986, 0
      %v2042 = vsel %vm663, %v1812, 0
      %2044 = vmatprep.subr.bf16.mxu0 0
      %2045 = vmatpush1.bf16.msra.mxu0 %v2042
      %2046 = vmatprep.subr.bf16.mxu0 0
      %2047 = vmatpush1.bf16.msra.mxu0 0
      %2048 = vmatprep.subr.bf16.mxu0 0
      %2049 = vmatpush1.bf16.msra.mxu0 0
      %2050 = vmatprep.subr.bf16.mxu0 0
      %2051 = vmatpush1.bf16.msra.mxu0 0
      %2052 = vmatprep.subr.bf16.mxu0 0
      %2053 = vmatpush1.bf16.msra.mxu0 0
      %2054 = vmatprep.subr.bf16.mxu0 0
      %2055 = vmatpush1.bf16.msra.mxu0 0
      %2056 = vmatprep.subr.bf16.mxu0 0
      %2057 = vmatpush1.bf16.msra.mxu0 0
      %2058 = vmatprep.subr.bf16.mxu0 0
      %2059 = vmatpush1.bf16.msra.mxu0 0
      %2060 = vmatprep.subr.bf16.mxu0 0
      %2061 = vmatpush1.bf16.msra.mxu0 0
      %2062 = vmatprep.subr.bf16.mxu0 0
      %2063 = vmatpush1.bf16.msra.mxu0 0
      %2064 = vmatprep.subr.bf16.mxu0 0
      %2065 = vmatpush1.bf16.msra.mxu0 0
      %2066 = vmatprep.subr.bf16.mxu0 0
      %2067 = vmatpush1.bf16.msra.mxu0 0
      %2068 = vmatprep.subr.bf16.mxu0 0
      %2069 = vmatpush1.bf16.msra.mxu0 0
      %2070 = vmatprep.subr.bf16.mxu0 0
      %2071 = vmatpush1.bf16.msra.mxu0 0
      %2072 = vmatprep.subr.bf16.mxu0 0
      %2073 = vmatpush1.bf16.msra.mxu0 0
      %2074 = vmatprep.subr.bf16.mxu0 0
      %2075 = vmatpush1.bf16.msra.mxu0 0
      %2076 = vmatprep.mubr.bf16.mxu0 0
      %2077 = vmatmul.mubr.bf16.gmra.mrb[0].mxu0 %v1988
      %v2078 = vpop.f32.mrb[0].mxu0
      %v2079 = vadd.f32 0.0, %v2078
      %v2080 = vpop.f32.mrb[0].mxu0
      %v2081 = vpop.f32.mrb[0].mxu0
      %v2082 = vadd.f32 0.0, %v2081
      %v2083 = vpop.f32.mrb[0].mxu0
      %2084 = vmatprep.mubr.bf16.mxu0 0
      %2085 = vmatmul.mubr.bf16.gmra.mrb[0].mxu0 %v1991
      %v2086 = vpop.f32.mrb[0].mxu0
      %v2087 = vadd.f32 0.0, %v2086
      %v2088 = vpop.f32.mrb[0].mxu0
      %v2089 = vpop.f32.mrb[0].mxu0
      %v2090 = vadd.f32 0.0, %v2089
      %v2091 = vpop.f32.mrb[0].mxu0
      %2092 = vmatprep.mubr.bf16.mxu0 0
      %2093 = vmatmul.mubr.bf16.gmra.mrb[0].mxu0 %v1994
      %v2094 = vpop.f32.mrb[0].mxu0
      %v2095 = vadd.f32 0.0, %v2094
      %v2096 = vpop.f32.mrb[0].mxu0
      %v2097 = vpop.f32.mrb[0].mxu0
      %v2098 = vadd.f32 0.0, %v2097
      %v2099 = vpop.f32.mrb[0].mxu0
      %2100 = vmatprep.mubr.bf16.mxu0 0
      %2101 = vmatmul.mubr.bf16.gmra.mrb[0].mxu0 %v1997
      %v2102 = vpop.f32.mrb[0].mxu0
      %v2103 = vadd.f32 0.0, %v2102
      %v2104 = vpop.f32.mrb[0].mxu0
      %v2105 = vpop.f32.mrb[0].mxu0
      %v2106 = vadd.f32 0.0, %v2105
      %v2107 = vpop.f32.mrb[0].mxu0
      %2108 = vmatprep.mubr.bf16.mxu0 0
      %2109 = vmatmul.mubr.bf16.gmra.mrb[0].mxu0 %v2000
      %v2110 = vpop.f32.mrb[0].mxu0
      %v2111 = vadd.f32 0.0, %v2110
      %v2112 = vpop.f32.mrb[0].mxu0
      %v2113 = vpop.f32.mrb[0].mxu0
      %v2114 = vadd.f32 0.0, %v2113
      %v2115 = vpop.f32.mrb[0].mxu0
      %2116 = vmatprep.mubr.bf16.mxu0 0
      %2117 = vmatmul.mubr.bf16.gmra.mrb[0].mxu0 %v2003
      %v2118 = vpop.f32.mrb[0].mxu0
      %v2119 = vadd.f32 0.0, %v2118
      %v2120 = vpop.f32.mrb[0].mxu0
      %v2121 = vpop.f32.mrb[0].mxu0
      %v2122 = vadd.f32 0.0, %v2121
      %v2123 = vpop.f32.mrb[0].mxu0
      %2124 = vmatprep.mubr.bf16.mxu0 0
      %2125 = vmatmul.mubr.bf16.gmra.mrb[0].mxu0 %v2006
      %v2126 = vpop.f32.mrb[0].mxu0
      %v2127 = vadd.f32 0.0, %v2126
      %v2128 = vpop.f32.mrb[0].mxu0
      %v2129 = vpop.f32.mrb[0].mxu0
      %v2130 = vadd.f32 0.0, %v2129
      %v2131 = vpop.f32.mrb[0].mxu0
      %2132 = vmatprep.mubr.bf16.mxu0 0
      %2133 = vmatmul.mubr.bf16.gmra.mrb[0].mxu0 %v2009
      %v2134 = vpop.f32.mrb[0].mxu0
      %v2135 = vadd.f32 0.0, %v2134
      %v2136 = vpop.f32.mrb[0].mxu0
      %v2137 = vpop.f32.mrb[0].mxu0
      %v2138 = vadd.f32 0.0, %v2137
      %v2139 = vpop.f32.mrb[0].mxu0
      %2140 = vmatprep.mubr.bf16.mxu0 0
      %2141 = vmatmul.mubr.bf16.gmra.mrb[0].mxu0 %v2012
      %v2142 = vpop.f32.mrb[0].mxu0
      %v2143 = vadd.f32 0.0, %v2142
      %v2144 = vpop.f32.mrb[0].mxu0
      %v2145 = vpop.f32.mrb[0].mxu0
      %v2146 = vadd.f32 0.0, %v2145
      %v2147 = vpop.f32.mrb[0].mxu0
      %2148 = vmatprep.mubr.bf16.mxu0 0
      %2149 = vmatmul.mubr.bf16.gmra.mrb[0].mxu0 %v2015
      %v2150 = vpop.f32.mrb[0].mxu0
      %v2151 = vadd.f32 0.0, %v2150
      %v2152 = vpop.f32.mrb[0].mxu0
      %v2153 = vpop.f32.mrb[0].mxu0
      %v2154 = vadd.f32 0.0, %v2153
      %v2155 = vpop.f32.mrb[0].mxu0
      %2156 = vmatprep.mubr.bf16.mxu0 0
      %2157 = vmatmul.mubr.bf16.gmra.mrb[0].mxu0 %v2018
      %v2158 = vpop.f32.mrb[0].mxu0
      %v2159 = vadd.f32 0.0, %v2158
      %v2160 = vpop.f32.mrb[0].mxu0
      %v2161 = vpop.f32.mrb[0].mxu0
      %v2162 = vadd.f32 0.0, %v2161
      %v2163 = vpop.f32.mrb[0].mxu0
      %2164 = vmatprep.mubr.bf16.mxu0 0
      %2165 = vmatmul.mubr.bf16.gmra.mrb[0].mxu0 %v2021
      %v2166 = vpop.f32.mrb[0].mxu0
      %v2167 = vadd.f32 0.0, %v2166
      %v2168 = vpop.f32.mrb[0].mxu0
      %v2169 = vpop.f32.mrb[0].mxu0
      %v2170 = vadd.f32 0.0, %v2169
      %v2171 = vpop.f32.mrb[0].mxu0
      %2172 = vmatprep.mubr.bf16.mxu0 0
      %2173 = vmatmul.mubr.bf16.gmra.mrb[0].mxu0 %v2024
      %v2174 = vpop.f32.mrb[0].mxu0
      %v2175 = vadd.f32 0.0, %v2174
      %v2176 = vpop.f32.mrb[0].mxu0
      %v2177 = vpop.f32.mrb[0].mxu0
      %v2178 = vadd.f32 0.0, %v2177
      %v2179 = vpop.f32.mrb[0].mxu0
      %2180 = vmatprep.mubr.bf16.mxu0 0
      %2181 = vmatmul.mubr.bf16.gmra.mrb[0].mxu0 %v2027
      %v2182 = vpop.f32.mrb[0].mxu0
      %v2183 = vadd.f32 0.0, %v2182
      %v2184 = vpop.f32.mrb[0].mxu0
      %v2185 = vpop.f32.mrb[0].mxu0
      %v2186 = vadd.f32 0.0, %v2185
      %v2187 = vpop.f32.mrb[0].mxu0
      %2188 = vmatprep.mubr.bf16.mxu0 0
      %2189 = vmatmul.mubr.bf16.gmra.mrb[0].mxu0 %v2030
      %v2190 = vpop.f32.mrb[0].mxu0
      %v2191 = vadd.f32 0.0, %v2190
      %v2192 = vpop.f32.mrb[0].mxu0
      %v2193 = vpop.f32.mrb[0].mxu0
      %v2194 = vadd.f32 0.0, %v2193
      %v2195 = vpop.f32.mrb[0].mxu0
      %2196 = vmatprep.mubr.bf16.mxu0 0
      %2197 = vmatmul.mubr.bf16.gmra.mrb[0].mxu0 %v2033
      %v2198 = vpop.f32.mrb[0].mxu0
      %v2199 = vadd.f32 0.0, %v2198
      %v2200 = vpop.f32.mrb[0].mxu0
      %v2201 = vpop.f32.mrb[0].mxu0
      %v2202 = vadd.f32 0.0, %v2201
      %v2203 = vpop.f32.mrb[0].mxu0
      %2204 = vmatprep.mubr.bf16.mxu0 0
      %2205 = vmatmul.mubr.bf16.gmra.mrb[0].mxu0 %v2036
      %v2206 = vpop.f32.mrb[0].mxu0
      %v2207 = vadd.f32 0.0, %v2206
      %v2208 = vpop.f32.mrb[0].mxu0
      %v2209 = vpop.f32.mrb[0].mxu0
      %v2210 = vadd.f32 0.0, %v2209
      %v2211 = vpop.f32.mrb[0].mxu0
      %2212 = vmatprep.mubr.bf16.mxu0 0
      %2213 = vmatmul.mubr.bf16.gmra.mrb[0].mxu0 %v2039
      %v2214 = vpop.f32.mrb[0].mxu0
      %v2215 = vadd.f32 0.0, %v2214
      %v2216 = vpop.f32.mrb[0].mxu0
      %v2217 = vpop.f32.mrb[0].mxu0
      %v2218 = vadd.f32 0.0, %v2217
      %v2219 = vpop.f32.mrb[0].mxu0
      %2220 = vdwg.mxu0
      %v2221 = vadd.f32 %v1775, %v2079
      %v2222 = vadd.f32 %v1776, %v2082
      %v2223 = vadd.f32 %v1777, %v2087
      %v2224 = vadd.f32 %v1778, %v2090
      %v2225 = vadd.f32 %v1779, %v2095
      %v2226 = vadd.f32 %v1780, %v2098
      %v2227 = vadd.f32 %v1781, %v2103
      %v2228 = vadd.f32 %v1782, %v2106
      %v2229 = vadd.f32 %v1783, %v2111
      %v2230 = vadd.f32 %v1784, %v2114
      %v2231 = vadd.f32 %v1785, %v2119
      %v2232 = vadd.f32 %v1786, %v2122
      %v2233 = vadd.f32 %v1787, %v2127
      %v2234 = vadd.f32 %v1788, %v2130
      %v2235 = vadd.f32 %v1789, %v2135
      %v2236 = vadd.f32 %v1790, %v2138
      %v2237 = vadd.f32 %v1791, %v2143
      %v2238 = vadd.f32 %v1792, %v2146
      %v2239 = vadd.f32 %v1793, %v2151
      %v2240 = vadd.f32 %v1794, %v2154
      %v2241 = vadd.f32 %v1795, %v2159
      %v2242 = vadd.f32 %v1796, %v2162
      %v2243 = vadd.f32 %v1797, %v2167
      %v2244 = vadd.f32 %v1798, %v2170
      %v2245 = vadd.f32 %v1799, %v2175
      %v2246 = vadd.f32 %v1800, %v2178
      %v2247 = vadd.f32 %v1801, %v2183
      %v2248 = vadd.f32 %v1802, %v2186
      %v2249 = vadd.f32 %v1803, %v2191
      %v2250 = vadd.f32 %v1804, %v2194
      %v2251 = vadd.f32 %v1805, %v2199
      %v2252 = vadd.f32 %v1806, %v2202
      %v2253 = vadd.f32 %v1807, %v2207
      %v2254 = vadd.f32 %v1808, %v2210
      %v2255 = vadd.f32 %v1809, %v2215
      %v2256 = vadd.f32 %v1810, %v2218
      %v2257 = vld [vmem:[%s315 + $0x8] sm:$0xc]
      %v2258 = vld [vmem:[%s3 + $0x14] sm:$0xf]
      %v2260 = vunpack.c.l.b16 %v2257
      %v2261 = vpack.c.b16 %v1449, %v2260
      %vm2262 = vcmask 1045504
      %v2263 = vrot.slane %v2261, 2
      %v2264 = vrot.slane %v1486, 2
      %v2265 = vsel %vm2262, %v2263, %v2264
      %v2266 = vrot.slane %v1487, 2
      %v2267 = vsel %vm2262, %v2264, %v2266
      %v2268 = vrot.slane %v1488, 2
      %v2269 = vsel %vm2262, %v2266, %v2268
      %v2270 = vrot.slane %v1489, 2
      %v2271 = vsel %vm2262, %v2268, %v2270
      %v2272 = vrot.slane %v1490, 2
      %v2273 = vsel %vm2262, %v2270, %v2272
      %v2274 = vrot.slane %v1491, 2
      %v2275 = vsel %vm2262, %v2272, %v2274
      %v2276 = vrot.slane %v1492, 2
      %v2277 = vsel %vm2262, %v2274, %v2276
      %v2278 = vrot.slane %v1493, 2
      %v2279 = vsel %vm2262, %v2276, %v2278
      %v2280 = vrot.slane %v1494, 2
      %v2281 = vsel %vm2262, %v2278, %v2280
      %v2282 = vrot.slane %v1495, 2
      %v2283 = vsel %vm2262, %v2280, %v2282
      %v2284 = vrot.slane %v1496, 2
      %v2285 = vsel %vm2262, %v2282, %v2284
      %v2286 = vrot.slane %v1497, 2
      %v2287 = vsel %vm2262, %v2284, %v2286
      %v2288 = vrot.slane %v1498, 2
      %v2289 = vsel %vm2262, %v2286, %v2288
      %v2290 = vrot.slane %v1499, 2
      %v2291 = vsel %vm2262, %v2288, %v2290
      %v2292 = vrot.slane %v1500, 2
      %v2293 = vsel %vm2262, %v2290, %v2292
      %v2294 = vrot.slane %v1501, 2
      %v2295 = vsel %vm2262, %v2292, %v2294
      %v2296 = vrot.slane %v1502, 2
      %v2297 = vsel %vm2262, %v2294, %v2296
      %v2298 = vrot.slane %v1815, 2
      %v2299 = vsel %vm2262, %v2296, %v2298
      %v2301 = vsel %vm608, %v2265, 0
      %v2304 = vsel %vm608, %v2267, 0
      %v2307 = vsel %vm608, %v2269, 0
      %v2310 = vsel %vm608, %v2271, 0
      %v2313 = vsel %vm608, %v2273, 0
      %v2316 = vsel %vm608, %v2275, 0
      %v2319 = vsel %vm608, %v2277, 0
      %v2322 = vsel %vm608, %v2279, 0
      %v2325 = vsel %vm608, %v2281, 0
      %v2328 = vsel %vm608, %v2283, 0
      %v2331 = vsel %vm608, %v2285, 0
      %v2334 = vsel %vm608, %v2287, 0
      %v2337 = vsel %vm608, %v2289, 0
      %v2340 = vsel %vm608, %v2291, 0
      %v2343 = vsel %vm608, %v2293, 0
      %v2346 = vsel %vm608, %v2295, 0
      %v2349 = vsel %vm608, %v2297, 0
      %v2352 = vsel %vm608, %v2299, 0
      %v2355 = vsel %vm663, %v2258, 0
      %2357 = vmatprep.subr.bf16.mxu0 0
      %2358 = vmatpush1.bf16.msra.mxu0 %v2355
      %2359 = vmatprep.subr.bf16.mxu0 0
      %2360 = vmatpush1.bf16.msra.mxu0 0
      %2361 = vmatprep.subr.bf16.mxu0 0
      %2362 = vmatpush1.bf16.msra.mxu0 0
      %2363 = vmatprep.subr.bf16.mxu0 0
      %2364 = vmatpush1.bf16.msra.mxu0 0
      %2365 = vmatprep.subr.bf16.mxu0 0
      %2366 = vmatpush1.bf16.msra.mxu0 0
      %2367 = vmatprep.subr.bf16.mxu0 0
      %2368 = vmatpush1.bf16.msra.mxu0 0
      %2369 = vmatprep.subr.bf16.mxu0 0
      %2370 = vmatpush1.bf16.msra.mxu0 0
      %2371 = vmatprep.subr.bf16.mxu0 0
      %2372 = vmatpush1.bf16.msra.mxu0 0
      %2373 = vmatprep.subr.bf16.mxu0 0
      %2374 = vmatpush1.bf16.msra.mxu0 0
      %2375 = vmatprep.subr.bf16.mxu0 0
      %2376 = vmatpush1.bf16.msra.mxu0 0
      %2377 = vmatprep.subr.bf16.mxu0 0
      %2378 = vmatpush1.bf16.msra.mxu0 0
      %2379 = vmatprep.subr.bf16.mxu0 0
      %2380 = vmatpush1.bf16.msra.mxu0 0
      %2381 = vmatprep.subr.bf16.mxu0 0
      %2382 = vmatpush1.bf16.msra.mxu0 0
      %2383 = vmatprep.subr.bf16.mxu0 0
      %2384 = vmatpush1.bf16.msra.mxu0 0
      %2385 = vmatprep.subr.bf16.mxu0 0
      %2386 = vmatpush1.bf16.msra.mxu0 0
      %2387 = vmatprep.subr.bf16.mxu0 0
      %2388 = vmatpush1.bf16.msra.mxu0 0
      %2389 = vmatprep.mubr.bf16.mxu0 0
      %2390 = vmatmul.mubr.bf16.gmra.mrb[0].mxu0 %v2301
      %v2391 = vpop.f32.mrb[0].mxu0
      %v2392 = vadd.f32 0.0, %v2391
      %v2393 = vpop.f32.mrb[0].mxu0
      %v2394 = vpop.f32.mrb[0].mxu0
      %v2395 = vadd.f32 0.0, %v2394
      %v2396 = vpop.f32.mrb[0].mxu0
      %2397 = vmatprep.mubr.bf16.mxu0 0
      %2398 = vmatmul.mubr.bf16.gmra.mrb[0].mxu0 %v2304
      %v2399 = vpop.f32.mrb[0].mxu0
      %v2400 = vadd.f32 0.0, %v2399
      %v2401 = vpop.f32.mrb[0].mxu0
      %v2402 = vpop.f32.mrb[0].mxu0
      %v2403 = vadd.f32 0.0, %v2402
      %v2404 = vpop.f32.mrb[0].mxu0
      %2405 = vmatprep.mubr.bf16.mxu0 0
      %2406 = vmatmul.mubr.bf16.gmra.mrb[0].mxu0 %v2307
      %v2407 = vpop.f32.mrb[0].mxu0
      %v2408 = vadd.f32 0.0, %v2407
      %v2409 = vpop.f32.mrb[0].mxu0
      %v2410 = vpop.f32.mrb[0].mxu0
      %v2411 = vadd.f32 0.0, %v2410
      %v2412 = vpop.f32.mrb[0].mxu0
      %2413 = vmatprep.mubr.bf16.mxu0 0
      %2414 = vmatmul.mubr.bf16.gmra.mrb[0].mxu0 %v2310
      %v2415 = vpop.f32.mrb[0].mxu0
      %v2416 = vadd.f32 0.0, %v2415
      %v2417 = vpop.f32.mrb[0].mxu0
      %v2418 = vpop.f32.mrb[0].mxu0
      %v2419 = vadd.f32 0.0, %v2418
      %v2420 = vpop.f32.mrb[0].mxu0
      %2421 = vmatprep.mubr.bf16.mxu0 0
      %2422 = vmatmul.mubr.bf16.gmra.mrb[0].mxu0 %v2313
      %v2423 = vpop.f32.mrb[0].mxu0
      %v2424 = vadd.f32 0.0, %v2423
      %v2425 = vpop.f32.mrb[0].mxu0
      %v2426 = vpop.f32.mrb[0].mxu0
      %v2427 = vadd.f32 0.0, %v2426
      %v2428 = vpop.f32.mrb[0].mxu0
      %2429 = vmatprep.mubr.bf16.mxu0 0
      %2430 = vmatmul.mubr.bf16.gmra.mrb[0].mxu0 %v2316
      %v2431 = vpop.f32.mrb[0].mxu0
      %v2432 = vadd.f32 0.0, %v2431
      %v2433 = vpop.f32.mrb[0].mxu0
      %v2434 = vpop.f32.mrb[0].mxu0
      %v2435 = vadd.f32 0.0, %v2434
      %v2436 = vpop.f32.mrb[0].mxu0
      %2437 = vmatprep.mubr.bf16.mxu0 0
      %2438 = vmatmul.mubr.bf16.gmra.mrb[0].mxu0 %v2319
      %v2439 = vpop.f32.mrb[0].mxu0
      %v2440 = vadd.f32 0.0, %v2439
      %v2441 = vpop.f32.mrb[0].mxu0
      %v2442 = vpop.f32.mrb[0].mxu0
      %v2443 = vadd.f32 0.0, %v2442
      %v2444 = vpop.f32.mrb[0].mxu0
      %2445 = vmatprep.mubr.bf16.mxu0 0
      %2446 = vmatmul.mubr.bf16.gmra.mrb[0].mxu0 %v2322
      %v2447 = vpop.f32.mrb[0].mxu0
      %v2448 = vadd.f32 0.0, %v2447
      %v2449 = vpop.f32.mrb[0].mxu0
      %v2450 = vpop.f32.mrb[0].mxu0
      %v2451 = vadd.f32 0.0, %v2450
      %v2452 = vpop.f32.mrb[0].mxu0
      %2453 = vmatprep.mubr.bf16.mxu0 0
      %2454 = vmatmul.mubr.bf16.gmra.mrb[0].mxu0 %v2325
      %v2455 = vpop.f32.mrb[0].mxu0
      %v2456 = vadd.f32 0.0, %v2455
      %v2457 = vpop.f32.mrb[0].mxu0
      %v2458 = vpop.f32.mrb[0].mxu0
      %v2459 = vadd.f32 0.0, %v2458
      %v2460 = vpop.f32.mrb[0].mxu0
      %2461 = vmatprep.mubr.bf16.mxu0 0
      %2462 = vmatmul.mubr.bf16.gmra.mrb[0].mxu0 %v2328
      %v2463 = vpop.f32.mrb[0].mxu0
      %v2464 = vadd.f32 0.0, %v2463
      %v2465 = vpop.f32.mrb[0].mxu0
      %v2466 = vpop.f32.mrb[0].mxu0
      %v2467 = vadd.f32 0.0, %v2466
      %v2468 = vpop.f32.mrb[0].mxu0
      %2469 = vmatprep.mubr.bf16.mxu0 0
      %2470 = vmatmul.mubr.bf16.gmra.mrb[0].mxu0 %v2331
      %v2471 = vpop.f32.mrb[0].mxu0
      %v2472 = vadd.f32 0.0, %v2471
      %v2473 = vpop.f32.mrb[0].mxu0
      %v2474 = vpop.f32.mrb[0].mxu0
      %v2475 = vadd.f32 0.0, %v2474
      %v2476 = vpop.f32.mrb[0].mxu0
      %2477 = vmatprep.mubr.bf16.mxu0 0
      %2478 = vmatmul.mubr.bf16.gmra.mrb[0].mxu0 %v2334
      %v2479 = vpop.f32.mrb[0].mxu0
      %v2480 = vadd.f32 0.0, %v2479
      %v2481 = vpop.f32.mrb[0].mxu0
      %v2482 = vpop.f32.mrb[0].mxu0
      %v2483 = vadd.f32 0.0, %v2482
      %v2484 = vpop.f32.mrb[0].mxu0
      %2485 = vmatprep.mubr.bf16.mxu0 0
      %2486 = vmatmul.mubr.bf16.gmra.mrb[0].mxu0 %v2337
      %v2487 = vpop.f32.mrb[0].mxu0
      %v2488 = vadd.f32 0.0, %v2487
      %v2489 = vpop.f32.mrb[0].mxu0
      %v2490 = vpop.f32.mrb[0].mxu0
      %v2491 = vadd.f32 0.0, %v2490
      %v2492 = vpop.f32.mrb[0].mxu0
      %2493 = vmatprep.mubr.bf16.mxu0 0
      %2494 = vmatmul.mubr.bf16.gmra.mrb[0].mxu0 %v2340
      %v2495 = vpop.f32.mrb[0].mxu0
      %v2496 = vadd.f32 0.0, %v2495
      %v2497 = vpop.f32.mrb[0].mxu0
      %v2498 = vpop.f32.mrb[0].mxu0
      %v2499 = vadd.f32 0.0, %v2498
      %v2500 = vpop.f32.mrb[0].mxu0
      %2501 = vmatprep.mubr.bf16.mxu0 0
      %2502 = vmatmul.mubr.bf16.gmra.mrb[0].mxu0 %v2343
      %v2503 = vpop.f32.mrb[0].mxu0
      %v2504 = vadd.f32 0.0, %v2503
      %v2505 = vpop.f32.mrb[0].mxu0
      %v2506 = vpop.f32.mrb[0].mxu0
      %v2507 = vadd.f32 0.0, %v2506
      %v2508 = vpop.f32.mrb[0].mxu0
      %2509 = vmatprep.mubr.bf16.mxu0 0
      %2510 = vmatmul.mubr.bf16.gmra.mrb[0].mxu0 %v2346
      %v2511 = vpop.f32.mrb[0].mxu0
      %v2512 = vadd.f32 0.0, %v2511
      %v2513 = vpop.f32.mrb[0].mxu0
      %v2514 = vpop.f32.mrb[0].mxu0
      %v2515 = vadd.f32 0.0, %v2514
      %v2516 = vpop.f32.mrb[0].mxu0
      %2517 = vmatprep.mubr.bf16.mxu0 0
      %2518 = vmatmul.mubr.bf16.gmra.mrb[0].mxu0 %v2349
      %v2519 = vpop.f32.mrb[0].mxu0
      %v2520 = vadd.f32 0.0, %v2519
      %v2521 = vpop.f32.mrb[0].mxu0
      %v2522 = vpop.f32.mrb[0].mxu0
      %v2523 = vadd.f32 0.0, %v2522
      %v2524 = vpop.f32.mrb[0].mxu0
      %2525 = vmatprep.mubr.bf16.mxu0 0
      %2526 = vmatmul.mubr.bf16.gmra.mrb[0].mxu0 %v2352
      %v2527 = vpop.f32.mrb[0].mxu0
      %v2528 = vadd.f32 0.0, %v2527
      %v2529 = vpop.f32.mrb[0].mxu0
      %v2530 = vpop.f32.mrb[0].mxu0
      %v2531 = vadd.f32 0.0, %v2530
      %v2532 = vpop.f32.mrb[0].mxu0
      %2533 = vdwg.mxu0
      %v2534 = vadd.f32 %v2221, %v2392
      %v2535 = vadd.f32 %v2222, %v2395
      %v2536 = vadd.f32 %v2223, %v2400
      %v2537 = vadd.f32 %v2224, %v2403
      %v2538 = vadd.f32 %v2225, %v2408
      %v2539 = vadd.f32 %v2226, %v2411
      %v2540 = vadd.f32 %v2227, %v2416
      %v2541 = vadd.f32 %v2228, %v2419
      %v2542 = vadd.f32 %v2229, %v2424
      %v2543 = vadd.f32 %v2230, %v2427
      %v2544 = vadd.f32 %v2231, %v2432
      %v2545 = vadd.f32 %v2232, %v2435
      %v2546 = vadd.f32 %v2233, %v2440
      %v2547 = vadd.f32 %v2234, %v2443
      %v2548 = vadd.f32 %v2235, %v2448
      %v2549 = vadd.f32 %v2236, %v2451
      %v2550 = vadd.f32 %v2237, %v2456
      %v2551 = vadd.f32 %v2238, %v2459
      %v2552 = vadd.f32 %v2239, %v2464
      %v2553 = vadd.f32 %v2240, %v2467
      %v2554 = vadd.f32 %v2241, %v2472
      %v2555 = vadd.f32 %v2242, %v2475
      %v2556 = vadd.f32 %v2243, %v2480
      %v2557 = vadd.f32 %v2244, %v2483
      %v2558 = vadd.f32 %v2245, %v2488
      %v2559 = vadd.f32 %v2246, %v2491
      %v2560 = vadd.f32 %v2247, %v2496
      %v2561 = vadd.f32 %v2248, %v2499
      %v2562 = vadd.f32 %v2249, %v2504
      %v2563 = vadd.f32 %v2250, %v2507
      %v2564 = vadd.f32 %v2251, %v2512
      %v2565 = vadd.f32 %v2252, %v2515
      %v2566 = vadd.f32 %v2253, %v2520
      %v2567 = vadd.f32 %v2254, %v2523
      %v2568 = vadd.f32 %v2255, %v2528
      %v2569 = vadd.f32 %v2256, %v2531
      %v2570 = vld [vmem:[%s315 + $0x10] sm:$0xc]
      %v2571 = vld [vmem:[%s315 + $0x14] sm:$0xf]
      %v2572 = vld [vmem:[%s315 + $0x18] sm:$0xf]
      %v2573 = vld [vmem:[%s315 + $0x1c] sm:$0xf]
      %v2574 = vld [vmem:[%s315 + $0x20] sm:$0xf]
      %v2575 = vld [vmem:[%s315 + $0x24] sm:$0xf]
      %v2576 = vld [vmem:[%s315 + $0x28] sm:$0xf]
      %v2577 = vld [vmem:[%s315 + $0x2c] sm:$0xf]
      %v2578 = vld [vmem:[%s315 + $0x30] sm:$0xf]
      %v2579 = vld [vmem:[%s315 + $0x34] sm:$0xf]
      %v2580 = vld [vmem:[%s315 + $0x38] sm:$0xf]
      %v2581 = vld [vmem:[%s315 + $0x3c] sm:$0xf]
      %v2582 = vld [vmem:[%s315 + $0x40] sm:$0xf]
      %v2583 = vld [vmem:[%s315 + $0x44] sm:$0xf]
      %v2584 = vld [vmem:[%s315 + $0x48] sm:$0xf]
      %v2585 = vld [vmem:[%s315 + $0x4c] sm:$0xf]
      %v2586 = vld [vmem:[%s315 + $0x50] sm:$0xf]
      %v2587 = vld [vmem:[%s315 + $0x54] sm:$0xf]
      %v2588 = vld [vmem:[%s315 + $0x58] sm:$0xf]
      %v2589 = vld [vmem:[%s315 + $0x5c] sm:$0xf]
      %v2590 = vld [vmem:[%s315 + $0x60] sm:$0xf]
      %v2591 = vld [vmem:[%s315 + $0x64] sm:$0xf]
      %v2592 = vld [vmem:[%s315 + $0x68] sm:$0xf]
      %v2593 = vld [vmem:[%s315 + $0x6c] sm:$0xf]
      %v2594 = vld [vmem:[%s315 + $0x70] sm:$0xf]
      %v2595 = vld [vmem:[%s315 + $0x74] sm:$0xf]
      %v2596 = vld [vmem:[%s315 + $0x78] sm:$0xf]
      %v2597 = vld [vmem:[%s315 + $0x7c] sm:$0xf]
      %v2598 = vld [vmem:[%s315 + $0x80] sm:$0xf]
      %v2599 = vld [vmem:[%s315 + $0x84] sm:$0xf]
      %v2600 = vld [vmem:[%s315 + $0x88] sm:$0xf]
      %v2601 = vld [vmem:[%s315 + $0x8c] sm:$0xf]
      %v2602 = vld [vmem:[%s315 + $0x90] sm:$0xf]
      %v2603 = vld [vmem:[%s315 + $0x94] sm:$0xf]
      %v2604 = vld [vmem:[%s315 + $0x98] sm:$0xf]
      %v2605 = vld [vmem:[%s315 + $0x9c] sm:$0xf]
      %v2606 = vld [vmem:[%s315 + $0xa0] sm:$0x3]
      %v2607 = vld [vmem:[%s3 + $0x18] sm:$0xf]
      %v2645 = vunpack.c.l.b16 %v2570
      %v2646 = vunpack.c.l.b16 %v2571
      %v2647 = vunpack.c.l.b16 %v2572
      %v2648 = vunpack.c.l.b16 %v2573
      %v2649 = vunpack.c.l.b16 %v2574
      %v2650 = vunpack.c.l.b16 %v2575
      %v2651 = vunpack.c.l.b16 %v2576
      %v2652 = vunpack.c.l.b16 %v2577
      %v2653 = vunpack.c.l.b16 %v2578
      %v2654 = vunpack.c.l.b16 %v2579
      %v2655 = vunpack.c.l.b16 %v2580
      %v2656 = vunpack.c.l.b16 %v2581
      %v2657 = vunpack.c.l.b16 %v2582
      %v2658 = vunpack.c.l.b16 %v2583
      %v2659 = vunpack.c.l.b16 %v2584
      %v2660 = vunpack.c.l.b16 %v2585
      %v2661 = vunpack.c.l.b16 %v2586
      %v2662 = vunpack.c.l.b16 %v2587
      %v2663 = vunpack.c.l.b16 %v2588
      %v2664 = vunpack.c.l.b16 %v2589
      %v2665 = vunpack.c.l.b16 %v2590
      %v2666 = vunpack.c.l.b16 %v2591
      %v2667 = vunpack.c.l.b16 %v2592
      %v2668 = vunpack.c.l.b16 %v2593
      %v2669 = vunpack.c.l.b16 %v2594
      %v2670 = vunpack.c.l.b16 %v2595
      %v2671 = vunpack.c.l.b16 %v2596
      %v2672 = vunpack.c.l.b16 %v2597
      %v2673 = vunpack.c.l.b16 %v2598
      %v2674 = vunpack.c.l.b16 %v2599
      %v2675 = vunpack.c.l.b16 %v2600
      %v2676 = vunpack.c.l.b16 %v2601
      %v2677 = vunpack.c.l.b16 %v2602
      %v2678 = vunpack.c.l.b16 %v2603
      %v2679 = vunpack.c.l.b16 %v2604
      %v2680 = vunpack.c.l.b16 %v2605
      %v2681 = vunpack.c.l.b16 %v2606
      %v2682 = vpack.c.b16 %v2646, %v2645
      %v2683 = vpack.c.b16 %v2648, %v2647
      %v2684 = vpack.c.b16 %v2650, %v2649
      %v2685 = vpack.c.b16 %v2652, %v2651
      %v2686 = vpack.c.b16 %v2654, %v2653
      %v2687 = vpack.c.b16 %v2656, %v2655
      %v2688 = vpack.c.b16 %v2658, %v2657
      %v2689 = vpack.c.b16 %v2660, %v2659
      %v2690 = vpack.c.b16 %v2662, %v2661
      %v2691 = vpack.c.b16 %v2664, %v2663
      %v2692 = vpack.c.b16 %v2666, %v2665
      %v2693 = vpack.c.b16 %v2668, %v2667
      %v2694 = vpack.c.b16 %v2670, %v2669
      %v2695 = vpack.c.b16 %v2672, %v2671
      %v2696 = vpack.c.b16 %v2674, %v2673
      %v2697 = vpack.c.b16 %v2676, %v2675
      %v2698 = vpack.c.b16 %v2678, %v2677
      %v2699 = vpack.c.b16 %v2680, %v2679
      %v2700 = vpack.c.b16 %v2681, %v2681
      %v2701 = vrot.slane %v2682, 2
      %v2702 = vrot.slane %v2683, 2
      %v2703 = vsel %vm2262, %v2701, %v2702
      %v2704 = vrot.slane %v2684, 2
      %v2705 = vsel %vm2262, %v2702, %v2704
      %v2706 = vrot.slane %v2685, 2
      %v2707 = vsel %vm2262, %v2704, %v2706
      %v2708 = vrot.slane %v2686, 2
      %v2709 = vsel %vm2262, %v2706, %v2708
      %v2710 = vrot.slane %v2687, 2
      %v2711 = vsel %vm2262, %v2708, %v2710
      %v2712 = vrot.slane %v2688, 2
      %v2713 = vsel %vm2262, %v2710, %v2712
      %v2714 = vrot.slane %v2689, 2
      %v2715 = vsel %vm2262, %v2712, %v2714
      %v2716 = vrot.slane %v2690, 2
      %v2717 = vsel %vm2262, %v2714, %v2716
      %v2718 = vrot.slane %v2691, 2
      %v2719 = vsel %vm2262, %v2716, %v2718
      %v2720 = vrot.slane %v2692, 2
      %v2721 = vsel %vm2262, %v2718, %v2720
      %v2722 = vrot.slane %v2693, 2
      %v2723 = vsel %vm2262, %v2720, %v2722
      %v2724 = vrot.slane %v2694, 2
      %v2725 = vsel %vm2262, %v2722, %v2724
      %v2726 = vrot.slane %v2695, 2
      %v2727 = vsel %vm2262, %v2724, %v2726
      %v2728 = vrot.slane %v2696, 2
      %v2729 = vsel %vm2262, %v2726, %v2728
      %v2730 = vrot.slane %v2697, 2
      %v2731 = vsel %vm2262, %v2728, %v2730
      %v2732 = vrot.slane %v2698, 2
      %v2733 = vsel %vm2262, %v2730, %v2732
      %v2734 = vrot.slane %v2699, 2
      %v2735 = vsel %vm2262, %v2732, %v2734
      %v2736 = vrot.slane %v2700, 2
      %v2737 = vsel %vm2262, %v2734, %v2736
      %v2739 = vsel %vm608, %v2703, 0
      %v2742 = vsel %vm608, %v2705, 0
      %v2745 = vsel %vm608, %v2707, 0
      %v2748 = vsel %vm608, %v2709, 0
      %v2751 = vsel %vm608, %v2711, 0
      %v2754 = vsel %vm608, %v2713, 0
      %v2757 = vsel %vm608, %v2715, 0
      %v2760 = vsel %vm608, %v2717, 0
      %v2763 = vsel %vm608, %v2719, 0
      %v2766 = vsel %vm608, %v2721, 0
      %v2769 = vsel %vm608, %v2723, 0
      %v2772 = vsel %vm608, %v2725, 0
      %v2775 = vsel %vm608, %v2727, 0
      %v2778 = vsel %vm608, %v2729, 0
      %v2781 = vsel %vm608, %v2731, 0
      %v2784 = vsel %vm608, %v2733, 0
      %v2787 = vsel %vm608, %v2735, 0
      %v2790 = vsel %vm608, %v2737, 0
      %v2793 = vsel %vm663, %v2607, 0
      %2795 = vmatprep.subr.bf16.mxu0 0
      %2796 = vmatpush1.bf16.msra.mxu0 %v2793
      %2797 = vmatprep.subr.bf16.mxu0 0
      %2798 = vmatpush1.bf16.msra.mxu0 0
      %2799 = vmatprep.subr.bf16.mxu0 0
      %2800 = vmatpush1.bf16.msra.mxu0 0
      %2801 = vmatprep.subr.bf16.mxu0 0
      %2802 = vmatpush1.bf16.msra.mxu0 0
      %2803 = vmatprep.subr.bf16.mxu0 0
      %2804 = vmatpush1.bf16.msra.mxu0 0
      %2805 = vmatprep.subr.bf16.mxu0 0
      %2806 = vmatpush1.bf16.msra.mxu0 0
      %2807 = vmatprep.subr.bf16.mxu0 0
      %2808 = vmatpush1.bf16.msra.mxu0 0
      %2809 = vmatprep.subr.bf16.mxu0 0
      %2810 = vmatpush1.bf16.msra.mxu0 0
      %2811 = vmatprep.subr.bf16.mxu0 0
      %2812 = vmatpush1.bf16.msra.mxu0 0
      %2813 = vmatprep.subr.bf16.mxu0 0
      %2814 = vmatpush1.bf16.msra.mxu0 0
      %2815 = vmatprep.subr.bf16.mxu0 0
      %2816 = vmatpush1.bf16.msra.mxu0 0
      %2817 = vmatprep.subr.bf16.mxu0 0
      %2818 = vmatpush1.bf16.msra.mxu0 0
      %2819 = vmatprep.subr.bf16.mxu0 0
      %2820 = vmatpush1.bf16.msra.mxu0 0
      %2821 = vmatprep.subr.bf16.mxu0 0
      %2822 = vmatpush1.bf16.msra.mxu0 0
      %2823 = vmatprep.subr.bf16.mxu0 0
      %2824 = vmatpush1.bf16.msra.mxu0 0
      %2825 = vmatprep.subr.bf16.mxu0 0
      %2826 = vmatpush1.bf16.msra.mxu0 0
      %2827 = vmatprep.mubr.bf16.mxu0 0
      %2828 = vmatmul.mubr.bf16.gmra.mrb[0].mxu0 %v2739
      %v2829 = vpop.f32.mrb[0].mxu0
      %v2830 = vadd.f32 0.0, %v2829
      %v2831 = vpop.f32.mrb[0].mxu0
      %v2832 = vpop.f32.mrb[0].mxu0
      %v2833 = vadd.f32 0.0, %v2832
      %v2834 = vpop.f32.mrb[0].mxu0
      %2835 = vmatprep.mubr.bf16.mxu0 0
      %2836 = vmatmul.mubr.bf16.gmra.mrb[0].mxu0 %v2742
      %v2837 = vpop.f32.mrb[0].mxu0
      %v2838 = vadd.f32 0.0, %v2837
      %v2839 = vpop.f32.mrb[0].mxu0
      %v2840 = vpop.f32.mrb[0].mxu0
      %v2841 = vadd.f32 0.0, %v2840
      %v2842 = vpop.f32.mrb[0].mxu0
      %2843 = vmatprep.mubr.bf16.mxu0 0
      %2844 = vmatmul.mubr.bf16.gmra.mrb[0].mxu0 %v2745
      %v2845 = vpop.f32.mrb[0].mxu0
      %v2846 = vadd.f32 0.0, %v2845
      %v2847 = vpop.f32.mrb[0].mxu0
      %v2848 = vpop.f32.mrb[0].mxu0
      %v2849 = vadd.f32 0.0, %v2848
      %v2850 = vpop.f32.mrb[0].mxu0
      %2851 = vmatprep.mubr.bf16.mxu0 0
      %2852 = vmatmul.mubr.bf16.gmra.mrb[0].mxu0 %v2748
      %v2853 = vpop.f32.mrb[0].mxu0
      %v2854 = vadd.f32 0.0, %v2853
      %v2855 = vpop.f32.mrb[0].mxu0
      %v2856 = vpop.f32.mrb[0].mxu0
      %v2857 = vadd.f32 0.0, %v2856
      %v2858 = vpop.f32.mrb[0].mxu0
      %2859 = vmatprep.mubr.bf16.mxu0 0
      %2860 = vmatmul.mubr.bf16.gmra.mrb[0].mxu0 %v2751
      %v2861 = vpop.f32.mrb[0].mxu0
      %v2862 = vadd.f32 0.0, %v2861
      %v2863 = vpop.f32.mrb[0].mxu0
      %v2864 = vpop.f32.mrb[0].mxu0
      %v2865 = vadd.f32 0.0, %v2864
      %v2866 = vpop.f32.mrb[0].mxu0
      %2867 = vmatprep.mubr.bf16.mxu0 0
      %2868 = vmatmul.mubr.bf16.gmra.mrb[0].mxu0 %v2754
      %v2869 = vpop.f32.mrb[0].mxu0
      %v2870 = vadd.f32 0.0, %v2869
      %v2871 = vpop.f32.mrb[0].mxu0
      %v2872 = vpop.f32.mrb[0].mxu0
      %v2873 = vadd.f32 0.0, %v2872
      %v2874 = vpop.f32.mrb[0].mxu0
      %2875 = vmatprep.mubr.bf16.mxu0 0
      %2876 = vmatmul.mubr.bf16.gmra.mrb[0].mxu0 %v2757
      %v2877 = vpop.f32.mrb[0].mxu0
      %v2878 = vadd.f32 0.0, %v2877
      %v2879 = vpop.f32.mrb[0].mxu0
      %v2880 = vpop.f32.mrb[0].mxu0
      %v2881 = vadd.f32 0.0, %v2880
      %v2882 = vpop.f32.mrb[0].mxu0
      %2883 = vmatprep.mubr.bf16.mxu0 0
      %2884 = vmatmul.mubr.bf16.gmra.mrb[0].mxu0 %v2760
      %v2885 = vpop.f32.mrb[0].mxu0
      %v2886 = vadd.f32 0.0, %v2885
      %v2887 = vpop.f32.mrb[0].mxu0
      %v2888 = vpop.f32.mrb[0].mxu0
      %v2889 = vadd.f32 0.0, %v2888
      %v2890 = vpop.f32.mrb[0].mxu0
      %2891 = vmatprep.mubr.bf16.mxu0 0
      %2892 = vmatmul.mubr.bf16.gmra.mrb[0].mxu0 %v2763
      %v2893 = vpop.f32.mrb[0].mxu0
      %v2894 = vadd.f32 0.0, %v2893
      %v2895 = vpop.f32.mrb[0].mxu0
      %v2896 = vpop.f32.mrb[0].mxu0
      %v2897 = vadd.f32 0.0, %v2896
      %v2898 = vpop.f32.mrb[0].mxu0
      %2899 = vmatprep.mubr.bf16.mxu0 0
      %2900 = vmatmul.mubr.bf16.gmra.mrb[0].mxu0 %v2766
      %v2901 = vpop.f32.mrb[0].mxu0
      %v2902 = vadd.f32 0.0, %v2901
      %v2903 = vpop.f32.mrb[0].mxu0
      %v2904 = vpop.f32.mrb[0].mxu0
      %v2905 = vadd.f32 0.0, %v2904
      %v2906 = vpop.f32.mrb[0].mxu0
      %2907 = vmatprep.mubr.bf16.mxu0 0
      %2908 = vmatmul.mubr.bf16.gmra.mrb[0].mxu0 %v2769
      %v2909 = vpop.f32.mrb[0].mxu0
      %v2910 = vadd.f32 0.0, %v2909
      %v2911 = vpop.f32.mrb[0].mxu0
      %v2912 = vpop.f32.mrb[0].mxu0
      %v2913 = vadd.f32 0.0, %v2912
      %v2914 = vpop.f32.mrb[0].mxu0
      %2915 = vmatprep.mubr.bf16.mxu0 0
      %2916 = vmatmul.mubr.bf16.gmra.mrb[0].mxu0 %v2772
      %v2917 = vpop.f32.mrb[0].mxu0
      %v2918 = vadd.f32 0.0, %v2917
      %v2919 = vpop.f32.mrb[0].mxu0
      %v2920 = vpop.f32.mrb[0].mxu0
      %v2921 = vadd.f32 0.0, %v2920
      %v2922 = vpop.f32.mrb[0].mxu0
      %2923 = vmatprep.mubr.bf16.mxu0 0
      %2924 = vmatmul.mubr.bf16.gmra.mrb[0].mxu0 %v2775
      %v2925 = vpop.f32.mrb[0].mxu0
      %v2926 = vadd.f32 0.0, %v2925
      %v2927 = vpop.f32.mrb[0].mxu0
      %v2928 = vpop.f32.mrb[0].mxu0
      %v2929 = vadd.f32 0.0, %v2928
      %v2930 = vpop.f32.mrb[0].mxu0
      %2931 = vmatprep.mubr.bf16.mxu0 0
      %2932 = vmatmul.mubr.bf16.gmra.mrb[0].mxu0 %v2778
      %v2933 = vpop.f32.mrb[0].mxu0
      %v2934 = vadd.f32 0.0, %v2933
      %v2935 = vpop.f32.mrb[0].mxu0
      %v2936 = vpop.f32.mrb[0].mxu0
      %v2937 = vadd.f32 0.0, %v2936
      %v2938 = vpop.f32.mrb[0].mxu0
      %2939 = vmatprep.mubr.bf16.mxu0 0
      %2940 = vmatmul.mubr.bf16.gmra.mrb[0].mxu0 %v2781
      %v2941 = vpop.f32.mrb[0].mxu0
      %v2942 = vadd.f32 0.0, %v2941
      %v2943 = vpop.f32.mrb[0].mxu0
      %v2944 = vpop.f32.mrb[0].mxu0
      %v2945 = vadd.f32 0.0, %v2944
      %v2946 = vpop.f32.mrb[0].mxu0
      %2947 = vmatprep.mubr.bf16.mxu0 0
      %2948 = vmatmul.mubr.bf16.gmra.mrb[0].mxu0 %v2784
      %v2949 = vpop.f32.mrb[0].mxu0
      %v2950 = vadd.f32 0.0, %v2949
      %v2951 = vpop.f32.mrb[0].mxu0
      %v2952 = vpop.f32.mrb[0].mxu0
      %v2953 = vadd.f32 0.0, %v2952
      %v2954 = vpop.f32.mrb[0].mxu0
      %2955 = vmatprep.mubr.bf16.mxu0 0
      %2956 = vmatmul.mubr.bf16.gmra.mrb[0].mxu0 %v2787
      %v2957 = vpop.f32.mrb[0].mxu0
      %v2958 = vadd.f32 0.0, %v2957
      %v2959 = vpop.f32.mrb[0].mxu0
      %v2960 = vpop.f32.mrb[0].mxu0
      %v2961 = vadd.f32 0.0, %v2960
      %v2962 = vpop.f32.mrb[0].mxu0
      %2963 = vmatprep.mubr.bf16.mxu0 0
      %2964 = vmatmul.mubr.bf16.gmra.mrb[0].mxu0 %v2790
      %v2965 = vpop.f32.mrb[0].mxu0
      %v2966 = vadd.f32 0.0, %v2965
      %v2967 = vpop.f32.mrb[0].mxu0
      %v2968 = vpop.f32.mrb[0].mxu0
      %v2969 = vadd.f32 0.0, %v2968
      %v2970 = vpop.f32.mrb[0].mxu0
      %2971 = vdwg.mxu0
      %v2972 = vadd.f32 %v2534, %v2830
      %v2973 = vadd.f32 %v2535, %v2833
      %v2974 = vadd.f32 %v2536, %v2838
      %v2975 = vadd.f32 %v2537, %v2841
      %v2976 = vadd.f32 %v2538, %v2846
      %v2977 = vadd.f32 %v2539, %v2849
      %v2978 = vadd.f32 %v2540, %v2854
      %v2979 = vadd.f32 %v2541, %v2857
      %v2980 = vadd.f32 %v2542, %v2862
      %v2981 = vadd.f32 %v2543, %v2865
      %v2982 = vadd.f32 %v2544, %v2870
      %v2983 = vadd.f32 %v2545, %v2873
      %v2984 = vadd.f32 %v2546, %v2878
      %v2985 = vadd.f32 %v2547, %v2881
      %v2986 = vadd.f32 %v2548, %v2886
      %v2987 = vadd.f32 %v2549, %v2889
      %v2988 = vadd.f32 %v2550, %v2894
      %v2989 = vadd.f32 %v2551, %v2897
      %v2990 = vadd.f32 %v2552, %v2902
      %v2991 = vadd.f32 %v2553, %v2905
      %v2992 = vadd.f32 %v2554, %v2910
      %v2993 = vadd.f32 %v2555, %v2913
      %v2994 = vadd.f32 %v2556, %v2918
      %v2995 = vadd.f32 %v2557, %v2921
      %v2996 = vadd.f32 %v2558, %v2926
      %v2997 = vadd.f32 %v2559, %v2929
      %v2998 = vadd.f32 %v2560, %v2934
      %v2999 = vadd.f32 %v2561, %v2937
      %v3000 = vadd.f32 %v2562, %v2942
      %v3001 = vadd.f32 %v2563, %v2945
      %v3002 = vadd.f32 %v2564, %v2950
      %v3003 = vadd.f32 %v2565, %v2953
      %v3004 = vadd.f32 %v2566, %v2958
      %v3005 = vadd.f32 %v2567, %v2961
      %v3006 = vadd.f32 %v2568, %v2966
      %v3007 = vadd.f32 %v2569, %v2969
      %v3008 = vld [vmem:[%s315 + $0xa0] sm:$0x7]
      %v3009 = vld [vmem:[%s3 + $0x1c] sm:$0xf]
      %v3011 = vunpack.c.l.b16 %v3008
      %v3012 = vpack.c.b16 %v3011, %v3011
      %vm3013 = vsmask.f32 5376
      %v3015 = vshrl.u32 %v2682, 16
      %v3017 = vrot.slane %v3015, 2
      %v3018 = vshll.u32 %v2682, 16
      %v3020 = vrot.slane %v3018, 3
      %v3021 = vor.u32 %v3017, %v3020
      %v3023 = vshrl.u32 %v2683, 16
      %v3025 = vrot.slane %v3023, 2
      %v3026 = vshll.u32 %v2683, 16
      %v3028 = vrot.slane %v3026, 3
      %v3029 = vor.u32 %v3025, %v3028
      %v3030 = vsel %vm3013, %v3021, %v3029
      %v3032 = vshrl.u32 %v2684, 16
      %v3034 = vrot.slane %v3032, 2
      %v3035 = vshll.u32 %v2684, 16
      %v3037 = vrot.slane %v3035, 3
      %v3038 = vor.u32 %v3034, %v3037
      %v3039 = vsel %vm3013, %v3029, %v3038
      %v3041 = vshrl.u32 %v2685, 16
      %v3043 = vrot.slane %v3041, 2
      %v3044 = vshll.u32 %v2685, 16
      %v3046 = vrot.slane %v3044, 3
      %v3047 = vor.u32 %v3043, %v3046
      %v3048 = vsel %vm3013, %v3038, %v3047
      %v3050 = vshrl.u32 %v2686, 16
      %v3052 = vrot.slane %v3050, 2
      %v3053 = vshll.u32 %v2686, 16
      %v3055 = vrot.slane %v3053, 3
      %v3056 = vor.u32 %v3052, %v3055
      %v3057 = vsel %vm3013, %v3047, %v3056
      %v3059 = vshrl.u32 %v2687, 16
      %v3061 = vrot.slane %v3059, 2
      %v3062 = vshll.u32 %v2687, 16
      %v3064 = vrot.slane %v3062, 3
      %v3065 = vor.u32 %v3061, %v3064
      %v3066 = vsel %vm3013, %v3056, %v3065
      %v3068 = vshrl.u32 %v2688, 16
      %v3070 = vrot.slane %v3068, 2
      %v3071 = vshll.u32 %v2688, 16
      %v3073 = vrot.slane %v3071, 3
      %v3074 = vor.u32 %v3070, %v3073
      %v3075 = vsel %vm3013, %v3065, %v3074
      %v3077 = vshrl.u32 %v2689, 16
      %v3079 = vrot.slane %v3077, 2
      %v3080 = vshll.u32 %v2689, 16
      %v3082 = vrot.slane %v3080, 3
      %v3083 = vor.u32 %v3079, %v3082
      %v3084 = vsel %vm3013, %v3074, %v3083
      %v3086 = vshrl.u32 %v2690, 16
      %v3088 = vrot.slane %v3086, 2
      %v3089 = vshll.u32 %v2690, 16
      %v3091 = vrot.slane %v3089, 3
      %v3092 = vor.u32 %v3088, %v3091
      %v3093 = vsel %vm3013, %v3083, %v3092
      %v3095 = vshrl.u32 %v2691, 16
      %v3097 = vrot.slane %v3095, 2
      %v3098 = vshll.u32 %v2691, 16
      %v3100 = vrot.slane %v3098, 3
      %v3101 = vor.u32 %v3097, %v3100
      %v3102 = vsel %vm3013, %v3092, %v3101
      %v3104 = vshrl.u32 %v2692, 16
      %v3106 = vrot.slane %v3104, 2
      %v3107 = vshll.u32 %v2692, 16
      %v3109 = vrot.slane %v3107, 3
      %v3110 = vor.u32 %v3106, %v3109
      %v3111 = vsel %vm3013, %v3101, %v3110
      %v3113 = vshrl.u32 %v2693, 16
      %v3115 = vrot.slane %v3113, 2
      %v3116 = vshll.u32 %v2693, 16
      %v3118 = vrot.slane %v3116, 3
      %v3119 = vor.u32 %v3115, %v3118
      %v3120 = vsel %vm3013, %v3110, %v3119
      %v3122 = vshrl.u32 %v2694, 16
      %v3124 = vrot.slane %v3122, 2
      %v3125 = vshll.u32 %v2694, 16
      %v3127 = vrot.slane %v3125, 3
      %v3128 = vor.u32 %v3124, %v3127
      %v3129 = vsel %vm3013, %v3119, %v3128
      %v3131 = vshrl.u32 %v2695, 16
      %v3133 = vrot.slane %v3131, 2
      %v3134 = vshll.u32 %v2695, 16
      %v3136 = vrot.slane %v3134, 3
      %v3137 = vor.u32 %v3133, %v3136
      %v3138 = vsel %vm3013, %v3128, %v3137
      %v3140 = vshrl.u32 %v2696, 16
      %v3142 = vrot.slane %v3140, 2
      %v3143 = vshll.u32 %v2696, 16
      %v3145 = vrot.slane %v3143, 3
      %v3146 = vor.u32 %v3142, %v3145
      %v3147 = vsel %vm3013, %v3137, %v3146
      %v3149 = vshrl.u32 %v2697, 16
      %v3151 = vrot.slane %v3149, 2
      %v3152 = vshll.u32 %v2697, 16
      %v3154 = vrot.slane %v3152, 3
      %v3155 = vor.u32 %v3151, %v3154
      %v3156 = vsel %vm3013, %v3146, %v3155
      %v3158 = vshrl.u32 %v2698, 16
      %v3160 = vrot.slane %v3158, 2
      %v3161 = vshll.u32 %v2698, 16
      %v3163 = vrot.slane %v3161, 3
      %v3164 = vor.u32 %v3160, %v3163
      %v3165 = vsel %vm3013, %v3155, %v3164
      %v3167 = vshrl.u32 %v2699, 16
      %v3169 = vrot.slane %v3167, 2
      %v3170 = vshll.u32 %v2699, 16
      %v3172 = vrot.slane %v3170, 3
      %v3173 = vor.u32 %v3169, %v3172
      %v3174 = vsel %vm3013, %v3164, %v3173
      %v3176 = vshrl.u32 %v3012, 16
      %v3178 = vrot.slane %v3176, 2
      %v3179 = vshll.u32 %v3012, 16
      %v3181 = vrot.slane %v3179, 3
      %v3182 = vor.u32 %v3178, %v3181
      %v3183 = vsel %vm3013, %v3173, %v3182
      %v3185 = vsel %vm608, %v3030, 0
      %v3188 = vsel %vm608, %v3039, 0
      %v3191 = vsel %vm608, %v3048, 0
      %v3194 = vsel %vm608, %v3057, 0
      %v3197 = vsel %vm608, %v3066, 0
      %v3200 = vsel %vm608, %v3075, 0
      %v3203 = vsel %vm608, %v3084, 0
      %v3206 = vsel %vm608, %v3093, 0
      %v3209 = vsel %vm608, %v3102, 0
      %v3212 = vsel %vm608, %v3111, 0
      %v3215 = vsel %vm608, %v3120, 0
      %v3218 = vsel %vm608, %v3129, 0
      %v3221 = vsel %vm608, %v3138, 0
      %v3224 = vsel %vm608, %v3147, 0
      %v3227 = vsel %vm608, %v3156, 0
      %v3230 = vsel %vm608, %v3165, 0
      %v3233 = vsel %vm608, %v3174, 0
      %v3236 = vsel %vm608, %v3183, 0
      %v3239 = vsel %vm663, %v3009, 0
      %3241 = vmatprep.subr.bf16.mxu0 0
      %3242 = vmatpush1.bf16.msra.mxu0 %v3239
      %3243 = vmatprep.subr.bf16.mxu0 0
      %3244 = vmatpush1.bf16.msra.mxu0 0
      %3245 = vmatprep.subr.bf16.mxu0 0
      %3246 = vmatpush1.bf16.msra.mxu0 0
      %3247 = vmatprep.subr.bf16.mxu0 0
      %3248 = vmatpush1.bf16.msra.mxu0 0
      %3249 = vmatprep.subr.bf16.mxu0 0
      %3250 = vmatpush1.bf16.msra.mxu0 0
      %3251 = vmatprep.subr.bf16.mxu0 0
      %3252 = vmatpush1.bf16.msra.mxu0 0
      %3253 = vmatprep.subr.bf16.mxu0 0
      %3254 = vmatpush1.bf16.msra.mxu0 0
      %3255 = vmatprep.subr.bf16.mxu0 0
      %3256 = vmatpush1.bf16.msra.mxu0 0
      %3257 = vmatprep.subr.bf16.mxu0 0
      %3258 = vmatpush1.bf16.msra.mxu0 0
      %3259 = vmatprep.subr.bf16.mxu0 0
      %3260 = vmatpush1.bf16.msra.mxu0 0
      %3261 = vmatprep.subr.bf16.mxu0 0
      %3262 = vmatpush1.bf16.msra.mxu0 0
      %3263 = vmatprep.subr.bf16.mxu0 0
      %3264 = vmatpush1.bf16.msra.mxu0 0
      %3265 = vmatprep.subr.bf16.mxu0 0
      %3266 = vmatpush1.bf16.msra.mxu0 0
      %3267 = vmatprep.subr.bf16.mxu0 0
      %3268 = vmatpush1.bf16.msra.mxu0 0
      %3269 = vmatprep.subr.bf16.mxu0 0
      %3270 = vmatpush1.bf16.msra.mxu0 0
      %3271 = vmatprep.subr.bf16.mxu0 0
      %3272 = vmatpush1.bf16.msra.mxu0 0
      %3273 = vmatprep.mubr.bf16.mxu0 0
      %3274 = vmatmul.mubr.bf16.gmra.mrb[0].mxu0 %v3185
      %v3275 = vpop.f32.mrb[0].mxu0
      %v3276 = vadd.f32 0.0, %v3275
      %v3277 = vpop.f32.mrb[0].mxu0
      %v3278 = vpop.f32.mrb[0].mxu0
      %v3279 = vadd.f32 0.0, %v3278
      %v3280 = vpop.f32.mrb[0].mxu0
      %3281 = vmatprep.mubr.bf16.mxu0 0
      %3282 = vmatmul.mubr.bf16.gmra.mrb[0].mxu0 %v3188
      %v3283 = vpop.f32.mrb[0].mxu0
      %v3284 = vadd.f32 0.0, %v3283
      %v3285 = vpop.f32.mrb[0].mxu0
      %v3286 = vpop.f32.mrb[0].mxu0
      %v3287 = vadd.f32 0.0, %v3286
      %v3288 = vpop.f32.mrb[0].mxu0
      %3289 = vmatprep.mubr.bf16.mxu0 0
      %3290 = vmatmul.mubr.bf16.gmra.mrb[0].mxu0 %v3191
      %v3291 = vpop.f32.mrb[0].mxu0
      %v3292 = vadd.f32 0.0, %v3291
      %v3293 = vpop.f32.mrb[0].mxu0
      %v3294 = vpop.f32.mrb[0].mxu0
      %v3295 = vadd.f32 0.0, %v3294
      %v3296 = vpop.f32.mrb[0].mxu0
      %3297 = vmatprep.mubr.bf16.mxu0 0
      %3298 = vmatmul.mubr.bf16.gmra.mrb[0].mxu0 %v3194
      %v3299 = vpop.f32.mrb[0].mxu0
      %v3300 = vadd.f32 0.0, %v3299
      %v3301 = vpop.f32.mrb[0].mxu0
      %v3302 = vpop.f32.mrb[0].mxu0
      %v3303 = vadd.f32 0.0, %v3302
      %v3304 = vpop.f32.mrb[0].mxu0
      %3305 = vmatprep.mubr.bf16.mxu0 0
      %3306 = vmatmul.mubr.bf16.gmra.mrb[0].mxu0 %v3197
      %v3307 = vpop.f32.mrb[0].mxu0
      %v3308 = vadd.f32 0.0, %v3307
      %v3309 = vpop.f32.mrb[0].mxu0
      %v3310 = vpop.f32.mrb[0].mxu0
      %v3311 = vadd.f32 0.0, %v3310
      %v3312 = vpop.f32.mrb[0].mxu0
      %3313 = vmatprep.mubr.bf16.mxu0 0
      %3314 = vmatmul.mubr.bf16.gmra.mrb[0].mxu0 %v3200
      %v3315 = vpop.f32.mrb[0].mxu0
      %v3316 = vadd.f32 0.0, %v3315
      %v3317 = vpop.f32.mrb[0].mxu0
      %v3318 = vpop.f32.mrb[0].mxu0
      %v3319 = vadd.f32 0.0, %v3318
      %v3320 = vpop.f32.mrb[0].mxu0
      %3321 = vmatprep.mubr.bf16.mxu0 0
      %3322 = vmatmul.mubr.bf16.gmra.mrb[0].mxu0 %v3203
      %v3323 = vpop.f32.mrb[0].mxu0
      %v3324 = vadd.f32 0.0, %v3323
      %v3325 = vpop.f32.mrb[0].mxu0
      %v3326 = vpop.f32.mrb[0].mxu0
      %v3327 = vadd.f32 0.0, %v3326
      %v3328 = vpop.f32.mrb[0].mxu0
      %3329 = vmatprep.mubr.bf16.mxu0 0
      %3330 = vmatmul.mubr.bf16.gmra.mrb[0].mxu0 %v3206
      %v3331 = vpop.f32.mrb[0].mxu0
      %v3332 = vadd.f32 0.0, %v3331
      %v3333 = vpop.f32.mrb[0].mxu0
      %v3334 = vpop.f32.mrb[0].mxu0
      %v3335 = vadd.f32 0.0, %v3334
      %v3336 = vpop.f32.mrb[0].mxu0
      %3337 = vmatprep.mubr.bf16.mxu0 0
      %3338 = vmatmul.mubr.bf16.gmra.mrb[0].mxu0 %v3209
      %v3339 = vpop.f32.mrb[0].mxu0
      %v3340 = vadd.f32 0.0, %v3339
      %v3341 = vpop.f32.mrb[0].mxu0
      %v3342 = vpop.f32.mrb[0].mxu0
      %v3343 = vadd.f32 0.0, %v3342
      %v3344 = vpop.f32.mrb[0].mxu0
      %3345 = vmatprep.mubr.bf16.mxu0 0
      %3346 = vmatmul.mubr.bf16.gmra.mrb[0].mxu0 %v3212
      %v3347 = vpop.f32.mrb[0].mxu0
      %v3348 = vadd.f32 0.0, %v3347
      %v3349 = vpop.f32.mrb[0].mxu0
      %v3350 = vpop.f32.mrb[0].mxu0
      %v3351 = vadd.f32 0.0, %v3350
      %v3352 = vpop.f32.mrb[0].mxu0
      %3353 = vmatprep.mubr.bf16.mxu0 0
      %3354 = vmatmul.mubr.bf16.gmra.mrb[0].mxu0 %v3215
      %v3355 = vpop.f32.mrb[0].mxu0
      %v3356 = vadd.f32 0.0, %v3355
      %v3357 = vpop.f32.mrb[0].mxu0
      %v3358 = vpop.f32.mrb[0].mxu0
      %v3359 = vadd.f32 0.0, %v3358
      %v3360 = vpop.f32.mrb[0].mxu0
      %3361 = vmatprep.mubr.bf16.mxu0 0
      %3362 = vmatmul.mubr.bf16.gmra.mrb[0].mxu0 %v3218
      %v3363 = vpop.f32.mrb[0].mxu0
      %v3364 = vadd.f32 0.0, %v3363
      %v3365 = vpop.f32.mrb[0].mxu0
      %v3366 = vpop.f32.mrb[0].mxu0
      %v3367 = vadd.f32 0.0, %v3366
      %v3368 = vpop.f32.mrb[0].mxu0
      %3369 = vmatprep.mubr.bf16.mxu0 0
      %3370 = vmatmul.mubr.bf16.gmra.mrb[0].mxu0 %v3221
      %v3371 = vpop.f32.mrb[0].mxu0
      %v3372 = vadd.f32 0.0, %v3371
      %v3373 = vpop.f32.mrb[0].mxu0
      %v3374 = vpop.f32.mrb[0].mxu0
      %v3375 = vadd.f32 0.0, %v3374
      %v3376 = vpop.f32.mrb[0].mxu0
      %3377 = vmatprep.mubr.bf16.mxu0 0
      %3378 = vmatmul.mubr.bf16.gmra.mrb[0].mxu0 %v3224
      %v3379 = vpop.f32.mrb[0].mxu0
      %v3380 = vadd.f32 0.0, %v3379
      %v3381 = vpop.f32.mrb[0].mxu0
      %v3382 = vpop.f32.mrb[0].mxu0
      %v3383 = vadd.f32 0.0, %v3382
      %v3384 = vpop.f32.mrb[0].mxu0
      %3385 = vmatprep.mubr.bf16.mxu0 0
      %3386 = vmatmul.mubr.bf16.gmra.mrb[0].mxu0 %v3227
      %v3387 = vpop.f32.mrb[0].mxu0
      %v3388 = vadd.f32 0.0, %v3387
      %v3389 = vpop.f32.mrb[0].mxu0
      %v3390 = vpop.f32.mrb[0].mxu0
      %v3391 = vadd.f32 0.0, %v3390
      %v3392 = vpop.f32.mrb[0].mxu0
      %3393 = vmatprep.mubr.bf16.mxu0 0
      %3394 = vmatmul.mubr.bf16.gmra.mrb[0].mxu0 %v3230
      %v3395 = vpop.f32.mrb[0].mxu0
      %v3396 = vadd.f32 0.0, %v3395
      %v3397 = vpop.f32.mrb[0].mxu0
      %v3398 = vpop.f32.mrb[0].mxu0
      %v3399 = vadd.f32 0.0, %v3398
      %v3400 = vpop.f32.mrb[0].mxu0
      %3401 = vmatprep.mubr.bf16.mxu0 0
      %3402 = vmatmul.mubr.bf16.gmra.mrb[0].mxu0 %v3233
      %v3403 = vpop.f32.mrb[0].mxu0
      %v3404 = vadd.f32 0.0, %v3403
      %v3405 = vpop.f32.mrb[0].mxu0
      %v3406 = vpop.f32.mrb[0].mxu0
      %v3407 = vadd.f32 0.0, %v3406
      %v3408 = vpop.f32.mrb[0].mxu0
      %3409 = vmatprep.mubr.bf16.mxu0 0
      %3410 = vmatmul.mubr.bf16.gmra.mrb[0].mxu0 %v3236
      %v3411 = vpop.f32.mrb[0].mxu0
      %v3412 = vadd.f32 0.0, %v3411
      %v3413 = vpop.f32.mrb[0].mxu0
      %v3414 = vpop.f32.mrb[0].mxu0
      %v3415 = vadd.f32 0.0, %v3414
      %v3416 = vpop.f32.mrb[0].mxu0
      %3417 = vdwg.mxu0
      %v3418 = vadd.f32 %v2972, %v3276
      %v3419 = vadd.f32 %v2973, %v3279
      %v3420 = vadd.f32 %v2974, %v3284
      %v3421 = vadd.f32 %v2975, %v3287
      %v3422 = vadd.f32 %v2976, %v3292
      %v3423 = vadd.f32 %v2977, %v3295
      %v3424 = vadd.f32 %v2978, %v3300
      %v3425 = vadd.f32 %v2979, %v3303
      %v3426 = vadd.f32 %v2980, %v3308
      %v3427 = vadd.f32 %v2981, %v3311
      %v3428 = vadd.f32 %v2982, %v3316
      %v3429 = vadd.f32 %v2983, %v3319
      %v3430 = vadd.f32 %v2984, %v3324
      %v3431 = vadd.f32 %v2985, %v3327
      %v3432 = vadd.f32 %v2986, %v3332
      %v3433 = vadd.f32 %v2987, %v3335
      %v3434 = vadd.f32 %v2988, %v3340
      %v3435 = vadd.f32 %v2989, %v3343
      %v3436 = vadd.f32 %v2990, %v3348
      %v3437 = vadd.f32 %v2991, %v3351
      %v3438 = vadd.f32 %v2992, %v3356
      %v3439 = vadd.f32 %v2993, %v3359
      %v3440 = vadd.f32 %v2994, %v3364
      %v3441 = vadd.f32 %v2995, %v3367
      %v3442 = vadd.f32 %v2996, %v3372
      %v3443 = vadd.f32 %v2997, %v3375
      %v3444 = vadd.f32 %v2998, %v3380
      %v3445 = vadd.f32 %v2999, %v3383
      %v3446 = vadd.f32 %v3000, %v3388
      %v3447 = vadd.f32 %v3001, %v3391
      %v3448 = vadd.f32 %v3002, %v3396
      %v3449 = vadd.f32 %v3003, %v3399
      %v3450 = vadd.f32 %v3004, %v3404
      %v3451 = vadd.f32 %v3005, %v3407
      %v3452 = vadd.f32 %v3006, %v3412
      %v3453 = vadd.f32 %v3007, %v3415
      %v3454 = vld [vmem:[%s315 + $0x10] sm:$0x8]
      %v3455 = vld [vmem:[%s3 + $0x20] sm:$0xf]
      %v3457 = vunpack.c.l.b16 %v3454
      %v3458 = vpack.c.b16 %v2646, %v3457
      %vm3459 = vcmask 1044480
      %v3460 = vrot.slane %v3458, 3
      %v3461 = vrot.slane %v2683, 3
      %v3462 = vsel %vm3459, %v3460, %v3461
      %v3463 = vrot.slane %v2684, 3
      %v3464 = vsel %vm3459, %v3461, %v3463
      %v3465 = vrot.slane %v2685, 3
      %v3466 = vsel %vm3459, %v3463, %v3465
      %v3467 = vrot.slane %v2686, 3
      %v3468 = vsel %vm3459, %v3465, %v3467
      %v3469 = vrot.slane %v2687, 3
      %v3470 = vsel %vm3459, %v3467, %v3469
      %v3471 = vrot.slane %v2688, 3
      %v3472 = vsel %vm3459, %v3469, %v3471
      %v3473 = vrot.slane %v2689, 3
      %v3474 = vsel %vm3459, %v3471, %v3473
      %v3475 = vrot.slane %v2690, 3
      %v3476 = vsel %vm3459, %v3473, %v3475
      %v3477 = vrot.slane %v2691, 3
      %v3478 = vsel %vm3459, %v3475, %v3477
      %v3479 = vrot.slane %v2692, 3
      %v3480 = vsel %vm3459, %v3477, %v3479
      %v3481 = vrot.slane %v2693, 3
      %v3482 = vsel %vm3459, %v3479, %v3481
      %v3483 = vrot.slane %v2694, 3
      %v3484 = vsel %vm3459, %v3481, %v3483
      %v3485 = vrot.slane %v2695, 3
      %v3486 = vsel %vm3459, %v3483, %v3485
      %v3487 = vrot.slane %v2696, 3
      %v3488 = vsel %vm3459, %v3485, %v3487
      %v3489 = vrot.slane %v2697, 3
      %v3490 = vsel %vm3459, %v3487, %v3489
      %v3491 = vrot.slane %v2698, 3
      %v3492 = vsel %vm3459, %v3489, %v3491
      %v3493 = vrot.slane %v2699, 3
      %v3494 = vsel %vm3459, %v3491, %v3493
      %v3495 = vrot.slane %v3012, 3
      %v3496 = vsel %vm3459, %v3493, %v3495
      %v3498 = vsel %vm608, %v3462, 0
      %v3501 = vsel %vm608, %v3464, 0
      %v3504 = vsel %vm608, %v3466, 0
      %v3507 = vsel %vm608, %v3468, 0
      %v3510 = vsel %vm608, %v3470, 0
      %v3513 = vsel %vm608, %v3472, 0
      %v3516 = vsel %vm608, %v3474, 0
      %v3519 = vsel %vm608, %v3476, 0
      %v3522 = vsel %vm608, %v3478, 0
      %v3525 = vsel %vm608, %v3480, 0
      %v3528 = vsel %vm608, %v3482, 0
      %v3531 = vsel %vm608, %v3484, 0
      %v3534 = vsel %vm608, %v3486, 0
      %v3537 = vsel %vm608, %v3488, 0
      %v3540 = vsel %vm608, %v3490, 0
      %v3543 = vsel %vm608, %v3492, 0
      %v3546 = vsel %vm608, %v3494, 0
      %v3549 = vsel %vm608, %v3496, 0
      %v3552 = vsel %vm663, %v3455, 0
      %3554 = vmatprep.subr.bf16.mxu0 0
      %3555 = vmatpush1.bf16.msra.mxu0 %v3552
      %3556 = vmatprep.subr.bf16.mxu0 0
      %3557 = vmatpush1.bf16.msra.mxu0 0
      %3558 = vmatprep.subr.bf16.mxu0 0
      %3559 = vmatpush1.bf16.msra.mxu0 0
      %3560 = vmatprep.subr.bf16.mxu0 0
      %3561 = vmatpush1.bf16.msra.mxu0 0
      %3562 = vmatprep.subr.bf16.mxu0 0
      %3563 = vmatpush1.bf16.msra.mxu0 0
      %3564 = vmatprep.subr.bf16.mxu0 0
      %3565 = vmatpush1.bf16.msra.mxu0 0
      %3566 = vmatprep.subr.bf16.mxu0 0
      %3567 = vmatpush1.bf16.msra.mxu0 0
      %3568 = vmatprep.subr.bf16.mxu0 0
      %3569 = vmatpush1.bf16.msra.mxu0 0
      %3570 = vmatprep.subr.bf16.mxu0 0
      %3571 = vmatpush1.bf16.msra.mxu0 0
      %3572 = vmatprep.subr.bf16.mxu0 0
      %3573 = vmatpush1.bf16.msra.mxu0 0
      %3574 = vmatprep.subr.bf16.mxu0 0
      %3575 = vmatpush1.bf16.msra.mxu0 0
      %3576 = vmatprep.subr.bf16.mxu0 0
      %3577 = vmatpush1.bf16.msra.mxu0 0
      %3578 = vmatprep.subr.bf16.mxu0 0
      %3579 = vmatpush1.bf16.msra.mxu0 0
      %3580 = vmatprep.subr.bf16.mxu0 0
      %3581 = vmatpush1.bf16.msra.mxu0 0
      %3582 = vmatprep.subr.bf16.mxu0 0
      %3583 = vmatpush1.bf16.msra.mxu0 0
      %3584 = vmatprep.subr.bf16.mxu0 0
      %3585 = vmatpush1.bf16.msra.mxu0 0
      %3586 = vmatprep.mubr.bf16.mxu0 0
      %3587 = vmatmul.mubr.bf16.gmra.mrb[0].mxu0 %v3498
      %v3588 = vpop.f32.mrb[0].mxu0
      %v3589 = vadd.f32 0.0, %v3588
      %v3590 = vpop.f32.mrb[0].mxu0
      %v3591 = vpop.f32.mrb[0].mxu0
      %v3592 = vadd.f32 0.0, %v3591
      %v3593 = vpop.f32.mrb[0].mxu0
      %3594 = vmatprep.mubr.bf16.mxu0 0
      %3595 = vmatmul.mubr.bf16.gmra.mrb[0].mxu0 %v3501
      %v3596 = vpop.f32.mrb[0].mxu0
      %v3597 = vadd.f32 0.0, %v3596
      %v3598 = vpop.f32.mrb[0].mxu0
      %v3599 = vpop.f32.mrb[0].mxu0
      %v3600 = vadd.f32 0.0, %v3599
      %v3601 = vpop.f32.mrb[0].mxu0
      %3602 = vmatprep.mubr.bf16.mxu0 0
      %3603 = vmatmul.mubr.bf16.gmra.mrb[0].mxu0 %v3504
      %v3604 = vpop.f32.mrb[0].mxu0
      %v3605 = vadd.f32 0.0, %v3604
      %v3606 = vpop.f32.mrb[0].mxu0
      %v3607 = vpop.f32.mrb[0].mxu0
      %v3608 = vadd.f32 0.0, %v3607
      %v3609 = vpop.f32.mrb[0].mxu0
      %3610 = vmatprep.mubr.bf16.mxu0 0
      %3611 = vmatmul.mubr.bf16.gmra.mrb[0].mxu0 %v3507
      %v3612 = vpop.f32.mrb[0].mxu0
      %v3613 = vadd.f32 0.0, %v3612
      %v3614 = vpop.f32.mrb[0].mxu0
      %v3615 = vpop.f32.mrb[0].mxu0
      %v3616 = vadd.f32 0.0, %v3615
      %v3617 = vpop.f32.mrb[0].mxu0
      %3618 = vmatprep.mubr.bf16.mxu0 0
      %3619 = vmatmul.mubr.bf16.gmra.mrb[0].mxu0 %v3510
      %v3620 = vpop.f32.mrb[0].mxu0
      %v3621 = vadd.f32 0.0, %v3620
      %v3622 = vpop.f32.mrb[0].mxu0
      %v3623 = vpop.f32.mrb[0].mxu0
      %v3624 = vadd.f32 0.0, %v3623
      %v3625 = vpop.f32.mrb[0].mxu0
      %3626 = vmatprep.mubr.bf16.mxu0 0
      %3627 = vmatmul.mubr.bf16.gmra.mrb[0].mxu0 %v3513
      %v3628 = vpop.f32.mrb[0].mxu0
      %v3629 = vadd.f32 0.0, %v3628
      %v3630 = vpop.f32.mrb[0].mxu0
      %v3631 = vpop.f32.mrb[0].mxu0
      %v3632 = vadd.f32 0.0, %v3631
      %v3633 = vpop.f32.mrb[0].mxu0
      %3634 = vmatprep.mubr.bf16.mxu0 0
      %3635 = vmatmul.mubr.bf16.gmra.mrb[0].mxu0 %v3516
      %v3636 = vpop.f32.mrb[0].mxu0
      %v3637 = vadd.f32 0.0, %v3636
      %v3638 = vpop.f32.mrb[0].mxu0
      %v3639 = vpop.f32.mrb[0].mxu0
      %v3640 = vadd.f32 0.0, %v3639
      %v3641 = vpop.f32.mrb[0].mxu0
      %3642 = vmatprep.mubr.bf16.mxu0 0
      %3643 = vmatmul.mubr.bf16.gmra.mrb[0].mxu0 %v3519
      %v3644 = vpop.f32.mrb[0].mxu0
      %v3645 = vadd.f32 0.0, %v3644
      %v3646 = vpop.f32.mrb[0].mxu0
      %v3647 = vpop.f32.mrb[0].mxu0
      %v3648 = vadd.f32 0.0, %v3647
      %v3649 = vpop.f32.mrb[0].mxu0
      %3650 = vmatprep.mubr.bf16.mxu0 0
      %3651 = vmatmul.mubr.bf16.gmra.mrb[0].mxu0 %v3522
      %v3652 = vpop.f32.mrb[0].mxu0
      %v3653 = vadd.f32 0.0, %v3652
      %v3654 = vpop.f32.mrb[0].mxu0
      %v3655 = vpop.f32.mrb[0].mxu0
      %v3656 = vadd.f32 0.0, %v3655
      %v3657 = vpop.f32.mrb[0].mxu0
      %3658 = vmatprep.mubr.bf16.mxu0 0
      %3659 = vmatmul.mubr.bf16.gmra.mrb[0].mxu0 %v3525
      %v3660 = vpop.f32.mrb[0].mxu0
      %v3661 = vadd.f32 0.0, %v3660
      %v3662 = vpop.f32.mrb[0].mxu0
      %v3663 = vpop.f32.mrb[0].mxu0
      %v3664 = vadd.f32 0.0, %v3663
      %v3665 = vpop.f32.mrb[0].mxu0
      %3666 = vmatprep.mubr.bf16.mxu0 0
      %3667 = vmatmul.mubr.bf16.gmra.mrb[0].mxu0 %v3528
      %v3668 = vpop.f32.mrb[0].mxu0
      %v3669 = vadd.f32 0.0, %v3668
      %v3670 = vpop.f32.mrb[0].mxu0
      %v3671 = vpop.f32.mrb[0].mxu0
      %v3672 = vadd.f32 0.0, %v3671
      %v3673 = vpop.f32.mrb[0].mxu0
      %3674 = vmatprep.mubr.bf16.mxu0 0
      %3675 = vmatmul.mubr.bf16.gmra.mrb[0].mxu0 %v3531
      %v3676 = vpop.f32.mrb[0].mxu0
      %v3677 = vadd.f32 0.0, %v3676
      %v3678 = vpop.f32.mrb[0].mxu0
      %v3679 = vpop.f32.mrb[0].mxu0
      %v3680 = vadd.f32 0.0, %v3679
      %v3681 = vpop.f32.mrb[0].mxu0
      %3682 = vmatprep.mubr.bf16.mxu0 0
      %3683 = vmatmul.mubr.bf16.gmra.mrb[0].mxu0 %v3534
      %v3684 = vpop.f32.mrb[0].mxu0
      %v3685 = vadd.f32 0.0, %v3684
      %v3686 = vpop.f32.mrb[0].mxu0
      %v3687 = vpop.f32.mrb[0].mxu0
      %v3688 = vadd.f32 0.0, %v3687
      %v3689 = vpop.f32.mrb[0].mxu0
      %3690 = vmatprep.mubr.bf16.mxu0 0
      %3691 = vmatmul.mubr.bf16.gmra.mrb[0].mxu0 %v3537
      %v3692 = vpop.f32.mrb[0].mxu0
      %v3693 = vadd.f32 0.0, %v3692
      %v3694 = vpop.f32.mrb[0].mxu0
      %v3695 = vpop.f32.mrb[0].mxu0
      %v3696 = vadd.f32 0.0, %v3695
      %v3697 = vpop.f32.mrb[0].mxu0
      %3698 = vmatprep.mubr.bf16.mxu0 0
      %3699 = vmatmul.mubr.bf16.gmra.mrb[0].mxu0 %v3540
      %v3700 = vpop.f32.mrb[0].mxu0
      %v3701 = vadd.f32 0.0, %v3700
      %v3702 = vpop.f32.mrb[0].mxu0
      %v3703 = vpop.f32.mrb[0].mxu0
      %v3704 = vadd.f32 0.0, %v3703
      %v3705 = vpop.f32.mrb[0].mxu0
      %3706 = vmatprep.mubr.bf16.mxu0 0
      %3707 = vmatmul.mubr.bf16.gmra.mrb[0].mxu0 %v3543
      %v3708 = vpop.f32.mrb[0].mxu0
      %v3709 = vadd.f32 0.0, %v3708
      %v3710 = vpop.f32.mrb[0].mxu0
      %v3711 = vpop.f32.mrb[0].mxu0
      %v3712 = vadd.f32 0.0, %v3711
      %v3713 = vpop.f32.mrb[0].mxu0
      %3714 = vmatprep.mubr.bf16.mxu0 0
      %3715 = vmatmul.mubr.bf16.gmra.mrb[0].mxu0 %v3546
      %v3716 = vpop.f32.mrb[0].mxu0
      %v3717 = vadd.f32 0.0, %v3716
      %v3718 = vpop.f32.mrb[0].mxu0
      %v3719 = vpop.f32.mrb[0].mxu0
      %v3720 = vadd.f32 0.0, %v3719
      %v3721 = vpop.f32.mrb[0].mxu0
      %3722 = vmatprep.mubr.bf16.mxu0 0
      %3723 = vmatmul.mubr.bf16.gmra.mrb[0].mxu0 %v3549
      %v3724 = vpop.f32.mrb[0].mxu0
      %v3725 = vadd.f32 0.0, %v3724
      %v3726 = vpop.f32.mrb[0].mxu0
      %v3727 = vpop.f32.mrb[0].mxu0
      %v3728 = vadd.f32 0.0, %v3727
      %v3729 = vpop.f32.mrb[0].mxu0
      %3730 = vdwg.mxu0
      %v3731 = vadd.f32 %v3418, %v3589
      %v3732 = vadd.f32 %v3419, %v3592
      %v3733 = vadd.f32 %v3420, %v3597
      %v3734 = vadd.f32 %v3421, %v3600
      %v3735 = vadd.f32 %v3422, %v3605
      %v3736 = vadd.f32 %v3423, %v3608
      %v3737 = vadd.f32 %v3424, %v3613
      %v3738 = vadd.f32 %v3425, %v3616
      %v3739 = vadd.f32 %v3426, %v3621
      %v3740 = vadd.f32 %v3427, %v3624
      %v3741 = vadd.f32 %v3428, %v3629
      %v3742 = vadd.f32 %v3429, %v3632
      %v3743 = vadd.f32 %v3430, %v3637
      %v3744 = vadd.f32 %v3431, %v3640
      %v3745 = vadd.f32 %v3432, %v3645
      %v3746 = vadd.f32 %v3433, %v3648
      %v3747 = vadd.f32 %v3434, %v3653
      %v3748 = vadd.f32 %v3435, %v3656
      %v3749 = vadd.f32 %v3436, %v3661
      %v3750 = vadd.f32 %v3437, %v3664
      %v3751 = vadd.f32 %v3438, %v3669
      %v3752 = vadd.f32 %v3439, %v3672
      %v3753 = vadd.f32 %v3440, %v3677
      %v3754 = vadd.f32 %v3441, %v3680
      %v3755 = vadd.f32 %v3442, %v3685
      %v3756 = vadd.f32 %v3443, %v3688
      %v3757 = vadd.f32 %v3444, %v3693
      %v3758 = vadd.f32 %v3445, %v3696
      %v3759 = vadd.f32 %v3446, %v3701
      %v3760 = vadd.f32 %v3447, %v3704
      %v3761 = vadd.f32 %v3448, %v3709
      %v3762 = vadd.f32 %v3449, %v3712
      %v3763 = vadd.f32 %v3450, %v3717
      %v3764 = vadd.f32 %v3451, %v3720
      %v3765 = vadd.f32 %v3452, %v3725
      %v3766 = vadd.f32 %v3453, %v3728
      %v3767 = vld [vmem:[%s4] sm:$0x1]
      %v3769 = vlaneseq
      %v3770 = vshrl.u32 %v3769, 7
      %v3771 = vsub.s32 0, %v3770
      %v3772 = vrot.slane %v3767, %v3771
      %v3774 = vadd.f32 %v3731, %v3772
      %v3775 = vadd.f32 %v3732, %v3772
      %v3776 = vadd.f32 %v3733, %v3772
      %v3777 = vadd.f32 %v3734, %v3772
      %v3778 = vadd.f32 %v3735, %v3772
      %v3779 = vadd.f32 %v3736, %v3772
      %v3780 = vadd.f32 %v3737, %v3772
      %v3781 = vadd.f32 %v3738, %v3772
      %v3782 = vadd.f32 %v3739, %v3772
      %v3783 = vadd.f32 %v3740, %v3772
      %v3784 = vadd.f32 %v3741, %v3772
      %v3785 = vadd.f32 %v3742, %v3772
      %v3786 = vadd.f32 %v3743, %v3772
      %v3787 = vadd.f32 %v3744, %v3772
      %v3788 = vadd.f32 %v3745, %v3772
      %v3789 = vadd.f32 %v3746, %v3772
      %v3790 = vadd.f32 %v3747, %v3772
      %v3791 = vadd.f32 %v3748, %v3772
      %v3792 = vadd.f32 %v3749, %v3772
      %v3793 = vadd.f32 %v3750, %v3772
      %v3794 = vadd.f32 %v3751, %v3772
      %v3795 = vadd.f32 %v3752, %v3772
      %v3796 = vadd.f32 %v3753, %v3772
      %v3797 = vadd.f32 %v3754, %v3772
      %v3798 = vadd.f32 %v3755, %v3772
      %v3799 = vadd.f32 %v3756, %v3772
      %v3800 = vadd.f32 %v3757, %v3772
      %v3801 = vadd.f32 %v3758, %v3772
      %v3802 = vadd.f32 %v3759, %v3772
      %v3803 = vadd.f32 %v3760, %v3772
      %v3804 = vadd.f32 %v3761, %v3772
      %v3805 = vadd.f32 %v3762, %v3772
      %v3806 = vadd.f32 %v3763, %v3772
      %v3807 = vadd.f32 %v3764, %v3772
      %v3808 = vadd.f32 %v3765, %v3772
      %v3809 = vadd.f32 %v3766, %v3772
      %vm3810 = vcmp.ge.f32.partialorder %v3774, 0.0
      %vm3811 = vcmp.ge.f32.partialorder %v3775, 0.0
      %vm3812 = vcmp.ge.f32.partialorder %v3776, 0.0
      %vm3813 = vcmp.ge.f32.partialorder %v3777, 0.0
      %vm3814 = vcmp.ge.f32.partialorder %v3778, 0.0
      %vm3815 = vcmp.ge.f32.partialorder %v3779, 0.0
      %vm3816 = vcmp.ge.f32.partialorder %v3780, 0.0
      %vm3817 = vcmp.ge.f32.partialorder %v3781, 0.0
      %vm3818 = vcmp.ge.f32.partialorder %v3782, 0.0
      %vm3819 = vcmp.ge.f32.partialorder %v3783, 0.0
      %vm3820 = vcmp.ge.f32.partialorder %v3784, 0.0
      %vm3821 = vcmp.ge.f32.partialorder %v3785, 0.0
      %vm3822 = vcmp.ge.f32.partialorder %v3786, 0.0
      %vm3823 = vcmp.ge.f32.partialorder %v3787, 0.0
      %vm3824 = vcmp.ge.f32.partialorder %v3788, 0.0
      %vm3825 = vcmp.ge.f32.partialorder %v3789, 0.0
      %vm3826 = vcmp.ge.f32.partialorder %v3790, 0.0
      %vm3827 = vcmp.ge.f32.partialorder %v3791, 0.0
      %vm3828 = vcmp.ge.f32.partialorder %v3792, 0.0
      %vm3829 = vcmp.ge.f32.partialorder %v3793, 0.0
      %vm3830 = vcmp.ge.f32.partialorder %v3794, 0.0
      %vm3831 = vcmp.ge.f32.partialorder %v3795, 0.0
      %vm3832 = vcmp.ge.f32.partialorder %v3796, 0.0
      %vm3833 = vcmp.ge.f32.partialorder %v3797, 0.0
      %vm3834 = vcmp.ge.f32.partialorder %v3798, 0.0
      %vm3835 = vcmp.ge.f32.partialorder %v3799, 0.0
      %vm3836 = vcmp.ge.f32.partialorder %v3800, 0.0
      %vm3837 = vcmp.ge.f32.partialorder %v3801, 0.0
      %vm3838 = vcmp.ge.f32.partialorder %v3802, 0.0
      %vm3839 = vcmp.ge.f32.partialorder %v3803, 0.0
      %vm3840 = vcmp.ge.f32.partialorder %v3804, 0.0
      %vm3841 = vcmp.ge.f32.partialorder %v3805, 0.0
      %vm3842 = vcmp.ge.f32.partialorder %v3806, 0.0
      %vm3843 = vcmp.ge.f32.partialorder %v3807, 0.0
      %vm3844 = vcmp.ge.f32.partialorder %v3808, 0.0
      %vm3845 = vcmp.ge.f32.partialorder %v3809, 0.0
      %v3846 = vmul.f32 %v3774, 0.01
      %v3847 = vmul.f32 %v3775, 0.01
      %v3848 = vmul.f32 %v3776, 0.01
      %v3849 = vmul.f32 %v3777, 0.01
      %v3850 = vmul.f32 %v3778, 0.01
      %v3851 = vmul.f32 %v3779, 0.01
      %v3852 = vmul.f32 %v3780, 0.01
      %v3853 = vmul.f32 %v3781, 0.01
      %v3854 = vmul.f32 %v3782, 0.01
      %v3855 = vmul.f32 %v3783, 0.01
      %v3856 = vmul.f32 %v3784, 0.01
      %v3857 = vmul.f32 %v3785, 0.01
      %v3858 = vmul.f32 %v3786, 0.01
      %v3859 = vmul.f32 %v3787, 0.01
      %v3860 = vmul.f32 %v3788, 0.01
      %v3861 = vmul.f32 %v3789, 0.01
      %v3862 = vmul.f32 %v3790, 0.01
      %v3863 = vmul.f32 %v3791, 0.01
      %v3864 = vmul.f32 %v3792, 0.01
      %v3865 = vmul.f32 %v3793, 0.01
      %v3866 = vmul.f32 %v3794, 0.01
      %v3867 = vmul.f32 %v3795, 0.01
      %v3868 = vmul.f32 %v3796, 0.01
      %v3869 = vmul.f32 %v3797, 0.01
      %v3870 = vmul.f32 %v3798, 0.01
      %v3871 = vmul.f32 %v3799, 0.01
      %v3872 = vmul.f32 %v3800, 0.01
      %v3873 = vmul.f32 %v3801, 0.01
      %v3874 = vmul.f32 %v3802, 0.01
      %v3875 = vmul.f32 %v3803, 0.01
      %v3876 = vmul.f32 %v3804, 0.01
      %v3877 = vmul.f32 %v3805, 0.01
      %v3878 = vmul.f32 %v3806, 0.01
      %v3879 = vmul.f32 %v3807, 0.01
      %v3880 = vmul.f32 %v3808, 0.01
      %v3881 = vmul.f32 %v3809, 0.01
      %v3882 = vsel %vm3810, %v3774, %v3846
      %v3883 = vsel %vm3811, %v3775, %v3847
      %v3884 = vsel %vm3812, %v3776, %v3848
      %v3885 = vsel %vm3813, %v3777, %v3849
      %v3886 = vsel %vm3814, %v3778, %v3850
      %v3887 = vsel %vm3815, %v3779, %v3851
      %v3888 = vsel %vm3816, %v3780, %v3852
      %v3889 = vsel %vm3817, %v3781, %v3853
      %v3890 = vsel %vm3818, %v3782, %v3854
      %v3891 = vsel %vm3819, %v3783, %v3855
      %v3892 = vsel %vm3820, %v3784, %v3856
      %v3893 = vsel %vm3821, %v3785, %v3857
      %v3894 = vsel %vm3822, %v3786, %v3858
      %v3895 = vsel %vm3823, %v3787, %v3859
      %v3896 = vsel %vm3824, %v3788, %v3860
      %v3897 = vsel %vm3825, %v3789, %v3861
      %v3898 = vsel %vm3826, %v3790, %v3862
      %v3899 = vsel %vm3827, %v3791, %v3863
      %v3900 = vsel %vm3828, %v3792, %v3864
      %v3901 = vsel %vm3829, %v3793, %v3865
      %v3902 = vsel %vm3830, %v3794, %v3866
      %v3903 = vsel %vm3831, %v3795, %v3867
      %v3904 = vsel %vm3832, %v3796, %v3868
      %v3905 = vsel %vm3833, %v3797, %v3869
      %v3906 = vsel %vm3834, %v3798, %v3870
      %v3907 = vsel %vm3835, %v3799, %v3871
      %v3908 = vsel %vm3836, %v3800, %v3872
      %v3909 = vsel %vm3837, %v3801, %v3873
      %v3910 = vsel %vm3838, %v3802, %v3874
      %v3911 = vsel %vm3839, %v3803, %v3875
      %v3912 = vsel %vm3840, %v3804, %v3876
      %v3913 = vsel %vm3841, %v3805, %v3877
      %v3914 = vsel %vm3842, %v3806, %v3878
      %v3915 = vsel %vm3843, %v3807, %v3879
      %v3916 = vsel %vm3844, %v3808, %v3880
      %v3917 = vsel %vm3845, %v3809, %v3881
      %v3918 = vld [vmem:[%s2] sm:$0xff]
      %v3919 = vld [vmem:[%s2 + $0x8] sm:$0xff]
      %v3920 = vld [vmem:[%s2 + $0x10] sm:$0xff]
      %v3921 = vld [vmem:[%s2 + $0x18] sm:$0xff]
      %v3922 = vld [vmem:[%s2 + $0x20] sm:$0xff]
      %v3923 = vld [vmem:[%s2 + $0x28] sm:$0xff]
      %v3924 = vld [vmem:[%s2 + $0x30] sm:$0xff]
      %v3925 = vld [vmem:[%s2 + $0x38] sm:$0xff]
      %v3926 = vld [vmem:[%s2 + $0x40] sm:$0xff]
      %v3927 = vld [vmem:[%s2 + $0x48] sm:$0xff]
      %v3928 = vld [vmem:[%s2 + $0x50] sm:$0xff]
      %v3929 = vld [vmem:[%s2 + $0x58] sm:$0xff]
      %v3930 = vld [vmem:[%s2 + $0x60] sm:$0xff]
      %v3931 = vld [vmem:[%s2 + $0x68] sm:$0xff]
      %v3932 = vld [vmem:[%s2 + $0x70] sm:$0xff]
      %v3933 = vld [vmem:[%s2 + $0x78] sm:$0xff]
      %v3934 = vld [vmem:[%s2 + $0x80] sm:$0xff]
      %v3935 = vld [vmem:[%s2 + $0x88] sm:$0xff]
      %v3936 = vld [vmem:[%s2 + $0x90] sm:$0xff]
      %v3937 = vld [vmem:[%s2 + $0x98] sm:$0xff]
      %v3938 = vld [vmem:[%s2 + $0xa0] sm:$0xff]
      %v3939 = vld [vmem:[%s2 + $0xa8] sm:$0xff]
      %v3940 = vld [vmem:[%s2 + $0xb0] sm:$0xff]
      %v3941 = vld [vmem:[%s2 + $0xb8] sm:$0xff]
      %v3942 = vld [vmem:[%s2 + $0xc0] sm:$0xff]
      %v3943 = vld [vmem:[%s2 + $0xc8] sm:$0xff]
      %v3944 = vld [vmem:[%s2 + $0xd0] sm:$0xff]
      %v3945 = vld [vmem:[%s2 + $0xd8] sm:$0xff]
      %v3946 = vld [vmem:[%s2 + $0xe0] sm:$0xff]
      %v3947 = vld [vmem:[%s2 + $0xe8] sm:$0xff]
      %v3948 = vld [vmem:[%s2 + $0xf0] sm:$0xff]
      %v3949 = vld [vmem:[%s2 + $0xf8] sm:$0xff]
      %v3950 = vld [vmem:[%s2 + $0x100] sm:$0xff]
      %v3951 = vld [vmem:[%s2 + $0x108] sm:$0xff]
      %v3952 = vld [vmem:[%s2 + $0x110] sm:$0xff]
      %v3953 = vld [vmem:[%s2 + $0x118] sm:$0xff]
      %3955 = vset.pattern.permute.xlu0 0
      %3956 = vperm.xlu0 %3955, %v3918
      %v3957 = vpop.permute.xlu0 %3956
      %3960 = vset.pattern.permute.xlu0 0
      %3961 = vperm.xlu0 %3960, %v3919
      %v3962 = vpop.permute.xlu0 %3961
      %3965 = vset.pattern.permute.xlu0 0
      %3966 = vperm.xlu0 %3965, %v3920
      %v3967 = vpop.permute.xlu0 %3966
      %3970 = vset.pattern.permute.xlu0 0
      %3971 = vperm.xlu0 %3970, %v3921
      %v3972 = vpop.permute.xlu0 %3971
      %3975 = vset.pattern.permute.xlu0 0
      %3976 = vperm.xlu0 %3975, %v3922
      %v3977 = vpop.permute.xlu0 %3976
      %3980 = vset.pattern.permute.xlu0 0
      %3981 = vperm.xlu0 %3980, %v3923
      %v3982 = vpop.permute.xlu0 %3981
      %3985 = vset.pattern.permute.xlu0 0
      %3986 = vperm.xlu0 %3985, %v3924
      %v3987 = vpop.permute.xlu0 %3986
      %3990 = vset.pattern.permute.xlu0 0
      %3991 = vperm.xlu0 %3990, %v3925
      %v3992 = vpop.permute.xlu0 %3991
      %3995 = vset.pattern.permute.xlu0 0
      %3996 = vperm.xlu0 %3995, %v3926
      %v3997 = vpop.permute.xlu0 %3996
      %4000 = vset.pattern.permute.xlu0 0
      %4001 = vperm.xlu0 %4000, %v3927
      %v4002 = vpop.permute.xlu0 %4001
      %4005 = vset.pattern.permute.xlu0 0
      %4006 = vperm.xlu0 %4005, %v3928
      %v4007 = vpop.permute.xlu0 %4006
      %4010 = vset.pattern.permute.xlu0 0
      %4011 = vperm.xlu0 %4010, %v3929
      %v4012 = vpop.permute.xlu0 %4011
      %4015 = vset.pattern.permute.xlu0 0
      %4016 = vperm.xlu0 %4015, %v3930
      %v4017 = vpop.permute.xlu0 %4016
      %4020 = vset.pattern.permute.xlu0 0
      %4021 = vperm.xlu0 %4020, %v3931
      %v4022 = vpop.permute.xlu0 %4021
      %4025 = vset.pattern.permute.xlu0 0
      %4026 = vperm.xlu0 %4025, %v3932
      %v4027 = vpop.permute.xlu0 %4026
      %4030 = vset.pattern.permute.xlu0 0
      %4031 = vperm.xlu0 %4030, %v3933
      %v4032 = vpop.permute.xlu0 %4031
      %4035 = vset.pattern.permute.xlu0 0
      %4036 = vperm.xlu0 %4035, %v3934
      %v4037 = vpop.permute.xlu0 %4036
      %4040 = vset.pattern.permute.xlu0 0
      %4041 = vperm.xlu0 %4040, %v3935
      %v4042 = vpop.permute.xlu0 %4041
      %4045 = vset.pattern.permute.xlu0 0
      %4046 = vperm.xlu0 %4045, %v3936
      %v4047 = vpop.permute.xlu0 %4046
      %4050 = vset.pattern.permute.xlu0 0
      %4051 = vperm.xlu0 %4050, %v3937
      %v4052 = vpop.permute.xlu0 %4051
      %4055 = vset.pattern.permute.xlu0 0
      %4056 = vperm.xlu0 %4055, %v3938
      %v4057 = vpop.permute.xlu0 %4056
      %4060 = vset.pattern.permute.xlu0 0
      %4061 = vperm.xlu0 %4060, %v3939
      %v4062 = vpop.permute.xlu0 %4061
      %4065 = vset.pattern.permute.xlu0 0
      %4066 = vperm.xlu0 %4065, %v3940
      %v4067 = vpop.permute.xlu0 %4066
      %4070 = vset.pattern.permute.xlu0 0
      %4071 = vperm.xlu0 %4070, %v3941
      %v4072 = vpop.permute.xlu0 %4071
      %4075 = vset.pattern.permute.xlu0 0
      %4076 = vperm.xlu0 %4075, %v3942
      %v4077 = vpop.permute.xlu0 %4076
      %4080 = vset.pattern.permute.xlu0 0
      %4081 = vperm.xlu0 %4080, %v3943
      %v4082 = vpop.permute.xlu0 %4081
      %4085 = vset.pattern.permute.xlu0 0
      %4086 = vperm.xlu0 %4085, %v3944
      %v4087 = vpop.permute.xlu0 %4086
      %4090 = vset.pattern.permute.xlu0 0
      %4091 = vperm.xlu0 %4090, %v3945
      %v4092 = vpop.permute.xlu0 %4091
      %4095 = vset.pattern.permute.xlu0 0
      %4096 = vperm.xlu0 %4095, %v3946
      %v4097 = vpop.permute.xlu0 %4096
      %4100 = vset.pattern.permute.xlu0 0
      %4101 = vperm.xlu0 %4100, %v3947
      %v4102 = vpop.permute.xlu0 %4101
      %4105 = vset.pattern.permute.xlu0 0
      %4106 = vperm.xlu0 %4105, %v3948
      %v4107 = vpop.permute.xlu0 %4106
      %4110 = vset.pattern.permute.xlu0 0
      %4111 = vperm.xlu0 %4110, %v3949
      %v4112 = vpop.permute.xlu0 %4111
      %4115 = vset.pattern.permute.xlu0 0
      %4116 = vperm.xlu0 %4115, %v3950
      %v4117 = vpop.permute.xlu0 %4116
      %4120 = vset.pattern.permute.xlu0 0
      %4121 = vperm.xlu0 %4120, %v3951
      %v4122 = vpop.permute.xlu0 %4121
      %4125 = vset.pattern.permute.xlu0 0
      %4126 = vperm.xlu0 %4125, %v3952
      %v4127 = vpop.permute.xlu0 %4126
      %4130 = vset.pattern.permute.xlu0 0
      %4131 = vperm.xlu0 %4130, %v3953
      %v4132 = vpop.permute.xlu0 %4131
      %v4134 = vmul.f32 %v3882, %v3957
      %v4135 = vmul.f32 %v3883, %v3962
      %v4136 = vmul.f32 %v3884, %v3967
      %v4137 = vmul.f32 %v3885, %v3972
      %v4138 = vmul.f32 %v3886, %v3977
      %v4139 = vmul.f32 %v3887, %v3982
      %v4140 = vmul.f32 %v3888, %v3987
      %v4141 = vmul.f32 %v3889, %v3992
      %v4142 = vmul.f32 %v3890, %v3997
      %v4143 = vmul.f32 %v3891, %v4002
      %v4144 = vmul.f32 %v3892, %v4007
      %v4145 = vmul.f32 %v3893, %v4012
      %v4146 = vmul.f32 %v3894, %v4017
      %v4147 = vmul.f32 %v3895, %v4022
      %v4148 = vmul.f32 %v3896, %v4027
      %v4149 = vmul.f32 %v3897, %v4032
      %v4150 = vmul.f32 %v3898, %v4037
      %v4151 = vmul.f32 %v3899, %v4042
      %v4152 = vmul.f32 %v3900, %v4047
      %v4153 = vmul.f32 %v3901, %v4052
      %v4154 = vmul.f32 %v3902, %v4057
      %v4155 = vmul.f32 %v3903, %v4062
      %v4156 = vmul.f32 %v3904, %v4067
      %v4157 = vmul.f32 %v3905, %v4072
      %v4158 = vmul.f32 %v3906, %v4077
      %v4159 = vmul.f32 %v3907, %v4082
      %v4160 = vmul.f32 %v3908, %v4087
      %v4161 = vmul.f32 %v3909, %v4092
      %v4162 = vmul.f32 %v3910, %v4097
      %v4163 = vmul.f32 %v3911, %v4102
      %v4164 = vmul.f32 %v3912, %v4107
      %v4165 = vmul.f32 %v3913, %v4112
      %v4166 = vmul.f32 %v3914, %v4117
      %v4167 = vmul.f32 %v3915, %v4122
      %v4168 = vmul.f32 %v3916, %v4127
      %v4169 = vmul.f32 %v3917, %v4132
      %4170 = vst [vmem:[#allocation2] sm:$0xf] 0
      %4171 = vst [vmem:[#allocation2 + $0x4] sm:$0xf] 0
      %vm4172 = vcmask 1041408
      %vm4173 = vsmask.f32 1280
      %vm4174 = vmand %vm4172, %vm4173
      %v4175 = vld [vmem:[#allocation2 + $0x8] sm:$0x3]
      %v4176 = vsel %vm4174, 0, %v4175
      %4177 = vst [vmem:[#allocation2 + $0x8] sm:$0x3] %v4176
      %vm4178 = vcmask 1043457
      %vm4179 = vsmask.f32 7942
      %vm4180 = vmand %vm4178, %vm4179
      %v4181 = vld [vmem:[#allocation2 + $0x98] sm:$0xe]
      %v4182 = vsel %vm4180, 0, %v4181
      %4183 = vst [vmem:[#allocation2 + $0x98] sm:$0xe] %v4182
      %4184 = vst [vmem:[#allocation2 + $0x9c] sm:$0xf] 0
      %4185 = vst [vmem:[#allocation2 + $0xa0] sm:$0x7] 0
      %v4186 = vpack.c.bf16 %v4135, %v4134
      %v4187 = vpack.c.bf16 %v4137, %v4136
      %v4188 = vpack.c.bf16 %v4139, %v4138
      %v4189 = vpack.c.bf16 %v4141, %v4140
      %v4190 = vpack.c.bf16 %v4143, %v4142
      %v4191 = vpack.c.bf16 %v4145, %v4144
      %v4192 = vpack.c.bf16 %v4147, %v4146
      %v4193 = vpack.c.bf16 %v4149, %v4148
      %v4194 = vpack.c.bf16 %v4151, %v4150
      %v4195 = vpack.c.bf16 %v4153, %v4152
      %v4196 = vpack.c.bf16 %v4155, %v4154
      %v4197 = vpack.c.bf16 %v4157, %v4156
      %v4198 = vpack.c.bf16 %v4159, %v4158
      %v4199 = vpack.c.bf16 %v4161, %v4160
      %v4200 = vpack.c.bf16 %v4163, %v4162
      %v4201 = vpack.c.bf16 %v4165, %v4164
      %v4202 = vpack.c.bf16 %v4167, %v4166
      %v4203 = vpack.c.bf16 %v4169, %v4168
      %v4222 = vunpack.c.l.b16 %v4186
      %v4223 = vunpack.c.h.b16 %v4186
      %v4224 = vunpack.c.l.b16 %v4187
      %v4225 = vunpack.c.h.b16 %v4187
      %v4226 = vunpack.c.l.b16 %v4188
      %v4227 = vunpack.c.h.b16 %v4188
      %v4228 = vunpack.c.l.b16 %v4189
      %v4229 = vunpack.c.h.b16 %v4189
      %v4230 = vunpack.c.l.b16 %v4190
      %v4231 = vunpack.c.h.b16 %v4190
      %v4232 = vunpack.c.l.b16 %v4191
      %v4233 = vunpack.c.h.b16 %v4191
      %v4234 = vunpack.c.l.b16 %v4192
      %v4235 = vunpack.c.h.b16 %v4192
      %v4236 = vunpack.c.l.b16 %v4193
      %v4237 = vunpack.c.h.b16 %v4193
      %v4238 = vunpack.c.l.b16 %v4194
      %v4239 = vunpack.c.h.b16 %v4194
      %v4240 = vunpack.c.l.b16 %v4195
      %v4241 = vunpack.c.h.b16 %v4195
      %v4242 = vunpack.c.l.b16 %v4196
      %v4243 = vunpack.c.h.b16 %v4196
      %v4244 = vunpack.c.l.b16 %v4197
      %v4245 = vunpack.c.h.b16 %v4197
      %v4246 = vunpack.c.l.b16 %v4198
      %v4247 = vunpack.c.h.b16 %v4198
      %v4248 = vunpack.c.l.b16 %v4199
      %v4249 = vunpack.c.h.b16 %v4199
      %v4250 = vunpack.c.l.b16 %v4200
      %v4251 = vunpack.c.h.b16 %v4200
      %v4252 = vunpack.c.l.b16 %v4201
      %v4253 = vunpack.c.h.b16 %v4201
      %v4254 = vunpack.c.l.b16 %v4202
      %v4255 = vunpack.c.h.b16 %v4202
      %v4256 = vunpack.c.l.b16 %v4203
      %v4257 = vunpack.c.h.b16 %v4203
      %v4258 = vpack.c.b16 %v4222, %v4222
      %v4259 = vpack.c.b16 %v4223, %v4223
      %v4260 = vpack.c.b16 %v4224, %v4224
      %v4261 = vpack.c.b16 %v4225, %v4225
      %v4262 = vpack.c.b16 %v4226, %v4226
      %v4263 = vpack.c.b16 %v4227, %v4227
      %v4264 = vpack.c.b16 %v4228, %v4228
      %v4265 = vpack.c.b16 %v4229, %v4229
      %v4266 = vpack.c.b16 %v4230, %v4230
      %v4267 = vpack.c.b16 %v4231, %v4231
      %v4268 = vpack.c.b16 %v4232, %v4232
      %v4269 = vpack.c.b16 %v4233, %v4233
      %v4270 = vpack.c.b16 %v4234, %v4234
      %v4271 = vpack.c.b16 %v4235, %v4235
      %v4272 = vpack.c.b16 %v4236, %v4236
      %v4273 = vpack.c.b16 %v4237, %v4237
      %v4274 = vpack.c.b16 %v4238, %v4238
      %v4275 = vpack.c.b16 %v4239, %v4239
      %v4276 = vpack.c.b16 %v4240, %v4240
      %v4277 = vpack.c.b16 %v4241, %v4241
      %v4278 = vpack.c.b16 %v4242, %v4242
      %v4279 = vpack.c.b16 %v4243, %v4243
      %v4280 = vpack.c.b16 %v4244, %v4244
      %v4281 = vpack.c.b16 %v4245, %v4245
      %v4282 = vpack.c.b16 %v4246, %v4246
      %v4283 = vpack.c.b16 %v4247, %v4247
      %v4284 = vpack.c.b16 %v4248, %v4248
      %v4285 = vpack.c.b16 %v4249, %v4249
      %v4286 = vpack.c.b16 %v4250, %v4250
      %v4287 = vpack.c.b16 %v4251, %v4251
      %v4288 = vpack.c.b16 %v4252, %v4252
      %v4289 = vpack.c.b16 %v4253, %v4253
      %v4290 = vpack.c.b16 %v4254, %v4254
      %v4291 = vpack.c.b16 %v4255, %v4255
      %v4292 = vpack.c.b16 %v4256, %v4256
      %v4293 = vpack.c.b16 %v4257, %v4257
      %vm4294 = vsmask.f32 5392
      %vm4295 = vmor %vm4173, %vm4294
      %v4297 = vshrl.u32 %v4258, 16
      %v4299 = vrot.slane %v4297, 6
      %v4300 = vshll.u32 %v4258, 16
      %v4302 = vrot.slane %v4300, 7
      %v4303 = vor.u32 %v4299, %v4302
      %v4304 = vrot.slane %v4303, 4
      %v4306 = vshrl.u32 %v4259, 16
      %v4308 = vrot.slane %v4306, 6
      %v4309 = vshll.u32 %v4259, 16
      %v4311 = vrot.slane %v4309, 7
      %v4312 = vor.u32 %v4308, %v4311
      %v4313 = vsel %vm4295, %v4304, %v4312
      %v4314 = vrot.slane %v4312, 4
      %v4316 = vshrl.u32 %v4260, 16
      %v4318 = vrot.slane %v4316, 6
      %v4319 = vshll.u32 %v4260, 16
      %v4321 = vrot.slane %v4319, 7
      %v4322 = vor.u32 %v4318, %v4321
      %v4323 = vsel %vm4295, %v4314, %v4322
      %v4324 = vrot.slane %v4322, 4
      %v4326 = vshrl.u32 %v4261, 16
      %v4328 = vrot.slane %v4326, 6
      %v4329 = vshll.u32 %v4261, 16
      %v4331 = vrot.slane %v4329, 7
      %v4332 = vor.u32 %v4328, %v4331
      %v4333 = vsel %vm4295, %v4324, %v4332
      %v4334 = vrot.slane %v4332, 4
      %v4336 = vshrl.u32 %v4262, 16
      %v4338 = vrot.slane %v4336, 6
      %v4339 = vshll.u32 %v4262, 16
      %v4341 = vrot.slane %v4339, 7
      %v4342 = vor.u32 %v4338, %v4341
      %v4343 = vsel %vm4295, %v4334, %v4342
      %v4344 = vrot.slane %v4342, 4
      %v4346 = vshrl.u32 %v4263, 16
      %v4348 = vrot.slane %v4346, 6
      %v4349 = vshll.u32 %v4263, 16
      %v4351 = vrot.slane %v4349, 7
      %v4352 = vor.u32 %v4348, %v4351
      %v4353 = vsel %vm4295, %v4344, %v4352
      %v4354 = vrot.slane %v4352, 4
      %v4356 = vshrl.u32 %v4264, 16
      %v4358 = vrot.slane %v4356, 6
      %v4359 = vshll.u32 %v4264, 16
      %v4361 = vrot.slane %v4359, 7
      %v4362 = vor.u32 %v4358, %v4361
      %v4363 = vsel %vm4295, %v4354, %v4362
      %v4364 = vrot.slane %v4362, 4
      %v4366 = vshrl.u32 %v4265, 16
      %v4368 = vrot.slane %v4366, 6
      %v4369 = vshll.u32 %v4265, 16
      %v4371 = vrot.slane %v4369, 7
      %v4372 = vor.u32 %v4368, %v4371
      %v4373 = vsel %vm4295, %v4364, %v4372
      %v4374 = vrot.slane %v4372, 4
      %v4376 = vshrl.u32 %v4266, 16
      %v4378 = vrot.slane %v4376, 6
      %v4379 = vshll.u32 %v4266, 16
      %v4381 = vrot.slane %v4379, 7
      %v4382 = vor.u32 %v4378, %v4381
      %v4383 = vsel %vm4295, %v4374, %v4382
      %v4384 = vrot.slane %v4382, 4
      %v4386 = vshrl.u32 %v4267, 16
      %v4388 = vrot.slane %v4386, 6
      %v4389 = vshll.u32 %v4267, 16
      %v4391 = vrot.slane %v4389, 7
      %v4392 = vor.u32 %v4388, %v4391
      %v4393 = vsel %vm4295, %v4384, %v4392
      %v4394 = vrot.slane %v4392, 4
      %v4396 = vshrl.u32 %v4268, 16
      %v4398 = vrot.slane %v4396, 6
      %v4399 = vshll.u32 %v4268, 16
      %v4401 = vrot.slane %v4399, 7
      %v4402 = vor.u32 %v4398, %v4401
      %v4403 = vsel %vm4295, %v4394, %v4402
      %v4404 = vrot.slane %v4402, 4
      %v4406 = vshrl.u32 %v4269, 16
      %v4408 = vrot.slane %v4406, 6
      %v4409 = vshll.u32 %v4269, 16
      %v4411 = vrot.slane %v4409, 7
      %v4412 = vor.u32 %v4408, %v4411
      %v4413 = vsel %vm4295, %v4404, %v4412
      %v4414 = vrot.slane %v4412, 4
      %v4416 = vshrl.u32 %v4270, 16
      %v4418 = vrot.slane %v4416, 6
      %v4419 = vshll.u32 %v4270, 16
      %v4421 = vrot.slane %v4419, 7
      %v4422 = vor.u32 %v4418, %v4421
      %v4423 = vsel %vm4295, %v4414, %v4422
      %v4424 = vrot.slane %v4422, 4
      %v4426 = vshrl.u32 %v4271, 16
      %v4428 = vrot.slane %v4426, 6
      %v4429 = vshll.u32 %v4271, 16
      %v4431 = vrot.slane %v4429, 7
      %v4432 = vor.u32 %v4428, %v4431
      %v4433 = vsel %vm4295, %v4424, %v4432
      %v4434 = vrot.slane %v4432, 4
      %v4436 = vshrl.u32 %v4272, 16
      %v4438 = vrot.slane %v4436, 6
      %v4439 = vshll.u32 %v4272, 16
      %v4441 = vrot.slane %v4439, 7
      %v4442 = vor.u32 %v4438, %v4441
      %v4443 = vsel %vm4295, %v4434, %v4442
      %v4444 = vrot.slane %v4442, 4
      %v4446 = vshrl.u32 %v4273, 16
      %v4448 = vrot.slane %v4446, 6
      %v4449 = vshll.u32 %v4273, 16
      %v4451 = vrot.slane %v4449, 7
      %v4452 = vor.u32 %v4448, %v4451
      %v4453 = vsel %vm4295, %v4444, %v4452
      %v4454 = vrot.slane %v4452, 4
      %v4456 = vshrl.u32 %v4274, 16
      %v4458 = vrot.slane %v4456, 6
      %v4459 = vshll.u32 %v4274, 16
      %v4461 = vrot.slane %v4459, 7
      %v4462 = vor.u32 %v4458, %v4461
      %v4463 = vsel %vm4295, %v4454, %v4462
      %v4464 = vrot.slane %v4462, 4
      %v4466 = vshrl.u32 %v4275, 16
      %v4468 = vrot.slane %v4466, 6
      %v4469 = vshll.u32 %v4275, 16
      %v4471 = vrot.slane %v4469, 7
      %v4472 = vor.u32 %v4468, %v4471
      %v4473 = vsel %vm4295, %v4464, %v4472
      %v4474 = vrot.slane %v4472, 4
      %v4476 = vshrl.u32 %v4276, 16
      %v4478 = vrot.slane %v4476, 6
      %v4479 = vshll.u32 %v4276, 16
      %v4481 = vrot.slane %v4479, 7
      %v4482 = vor.u32 %v4478, %v4481
      %v4483 = vsel %vm4295, %v4474, %v4482
      %v4484 = vrot.slane %v4482, 4
      %v4486 = vshrl.u32 %v4277, 16
      %v4488 = vrot.slane %v4486, 6
      %v4489 = vshll.u32 %v4277, 16
      %v4491 = vrot.slane %v4489, 7
      %v4492 = vor.u32 %v4488, %v4491
      %v4493 = vsel %vm4295, %v4484, %v4492
      %v4494 = vrot.slane %v4492, 4
      %v4496 = vshrl.u32 %v4278, 16
      %v4498 = vrot.slane %v4496, 6
      %v4499 = vshll.u32 %v4278, 16
      %v4501 = vrot.slane %v4499, 7
      %v4502 = vor.u32 %v4498, %v4501
      %v4503 = vsel %vm4295, %v4494, %v4502
      %v4504 = vrot.slane %v4502, 4
      %v4506 = vshrl.u32 %v4279, 16
      %v4508 = vrot.slane %v4506, 6
      %v4509 = vshll.u32 %v4279, 16
      %v4511 = vrot.slane %v4509, 7
      %v4512 = vor.u32 %v4508, %v4511
      %v4513 = vsel %vm4295, %v4504, %v4512
      %v4514 = vrot.slane %v4512, 4
      %v4516 = vshrl.u32 %v4280, 16
      %v4518 = vrot.slane %v4516, 6
      %v4519 = vshll.u32 %v4280, 16
      %v4521 = vrot.slane %v4519, 7
      %v4522 = vor.u32 %v4518, %v4521
      %v4523 = vsel %vm4295, %v4514, %v4522
      %v4524 = vrot.slane %v4522, 4
      %v4526 = vshrl.u32 %v4281, 16
      %v4528 = vrot.slane %v4526, 6
      %v4529 = vshll.u32 %v4281, 16
      %v4531 = vrot.slane %v4529, 7
      %v4532 = vor.u32 %v4528, %v4531
      %v4533 = vsel %vm4295, %v4524, %v4532
      %v4534 = vrot.slane %v4532, 4
      %v4536 = vshrl.u32 %v4282, 16
      %v4538 = vrot.slane %v4536, 6
      %v4539 = vshll.u32 %v4282, 16
      %v4541 = vrot.slane %v4539, 7
      %v4542 = vor.u32 %v4538, %v4541
      %v4543 = vsel %vm4295, %v4534, %v4542
      %v4544 = vrot.slane %v4542, 4
      %v4546 = vshrl.u32 %v4283, 16
      %v4548 = vrot.slane %v4546, 6
      %v4549 = vshll.u32 %v4283, 16
      %v4551 = vrot.slane %v4549, 7
      %v4552 = vor.u32 %v4548, %v4551
      %v4553 = vsel %vm4295, %v4544, %v4552
      %v4554 = vrot.slane %v4552, 4
      %v4556 = vshrl.u32 %v4284, 16
      %v4558 = vrot.slane %v4556, 6
      %v4559 = vshll.u32 %v4284, 16
      %v4561 = vrot.slane %v4559, 7
      %v4562 = vor.u32 %v4558, %v4561
      %v4563 = vsel %vm4295, %v4554, %v4562
      %v4564 = vrot.slane %v4562, 4
      %v4566 = vshrl.u32 %v4285, 16
      %v4568 = vrot.slane %v4566, 6
      %v4569 = vshll.u32 %v4285, 16
      %v4571 = vrot.slane %v4569, 7
      %v4572 = vor.u32 %v4568, %v4571
      %v4573 = vsel %vm4295, %v4564, %v4572
      %v4574 = vrot.slane %v4572, 4
      %v4576 = vshrl.u32 %v4286, 16
      %v4578 = vrot.slane %v4576, 6
      %v4579 = vshll.u32 %v4286, 16
      %v4581 = vrot.slane %v4579, 7
      %v4582 = vor.u32 %v4578, %v4581
      %v4583 = vsel %vm4295, %v4574, %v4582
      %v4584 = vrot.slane %v4582, 4
      %v4586 = vshrl.u32 %v4287, 16
      %v4588 = vrot.slane %v4586, 6
      %v4589 = vshll.u32 %v4287, 16
      %v4591 = vrot.slane %v4589, 7
      %v4592 = vor.u32 %v4588, %v4591
      %v4593 = vsel %vm4295, %v4584, %v4592
      %v4594 = vrot.slane %v4592, 4
      %v4596 = vshrl.u32 %v4288, 16
      %v4598 = vrot.slane %v4596, 6
      %v4599 = vshll.u32 %v4288, 16
      %v4601 = vrot.slane %v4599, 7
      %v4602 = vor.u32 %v4598, %v4601
      %v4603 = vsel %vm4295, %v4594, %v4602
      %v4604 = vrot.slane %v4602, 4
      %v4606 = vshrl.u32 %v4289, 16
      %v4608 = vrot.slane %v4606, 6
      %v4609 = vshll.u32 %v4289, 16
      %v4611 = vrot.slane %v4609, 7
      %v4612 = vor.u32 %v4608, %v4611
      %v4613 = vsel %vm4295, %v4604, %v4612
      %v4614 = vrot.slane %v4612, 4
      %v4616 = vshrl.u32 %v4290, 16
      %v4618 = vrot.slane %v4616, 6
      %v4619 = vshll.u32 %v4290, 16
      %v4621 = vrot.slane %v4619, 7
      %v4622 = vor.u32 %v4618, %v4621
      %v4623 = vsel %vm4295, %v4614, %v4622
      %v4624 = vrot.slane %v4622, 4
      %v4626 = vshrl.u32 %v4291, 16
      %v4628 = vrot.slane %v4626, 6
      %v4629 = vshll.u32 %v4291, 16
      %v4631 = vrot.slane %v4629, 7
      %v4632 = vor.u32 %v4628, %v4631
      %v4633 = vsel %vm4295, %v4624, %v4632
      %v4634 = vrot.slane %v4632, 4
      %v4636 = vshrl.u32 %v4292, 16
      %v4638 = vrot.slane %v4636, 6
      %v4639 = vshll.u32 %v4292, 16
      %v4641 = vrot.slane %v4639, 7
      %v4642 = vor.u32 %v4638, %v4641
      %v4643 = vsel %vm4295, %v4634, %v4642
      %v4644 = vrot.slane %v4642, 4
      %v4646 = vshrl.u32 %v4293, 16
      %v4648 = vrot.slane %v4646, 6
      %v4649 = vshll.u32 %v4293, 16
      %v4651 = vrot.slane %v4649, 7
      %v4652 = vor.u32 %v4648, %v4651
      %v4653 = vsel %vm4295, %v4644, %v4652
      %v4654 = vrot.slane %v4652, 4
      %v4692 = vld [vmem:[#allocation2 + $0x8] sm:$0xe]
      %v4693 = vsel %vm4180, %v4303, %v4692
      %4694 = vst [vmem:[#allocation2 + $0x8] sm:$0xe] %v4693
      %4695 = vst [vmem:[#allocation2 + $0xc] sm:$0xf] %v4313
      %4696 = vst [vmem:[#allocation2 + $0x10] sm:$0xf] %v4323
      %4697 = vst [vmem:[#allocation2 + $0x14] sm:$0xf] %v4333
      %4698 = vst [vmem:[#allocation2 + $0x18] sm:$0xf] %v4343
      %4699 = vst [vmem:[#allocation2 + $0x1c] sm:$0xf] %v4353
      %4700 = vst [vmem:[#allocation2 + $0x20] sm:$0xf] %v4363
      %4701 = vst [vmem:[#allocation2 + $0x24] sm:$0xf] %v4373
      %4702 = vst [vmem:[#allocation2 + $0x28] sm:$0xf] %v4383
      %4703 = vst [vmem:[#allocation2 + $0x2c] sm:$0xf] %v4393
      %4704 = vst [vmem:[#allocation2 + $0x30] sm:$0xf] %v4403
      %4705 = vst [vmem:[#allocation2 + $0x34] sm:$0xf] %v4413
      %4706 = vst [vmem:[#allocation2 + $0x38] sm:$0xf] %v4423
      %4707 = vst [vmem:[#allocation2 + $0x3c] sm:$0xf] %v4433
      %4708 = vst [vmem:[#allocation2 + $0x40] sm:$0xf] %v4443
      %4709 = vst [vmem:[#allocation2 + $0x44] sm:$0xf] %v4453
      %4710 = vst [vmem:[#allocation2 + $0x48] sm:$0xf] %v4463
      %4711 = vst [vmem:[#allocation2 + $0x4c] sm:$0xf] %v4473
      %4712 = vst [vmem:[#allocation2 + $0x50] sm:$0xf] %v4483
      %4713 = vst [vmem:[#allocation2 + $0x54] sm:$0xf] %v4493
      %4714 = vst [vmem:[#allocation2 + $0x58] sm:$0xf] %v4503
      %4715 = vst [vmem:[#allocation2 + $0x5c] sm:$0xf] %v4513
      %4716 = vst [vmem:[#allocation2 + $0x60] sm:$0xf] %v4523
      %4717 = vst [vmem:[#allocation2 + $0x64] sm:$0xf] %v4533
      %4718 = vst [vmem:[#allocation2 + $0x68] sm:$0xf] %v4543
      %4719 = vst [vmem:[#allocation2 + $0x6c] sm:$0xf] %v4553
      %4720 = vst [vmem:[#allocation2 + $0x70] sm:$0xf] %v4563
      %4721 = vst [vmem:[#allocation2 + $0x74] sm:$0xf] %v4573
      %4722 = vst [vmem:[#allocation2 + $0x78] sm:$0xf] %v4583
      %4723 = vst [vmem:[#allocation2 + $0x7c] sm:$0xf] %v4593
      %4724 = vst [vmem:[#allocation2 + $0x80] sm:$0xf] %v4603
      %4725 = vst [vmem:[#allocation2 + $0x84] sm:$0xf] %v4613
      %4726 = vst [vmem:[#allocation2 + $0x88] sm:$0xf] %v4623
      %4727 = vst [vmem:[#allocation2 + $0x8c] sm:$0xf] %v4633
      %4728 = vst [vmem:[#allocation2 + $0x90] sm:$0xf] %v4643
      %4729 = vst [vmem:[#allocation2 + $0x94] sm:$0xf] %v4653
      %v4730 = vld [vmem:[#allocation2 + $0x98] sm:$0x3]
      %v4731 = vsel %vm4174, %v4654, %v4730
      %4732 = vst [vmem:[#allocation2 + $0x98] sm:$0x3] %v4731
      %v4733 = vld [vmem:[%s320] sm:$0xf]
      %v4734 = vld [vmem:[%s320 + $0x4] sm:$0xf]
      %v4735 = vld [vmem:[%s320 + $0x8] sm:$0xf]
      %v4736 = vld [vmem:[%s320 + $0xc] sm:$0xf]
      %v4737 = vld [vmem:[%s320 + $0x10] sm:$0xf]
      %v4738 = vld [vmem:[%s320 + $0x14] sm:$0xf]
      %v4739 = vld [vmem:[%s320 + $0x18] sm:$0xf]
      %v4740 = vld [vmem:[%s320 + $0x1c] sm:$0xf]
      %v4741 = vld [vmem:[%s320 + $0x20] sm:$0xf]
      %v4742 = vld [vmem:[%s320 + $0x24] sm:$0xf]
      %v4743 = vld [vmem:[%s320 + $0x28] sm:$0xf]
      %v4744 = vld [vmem:[%s320 + $0x2c] sm:$0xf]
      %v4745 = vld [vmem:[%s320 + $0x30] sm:$0xf]
      %v4746 = vld [vmem:[%s320 + $0x34] sm:$0xf]
      %v4747 = vld [vmem:[%s320 + $0x38] sm:$0xf]
      %v4748 = vld [vmem:[%s320 + $0x3c] sm:$0xf]
      %v4749 = vld [vmem:[%s320 + $0x40] sm:$0xf]
      %v4750 = vld [vmem:[%s320 + $0x44] sm:$0xf]
      %v4751 = vld [vmem:[%s320 + $0x48] sm:$0xf]
      %v4752 = vld [vmem:[%s320 + $0x4c] sm:$0xf]
      %v4753 = vld [vmem:[%s320 + $0x50] sm:$0xf]
      %v4754 = vld [vmem:[%s320 + $0x54] sm:$0xf]
      %v4755 = vld [vmem:[%s320 + $0x58] sm:$0xf]
      %v4756 = vld [vmem:[%s320 + $0x5c] sm:$0xf]
      %v4757 = vld [vmem:[%s320 + $0x60] sm:$0xf]
      %v4758 = vld [vmem:[%s320 + $0x64] sm:$0xf]
      %v4759 = vld [vmem:[%s320 + $0x68] sm:$0xf]
      %v4760 = vld [vmem:[%s320 + $0x6c] sm:$0xf]
      %v4761 = vld [vmem:[%s320 + $0x70] sm:$0xf]
      %v4762 = vld [vmem:[%s320 + $0x74] sm:$0xf]
      %v4763 = vld [vmem:[%s320 + $0x78] sm:$0xf]
      %v4764 = vld [vmem:[%s320 + $0x7c] sm:$0xf]
      %v4765 = vld [vmem:[%s320 + $0x80] sm:$0xf]
      %v4766 = vld [vmem:[%s320 + $0x84] sm:$0xf]
      %v4767 = vld [vmem:[%s320 + $0x88] sm:$0xf]
      %v4768 = vld [vmem:[%s320 + $0x8c] sm:$0xf]
      %v4769 = vld [vmem:[%s6] sm:$0xf]
      %v4770 = vld [vmem:[#allocation2] sm:$0xf]
      %v4771 = vld [vmem:[#allocation2 + $0x4] sm:$0xf]
      %v4772 = vld [vmem:[#allocation2 + $0x8] sm:$0xf]
      %v4773 = vld [vmem:[#allocation2 + $0xc] sm:$0xf]
      %v4774 = vld [vmem:[#allocation2 + $0x10] sm:$0xf]
      %v4775 = vld [vmem:[#allocation2 + $0x14] sm:$0xf]
      %v4776 = vld [vmem:[#allocation2 + $0x18] sm:$0xf]
      %v4777 = vld [vmem:[#allocation2 + $0x1c] sm:$0xf]
      %v4778 = vld [vmem:[#allocation2 + $0x20] sm:$0xf]
      %v4779 = vld [vmem:[#allocation2 + $0x24] sm:$0xf]
      %v4780 = vld [vmem:[#allocation2 + $0x28] sm:$0xf]
      %v4781 = vld [vmem:[#allocation2 + $0x2c] sm:$0xf]
      %v4782 = vld [vmem:[#allocation2 + $0x30] sm:$0xf]
      %v4783 = vld [vmem:[#allocation2 + $0x34] sm:$0xf]
      %v4784 = vld [vmem:[#allocation2 + $0x38] sm:$0xf]
      %v4785 = vld [vmem:[#allocation2 + $0x3c] sm:$0xf]
      %v4786 = vld [vmem:[#allocation2 + $0x40] sm:$0xf]
      %v4787 = vld [vmem:[#allocation2 + $0x44] sm:$0xf]
      %v4788 = vld [vmem:[#allocation2 + $0x48] sm:$0xf]
      %v4789 = vld [vmem:[#allocation2 + $0x4c] sm:$0xf]
      %v4790 = vld [vmem:[#allocation2 + $0x50] sm:$0xf]
      %v4791 = vld [vmem:[#allocation2 + $0x54] sm:$0xf]
      %v4792 = vld [vmem:[#allocation2 + $0x58] sm:$0xf]
      %v4793 = vld [vmem:[#allocation2 + $0x5c] sm:$0xf]
      %v4794 = vld [vmem:[#allocation2 + $0x60] sm:$0xf]
      %v4795 = vld [vmem:[#allocation2 + $0x64] sm:$0xf]
      %v4796 = vld [vmem:[#allocation2 + $0x68] sm:$0xf]
      %v4797 = vld [vmem:[#allocation2 + $0x6c] sm:$0xf]
      %v4798 = vld [vmem:[#allocation2 + $0x70] sm:$0xf]
      %v4799 = vld [vmem:[#allocation2 + $0x74] sm:$0xf]
      %v4800 = vld [vmem:[#allocation2 + $0x78] sm:$0xf]
      %v4801 = vld [vmem:[#allocation2 + $0x7c] sm:$0xf]
      %v4802 = vld [vmem:[#allocation2 + $0x80] sm:$0xf]
      %v4803 = vld [vmem:[#allocation2 + $0x84] sm:$0xf]
      %v4804 = vld [vmem:[#allocation2 + $0x88] sm:$0xf]
      %v4805 = vld [vmem:[#allocation2 + $0x8c] sm:$0xf]
      %v4806 = vld [vmem:[%s5] sm:$0xf]
      %v4807 = vld [vmem:[%s5 + $0x4] sm:$0xf]
      %v4808 = vld [vmem:[%s5 + $0x8] sm:$0xf]
      %v4809 = vld [vmem:[%s5 + $0xc] sm:$0xf]
      %v4810 = vld [vmem:[%s5 + $0x10] sm:$0xf]
      %v4811 = vld [vmem:[%s5 + $0x14] sm:$0xf]
      %v4812 = vld [vmem:[%s5 + $0x18] sm:$0xf]
      %v4813 = vld [vmem:[%s5 + $0x1c] sm:$0xf]
      %v4814 = vld [vmem:[%s5 + $0x20] sm:$0xf]
      %v4815 = vld [vmem:[%s5 + $0x24] sm:$0xf]
      %v4816 = vld [vmem:[%s5 + $0x28] sm:$0xf]
      %v4817 = vld [vmem:[%s5 + $0x2c] sm:$0xf]
      %v4818 = vld [vmem:[%s5 + $0x30] sm:$0xf]
      %v4819 = vld [vmem:[%s5 + $0x34] sm:$0xf]
      %v4820 = vld [vmem:[%s5 + $0x38] sm:$0xf]
      %v4821 = vld [vmem:[%s5 + $0x3c] sm:$0xf]
      %v4858 = vunpack.c.l.b16 %v4770
      %v4859 = vunpack.c.l.b16 %v4771
      %v4860 = vunpack.c.l.b16 %v4772
      %v4861 = vunpack.c.l.b16 %v4773
      %v4862 = vunpack.c.l.b16 %v4774
      %v4863 = vunpack.c.l.b16 %v4775
      %v4864 = vunpack.c.l.b16 %v4776
      %v4865 = vunpack.c.l.b16 %v4777
      %v4866 = vunpack.c.l.b16 %v4778
      %v4867 = vunpack.c.l.b16 %v4779
      %v4868 = vunpack.c.l.b16 %v4780
      %v4869 = vunpack.c.l.b16 %v4781
      %v4870 = vunpack.c.l.b16 %v4782
      %v4871 = vunpack.c.l.b16 %v4783
      %v4872 = vunpack.c.l.b16 %v4784
      %v4873 = vunpack.c.l.b16 %v4785
      %v4874 = vunpack.c.l.b16 %v4786
      %v4875 = vunpack.c.l.b16 %v4787
      %v4876 = vunpack.c.l.b16 %v4788
      %v4877 = vunpack.c.l.b16 %v4789
      %v4878 = vunpack.c.l.b16 %v4790
      %v4879 = vunpack.c.l.b16 %v4791
      %v4880 = vunpack.c.l.b16 %v4792
      %v4881 = vunpack.c.l.b16 %v4793
      %v4882 = vunpack.c.l.b16 %v4794
      %v4883 = vunpack.c.l.b16 %v4795
      %v4884 = vunpack.c.l.b16 %v4796
      %v4885 = vunpack.c.l.b16 %v4797
      %v4886 = vunpack.c.l.b16 %v4798
      %v4887 = vunpack.c.l.b16 %v4799
      %v4888 = vunpack.c.l.b16 %v4800
      %v4889 = vunpack.c.l.b16 %v4801
      %v4890 = vunpack.c.l.b16 %v4802
      %v4891 = vunpack.c.l.b16 %v4803
      %v4892 = vunpack.c.l.b16 %v4804
      %v4893 = vunpack.c.l.b16 %v4805
      %v4894 = vpack.c.b16 %v4859, %v4858
      %v4895 = vpack.c.b16 %v4861, %v4860
      %v4896 = vpack.c.b16 %v4863, %v4862
      %v4897 = vpack.c.b16 %v4865, %v4864
      %v4898 = vpack.c.b16 %v4867, %v4866
      %v4899 = vpack.c.b16 %v4869, %v4868
      %v4900 = vpack.c.b16 %v4871, %v4870
      %v4901 = vpack.c.b16 %v4873, %v4872
      %v4902 = vpack.c.b16 %v4875, %v4874
      %v4903 = vpack.c.b16 %v4877, %v4876
      %v4904 = vpack.c.b16 %v4879, %v4878
      %v4905 = vpack.c.b16 %v4881, %v4880
      %v4906 = vpack.c.b16 %v4883, %v4882
      %v4907 = vpack.c.b16 %v4885, %v4884
      %v4908 = vpack.c.b16 %v4887, %v4886
      %v4909 = vpack.c.b16 %v4889, %v4888
      %v4910 = vpack.c.b16 %v4891, %v4890
      %v4911 = vpack.c.b16 %v4893, %v4892
      %v4946 = vunpack.c.l.b16 %v4806
      %v4947 = vunpack.c.l.b16 %v4807
      %v4948 = vunpack.c.l.b16 %v4808
      %v4949 = vunpack.c.l.b16 %v4809
      %v4950 = vunpack.c.l.b16 %v4810
      %v4951 = vunpack.c.l.b16 %v4811
      %v4952 = vunpack.c.l.b16 %v4812
      %v4953 = vunpack.c.l.b16 %v4813
      %v4954 = vunpack.c.l.b16 %v4814
      %v4955 = vunpack.c.l.b16 %v4815
      %v4956 = vunpack.c.l.b16 %v4816
      %v4957 = vunpack.c.l.b16 %v4817
      %v4958 = vunpack.c.l.b16 %v4818
      %v4959 = vunpack.c.l.b16 %v4819
      %v4960 = vunpack.c.l.b16 %v4820
      %v4961 = vunpack.c.l.b16 %v4821
      %v4962 = vpack.c.b16 %v4947, %v4946
      %v4963 = vpack.c.b16 %v4949, %v4948
      %v4964 = vpack.c.b16 %v4951, %v4950
      %v4965 = vpack.c.b16 %v4953, %v4952
      %v4966 = vpack.c.b16 %v4955, %v4954
      %v4967 = vpack.c.b16 %v4957, %v4956
      %v4968 = vpack.c.b16 %v4959, %v4958
      %v4969 = vpack.c.b16 %v4961, %v4960
      %4978 = vmatprep.subr.bf16.mxu0 0
      %4979 = vmatpush1.bf16.msra.mxu0 %v4962
      %4980 = vmatprep.subr.bf16.mxu0 0
      %4981 = vmatpush1.bf16.msra.mxu0 %v4963
      %4982 = vmatprep.subr.bf16.mxu0 0
      %4983 = vmatpush1.bf16.msra.mxu0 %v4964
      %4984 = vmatprep.subr.bf16.mxu0 0
      %4985 = vmatpush1.bf16.msra.mxu0 %v4965
      %4986 = vmatprep.subr.bf16.mxu0 0
      %4987 = vmatpush1.bf16.msra.mxu0 %v4966
      %4988 = vmatprep.subr.bf16.mxu0 0
      %4989 = vmatpush1.bf16.msra.mxu0 %v4967
      %4990 = vmatprep.subr.bf16.mxu0 0
      %4991 = vmatpush1.bf16.msra.mxu0 %v4968
      %4992 = vmatprep.subr.bf16.mxu0 0
      %4993 = vmatpush1.bf16.msra.mxu0 %v4969
      %4994 = vmatprep.subr.bf16.mxu0 0
      %4995 = vmatpush1.bf16.msra.mxu0 0
      %4996 = vmatprep.subr.bf16.mxu0 0
      %4997 = vmatpush1.bf16.msra.mxu0 0
      %4998 = vmatprep.subr.bf16.mxu0 0
      %4999 = vmatpush1.bf16.msra.mxu0 0
      %5000 = vmatprep.subr.bf16.mxu0 0
      %5001 = vmatpush1.bf16.msra.mxu0 0
      %5002 = vmatprep.subr.bf16.mxu0 0
      %5003 = vmatpush1.bf16.msra.mxu0 0
      %5004 = vmatprep.subr.bf16.mxu0 0
      %5005 = vmatpush1.bf16.msra.mxu0 0
      %5006 = vmatprep.subr.bf16.mxu0 0
      %5007 = vmatpush1.bf16.msra.mxu0 0
      %5008 = vmatprep.subr.bf16.mxu0 0
      %5009 = vmatpush1.bf16.msra.mxu0 0
      %5010 = vmatprep.mubr.bf16.mxu0 0
      %5011 = vmatmul.mubr.bf16.gmra.mrb[0].mxu0 %v4894
      %v5012 = vpop.f32.mrb[0].mxu0
      %v5013 = vadd.f32 0.0, %v5012
      %v5014 = vpop.f32.mrb[0].mxu0
      %v5015 = vpop.f32.mrb[0].mxu0
      %v5016 = vadd.f32 0.0, %v5015
      %v5017 = vpop.f32.mrb[0].mxu0
      %5018 = vmatprep.mubr.bf16.mxu0 0
      %5019 = vmatmul.mubr.bf16.gmra.mrb[0].mxu0 %v4895
      %v5020 = vpop.f32.mrb[0].mxu0
      %v5021 = vadd.f32 0.0, %v5020
      %v5022 = vpop.f32.mrb[0].mxu0
      %v5023 = vpop.f32.mrb[0].mxu0
      %v5024 = vadd.f32 0.0, %v5023
      %v5025 = vpop.f32.mrb[0].mxu0
      %5026 = vmatprep.mubr.bf16.mxu0 0
      %5027 = vmatmul.mubr.bf16.gmra.mrb[0].mxu0 %v4896
      %v5028 = vpop.f32.mrb[0].mxu0
      %v5029 = vadd.f32 0.0, %v5028
      %v5030 = vpop.f32.mrb[0].mxu0
      %v5031 = vpop.f32.mrb[0].mxu0
      %v5032 = vadd.f32 0.0, %v5031
      %v5033 = vpop.f32.mrb[0].mxu0
      %5034 = vmatprep.mubr.bf16.mxu0 0
      %5035 = vmatmul.mubr.bf16.gmra.mrb[0].mxu0 %v4897
      %v5036 = vpop.f32.mrb[0].mxu0
      %v5037 = vadd.f32 0.0, %v5036
      %v5038 = vpop.f32.mrb[0].mxu0
      %v5039 = vpop.f32.mrb[0].mxu0
      %v5040 = vadd.f32 0.0, %v5039
      %v5041 = vpop.f32.mrb[0].mxu0
      %5042 = vmatprep.mubr.bf16.mxu0 0
      %5043 = vmatmul.mubr.bf16.gmra.mrb[0].mxu0 %v4898
      %v5044 = vpop.f32.mrb[0].mxu0
      %v5045 = vadd.f32 0.0, %v5044
      %v5046 = vpop.f32.mrb[0].mxu0
      %v5047 = vpop.f32.mrb[0].mxu0
      %v5048 = vadd.f32 0.0, %v5047
      %v5049 = vpop.f32.mrb[0].mxu0
      %5050 = vmatprep.mubr.bf16.mxu0 0
      %5051 = vmatmul.mubr.bf16.gmra.mrb[0].mxu0 %v4899
      %v5052 = vpop.f32.mrb[0].mxu0
      %v5053 = vadd.f32 0.0, %v5052
      %v5054 = vpop.f32.mrb[0].mxu0
      %v5055 = vpop.f32.mrb[0].mxu0
      %v5056 = vadd.f32 0.0, %v5055
      %v5057 = vpop.f32.mrb[0].mxu0
      %5058 = vmatprep.mubr.bf16.mxu0 0
      %5059 = vmatmul.mubr.bf16.gmra.mrb[0].mxu0 %v4900
      %v5060 = vpop.f32.mrb[0].mxu0
      %v5061 = vadd.f32 0.0, %v5060
      %v5062 = vpop.f32.mrb[0].mxu0
      %v5063 = vpop.f32.mrb[0].mxu0
      %v5064 = vadd.f32 0.0, %v5063
      %v5065 = vpop.f32.mrb[0].mxu0
      %5066 = vmatprep.mubr.bf16.mxu0 0
      %5067 = vmatmul.mubr.bf16.gmra.mrb[0].mxu0 %v4901
      %v5068 = vpop.f32.mrb[0].mxu0
      %v5069 = vadd.f32 0.0, %v5068
      %v5070 = vpop.f32.mrb[0].mxu0
      %v5071 = vpop.f32.mrb[0].mxu0
      %v5072 = vadd.f32 0.0, %v5071
      %v5073 = vpop.f32.mrb[0].mxu0
      %5074 = vmatprep.mubr.bf16.mxu0 0
      %5075 = vmatmul.mubr.bf16.gmra.mrb[0].mxu0 %v4902
      %v5076 = vpop.f32.mrb[0].mxu0
      %v5077 = vadd.f32 0.0, %v5076
      %v5078 = vpop.f32.mrb[0].mxu0
      %v5079 = vpop.f32.mrb[0].mxu0
      %v5080 = vadd.f32 0.0, %v5079
      %v5081 = vpop.f32.mrb[0].mxu0
      %5082 = vmatprep.mubr.bf16.mxu0 0
      %5083 = vmatmul.mubr.bf16.gmra.mrb[0].mxu0 %v4903
      %v5084 = vpop.f32.mrb[0].mxu0
      %v5085 = vadd.f32 0.0, %v5084
      %v5086 = vpop.f32.mrb[0].mxu0
      %v5087 = vpop.f32.mrb[0].mxu0
      %v5088 = vadd.f32 0.0, %v5087
      %v5089 = vpop.f32.mrb[0].mxu0
      %5090 = vmatprep.mubr.bf16.mxu0 0
      %5091 = vmatmul.mubr.bf16.gmra.mrb[0].mxu0 %v4904
      %v5092 = vpop.f32.mrb[0].mxu0
      %v5093 = vadd.f32 0.0, %v5092
      %v5094 = vpop.f32.mrb[0].mxu0
      %v5095 = vpop.f32.mrb[0].mxu0
      %v5096 = vadd.f32 0.0, %v5095
      %v5097 = vpop.f32.mrb[0].mxu0
      %5098 = vmatprep.mubr.bf16.mxu0 0
      %5099 = vmatmul.mubr.bf16.gmra.mrb[0].mxu0 %v4905
      %v5100 = vpop.f32.mrb[0].mxu0
      %v5101 = vadd.f32 0.0, %v5100
      %v5102 = vpop.f32.mrb[0].mxu0
      %v5103 = vpop.f32.mrb[0].mxu0
      %v5104 = vadd.f32 0.0, %v5103
      %v5105 = vpop.f32.mrb[0].mxu0
      %5106 = vmatprep.mubr.bf16.mxu0 0
      %5107 = vmatmul.mubr.bf16.gmra.mrb[0].mxu0 %v4906
      %v5108 = vpop.f32.mrb[0].mxu0
      %v5109 = vadd.f32 0.0, %v5108
      %v5110 = vpop.f32.mrb[0].mxu0
      %v5111 = vpop.f32.mrb[0].mxu0
      %v5112 = vadd.f32 0.0, %v5111
      %v5113 = vpop.f32.mrb[0].mxu0
      %5114 = vmatprep.mubr.bf16.mxu0 0
      %5115 = vmatmul.mubr.bf16.gmra.mrb[0].mxu0 %v4907
      %v5116 = vpop.f32.mrb[0].mxu0
      %v5117 = vadd.f32 0.0, %v5116
      %v5118 = vpop.f32.mrb[0].mxu0
      %v5119 = vpop.f32.mrb[0].mxu0
      %v5120 = vadd.f32 0.0, %v5119
      %v5121 = vpop.f32.mrb[0].mxu0
      %5122 = vmatprep.mubr.bf16.mxu0 0
      %5123 = vmatmul.mubr.bf16.gmra.mrb[0].mxu0 %v4908
      %v5124 = vpop.f32.mrb[0].mxu0
      %v5125 = vadd.f32 0.0, %v5124
      %v5126 = vpop.f32.mrb[0].mxu0
      %v5127 = vpop.f32.mrb[0].mxu0
      %v5128 = vadd.f32 0.0, %v5127
      %v5129 = vpop.f32.mrb[0].mxu0
      %5130 = vmatprep.mubr.bf16.mxu0 0
      %5131 = vmatmul.mubr.bf16.gmra.mrb[0].mxu0 %v4909
      %v5132 = vpop.f32.mrb[0].mxu0
      %v5133 = vadd.f32 0.0, %v5132
      %v5134 = vpop.f32.mrb[0].mxu0
      %v5135 = vpop.f32.mrb[0].mxu0
      %v5136 = vadd.f32 0.0, %v5135
      %v5137 = vpop.f32.mrb[0].mxu0
      %5138 = vmatprep.mubr.bf16.mxu0 0
      %5139 = vmatmul.mubr.bf16.gmra.mrb[0].mxu0 %v4910
      %v5140 = vpop.f32.mrb[0].mxu0
      %v5141 = vadd.f32 0.0, %v5140
      %v5142 = vpop.f32.mrb[0].mxu0
      %v5143 = vpop.f32.mrb[0].mxu0
      %v5144 = vadd.f32 0.0, %v5143
      %v5145 = vpop.f32.mrb[0].mxu0
      %5146 = vmatprep.mubr.bf16.mxu0 0
      %5147 = vmatmul.mubr.bf16.gmra.mrb[0].mxu0 %v4911
      %v5148 = vpop.f32.mrb[0].mxu0
      %v5149 = vadd.f32 0.0, %v5148
      %v5150 = vpop.f32.mrb[0].mxu0
      %v5151 = vpop.f32.mrb[0].mxu0
      %v5152 = vadd.f32 0.0, %v5151
      %v5153 = vpop.f32.mrb[0].mxu0
      %5154 = vdwg.mxu0
      %v5191 = vunpack.c.l.b16 %v4733
      %v5192 = vunpack.c.l.b16 %v4734
      %v5193 = vunpack.c.l.b16 %v4735
      %v5194 = vunpack.c.l.b16 %v4736
      %v5195 = vunpack.c.l.b16 %v4737
      %v5196 = vunpack.c.l.b16 %v4738
      %v5197 = vunpack.c.l.b16 %v4739
      %v5198 = vunpack.c.l.b16 %v4740
      %v5199 = vunpack.c.l.b16 %v4741
      %v5200 = vunpack.c.l.b16 %v4742
      %v5201 = vunpack.c.l.b16 %v4743
      %v5202 = vunpack.c.l.b16 %v4744
      %v5203 = vunpack.c.l.b16 %v4745
      %v5204 = vunpack.c.l.b16 %v4746
      %v5205 = vunpack.c.l.b16 %v4747
      %v5206 = vunpack.c.l.b16 %v4748
      %v5207 = vunpack.c.l.b16 %v4749
      %v5208 = vunpack.c.l.b16 %v4750
      %v5209 = vunpack.c.l.b16 %v4751
      %v5210 = vunpack.c.l.b16 %v4752
      %v5211 = vunpack.c.l.b16 %v4753
      %v5212 = vunpack.c.l.b16 %v4754
      %v5213 = vunpack.c.l.b16 %v4755
      %v5214 = vunpack.c.l.b16 %v4756
      %v5215 = vunpack.c.l.b16 %v4757
      %v5216 = vunpack.c.l.b16 %v4758
      %v5217 = vunpack.c.l.b16 %v4759
      %v5218 = vunpack.c.l.b16 %v4760
      %v5219 = vunpack.c.l.b16 %v4761
      %v5220 = vunpack.c.l.b16 %v4762
      %v5221 = vunpack.c.l.b16 %v4763
      %v5222 = vunpack.c.l.b16 %v4764
      %v5223 = vunpack.c.l.b16 %v4765
      %v5224 = vunpack.c.l.b16 %v4766
      %v5225 = vunpack.c.l.b16 %v4767
      %v5226 = vunpack.c.l.b16 %v4768
      %v5227 = vpack.c.b16 %v5192, %v5191
      %v5228 = vpack.c.b16 %v5194, %v5193
      %v5229 = vpack.c.b16 %v5196, %v5195
      %v5230 = vpack.c.b16 %v5198, %v5197
      %v5231 = vpack.c.b16 %v5200, %v5199
      %v5232 = vpack.c.b16 %v5202, %v5201
      %v5233 = vpack.c.b16 %v5204, %v5203
      %v5234 = vpack.c.b16 %v5206, %v5205
      %v5235 = vpack.c.b16 %v5208, %v5207
      %v5236 = vpack.c.b16 %v5210, %v5209
      %v5237 = vpack.c.b16 %v5212, %v5211
      %v5238 = vpack.c.b16 %v5214, %v5213
      %v5239 = vpack.c.b16 %v5216, %v5215
      %v5240 = vpack.c.b16 %v5218, %v5217
      %v5241 = vpack.c.b16 %v5220, %v5219
      %v5242 = vpack.c.b16 %v5222, %v5221
      %v5243 = vpack.c.b16 %v5224, %v5223
      %v5244 = vpack.c.b16 %v5226, %v5225
      %v5246 = vsel %vm608, %v5227, 0
      %v5249 = vsel %vm608, %v5228, 0
      %v5252 = vsel %vm608, %v5229, 0
      %v5255 = vsel %vm608, %v5230, 0
      %v5258 = vsel %vm608, %v5231, 0
      %v5261 = vsel %vm608, %v5232, 0
      %v5264 = vsel %vm608, %v5233, 0
      %v5267 = vsel %vm608, %v5234, 0
      %v5270 = vsel %vm608, %v5235, 0
      %v5273 = vsel %vm608, %v5236, 0
      %v5276 = vsel %vm608, %v5237, 0
      %v5279 = vsel %vm608, %v5238, 0
      %v5282 = vsel %vm608, %v5239, 0
      %v5285 = vsel %vm608, %v5240, 0
      %v5288 = vsel %vm608, %v5241, 0
      %v5291 = vsel %vm608, %v5242, 0
      %v5294 = vsel %vm608, %v5243, 0
      %v5297 = vsel %vm608, %v5244, 0
      %v5300 = vsel %vm663, %v4769, 0
      %5302 = vmatprep.subr.bf16.mxu0 0
      %5303 = vmatpush1.bf16.msra.mxu0 %v5300
      %5304 = vmatprep.subr.bf16.mxu0 0
      %5305 = vmatpush1.bf16.msra.mxu0 0
      %5306 = vmatprep.subr.bf16.mxu0 0
      %5307 = vmatpush1.bf16.msra.mxu0 0
      %5308 = vmatprep.subr.bf16.mxu0 0
      %5309 = vmatpush1.bf16.msra.mxu0 0
      %5310 = vmatprep.subr.bf16.mxu0 0
      %5311 = vmatpush1.bf16.msra.mxu0 0
      %5312 = vmatprep.subr.bf16.mxu0 0
      %5313 = vmatpush1.bf16.msra.mxu0 0
      %5314 = vmatprep.subr.bf16.mxu0 0
      %5315 = vmatpush1.bf16.msra.mxu0 0
      %5316 = vmatprep.subr.bf16.mxu0 0
      %5317 = vmatpush1.bf16.msra.mxu0 0
      %5318 = vmatprep.subr.bf16.mxu0 0
      %5319 = vmatpush1.bf16.msra.mxu0 0
      %5320 = vmatprep.subr.bf16.mxu0 0
      %5321 = vmatpush1.bf16.msra.mxu0 0
      %5322 = vmatprep.subr.bf16.mxu0 0
      %5323 = vmatpush1.bf16.msra.mxu0 0
      %5324 = vmatprep.subr.bf16.mxu0 0
      %5325 = vmatpush1.bf16.msra.mxu0 0
      %5326 = vmatprep.subr.bf16.mxu0 0
      %5327 = vmatpush1.bf16.msra.mxu0 0
      %5328 = vmatprep.subr.bf16.mxu0 0
      %5329 = vmatpush1.bf16.msra.mxu0 0
      %5330 = vmatprep.subr.bf16.mxu0 0
      %5331 = vmatpush1.bf16.msra.mxu0 0
      %5332 = vmatprep.subr.bf16.mxu0 0
      %5333 = vmatpush1.bf16.msra.mxu0 0
      %5334 = vmatprep.mubr.bf16.mxu0 0
      %5335 = vmatmul.mubr.bf16.gmra.mrb[0].mxu0 %v5246
      %v5336 = vpop.f32.mrb[0].mxu0
      %v5337 = vadd.f32 %v5013, %v5336
      %v5338 = vpop.f32.mrb[0].mxu0
      %v5339 = vpop.f32.mrb[0].mxu0
      %v5340 = vadd.f32 %v5016, %v5339
      %v5341 = vpop.f32.mrb[0].mxu0
      %5342 = vmatprep.mubr.bf16.mxu0 0
      %5343 = vmatmul.mubr.bf16.gmra.mrb[0].mxu0 %v5249
      %v5344 = vpop.f32.mrb[0].mxu0
      %v5345 = vadd.f32 %v5021, %v5344
      %v5346 = vpop.f32.mrb[0].mxu0
      %v5347 = vpop.f32.mrb[0].mxu0
      %v5348 = vadd.f32 %v5024, %v5347
      %v5349 = vpop.f32.mrb[0].mxu0
      %5350 = vmatprep.mubr.bf16.mxu0 0
      %5351 = vmatmul.mubr.bf16.gmra.mrb[0].mxu0 %v5252
      %v5352 = vpop.f32.mrb[0].mxu0
      %v5353 = vadd.f32 %v5029, %v5352
      %v5354 = vpop.f32.mrb[0].mxu0
      %v5355 = vpop.f32.mrb[0].mxu0
      %v5356 = vadd.f32 %v5032, %v5355
      %v5357 = vpop.f32.mrb[0].mxu0
      %5358 = vmatprep.mubr.bf16.mxu0 0
      %5359 = vmatmul.mubr.bf16.gmra.mrb[0].mxu0 %v5255
      %v5360 = vpop.f32.mrb[0].mxu0
      %v5361 = vadd.f32 %v5037, %v5360
      %v5362 = vpop.f32.mrb[0].mxu0
      %v5363 = vpop.f32.mrb[0].mxu0
      %v5364 = vadd.f32 %v5040, %v5363
      %v5365 = vpop.f32.mrb[0].mxu0
      %5366 = vmatprep.mubr.bf16.mxu0 0
      %5367 = vmatmul.mubr.bf16.gmra.mrb[0].mxu0 %v5258
      %v5368 = vpop.f32.mrb[0].mxu0
      %v5369 = vadd.f32 %v5045, %v5368
      %v5370 = vpop.f32.mrb[0].mxu0
      %v5371 = vpop.f32.mrb[0].mxu0
      %v5372 = vadd.f32 %v5048, %v5371
      %v5373 = vpop.f32.mrb[0].mxu0
      %5374 = vmatprep.mubr.bf16.mxu0 0
      %5375 = vmatmul.mubr.bf16.gmra.mrb[0].mxu0 %v5261
      %v5376 = vpop.f32.mrb[0].mxu0
      %v5377 = vadd.f32 %v5053, %v5376
      %v5378 = vpop.f32.mrb[0].mxu0
      %v5379 = vpop.f32.mrb[0].mxu0
      %v5380 = vadd.f32 %v5056, %v5379
      %v5381 = vpop.f32.mrb[0].mxu0
      %5382 = vmatprep.mubr.bf16.mxu0 0
      %5383 = vmatmul.mubr.bf16.gmra.mrb[0].mxu0 %v5264
      %v5384 = vpop.f32.mrb[0].mxu0
      %v5385 = vadd.f32 %v5061, %v5384
      %v5386 = vpop.f32.mrb[0].mxu0
      %v5387 = vpop.f32.mrb[0].mxu0
      %v5388 = vadd.f32 %v5064, %v5387
      %v5389 = vpop.f32.mrb[0].mxu0
      %5390 = vmatprep.mubr.bf16.mxu0 0
      %5391 = vmatmul.mubr.bf16.gmra.mrb[0].mxu0 %v5267
      %v5392 = vpop.f32.mrb[0].mxu0
      %v5393 = vadd.f32 %v5069, %v5392
      %v5394 = vpop.f32.mrb[0].mxu0
      %v5395 = vpop.f32.mrb[0].mxu0
      %v5396 = vadd.f32 %v5072, %v5395
      %v5397 = vpop.f32.mrb[0].mxu0
      %5398 = vmatprep.mubr.bf16.mxu0 0
      %5399 = vmatmul.mubr.bf16.gmra.mrb[0].mxu0 %v5270
      %v5400 = vpop.f32.mrb[0].mxu0
      %v5401 = vadd.f32 %v5077, %v5400
      %v5402 = vpop.f32.mrb[0].mxu0
      %v5403 = vpop.f32.mrb[0].mxu0
      %v5404 = vadd.f32 %v5080, %v5403
      %v5405 = vpop.f32.mrb[0].mxu0
      %5406 = vmatprep.mubr.bf16.mxu0 0
      %5407 = vmatmul.mubr.bf16.gmra.mrb[0].mxu0 %v5273
      %v5408 = vpop.f32.mrb[0].mxu0
      %v5409 = vadd.f32 %v5085, %v5408
      %v5410 = vpop.f32.mrb[0].mxu0
      %v5411 = vpop.f32.mrb[0].mxu0
      %v5412 = vadd.f32 %v5088, %v5411
      %v5413 = vpop.f32.mrb[0].mxu0
      %5414 = vmatprep.mubr.bf16.mxu0 0
      %5415 = vmatmul.mubr.bf16.gmra.mrb[0].mxu0 %v5276
      %v5416 = vpop.f32.mrb[0].mxu0
      %v5417 = vadd.f32 %v5093, %v5416
      %v5418 = vpop.f32.mrb[0].mxu0
      %v5419 = vpop.f32.mrb[0].mxu0
      %v5420 = vadd.f32 %v5096, %v5419
      %v5421 = vpop.f32.mrb[0].mxu0
      %5422 = vmatprep.mubr.bf16.mxu0 0
      %5423 = vmatmul.mubr.bf16.gmra.mrb[0].mxu0 %v5279
      %v5424 = vpop.f32.mrb[0].mxu0
      %v5425 = vadd.f32 %v5101, %v5424
      %v5426 = vpop.f32.mrb[0].mxu0
      %v5427 = vpop.f32.mrb[0].mxu0
      %v5428 = vadd.f32 %v5104, %v5427
      %v5429 = vpop.f32.mrb[0].mxu0
      %5430 = vmatprep.mubr.bf16.mxu0 0
      %5431 = vmatmul.mubr.bf16.gmra.mrb[0].mxu0 %v5282
      %v5432 = vpop.f32.mrb[0].mxu0
      %v5433 = vadd.f32 %v5109, %v5432
      %v5434 = vpop.f32.mrb[0].mxu0
      %v5435 = vpop.f32.mrb[0].mxu0
      %v5436 = vadd.f32 %v5112, %v5435
      %v5437 = vpop.f32.mrb[0].mxu0
      %5438 = vmatprep.mubr.bf16.mxu0 0
      %5439 = vmatmul.mubr.bf16.gmra.mrb[0].mxu0 %v5285
      %v5440 = vpop.f32.mrb[0].mxu0
      %v5441 = vadd.f32 %v5117, %v5440
      %v5442 = vpop.f32.mrb[0].mxu0
      %v5443 = vpop.f32.mrb[0].mxu0
      %v5444 = vadd.f32 %v5120, %v5443
      %v5445 = vpop.f32.mrb[0].mxu0
      %5446 = vmatprep.mubr.bf16.mxu0 0
      %5447 = vmatmul.mubr.bf16.gmra.mrb[0].mxu0 %v5288
      %v5448 = vpop.f32.mrb[0].mxu0
      %v5449 = vadd.f32 %v5125, %v5448
      %v5450 = vpop.f32.mrb[0].mxu0
      %v5451 = vpop.f32.mrb[0].mxu0
      %v5452 = vadd.f32 %v5128, %v5451
      %v5453 = vpop.f32.mrb[0].mxu0
      %5454 = vmatprep.mubr.bf16.mxu0 0
      %5455 = vmatmul.mubr.bf16.gmra.mrb[0].mxu0 %v5291
      %v5456 = vpop.f32.mrb[0].mxu0
      %v5457 = vadd.f32 %v5133, %v5456
      %v5458 = vpop.f32.mrb[0].mxu0
      %v5459 = vpop.f32.mrb[0].mxu0
      %v5460 = vadd.f32 %v5136, %v5459
      %v5461 = vpop.f32.mrb[0].mxu0
      %5462 = vmatprep.mubr.bf16.mxu0 0
      %5463 = vmatmul.mubr.bf16.gmra.mrb[0].mxu0 %v5294
      %v5464 = vpop.f32.mrb[0].mxu0
      %v5465 = vadd.f32 %v5141, %v5464
      %v5466 = vpop.f32.mrb[0].mxu0
      %v5467 = vpop.f32.mrb[0].mxu0
      %v5468 = vadd.f32 %v5144, %v5467
      %v5469 = vpop.f32.mrb[0].mxu0
      %5470 = vmatprep.mubr.bf16.mxu0 0
      %5471 = vmatmul.mubr.bf16.gmra.mrb[0].mxu0 %v5297
      %v5472 = vpop.f32.mrb[0].mxu0
      %v5473 = vadd.f32 %v5149, %v5472
      %v5474 = vpop.f32.mrb[0].mxu0
      %v5475 = vpop.f32.mrb[0].mxu0
      %v5476 = vadd.f32 %v5152, %v5475
      %v5477 = vpop.f32.mrb[0].mxu0
      %5478 = vdwg.mxu0
      %v5479 = vld [vmem:[#allocation2] sm:$0xf]
      %v5480 = vld [vmem:[#allocation2 + $0x4] sm:$0xf]
      %v5481 = vld [vmem:[#allocation2 + $0x8] sm:$0xf]
      %v5482 = vld [vmem:[#allocation2 + $0xc] sm:$0xf]
      %v5483 = vld [vmem:[#allocation2 + $0x10] sm:$0xf]
      %v5484 = vld [vmem:[#allocation2 + $0x14] sm:$0xf]
      %v5485 = vld [vmem:[#allocation2 + $0x18] sm:$0xf]
      %v5486 = vld [vmem:[#allocation2 + $0x1c] sm:$0xf]
      %v5487 = vld [vmem:[#allocation2 + $0x20] sm:$0xf]
      %v5488 = vld [vmem:[#allocation2 + $0x24] sm:$0xf]
      %v5489 = vld [vmem:[#allocation2 + $0x28] sm:$0xf]
      %v5490 = vld [vmem:[#allocation2 + $0x2c] sm:$0xf]
      %v5491 = vld [vmem:[#allocation2 + $0x30] sm:$0xf]
      %v5492 = vld [vmem:[#allocation2 + $0x34] sm:$0xf]
      %v5493 = vld [vmem:[#allocation2 + $0x38] sm:$0xf]
      %v5494 = vld [vmem:[#allocation2 + $0x3c] sm:$0xf]
      %v5495 = vld [vmem:[#allocation2 + $0x40] sm:$0xf]
      %v5496 = vld [vmem:[#allocation2 + $0x44] sm:$0xf]
      %v5497 = vld [vmem:[#allocation2 + $0x48] sm:$0xf]
      %v5498 = vld [vmem:[#allocation2 + $0x4c] sm:$0xf]
      %v5499 = vld [vmem:[#allocation2 + $0x50] sm:$0xf]
      %v5500 = vld [vmem:[#allocation2 + $0x54] sm:$0xf]
      %v5501 = vld [vmem:[#allocation2 + $0x58] sm:$0xf]
      %v5502 = vld [vmem:[#allocation2 + $0x5c] sm:$0xf]
      %v5503 = vld [vmem:[#allocation2 + $0x60] sm:$0xf]
      %v5504 = vld [vmem:[#allocation2 + $0x64] sm:$0xf]
      %v5505 = vld [vmem:[#allocation2 + $0x68] sm:$0xf]
      %v5506 = vld [vmem:[#allocation2 + $0x6c] sm:$0xf]
      %v5507 = vld [vmem:[#allocation2 + $0x70] sm:$0xf]
      %v5508 = vld [vmem:[#allocation2 + $0x74] sm:$0xf]
      %v5509 = vld [vmem:[#allocation2 + $0x78] sm:$0xf]
      %v5510 = vld [vmem:[#allocation2 + $0x7c] sm:$0xf]
      %v5511 = vld [vmem:[#allocation2 + $0x80] sm:$0xf]
      %v5512 = vld [vmem:[#allocation2 + $0x84] sm:$0xf]
      %v5513 = vld [vmem:[#allocation2 + $0x88] sm:$0xf]
      %v5514 = vld [vmem:[#allocation2 + $0x8c] sm:$0xf]
      %v5515 = vld [vmem:[#allocation2 + $0x90] sm:$0x1]
      %v5516 = vld [vmem:[%s5 + $0x40] sm:$0xf]
      %v5517 = vld [vmem:[%s5 + $0x44] sm:$0xf]
      %v5518 = vld [vmem:[%s5 + $0x48] sm:$0xf]
      %v5519 = vld [vmem:[%s5 + $0x4c] sm:$0xf]
      %v5520 = vld [vmem:[%s5 + $0x50] sm:$0xf]
      %v5521 = vld [vmem:[%s5 + $0x54] sm:$0xf]
      %v5522 = vld [vmem:[%s5 + $0x58] sm:$0xf]
      %v5523 = vld [vmem:[%s5 + $0x5c] sm:$0xf]
      %v5524 = vld [vmem:[%s5 + $0x60] sm:$0xf]
      %v5525 = vld [vmem:[%s5 + $0x64] sm:$0xf]
      %v5526 = vld [vmem:[%s5 + $0x68] sm:$0xf]
      %v5527 = vld [vmem:[%s5 + $0x6c] sm:$0xf]
      %v5528 = vld [vmem:[%s5 + $0x70] sm:$0xf]
      %v5529 = vld [vmem:[%s5 + $0x74] sm:$0xf]
      %v5530 = vld [vmem:[%s5 + $0x78] sm:$0xf]
      %v5531 = vld [vmem:[%s5 + $0x7c] sm:$0xf]
      %v5569 = vunpack.c.l.b16 %v5479
      %v5570 = vunpack.c.l.b16 %v5480
      %v5571 = vunpack.c.l.b16 %v5481
      %v5572 = vunpack.c.l.b16 %v5482
      %v5573 = vunpack.c.l.b16 %v5483
      %v5574 = vunpack.c.l.b16 %v5484
      %v5575 = vunpack.c.l.b16 %v5485
      %v5576 = vunpack.c.l.b16 %v5486
      %v5577 = vunpack.c.l.b16 %v5487
      %v5578 = vunpack.c.l.b16 %v5488
      %v5579 = vunpack.c.l.b16 %v5489
      %v5580 = vunpack.c.l.b16 %v5490
      %v5581 = vunpack.c.l.b16 %v5491
      %v5582 = vunpack.c.l.b16 %v5492
      %v5583 = vunpack.c.l.b16 %v5493
      %v5584 = vunpack.c.l.b16 %v5494
      %v5585 = vunpack.c.l.b16 %v5495
      %v5586 = vunpack.c.l.b16 %v5496
      %v5587 = vunpack.c.l.b16 %v5497
      %v5588 = vunpack.c.l.b16 %v5498
      %v5589 = vunpack.c.l.b16 %v5499
      %v5590 = vunpack.c.l.b16 %v5500
      %v5591 = vunpack.c.l.b16 %v5501
      %v5592 = vunpack.c.l.b16 %v5502
      %v5593 = vunpack.c.l.b16 %v5503
      %v5594 = vunpack.c.l.b16 %v5504
      %v5595 = vunpack.c.l.b16 %v5505
      %v5596 = vunpack.c.l.b16 %v5506
      %v5597 = vunpack.c.l.b16 %v5507
      %v5598 = vunpack.c.l.b16 %v5508
      %v5599 = vunpack.c.l.b16 %v5509
      %v5600 = vunpack.c.l.b16 %v5510
      %v5601 = vunpack.c.l.b16 %v5511
      %v5602 = vunpack.c.l.b16 %v5512
      %v5603 = vunpack.c.l.b16 %v5513
      %v5604 = vunpack.c.l.b16 %v5514
      %v5605 = vunpack.c.l.b16 %v5515
      %v5606 = vpack.c.b16 %v5570, %v5569
      %v5607 = vpack.c.b16 %v5572, %v5571
      %v5608 = vpack.c.b16 %v5574, %v5573
      %v5609 = vpack.c.b16 %v5576, %v5575
      %v5610 = vpack.c.b16 %v5578, %v5577
      %v5611 = vpack.c.b16 %v5580, %v5579
      %v5612 = vpack.c.b16 %v5582, %v5581
      %v5613 = vpack.c.b16 %v5584, %v5583
      %v5614 = vpack.c.b16 %v5586, %v5585
      %v5615 = vpack.c.b16 %v5588, %v5587
      %v5616 = vpack.c.b16 %v5590, %v5589
      %v5617 = vpack.c.b16 %v5592, %v5591
      %v5618 = vpack.c.b16 %v5594, %v5593
      %v5619 = vpack.c.b16 %v5596, %v5595
      %v5620 = vpack.c.b16 %v5598, %v5597
      %v5621 = vpack.c.b16 %v5600, %v5599
      %v5622 = vpack.c.b16 %v5602, %v5601
      %v5623 = vpack.c.b16 %v5604, %v5603
      %v5624 = vpack.c.b16 %v5605, %v5605
      %v5626 = vshrl.u32 %v5606, 16
      %v5628 = vshll.u32 %v5606, 16
      %v5630 = vrot.slane %v5628, 1
      %v5631 = vor.u32 %v5626, %v5630
      %v5633 = vshll.u32 %v5607, 16
      %v5635 = vrot.slane %v5633, 1
      %v5636 = vsel %vm459, %v5631, %v5635
      %v5637 = vshrl.u32 %v5607, 16
      %v5639 = vor.u32 %v5637, %v5635
      %v5641 = vshll.u32 %v5608, 16
      %v5643 = vrot.slane %v5641, 1
      %v5644 = vsel %vm459, %v5639, %v5643
      %v5645 = vshrl.u32 %v5608, 16
      %v5647 = vor.u32 %v5645, %v5643
      %v5649 = vshll.u32 %v5609, 16
      %v5651 = vrot.slane %v5649, 1
      %v5652 = vsel %vm459, %v5647, %v5651
      %v5653 = vshrl.u32 %v5609, 16
      %v5655 = vor.u32 %v5653, %v5651
      %v5657 = vshll.u32 %v5610, 16
      %v5659 = vrot.slane %v5657, 1
      %v5660 = vsel %vm459, %v5655, %v5659
      %v5661 = vshrl.u32 %v5610, 16
      %v5663 = vor.u32 %v5661, %v5659
      %v5665 = vshll.u32 %v5611, 16
      %v5667 = vrot.slane %v5665, 1
      %v5668 = vsel %vm459, %v5663, %v5667
      %v5669 = vshrl.u32 %v5611, 16
      %v5671 = vor.u32 %v5669, %v5667
      %v5673 = vshll.u32 %v5612, 16
      %v5675 = vrot.slane %v5673, 1
      %v5676 = vsel %vm459, %v5671, %v5675
      %v5677 = vshrl.u32 %v5612, 16
      %v5679 = vor.u32 %v5677, %v5675
      %v5681 = vshll.u32 %v5613, 16
      %v5683 = vrot.slane %v5681, 1
      %v5684 = vsel %vm459, %v5679, %v5683
      %v5685 = vshrl.u32 %v5613, 16
      %v5687 = vor.u32 %v5685, %v5683
      %v5689 = vshll.u32 %v5614, 16
      %v5691 = vrot.slane %v5689, 1
      %v5692 = vsel %vm459, %v5687, %v5691
      %v5693 = vshrl.u32 %v5614, 16
      %v5695 = vor.u32 %v5693, %v5691
      %v5697 = vshll.u32 %v5615, 16
      %v5699 = vrot.slane %v5697, 1
      %v5700 = vsel %vm459, %v5695, %v5699
      %v5701 = vshrl.u32 %v5615, 16
      %v5703 = vor.u32 %v5701, %v5699
      %v5705 = vshll.u32 %v5616, 16
      %v5707 = vrot.slane %v5705, 1
      %v5708 = vsel %vm459, %v5703, %v5707
      %v5709 = vshrl.u32 %v5616, 16
      %v5711 = vor.u32 %v5709, %v5707
      %v5713 = vshll.u32 %v5617, 16
      %v5715 = vrot.slane %v5713, 1
      %v5716 = vsel %vm459, %v5711, %v5715
      %v5717 = vshrl.u32 %v5617, 16
      %v5719 = vor.u32 %v5717, %v5715
      %v5721 = vshll.u32 %v5618, 16
      %v5723 = vrot.slane %v5721, 1
      %v5724 = vsel %vm459, %v5719, %v5723
      %v5725 = vshrl.u32 %v5618, 16
      %v5727 = vor.u32 %v5725, %v5723
      %v5729 = vshll.u32 %v5619, 16
      %v5731 = vrot.slane %v5729, 1
      %v5732 = vsel %vm459, %v5727, %v5731
      %v5733 = vshrl.u32 %v5619, 16
      %v5735 = vor.u32 %v5733, %v5731
      %v5737 = vshll.u32 %v5620, 16
      %v5739 = vrot.slane %v5737, 1
      %v5740 = vsel %vm459, %v5735, %v5739
      %v5741 = vshrl.u32 %v5620, 16
      %v5743 = vor.u32 %v5741, %v5739
      %v5745 = vshll.u32 %v5621, 16
      %v5747 = vrot.slane %v5745, 1
      %v5748 = vsel %vm459, %v5743, %v5747
      %v5749 = vshrl.u32 %v5621, 16
      %v5751 = vor.u32 %v5749, %v5747
      %v5753 = vshll.u32 %v5622, 16
      %v5755 = vrot.slane %v5753, 1
      %v5756 = vsel %vm459, %v5751, %v5755
      %v5757 = vshrl.u32 %v5622, 16
      %v5759 = vor.u32 %v5757, %v5755
      %v5761 = vshll.u32 %v5623, 16
      %v5763 = vrot.slane %v5761, 1
      %v5764 = vsel %vm459, %v5759, %v5763
      %v5765 = vshrl.u32 %v5623, 16
      %v5767 = vor.u32 %v5765, %v5763
      %v5769 = vshll.u32 %v5624, 16
      %v5771 = vrot.slane %v5769, 1
      %v5772 = vsel %vm459, %v5767, %v5771
      %v5807 = vunpack.c.l.b16 %v5516
      %v5808 = vunpack.c.l.b16 %v5517
      %v5809 = vunpack.c.l.b16 %v5518
      %v5810 = vunpack.c.l.b16 %v5519
      %v5811 = vunpack.c.l.b16 %v5520
      %v5812 = vunpack.c.l.b16 %v5521
      %v5813 = vunpack.c.l.b16 %v5522
      %v5814 = vunpack.c.l.b16 %v5523
      %v5815 = vunpack.c.l.b16 %v5524
      %v5816 = vunpack.c.l.b16 %v5525
      %v5817 = vunpack.c.l.b16 %v5526
      %v5818 = vunpack.c.l.b16 %v5527
      %v5819 = vunpack.c.l.b16 %v5528
      %v5820 = vunpack.c.l.b16 %v5529
      %v5821 = vunpack.c.l.b16 %v5530
      %v5822 = vunpack.c.l.b16 %v5531
      %v5823 = vpack.c.b16 %v5808, %v5807
      %v5824 = vpack.c.b16 %v5810, %v5809
      %v5825 = vpack.c.b16 %v5812, %v5811
      %v5826 = vpack.c.b16 %v5814, %v5813
      %v5827 = vpack.c.b16 %v5816, %v5815
      %v5828 = vpack.c.b16 %v5818, %v5817
      %v5829 = vpack.c.b16 %v5820, %v5819
      %v5830 = vpack.c.b16 %v5822, %v5821
      %5839 = vmatprep.subr.bf16.mxu0 0
      %5840 = vmatpush1.bf16.msra.mxu0 %v5823
      %5841 = vmatprep.subr.bf16.mxu0 0
      %5842 = vmatpush1.bf16.msra.mxu0 %v5824
      %5843 = vmatprep.subr.bf16.mxu0 0
      %5844 = vmatpush1.bf16.msra.mxu0 %v5825
      %5845 = vmatprep.subr.bf16.mxu0 0
      %5846 = vmatpush1.bf16.msra.mxu0 %v5826
      %5847 = vmatprep.subr.bf16.mxu0 0
      %5848 = vmatpush1.bf16.msra.mxu0 %v5827
      %5849 = vmatprep.subr.bf16.mxu0 0
      %5850 = vmatpush1.bf16.msra.mxu0 %v5828
      %5851 = vmatprep.subr.bf16.mxu0 0
      %5852 = vmatpush1.bf16.msra.mxu0 %v5829
      %5853 = vmatprep.subr.bf16.mxu0 0
      %5854 = vmatpush1.bf16.msra.mxu0 %v5830
      %5855 = vmatprep.subr.bf16.mxu0 0
      %5856 = vmatpush1.bf16.msra.mxu0 0
      %5857 = vmatprep.subr.bf16.mxu0 0
      %5858 = vmatpush1.bf16.msra.mxu0 0
      %5859 = vmatprep.subr.bf16.mxu0 0
      %5860 = vmatpush1.bf16.msra.mxu0 0
      %5861 = vmatprep.subr.bf16.mxu0 0
      %5862 = vmatpush1.bf16.msra.mxu0 0
      %5863 = vmatprep.subr.bf16.mxu0 0
      %5864 = vmatpush1.bf16.msra.mxu0 0
      %5865 = vmatprep.subr.bf16.mxu0 0
      %5866 = vmatpush1.bf16.msra.mxu0 0
      %5867 = vmatprep.subr.bf16.mxu0 0
      %5868 = vmatpush1.bf16.msra.mxu0 0
      %5869 = vmatprep.subr.bf16.mxu0 0
      %5870 = vmatpush1.bf16.msra.mxu0 0
      %5871 = vmatprep.mubr.bf16.mxu0 0
      %5872 = vmatmul.mubr.bf16.gmra.mrb[0].mxu0 %v5636
      %v5873 = vpop.f32.mrb[0].mxu0
      %v5874 = vadd.f32 0.0, %v5873
      %v5875 = vpop.f32.mrb[0].mxu0
      %v5876 = vpop.f32.mrb[0].mxu0
      %v5877 = vadd.f32 0.0, %v5876
      %v5878 = vpop.f32.mrb[0].mxu0
      %5879 = vmatprep.mubr.bf16.mxu0 0
      %5880 = vmatmul.mubr.bf16.gmra.mrb[0].mxu0 %v5644
      %v5881 = vpop.f32.mrb[0].mxu0
      %v5882 = vadd.f32 0.0, %v5881
      %v5883 = vpop.f32.mrb[0].mxu0
      %v5884 = vpop.f32.mrb[0].mxu0
      %v5885 = vadd.f32 0.0, %v5884
      %v5886 = vpop.f32.mrb[0].mxu0
      %5887 = vmatprep.mubr.bf16.mxu0 0
      %5888 = vmatmul.mubr.bf16.gmra.mrb[0].mxu0 %v5652
      %v5889 = vpop.f32.mrb[0].mxu0
      %v5890 = vadd.f32 0.0, %v5889
      %v5891 = vpop.f32.mrb[0].mxu0
      %v5892 = vpop.f32.mrb[0].mxu0
      %v5893 = vadd.f32 0.0, %v5892
      %v5894 = vpop.f32.mrb[0].mxu0
      %5895 = vmatprep.mubr.bf16.mxu0 0
      %5896 = vmatmul.mubr.bf16.gmra.mrb[0].mxu0 %v5660
      %v5897 = vpop.f32.mrb[0].mxu0
      %v5898 = vadd.f32 0.0, %v5897
      %v5899 = vpop.f32.mrb[0].mxu0
      %v5900 = vpop.f32.mrb[0].mxu0
      %v5901 = vadd.f32 0.0, %v5900
      %v5902 = vpop.f32.mrb[0].mxu0
      %5903 = vmatprep.mubr.bf16.mxu0 0
      %5904 = vmatmul.mubr.bf16.gmra.mrb[0].mxu0 %v5668
      %v5905 = vpop.f32.mrb[0].mxu0
      %v5906 = vadd.f32 0.0, %v5905
      %v5907 = vpop.f32.mrb[0].mxu0
      %v5908 = vpop.f32.mrb[0].mxu0
      %v5909 = vadd.f32 0.0, %v5908
      %v5910 = vpop.f32.mrb[0].mxu0
      %5911 = vmatprep.mubr.bf16.mxu0 0
      %5912 = vmatmul.mubr.bf16.gmra.mrb[0].mxu0 %v5676
      %v5913 = vpop.f32.mrb[0].mxu0
      %v5914 = vadd.f32 0.0, %v5913
      %v5915 = vpop.f32.mrb[0].mxu0
      %v5916 = vpop.f32.mrb[0].mxu0
      %v5917 = vadd.f32 0.0, %v5916
      %v5918 = vpop.f32.mrb[0].mxu0
      %5919 = vmatprep.mubr.bf16.mxu0 0
      %5920 = vmatmul.mubr.bf16.gmra.mrb[0].mxu0 %v5684
      %v5921 = vpop.f32.mrb[0].mxu0
      %v5922 = vadd.f32 0.0, %v5921
      %v5923 = vpop.f32.mrb[0].mxu0
      %v5924 = vpop.f32.mrb[0].mxu0
      %v5925 = vadd.f32 0.0, %v5924
      %v5926 = vpop.f32.mrb[0].mxu0
      %5927 = vmatprep.mubr.bf16.mxu0 0
      %5928 = vmatmul.mubr.bf16.gmra.mrb[0].mxu0 %v5692
      %v5929 = vpop.f32.mrb[0].mxu0
      %v5930 = vadd.f32 0.0, %v5929
      %v5931 = vpop.f32.mrb[0].mxu0
      %v5932 = vpop.f32.mrb[0].mxu0
      %v5933 = vadd.f32 0.0, %v5932
      %v5934 = vpop.f32.mrb[0].mxu0
      %5935 = vmatprep.mubr.bf16.mxu0 0
      %5936 = vmatmul.mubr.bf16.gmra.mrb[0].mxu0 %v5700
      %v5937 = vpop.f32.mrb[0].mxu0
      %v5938 = vadd.f32 0.0, %v5937
      %v5939 = vpop.f32.mrb[0].mxu0
      %v5940 = vpop.f32.mrb[0].mxu0
      %v5941 = vadd.f32 0.0, %v5940
      %v5942 = vpop.f32.mrb[0].mxu0
      %5943 = vmatprep.mubr.bf16.mxu0 0
      %5944 = vmatmul.mubr.bf16.gmra.mrb[0].mxu0 %v5708
      %v5945 = vpop.f32.mrb[0].mxu0
      %v5946 = vadd.f32 0.0, %v5945
      %v5947 = vpop.f32.mrb[0].mxu0
      %v5948 = vpop.f32.mrb[0].mxu0
      %v5949 = vadd.f32 0.0, %v5948
      %v5950 = vpop.f32.mrb[0].mxu0
      %5951 = vmatprep.mubr.bf16.mxu0 0
      %5952 = vmatmul.mubr.bf16.gmra.mrb[0].mxu0 %v5716
      %v5953 = vpop.f32.mrb[0].mxu0
      %v5954 = vadd.f32 0.0, %v5953
      %v5955 = vpop.f32.mrb[0].mxu0
      %v5956 = vpop.f32.mrb[0].mxu0
      %v5957 = vadd.f32 0.0, %v5956
      %v5958 = vpop.f32.mrb[0].mxu0
      %5959 = vmatprep.mubr.bf16.mxu0 0
      %5960 = vmatmul.mubr.bf16.gmra.mrb[0].mxu0 %v5724
      %v5961 = vpop.f32.mrb[0].mxu0
      %v5962 = vadd.f32 0.0, %v5961
      %v5963 = vpop.f32.mrb[0].mxu0
      %v5964 = vpop.f32.mrb[0].mxu0
      %v5965 = vadd.f32 0.0, %v5964
      %v5966 = vpop.f32.mrb[0].mxu0
      %5967 = vmatprep.mubr.bf16.mxu0 0
      %5968 = vmatmul.mubr.bf16.gmra.mrb[0].mxu0 %v5732
      %v5969 = vpop.f32.mrb[0].mxu0
      %v5970 = vadd.f32 0.0, %v5969
      %v5971 = vpop.f32.mrb[0].mxu0
      %v5972 = vpop.f32.mrb[0].mxu0
      %v5973 = vadd.f32 0.0, %v5972
      %v5974 = vpop.f32.mrb[0].mxu0
      %5975 = vmatprep.mubr.bf16.mxu0 0
      %5976 = vmatmul.mubr.bf16.gmra.mrb[0].mxu0 %v5740
      %v5977 = vpop.f32.mrb[0].mxu0
      %v5978 = vadd.f32 0.0, %v5977
      %v5979 = vpop.f32.mrb[0].mxu0
      %v5980 = vpop.f32.mrb[0].mxu0
      %v5981 = vadd.f32 0.0, %v5980
      %v5982 = vpop.f32.mrb[0].mxu0
      %5983 = vmatprep.mubr.bf16.mxu0 0
      %5984 = vmatmul.mubr.bf16.gmra.mrb[0].mxu0 %v5748
      %v5985 = vpop.f32.mrb[0].mxu0
      %v5986 = vadd.f32 0.0, %v5985
      %v5987 = vpop.f32.mrb[0].mxu0
      %v5988 = vpop.f32.mrb[0].mxu0
      %v5989 = vadd.f32 0.0, %v5988
      %v5990 = vpop.f32.mrb[0].mxu0
      %5991 = vmatprep.mubr.bf16.mxu0 0
      %5992 = vmatmul.mubr.bf16.gmra.mrb[0].mxu0 %v5756
      %v5993 = vpop.f32.mrb[0].mxu0
      %v5994 = vadd.f32 0.0, %v5993
      %v5995 = vpop.f32.mrb[0].mxu0
      %v5996 = vpop.f32.mrb[0].mxu0
      %v5997 = vadd.f32 0.0, %v5996
      %v5998 = vpop.f32.mrb[0].mxu0
      %5999 = vmatprep.mubr.bf16.mxu0 0
      %6000 = vmatmul.mubr.bf16.gmra.mrb[0].mxu0 %v5764
      %v6001 = vpop.f32.mrb[0].mxu0
      %v6002 = vadd.f32 0.0, %v6001
      %v6003 = vpop.f32.mrb[0].mxu0
      %v6004 = vpop.f32.mrb[0].mxu0
      %v6005 = vadd.f32 0.0, %v6004
      %v6006 = vpop.f32.mrb[0].mxu0
      %6007 = vmatprep.mubr.bf16.mxu0 0
      %6008 = vmatmul.mubr.bf16.gmra.mrb[0].mxu0 %v5772
      %v6009 = vpop.f32.mrb[0].mxu0
      %v6010 = vadd.f32 0.0, %v6009
      %v6011 = vpop.f32.mrb[0].mxu0
      %v6012 = vpop.f32.mrb[0].mxu0
      %v6013 = vadd.f32 0.0, %v6012
      %v6014 = vpop.f32.mrb[0].mxu0
      %6015 = vdwg.mxu0
      %v6016 = vadd.f32 %v5337, %v5874
      %v6017 = vadd.f32 %v5340, %v5877
      %v6018 = vadd.f32 %v5345, %v5882
      %v6019 = vadd.f32 %v5348, %v5885
      %v6020 = vadd.f32 %v5353, %v5890
      %v6021 = vadd.f32 %v5356, %v5893
      %v6022 = vadd.f32 %v5361, %v5898
      %v6023 = vadd.f32 %v5364, %v5901
      %v6024 = vadd.f32 %v5369, %v5906
      %v6025 = vadd.f32 %v5372, %v5909
      %v6026 = vadd.f32 %v5377, %v5914
      %v6027 = vadd.f32 %v5380, %v5917
      %v6028 = vadd.f32 %v5385, %v5922
      %v6029 = vadd.f32 %v5388, %v5925
      %v6030 = vadd.f32 %v5393, %v5930
      %v6031 = vadd.f32 %v5396, %v5933
      %v6032 = vadd.f32 %v5401, %v5938
      %v6033 = vadd.f32 %v5404, %v5941
      %v6034 = vadd.f32 %v5409, %v5946
      %v6035 = vadd.f32 %v5412, %v5949
      %v6036 = vadd.f32 %v5417, %v5954
      %v6037 = vadd.f32 %v5420, %v5957
      %v6038 = vadd.f32 %v5425, %v5962
      %v6039 = vadd.f32 %v5428, %v5965
      %v6040 = vadd.f32 %v5433, %v5970
      %v6041 = vadd.f32 %v5436, %v5973
      %v6042 = vadd.f32 %v5441, %v5978
      %v6043 = vadd.f32 %v5444, %v5981
      %v6044 = vadd.f32 %v5449, %v5986
      %v6045 = vadd.f32 %v5452, %v5989
      %v6046 = vadd.f32 %v5457, %v5994
      %v6047 = vadd.f32 %v5460, %v5997
      %v6048 = vadd.f32 %v5465, %v6002
      %v6049 = vadd.f32 %v5468, %v6005
      %v6050 = vadd.f32 %v5473, %v6010
      %v6051 = vadd.f32 %v5476, %v6013
      %v6052 = vld [vmem:[#allocation2] sm:$0xe]
      %v6053 = vld [vmem:[%s5 + $0x80] sm:$0xf]
      %v6054 = vld [vmem:[%s5 + $0x84] sm:$0xf]
      %v6055 = vld [vmem:[%s5 + $0x88] sm:$0xf]
      %v6056 = vld [vmem:[%s5 + $0x8c] sm:$0xf]
      %v6057 = vld [vmem:[%s5 + $0x90] sm:$0xf]
      %v6058 = vld [vmem:[%s5 + $0x94] sm:$0xf]
      %v6059 = vld [vmem:[%s5 + $0x98] sm:$0xf]
      %v6060 = vld [vmem:[%s5 + $0x9c] sm:$0xf]
      %v6061 = vld [vmem:[%s5 + $0xa0] sm:$0xf]
      %v6062 = vld [vmem:[%s5 + $0xa4] sm:$0xf]
      %v6063 = vld [vmem:[%s5 + $0xa8] sm:$0xf]
      %v6064 = vld [vmem:[%s5 + $0xac] sm:$0xf]
      %v6065 = vld [vmem:[%s5 + $0xb0] sm:$0xf]
      %v6066 = vld [vmem:[%s5 + $0xb4] sm:$0xf]
      %v6067 = vld [vmem:[%s5 + $0xb8] sm:$0xf]
      %v6068 = vld [vmem:[%s5 + $0xbc] sm:$0xf]
      %v6070 = vunpack.c.l.b16 %v6052
      %v6071 = vpack.c.b16 %v5570, %v6070
      %v6072 = vrot.slane %v6071, 1
      %v6073 = vrot.slane %v5607, 1
      %v6074 = vsel %vm1065, %v6072, %v6073
      %v6075 = vrot.slane %v5608, 1
      %v6076 = vsel %vm1065, %v6073, %v6075
      %v6077 = vrot.slane %v5609, 1
      %v6078 = vsel %vm1065, %v6075, %v6077
      %v6079 = vrot.slane %v5610, 1
      %v6080 = vsel %vm1065, %v6077, %v6079
      %v6081 = vrot.slane %v5611, 1
      %v6082 = vsel %vm1065, %v6079, %v6081
      %v6083 = vrot.slane %v5612, 1
      %v6084 = vsel %vm1065, %v6081, %v6083
      %v6085 = vrot.slane %v5613, 1
      %v6086 = vsel %vm1065, %v6083, %v6085
      %v6087 = vrot.slane %v5614, 1
      %v6088 = vsel %vm1065, %v6085, %v6087
      %v6089 = vrot.slane %v5615, 1
      %v6090 = vsel %vm1065, %v6087, %v6089
      %v6091 = vrot.slane %v5616, 1
      %v6092 = vsel %vm1065, %v6089, %v6091
      %v6093 = vrot.slane %v5617, 1
      %v6094 = vsel %vm1065, %v6091, %v6093
      %v6095 = vrot.slane %v5618, 1
      %v6096 = vsel %vm1065, %v6093, %v6095
      %v6097 = vrot.slane %v5619, 1
      %v6098 = vsel %vm1065, %v6095, %v6097
      %v6099 = vrot.slane %v5620, 1
      %v6100 = vsel %vm1065, %v6097, %v6099
      %v6101 = vrot.slane %v5621, 1
      %v6102 = vsel %vm1065, %v6099, %v6101
      %v6103 = vrot.slane %v5622, 1
      %v6104 = vsel %vm1065, %v6101, %v6103
      %v6105 = vrot.slane %v5623, 1
      %v6106 = vsel %vm1065, %v6103, %v6105
      %v6107 = vrot.slane %v5624, 1
      %v6108 = vsel %vm1065, %v6105, %v6107
      %v6143 = vunpack.c.l.b16 %v6053
      %v6144 = vunpack.c.l.b16 %v6054
      %v6145 = vunpack.c.l.b16 %v6055
      %v6146 = vunpack.c.l.b16 %v6056
      %v6147 = vunpack.c.l.b16 %v6057
      %v6148 = vunpack.c.l.b16 %v6058
      %v6149 = vunpack.c.l.b16 %v6059
      %v6150 = vunpack.c.l.b16 %v6060
      %v6151 = vunpack.c.l.b16 %v6061
      %v6152 = vunpack.c.l.b16 %v6062
      %v6153 = vunpack.c.l.b16 %v6063
      %v6154 = vunpack.c.l.b16 %v6064
      %v6155 = vunpack.c.l.b16 %v6065
      %v6156 = vunpack.c.l.b16 %v6066
      %v6157 = vunpack.c.l.b16 %v6067
      %v6158 = vunpack.c.l.b16 %v6068
      %v6159 = vpack.c.b16 %v6144, %v6143
      %v6160 = vpack.c.b16 %v6146, %v6145
      %v6161 = vpack.c.b16 %v6148, %v6147
      %v6162 = vpack.c.b16 %v6150, %v6149
      %v6163 = vpack.c.b16 %v6152, %v6151
      %v6164 = vpack.c.b16 %v6154, %v6153
      %v6165 = vpack.c.b16 %v6156, %v6155
      %v6166 = vpack.c.b16 %v6158, %v6157
      %6175 = vmatprep.subr.bf16.mxu0 0
      %6176 = vmatpush1.bf16.msra.mxu0 %v6159
      %6177 = vmatprep.subr.bf16.mxu0 0
      %6178 = vmatpush1.bf16.msra.mxu0 %v6160
      %6179 = vmatprep.subr.bf16.mxu0 0
      %6180 = vmatpush1.bf16.msra.mxu0 %v6161
      %6181 = vmatprep.subr.bf16.mxu0 0
      %6182 = vmatpush1.bf16.msra.mxu0 %v6162
      %6183 = vmatprep.subr.bf16.mxu0 0
      %6184 = vmatpush1.bf16.msra.mxu0 %v6163
      %6185 = vmatprep.subr.bf16.mxu0 0
      %6186 = vmatpush1.bf16.msra.mxu0 %v6164
      %6187 = vmatprep.subr.bf16.mxu0 0
      %6188 = vmatpush1.bf16.msra.mxu0 %v6165
      %6189 = vmatprep.subr.bf16.mxu0 0
      %6190 = vmatpush1.bf16.msra.mxu0 %v6166
      %6191 = vmatprep.subr.bf16.mxu0 0
      %6192 = vmatpush1.bf16.msra.mxu0 0
      %6193 = vmatprep.subr.bf16.mxu0 0
      %6194 = vmatpush1.bf16.msra.mxu0 0
      %6195 = vmatprep.subr.bf16.mxu0 0
      %6196 = vmatpush1.bf16.msra.mxu0 0
      %6197 = vmatprep.subr.bf16.mxu0 0
      %6198 = vmatpush1.bf16.msra.mxu0 0
      %6199 = vmatprep.subr.bf16.mxu0 0
      %6200 = vmatpush1.bf16.msra.mxu0 0
      %6201 = vmatprep.subr.bf16.mxu0 0
      %6202 = vmatpush1.bf16.msra.mxu0 0
      %6203 = vmatprep.subr.bf16.mxu0 0
      %6204 = vmatpush1.bf16.msra.mxu0 0
      %6205 = vmatprep.subr.bf16.mxu0 0
      %6206 = vmatpush1.bf16.msra.mxu0 0
      %6207 = vmatprep.mubr.bf16.mxu0 0
      %6208 = vmatmul.mubr.bf16.gmra.mrb[0].mxu0 %v6074
      %v6209 = vpop.f32.mrb[0].mxu0
      %v6210 = vadd.f32 0.0, %v6209
      %v6211 = vpop.f32.mrb[0].mxu0
      %v6212 = vpop.f32.mrb[0].mxu0
      %v6213 = vadd.f32 0.0, %v6212
      %v6214 = vpop.f32.mrb[0].mxu0
      %6215 = vmatprep.mubr.bf16.mxu0 0
      %6216 = vmatmul.mubr.bf16.gmra.mrb[0].mxu0 %v6076
      %v6217 = vpop.f32.mrb[0].mxu0
      %v6218 = vadd.f32 0.0, %v6217
      %v6219 = vpop.f32.mrb[0].mxu0
      %v6220 = vpop.f32.mrb[0].mxu0
      %v6221 = vadd.f32 0.0, %v6220
      %v6222 = vpop.f32.mrb[0].mxu0
      %6223 = vmatprep.mubr.bf16.mxu0 0
      %6224 = vmatmul.mubr.bf16.gmra.mrb[0].mxu0 %v6078
      %v6225 = vpop.f32.mrb[0].mxu0
      %v6226 = vadd.f32 0.0, %v6225
      %v6227 = vpop.f32.mrb[0].mxu0
      %v6228 = vpop.f32.mrb[0].mxu0
      %v6229 = vadd.f32 0.0, %v6228
      %v6230 = vpop.f32.mrb[0].mxu0
      %6231 = vmatprep.mubr.bf16.mxu0 0
      %6232 = vmatmul.mubr.bf16.gmra.mrb[0].mxu0 %v6080
      %v6233 = vpop.f32.mrb[0].mxu0
      %v6234 = vadd.f32 0.0, %v6233
      %v6235 = vpop.f32.mrb[0].mxu0
      %v6236 = vpop.f32.mrb[0].mxu0
      %v6237 = vadd.f32 0.0, %v6236
      %v6238 = vpop.f32.mrb[0].mxu0
      %6239 = vmatprep.mubr.bf16.mxu0 0
      %6240 = vmatmul.mubr.bf16.gmra.mrb[0].mxu0 %v6082
      %v6241 = vpop.f32.mrb[0].mxu0
      %v6242 = vadd.f32 0.0, %v6241
      %v6243 = vpop.f32.mrb[0].mxu0
      %v6244 = vpop.f32.mrb[0].mxu0
      %v6245 = vadd.f32 0.0, %v6244
      %v6246 = vpop.f32.mrb[0].mxu0
      %6247 = vmatprep.mubr.bf16.mxu0 0
      %6248 = vmatmul.mubr.bf16.gmra.mrb[0].mxu0 %v6084
      %v6249 = vpop.f32.mrb[0].mxu0
      %v6250 = vadd.f32 0.0, %v6249
      %v6251 = vpop.f32.mrb[0].mxu0
      %v6252 = vpop.f32.mrb[0].mxu0
      %v6253 = vadd.f32 0.0, %v6252
      %v6254 = vpop.f32.mrb[0].mxu0
      %6255 = vmatprep.mubr.bf16.mxu0 0
      %6256 = vmatmul.mubr.bf16.gmra.mrb[0].mxu0 %v6086
      %v6257 = vpop.f32.mrb[0].mxu0
      %v6258 = vadd.f32 0.0, %v6257
      %v6259 = vpop.f32.mrb[0].mxu0
      %v6260 = vpop.f32.mrb[0].mxu0
      %v6261 = vadd.f32 0.0, %v6260
      %v6262 = vpop.f32.mrb[0].mxu0
      %6263 = vmatprep.mubr.bf16.mxu0 0
      %6264 = vmatmul.mubr.bf16.gmra.mrb[0].mxu0 %v6088
      %v6265 = vpop.f32.mrb[0].mxu0
      %v6266 = vadd.f32 0.0, %v6265
      %v6267 = vpop.f32.mrb[0].mxu0
      %v6268 = vpop.f32.mrb[0].mxu0
      %v6269 = vadd.f32 0.0, %v6268
      %v6270 = vpop.f32.mrb[0].mxu0
      %6271 = vmatprep.mubr.bf16.mxu0 0
      %6272 = vmatmul.mubr.bf16.gmra.mrb[0].mxu0 %v6090
      %v6273 = vpop.f32.mrb[0].mxu0
      %v6274 = vadd.f32 0.0, %v6273
      %v6275 = vpop.f32.mrb[0].mxu0
      %v6276 = vpop.f32.mrb[0].mxu0
      %v6277 = vadd.f32 0.0, %v6276
      %v6278 = vpop.f32.mrb[0].mxu0
      %6279 = vmatprep.mubr.bf16.mxu0 0
      %6280 = vmatmul.mubr.bf16.gmra.mrb[0].mxu0 %v6092
      %v6281 = vpop.f32.mrb[0].mxu0
      %v6282 = vadd.f32 0.0, %v6281
      %v6283 = vpop.f32.mrb[0].mxu0
      %v6284 = vpop.f32.mrb[0].mxu0
      %v6285 = vadd.f32 0.0, %v6284
      %v6286 = vpop.f32.mrb[0].mxu0
      %6287 = vmatprep.mubr.bf16.mxu0 0
      %6288 = vmatmul.mubr.bf16.gmra.mrb[0].mxu0 %v6094
      %v6289 = vpop.f32.mrb[0].mxu0
      %v6290 = vadd.f32 0.0, %v6289
      %v6291 = vpop.f32.mrb[0].mxu0
      %v6292 = vpop.f32.mrb[0].mxu0
      %v6293 = vadd.f32 0.0, %v6292
      %v6294 = vpop.f32.mrb[0].mxu0
      %6295 = vmatprep.mubr.bf16.mxu0 0
      %6296 = vmatmul.mubr.bf16.gmra.mrb[0].mxu0 %v6096
      %v6297 = vpop.f32.mrb[0].mxu0
      %v6298 = vadd.f32 0.0, %v6297
      %v6299 = vpop.f32.mrb[0].mxu0
      %v6300 = vpop.f32.mrb[0].mxu0
      %v6301 = vadd.f32 0.0, %v6300
      %v6302 = vpop.f32.mrb[0].mxu0
      %6303 = vmatprep.mubr.bf16.mxu0 0
      %6304 = vmatmul.mubr.bf16.gmra.mrb[0].mxu0 %v6098
      %v6305 = vpop.f32.mrb[0].mxu0
      %v6306 = vadd.f32 0.0, %v6305
      %v6307 = vpop.f32.mrb[0].mxu0
      %v6308 = vpop.f32.mrb[0].mxu0
      %v6309 = vadd.f32 0.0, %v6308
      %v6310 = vpop.f32.mrb[0].mxu0
      %6311 = vmatprep.mubr.bf16.mxu0 0
      %6312 = vmatmul.mubr.bf16.gmra.mrb[0].mxu0 %v6100
      %v6313 = vpop.f32.mrb[0].mxu0
      %v6314 = vadd.f32 0.0, %v6313
      %v6315 = vpop.f32.mrb[0].mxu0
      %v6316 = vpop.f32.mrb[0].mxu0
      %v6317 = vadd.f32 0.0, %v6316
      %v6318 = vpop.f32.mrb[0].mxu0
      %6319 = vmatprep.mubr.bf16.mxu0 0
      %6320 = vmatmul.mubr.bf16.gmra.mrb[0].mxu0 %v6102
      %v6321 = vpop.f32.mrb[0].mxu0
      %v6322 = vadd.f32 0.0, %v6321
      %v6323 = vpop.f32.mrb[0].mxu0
      %v6324 = vpop.f32.mrb[0].mxu0
      %v6325 = vadd.f32 0.0, %v6324
      %v6326 = vpop.f32.mrb[0].mxu0
      %6327 = vmatprep.mubr.bf16.mxu0 0
      %6328 = vmatmul.mubr.bf16.gmra.mrb[0].mxu0 %v6104
      %v6329 = vpop.f32.mrb[0].mxu0
      %v6330 = vadd.f32 0.0, %v6329
      %v6331 = vpop.f32.mrb[0].mxu0
      %v6332 = vpop.f32.mrb[0].mxu0
      %v6333 = vadd.f32 0.0, %v6332
      %v6334 = vpop.f32.mrb[0].mxu0
      %6335 = vmatprep.mubr.bf16.mxu0 0
      %6336 = vmatmul.mubr.bf16.gmra.mrb[0].mxu0 %v6106
      %v6337 = vpop.f32.mrb[0].mxu0
      %v6338 = vadd.f32 0.0, %v6337
      %v6339 = vpop.f32.mrb[0].mxu0
      %v6340 = vpop.f32.mrb[0].mxu0
      %v6341 = vadd.f32 0.0, %v6340
      %v6342 = vpop.f32.mrb[0].mxu0
      %6343 = vmatprep.mubr.bf16.mxu0 0
      %6344 = vmatmul.mubr.bf16.gmra.mrb[0].mxu0 %v6108
      %v6345 = vpop.f32.mrb[0].mxu0
      %v6346 = vadd.f32 0.0, %v6345
      %v6347 = vpop.f32.mrb[0].mxu0
      %v6348 = vpop.f32.mrb[0].mxu0
      %v6349 = vadd.f32 0.0, %v6348
      %v6350 = vpop.f32.mrb[0].mxu0
      %6351 = vdwg.mxu0
      %v6352 = vadd.f32 %v6016, %v6210
      %v6353 = vadd.f32 %v6017, %v6213
      %v6354 = vadd.f32 %v6018, %v6218
      %v6355 = vadd.f32 %v6019, %v6221
      %v6356 = vadd.f32 %v6020, %v6226
      %v6357 = vadd.f32 %v6021, %v6229
      %v6358 = vadd.f32 %v6022, %v6234
      %v6359 = vadd.f32 %v6023, %v6237
      %v6360 = vadd.f32 %v6024, %v6242
      %v6361 = vadd.f32 %v6025, %v6245
      %v6362 = vadd.f32 %v6026, %v6250
      %v6363 = vadd.f32 %v6027, %v6253
      %v6364 = vadd.f32 %v6028, %v6258
      %v6365 = vadd.f32 %v6029, %v6261
      %v6366 = vadd.f32 %v6030, %v6266
      %v6367 = vadd.f32 %v6031, %v6269
      %v6368 = vadd.f32 %v6032, %v6274
      %v6369 = vadd.f32 %v6033, %v6277
      %v6370 = vadd.f32 %v6034, %v6282
      %v6371 = vadd.f32 %v6035, %v6285
      %v6372 = vadd.f32 %v6036, %v6290
      %v6373 = vadd.f32 %v6037, %v6293
      %v6374 = vadd.f32 %v6038, %v6298
      %v6375 = vadd.f32 %v6039, %v6301
      %v6376 = vadd.f32 %v6040, %v6306
      %v6377 = vadd.f32 %v6041, %v6309
      %v6378 = vadd.f32 %v6042, %v6314
      %v6379 = vadd.f32 %v6043, %v6317
      %v6380 = vadd.f32 %v6044, %v6322
      %v6381 = vadd.f32 %v6045, %v6325
      %v6382 = vadd.f32 %v6046, %v6330
      %v6383 = vadd.f32 %v6047, %v6333
      %v6384 = vadd.f32 %v6048, %v6338
      %v6385 = vadd.f32 %v6049, %v6341
      %v6386 = vadd.f32 %v6050, %v6346
      %v6387 = vadd.f32 %v6051, %v6349
      %v6388 = vld [vmem:[#allocation2 + $0x8] sm:$0xe]
      %v6389 = vld [vmem:[#allocation2 + $0xc] sm:$0xf]
      %v6390 = vld [vmem:[#allocation2 + $0x10] sm:$0xf]
      %v6391 = vld [vmem:[#allocation2 + $0x14] sm:$0xf]
      %v6392 = vld [vmem:[#allocation2 + $0x18] sm:$0xf]
      %v6393 = vld [vmem:[#allocation2 + $0x1c] sm:$0xf]
      %v6394 = vld [vmem:[#allocation2 + $0x20] sm:$0xf]
      %v6395 = vld [vmem:[#allocation2 + $0x24] sm:$0xf]
      %v6396 = vld [vmem:[#allocation2 + $0x28] sm:$0xf]
      %v6397 = vld [vmem:[#allocation2 + $0x2c] sm:$0xf]
      %v6398 = vld [vmem:[#allocation2 + $0x30] sm:$0xf]
      %v6399 = vld [vmem:[#allocation2 + $0x34] sm:$0xf]
      %v6400 = vld [vmem:[#allocation2 + $0x38] sm:$0xf]
      %v6401 = vld [vmem:[#allocation2 + $0x3c] sm:$0xf]
      %v6402 = vld [vmem:[#allocation2 + $0x40] sm:$0xf]
      %v6403 = vld [vmem:[#allocation2 + $0x44] sm:$0xf]
      %v6404 = vld [vmem:[#allocation2 + $0x48] sm:$0xf]
      %v6405 = vld [vmem:[#allocation2 + $0x4c] sm:$0xf]
      %v6406 = vld [vmem:[#allocation2 + $0x50] sm:$0xf]
      %v6407 = vld [vmem:[#allocation2 + $0x54] sm:$0xf]
      %v6408 = vld [vmem:[#allocation2 + $0x58] sm:$0xf]
      %v6409 = vld [vmem:[#allocation2 + $0x5c] sm:$0xf]
      %v6410 = vld [vmem:[#allocation2 + $0x60] sm:$0xf]
      %v6411 = vld [vmem:[#allocation2 + $0x64] sm:$0xf]
      %v6412 = vld [vmem:[#allocation2 + $0x68] sm:$0xf]
      %v6413 = vld [vmem:[#allocation2 + $0x6c] sm:$0xf]
      %v6414 = vld [vmem:[#allocation2 + $0x70] sm:$0xf]
      %v6415 = vld [vmem:[#allocation2 + $0x74] sm:$0xf]
      %v6416 = vld [vmem:[#allocation2 + $0x78] sm:$0xf]
      %v6417 = vld [vmem:[#allocation2 + $0x7c] sm:$0xf]
      %v6418 = vld [vmem:[#allocation2 + $0x80] sm:$0xf]
      %v6419 = vld [vmem:[#allocation2 + $0x84] sm:$0xf]
      %v6420 = vld [vmem:[#allocation2 + $0x88] sm:$0xf]
      %v6421 = vld [vmem:[#allocation2 + $0x8c] sm:$0xf]
      %v6422 = vld [vmem:[#allocation2 + $0x90] sm:$0xf]
      %v6423 = vld [vmem:[#allocation2 + $0x94] sm:$0xf]
      %v6424 = vld [vmem:[#allocation2 + $0x98] sm:$0x1]
      %v6425 = vld [vmem:[%s5 + $0xc0] sm:$0xf]
      %v6426 = vld [vmem:[%s5 + $0xc4] sm:$0xf]
      %v6427 = vld [vmem:[%s5 + $0xc8] sm:$0xf]
      %v6428 = vld [vmem:[%s5 + $0xcc] sm:$0xf]
      %v6429 = vld [vmem:[%s5 + $0xd0] sm:$0xf]
      %v6430 = vld [vmem:[%s5 + $0xd4] sm:$0xf]
      %v6431 = vld [vmem:[%s5 + $0xd8] sm:$0xf]
      %v6432 = vld [vmem:[%s5 + $0xdc] sm:$0xf]
      %v6433 = vld [vmem:[%s5 + $0xe0] sm:$0xf]
      %v6434 = vld [vmem:[%s5 + $0xe4] sm:$0xf]
      %v6435 = vld [vmem:[%s5 + $0xe8] sm:$0xf]
      %v6436 = vld [vmem:[%s5 + $0xec] sm:$0xf]
      %v6437 = vld [vmem:[%s5 + $0xf0] sm:$0xf]
      %v6438 = vld [vmem:[%s5 + $0xf4] sm:$0xf]
      %v6439 = vld [vmem:[%s5 + $0xf8] sm:$0xf]
      %v6440 = vld [vmem:[%s5 + $0xfc] sm:$0xf]
      %v6478 = vunpack.c.l.b16 %v6388
      %v6479 = vunpack.c.l.b16 %v6389
      %v6480 = vunpack.c.l.b16 %v6390
      %v6481 = vunpack.c.l.b16 %v6391
      %v6482 = vunpack.c.l.b16 %v6392
      %v6483 = vunpack.c.l.b16 %v6393
      %v6484 = vunpack.c.l.b16 %v6394
      %v6485 = vunpack.c.l.b16 %v6395
      %v6486 = vunpack.c.l.b16 %v6396
      %v6487 = vunpack.c.l.b16 %v6397
      %v6488 = vunpack.c.l.b16 %v6398
      %v6489 = vunpack.c.l.b16 %v6399
      %v6490 = vunpack.c.l.b16 %v6400
      %v6491 = vunpack.c.l.b16 %v6401
      %v6492 = vunpack.c.l.b16 %v6402
      %v6493 = vunpack.c.l.b16 %v6403
      %v6494 = vunpack.c.l.b16 %v6404
      %v6495 = vunpack.c.l.b16 %v6405
      %v6496 = vunpack.c.l.b16 %v6406
      %v6497 = vunpack.c.l.b16 %v6407
      %v6498 = vunpack.c.l.b16 %v6408
      %v6499 = vunpack.c.l.b16 %v6409
      %v6500 = vunpack.c.l.b16 %v6410
      %v6501 = vunpack.c.l.b16 %v6411
      %v6502 = vunpack.c.l.b16 %v6412
      %v6503 = vunpack.c.l.b16 %v6413
      %v6504 = vunpack.c.l.b16 %v6414
      %v6505 = vunpack.c.l.b16 %v6415
      %v6506 = vunpack.c.l.b16 %v6416
      %v6507 = vunpack.c.l.b16 %v6417
      %v6508 = vunpack.c.l.b16 %v6418
      %v6509 = vunpack.c.l.b16 %v6419
      %v6510 = vunpack.c.l.b16 %v6420
      %v6511 = vunpack.c.l.b16 %v6421
      %v6512 = vunpack.c.l.b16 %v6422
      %v6513 = vunpack.c.l.b16 %v6423
      %v6514 = vunpack.c.l.b16 %v6424
      %v6515 = vpack.c.b16 %v6479, %v6478
      %v6516 = vpack.c.b16 %v6481, %v6480
      %v6517 = vpack.c.b16 %v6483, %v6482
      %v6518 = vpack.c.b16 %v6485, %v6484
      %v6519 = vpack.c.b16 %v6487, %v6486
      %v6520 = vpack.c.b16 %v6489, %v6488
      %v6521 = vpack.c.b16 %v6491, %v6490
      %v6522 = vpack.c.b16 %v6493, %v6492
      %v6523 = vpack.c.b16 %v6495, %v6494
      %v6524 = vpack.c.b16 %v6497, %v6496
      %v6525 = vpack.c.b16 %v6499, %v6498
      %v6526 = vpack.c.b16 %v6501, %v6500
      %v6527 = vpack.c.b16 %v6503, %v6502
      %v6528 = vpack.c.b16 %v6505, %v6504
      %v6529 = vpack.c.b16 %v6507, %v6506
      %v6530 = vpack.c.b16 %v6509, %v6508
      %v6531 = vpack.c.b16 %v6511, %v6510
      %v6532 = vpack.c.b16 %v6513, %v6512
      %v6533 = vpack.c.b16 %v6514, %v6514
      %v6534 = vrot.slane %v6515, 1
      %v6535 = vrot.slane %v6516, 1
      %v6536 = vsel %vm1065, %v6534, %v6535
      %v6537 = vrot.slane %v6517, 1
      %v6538 = vsel %vm1065, %v6535, %v6537
      %v6539 = vrot.slane %v6518, 1
      %v6540 = vsel %vm1065, %v6537, %v6539
      %v6541 = vrot.slane %v6519, 1
      %v6542 = vsel %vm1065, %v6539, %v6541
      %v6543 = vrot.slane %v6520, 1
      %v6544 = vsel %vm1065, %v6541, %v6543
      %v6545 = vrot.slane %v6521, 1
      %v6546 = vsel %vm1065, %v6543, %v6545
      %v6547 = vrot.slane %v6522, 1
      %v6548 = vsel %vm1065, %v6545, %v6547
      %v6549 = vrot.slane %v6523, 1
      %v6550 = vsel %vm1065, %v6547, %v6549
      %v6551 = vrot.slane %v6524, 1
      %v6552 = vsel %vm1065, %v6549, %v6551
      %v6553 = vrot.slane %v6525, 1
      %v6554 = vsel %vm1065, %v6551, %v6553
      %v6555 = vrot.slane %v6526, 1
      %v6556 = vsel %vm1065, %v6553, %v6555
      %v6557 = vrot.slane %v6527, 1
      %v6558 = vsel %vm1065, %v6555, %v6557
      %v6559 = vrot.slane %v6528, 1
      %v6560 = vsel %vm1065, %v6557, %v6559
      %v6561 = vrot.slane %v6529, 1
      %v6562 = vsel %vm1065, %v6559, %v6561
      %v6563 = vrot.slane %v6530, 1
      %v6564 = vsel %vm1065, %v6561, %v6563
      %v6565 = vrot.slane %v6531, 1
      %v6566 = vsel %vm1065, %v6563, %v6565
      %v6567 = vrot.slane %v6532, 1
      %v6568 = vsel %vm1065, %v6565, %v6567
      %v6569 = vrot.slane %v6533, 1
      %v6570 = vsel %vm1065, %v6567, %v6569
      %v6605 = vunpack.c.l.b16 %v6425
      %v6606 = vunpack.c.l.b16 %v6426
      %v6607 = vunpack.c.l.b16 %v6427
      %v6608 = vunpack.c.l.b16 %v6428
      %v6609 = vunpack.c.l.b16 %v6429
      %v6610 = vunpack.c.l.b16 %v6430
      %v6611 = vunpack.c.l.b16 %v6431
      %v6612 = vunpack.c.l.b16 %v6432
      %v6613 = vunpack.c.l.b16 %v6433
      %v6614 = vunpack.c.l.b16 %v6434
      %v6615 = vunpack.c.l.b16 %v6435
      %v6616 = vunpack.c.l.b16 %v6436
      %v6617 = vunpack.c.l.b16 %v6437
      %v6618 = vunpack.c.l.b16 %v6438
      %v6619 = vunpack.c.l.b16 %v6439
      %v6620 = vunpack.c.l.b16 %v6440
      %v6621 = vpack.c.b16 %v6606, %v6605
      %v6622 = vpack.c.b16 %v6608, %v6607
      %v6623 = vpack.c.b16 %v6610, %v6609
      %v6624 = vpack.c.b16 %v6612, %v6611
      %v6625 = vpack.c.b16 %v6614, %v6613
      %v6626 = vpack.c.b16 %v6616, %v6615
      %v6627 = vpack.c.b16 %v6618, %v6617
      %v6628 = vpack.c.b16 %v6620, %v6619
      %6637 = vmatprep.subr.bf16.mxu0 0
      %6638 = vmatpush1.bf16.msra.mxu0 %v6621
      %6639 = vmatprep.subr.bf16.mxu0 0
      %6640 = vmatpush1.bf16.msra.mxu0 %v6622
      %6641 = vmatprep.subr.bf16.mxu0 0
      %6642 = vmatpush1.bf16.msra.mxu0 %v6623
      %6643 = vmatprep.subr.bf16.mxu0 0
      %6644 = vmatpush1.bf16.msra.mxu0 %v6624
      %6645 = vmatprep.subr.bf16.mxu0 0
      %6646 = vmatpush1.bf16.msra.mxu0 %v6625
      %6647 = vmatprep.subr.bf16.mxu0 0
      %6648 = vmatpush1.bf16.msra.mxu0 %v6626
      %6649 = vmatprep.subr.bf16.mxu0 0
      %6650 = vmatpush1.bf16.msra.mxu0 %v6627
      %6651 = vmatprep.subr.bf16.mxu0 0
      %6652 = vmatpush1.bf16.msra.mxu0 %v6628
      %6653 = vmatprep.subr.bf16.mxu0 0
      %6654 = vmatpush1.bf16.msra.mxu0 0
      %6655 = vmatprep.subr.bf16.mxu0 0
      %6656 = vmatpush1.bf16.msra.mxu0 0
      %6657 = vmatprep.subr.bf16.mxu0 0
      %6658 = vmatpush1.bf16.msra.mxu0 0
      %6659 = vmatprep.subr.bf16.mxu0 0
      %6660 = vmatpush1.bf16.msra.mxu0 0
      %6661 = vmatprep.subr.bf16.mxu0 0
      %6662 = vmatpush1.bf16.msra.mxu0 0
      %6663 = vmatprep.subr.bf16.mxu0 0
      %6664 = vmatpush1.bf16.msra.mxu0 0
      %6665 = vmatprep.subr.bf16.mxu0 0
      %6666 = vmatpush1.bf16.msra.mxu0 0
      %6667 = vmatprep.subr.bf16.mxu0 0
      %6668 = vmatpush1.bf16.msra.mxu0 0
      %6669 = vmatprep.mubr.bf16.mxu0 0
      %6670 = vmatmul.mubr.bf16.gmra.mrb[0].mxu0 %v6536
      %v6671 = vpop.f32.mrb[0].mxu0
      %v6672 = vadd.f32 0.0, %v6671
      %v6673 = vpop.f32.mrb[0].mxu0
      %v6674 = vpop.f32.mrb[0].mxu0
      %v6675 = vadd.f32 0.0, %v6674
      %v6676 = vpop.f32.mrb[0].mxu0
      %6677 = vmatprep.mubr.bf16.mxu0 0
      %6678 = vmatmul.mubr.bf16.gmra.mrb[0].mxu0 %v6538
      %v6679 = vpop.f32.mrb[0].mxu0
      %v6680 = vadd.f32 0.0, %v6679
      %v6681 = vpop.f32.mrb[0].mxu0
      %v6682 = vpop.f32.mrb[0].mxu0
      %v6683 = vadd.f32 0.0, %v6682
      %v6684 = vpop.f32.mrb[0].mxu0
      %6685 = vmatprep.mubr.bf16.mxu0 0
      %6686 = vmatmul.mubr.bf16.gmra.mrb[0].mxu0 %v6540
      %v6687 = vpop.f32.mrb[0].mxu0
      %v6688 = vadd.f32 0.0, %v6687
      %v6689 = vpop.f32.mrb[0].mxu0
      %v6690 = vpop.f32.mrb[0].mxu0
      %v6691 = vadd.f32 0.0, %v6690
      %v6692 = vpop.f32.mrb[0].mxu0
      %6693 = vmatprep.mubr.bf16.mxu0 0
      %6694 = vmatmul.mubr.bf16.gmra.mrb[0].mxu0 %v6542
      %v6695 = vpop.f32.mrb[0].mxu0
      %v6696 = vadd.f32 0.0, %v6695
      %v6697 = vpop.f32.mrb[0].mxu0
      %v6698 = vpop.f32.mrb[0].mxu0
      %v6699 = vadd.f32 0.0, %v6698
      %v6700 = vpop.f32.mrb[0].mxu0
      %6701 = vmatprep.mubr.bf16.mxu0 0
      %6702 = vmatmul.mubr.bf16.gmra.mrb[0].mxu0 %v6544
      %v6703 = vpop.f32.mrb[0].mxu0
      %v6704 = vadd.f32 0.0, %v6703
      %v6705 = vpop.f32.mrb[0].mxu0
      %v6706 = vpop.f32.mrb[0].mxu0
      %v6707 = vadd.f32 0.0, %v6706
      %v6708 = vpop.f32.mrb[0].mxu0
      %6709 = vmatprep.mubr.bf16.mxu0 0
      %6710 = vmatmul.mubr.bf16.gmra.mrb[0].mxu0 %v6546
      %v6711 = vpop.f32.mrb[0].mxu0
      %v6712 = vadd.f32 0.0, %v6711
      %v6713 = vpop.f32.mrb[0].mxu0
      %v6714 = vpop.f32.mrb[0].mxu0
      %v6715 = vadd.f32 0.0, %v6714
      %v6716 = vpop.f32.mrb[0].mxu0
      %6717 = vmatprep.mubr.bf16.mxu0 0
      %6718 = vmatmul.mubr.bf16.gmra.mrb[0].mxu0 %v6548
      %v6719 = vpop.f32.mrb[0].mxu0
      %v6720 = vadd.f32 0.0, %v6719
      %v6721 = vpop.f32.mrb[0].mxu0
      %v6722 = vpop.f32.mrb[0].mxu0
      %v6723 = vadd.f32 0.0, %v6722
      %v6724 = vpop.f32.mrb[0].mxu0
      %6725 = vmatprep.mubr.bf16.mxu0 0
      %6726 = vmatmul.mubr.bf16.gmra.mrb[0].mxu0 %v6550
      %v6727 = vpop.f32.mrb[0].mxu0
      %v6728 = vadd.f32 0.0, %v6727
      %v6729 = vpop.f32.mrb[0].mxu0
      %v6730 = vpop.f32.mrb[0].mxu0
      %v6731 = vadd.f32 0.0, %v6730
      %v6732 = vpop.f32.mrb[0].mxu0
      %6733 = vmatprep.mubr.bf16.mxu0 0
      %6734 = vmatmul.mubr.bf16.gmra.mrb[0].mxu0 %v6552
      %v6735 = vpop.f32.mrb[0].mxu0
      %v6736 = vadd.f32 0.0, %v6735
      %v6737 = vpop.f32.mrb[0].mxu0
      %v6738 = vpop.f32.mrb[0].mxu0
      %v6739 = vadd.f32 0.0, %v6738
      %v6740 = vpop.f32.mrb[0].mxu0
      %6741 = vmatprep.mubr.bf16.mxu0 0
      %6742 = vmatmul.mubr.bf16.gmra.mrb[0].mxu0 %v6554
      %v6743 = vpop.f32.mrb[0].mxu0
      %v6744 = vadd.f32 0.0, %v6743
      %v6745 = vpop.f32.mrb[0].mxu0
      %v6746 = vpop.f32.mrb[0].mxu0
      %v6747 = vadd.f32 0.0, %v6746
      %v6748 = vpop.f32.mrb[0].mxu0
      %6749 = vmatprep.mubr.bf16.mxu0 0
      %6750 = vmatmul.mubr.bf16.gmra.mrb[0].mxu0 %v6556
      %v6751 = vpop.f32.mrb[0].mxu0
      %v6752 = vadd.f32 0.0, %v6751
      %v6753 = vpop.f32.mrb[0].mxu0
      %v6754 = vpop.f32.mrb[0].mxu0
      %v6755 = vadd.f32 0.0, %v6754
      %v6756 = vpop.f32.mrb[0].mxu0
      %6757 = vmatprep.mubr.bf16.mxu0 0
      %6758 = vmatmul.mubr.bf16.gmra.mrb[0].mxu0 %v6558
      %v6759 = vpop.f32.mrb[0].mxu0
      %v6760 = vadd.f32 0.0, %v6759
      %v6761 = vpop.f32.mrb[0].mxu0
      %v6762 = vpop.f32.mrb[0].mxu0
      %v6763 = vadd.f32 0.0, %v6762
      %v6764 = vpop.f32.mrb[0].mxu0
      %6765 = vmatprep.mubr.bf16.mxu0 0
      %6766 = vmatmul.mubr.bf16.gmra.mrb[0].mxu0 %v6560
      %v6767 = vpop.f32.mrb[0].mxu0
      %v6768 = vadd.f32 0.0, %v6767
      %v6769 = vpop.f32.mrb[0].mxu0
      %v6770 = vpop.f32.mrb[0].mxu0
      %v6771 = vadd.f32 0.0, %v6770
      %v6772 = vpop.f32.mrb[0].mxu0
      %6773 = vmatprep.mubr.bf16.mxu0 0
      %6774 = vmatmul.mubr.bf16.gmra.mrb[0].mxu0 %v6562
      %v6775 = vpop.f32.mrb[0].mxu0
      %v6776 = vadd.f32 0.0, %v6775
      %v6777 = vpop.f32.mrb[0].mxu0
      %v6778 = vpop.f32.mrb[0].mxu0
      %v6779 = vadd.f32 0.0, %v6778
      %v6780 = vpop.f32.mrb[0].mxu0
      %6781 = vmatprep.mubr.bf16.mxu0 0
      %6782 = vmatmul.mubr.bf16.gmra.mrb[0].mxu0 %v6564
      %v6783 = vpop.f32.mrb[0].mxu0
      %v6784 = vadd.f32 0.0, %v6783
      %v6785 = vpop.f32.mrb[0].mxu0
      %v6786 = vpop.f32.mrb[0].mxu0
      %v6787 = vadd.f32 0.0, %v6786
      %v6788 = vpop.f32.mrb[0].mxu0
      %6789 = vmatprep.mubr.bf16.mxu0 0
      %6790 = vmatmul.mubr.bf16.gmra.mrb[0].mxu0 %v6566
      %v6791 = vpop.f32.mrb[0].mxu0
      %v6792 = vadd.f32 0.0, %v6791
      %v6793 = vpop.f32.mrb[0].mxu0
      %v6794 = vpop.f32.mrb[0].mxu0
      %v6795 = vadd.f32 0.0, %v6794
      %v6796 = vpop.f32.mrb[0].mxu0
      %6797 = vmatprep.mubr.bf16.mxu0 0
      %6798 = vmatmul.mubr.bf16.gmra.mrb[0].mxu0 %v6568
      %v6799 = vpop.f32.mrb[0].mxu0
      %v6800 = vadd.f32 0.0, %v6799
      %v6801 = vpop.f32.mrb[0].mxu0
      %v6802 = vpop.f32.mrb[0].mxu0
      %v6803 = vadd.f32 0.0, %v6802
      %v6804 = vpop.f32.mrb[0].mxu0
      %6805 = vmatprep.mubr.bf16.mxu0 0
      %6806 = vmatmul.mubr.bf16.gmra.mrb[0].mxu0 %v6570
      %v6807 = vpop.f32.mrb[0].mxu0
      %v6808 = vadd.f32 0.0, %v6807
      %v6809 = vpop.f32.mrb[0].mxu0
      %v6810 = vpop.f32.mrb[0].mxu0
      %v6811 = vadd.f32 0.0, %v6810
      %v6812 = vpop.f32.mrb[0].mxu0
      %6813 = vdwg.mxu0
      %v6814 = vadd.f32 %v6352, %v6672
      %v6815 = vadd.f32 %v6353, %v6675
      %v6816 = vadd.f32 %v6354, %v6680
      %v6817 = vadd.f32 %v6355, %v6683
      %v6818 = vadd.f32 %v6356, %v6688
      %v6819 = vadd.f32 %v6357, %v6691
      %v6820 = vadd.f32 %v6358, %v6696
      %v6821 = vadd.f32 %v6359, %v6699
      %v6822 = vadd.f32 %v6360, %v6704
      %v6823 = vadd.f32 %v6361, %v6707
      %v6824 = vadd.f32 %v6362, %v6712
      %v6825 = vadd.f32 %v6363, %v6715
      %v6826 = vadd.f32 %v6364, %v6720
      %v6827 = vadd.f32 %v6365, %v6723
      %v6828 = vadd.f32 %v6366, %v6728
      %v6829 = vadd.f32 %v6367, %v6731
      %v6830 = vadd.f32 %v6368, %v6736
      %v6831 = vadd.f32 %v6369, %v6739
      %v6832 = vadd.f32 %v6370, %v6744
      %v6833 = vadd.f32 %v6371, %v6747
      %v6834 = vadd.f32 %v6372, %v6752
      %v6835 = vadd.f32 %v6373, %v6755
      %v6836 = vadd.f32 %v6374, %v6760
      %v6837 = vadd.f32 %v6375, %v6763
      %v6838 = vadd.f32 %v6376, %v6768
      %v6839 = vadd.f32 %v6377, %v6771
      %v6840 = vadd.f32 %v6378, %v6776
      %v6841 = vadd.f32 %v6379, %v6779
      %v6842 = vadd.f32 %v6380, %v6784
      %v6843 = vadd.f32 %v6381, %v6787
      %v6844 = vadd.f32 %v6382, %v6792
      %v6845 = vadd.f32 %v6383, %v6795
      %v6846 = vadd.f32 %v6384, %v6800
      %v6847 = vadd.f32 %v6385, %v6803
      %v6848 = vadd.f32 %v6386, %v6808
      %v6849 = vadd.f32 %v6387, %v6811
      %v6850 = vld [vmem:[#allocation2 + $0x98] sm:$0x3]
      %v6851 = vld [vmem:[%s5 + $0x100] sm:$0xf]
      %v6852 = vld [vmem:[%s5 + $0x104] sm:$0xf]
      %v6853 = vld [vmem:[%s5 + $0x108] sm:$0xf]
      %v6854 = vld [vmem:[%s5 + $0x10c] sm:$0xf]
      %v6855 = vld [vmem:[%s5 + $0x110] sm:$0xf]
      %v6856 = vld [vmem:[%s5 + $0x114] sm:$0xf]
      %v6857 = vld [vmem:[%s5 + $0x118] sm:$0xf]
      %v6858 = vld [vmem:[%s5 + $0x11c] sm:$0xf]
      %v6859 = vld [vmem:[%s5 + $0x120] sm:$0xf]
      %v6860 = vld [vmem:[%s5 + $0x124] sm:$0xf]
      %v6861 = vld [vmem:[%s5 + $0x128] sm:$0xf]
      %v6862 = vld [vmem:[%s5 + $0x12c] sm:$0xf]
      %v6863 = vld [vmem:[%s5 + $0x130] sm:$0xf]
      %v6864 = vld [vmem:[%s5 + $0x134] sm:$0xf]
      %v6865 = vld [vmem:[%s5 + $0x138] sm:$0xf]
      %v6866 = vld [vmem:[%s5 + $0x13c] sm:$0xf]
      %v6868 = vunpack.c.l.b16 %v6850
      %v6869 = vpack.c.b16 %v6868, %v6868
      %v6871 = vshrl.u32 %v6515, 16
      %v6873 = vrot.slane %v6871, 1
      %v6874 = vshll.u32 %v6515, 16
      %v6876 = vrot.slane %v6874, 2
      %v6877 = vor.u32 %v6873, %v6876
      %v6879 = vshrl.u32 %v6516, 16
      %v6881 = vrot.slane %v6879, 1
      %v6882 = vshll.u32 %v6516, 16
      %v6884 = vrot.slane %v6882, 2
      %v6885 = vor.u32 %v6881, %v6884
      %v6886 = vsel %vm1816, %v6877, %v6885
      %v6888 = vshrl.u32 %v6517, 16
      %v6890 = vrot.slane %v6888, 1
      %v6891 = vshll.u32 %v6517, 16
      %v6893 = vrot.slane %v6891, 2
      %v6894 = vor.u32 %v6890, %v6893
      %v6895 = vsel %vm1816, %v6885, %v6894
      %v6897 = vshrl.u32 %v6518, 16
      %v6899 = vrot.slane %v6897, 1
      %v6900 = vshll.u32 %v6518, 16
      %v6902 = vrot.slane %v6900, 2
      %v6903 = vor.u32 %v6899, %v6902
      %v6904 = vsel %vm1816, %v6894, %v6903
      %v6906 = vshrl.u32 %v6519, 16
      %v6908 = vrot.slane %v6906, 1
      %v6909 = vshll.u32 %v6519, 16
      %v6911 = vrot.slane %v6909, 2
      %v6912 = vor.u32 %v6908, %v6911
      %v6913 = vsel %vm1816, %v6903, %v6912
      %v6915 = vshrl.u32 %v6520, 16
      %v6917 = vrot.slane %v6915, 1
      %v6918 = vshll.u32 %v6520, 16
      %v6920 = vrot.slane %v6918, 2
      %v6921 = vor.u32 %v6917, %v6920
      %v6922 = vsel %vm1816, %v6912, %v6921
      %v6924 = vshrl.u32 %v6521, 16
      %v6926 = vrot.slane %v6924, 1
      %v6927 = vshll.u32 %v6521, 16
      %v6929 = vrot.slane %v6927, 2
      %v6930 = vor.u32 %v6926, %v6929
      %v6931 = vsel %vm1816, %v6921, %v6930
      %v6933 = vshrl.u32 %v6522, 16
      %v6935 = vrot.slane %v6933, 1
      %v6936 = vshll.u32 %v6522, 16
      %v6938 = vrot.slane %v6936, 2
      %v6939 = vor.u32 %v6935, %v6938
      %v6940 = vsel %vm1816, %v6930, %v6939
      %v6942 = vshrl.u32 %v6523, 16
      %v6944 = vrot.slane %v6942, 1
      %v6945 = vshll.u32 %v6523, 16
      %v6947 = vrot.slane %v6945, 2
      %v6948 = vor.u32 %v6944, %v6947
      %v6949 = vsel %vm1816, %v6939, %v6948
      %v6951 = vshrl.u32 %v6524, 16
      %v6953 = vrot.slane %v6951, 1
      %v6954 = vshll.u32 %v6524, 16
      %v6956 = vrot.slane %v6954, 2
      %v6957 = vor.u32 %v6953, %v6956
      %v6958 = vsel %vm1816, %v6948, %v6957
      %v6960 = vshrl.u32 %v6525, 16
      %v6962 = vrot.slane %v6960, 1
      %v6963 = vshll.u32 %v6525, 16
      %v6965 = vrot.slane %v6963, 2
      %v6966 = vor.u32 %v6962, %v6965
      %v6967 = vsel %vm1816, %v6957, %v6966
      %v6969 = vshrl.u32 %v6526, 16
      %v6971 = vrot.slane %v6969, 1
      %v6972 = vshll.u32 %v6526, 16
      %v6974 = vrot.slane %v6972, 2
      %v6975 = vor.u32 %v6971, %v6974
      %v6976 = vsel %vm1816, %v6966, %v6975
      %v6978 = vshrl.u32 %v6527, 16
      %v6980 = vrot.slane %v6978, 1
      %v6981 = vshll.u32 %v6527, 16
      %v6983 = vrot.slane %v6981, 2
      %v6984 = vor.u32 %v6980, %v6983
      %v6985 = vsel %vm1816, %v6975, %v6984
      %v6987 = vshrl.u32 %v6528, 16
      %v6989 = vrot.slane %v6987, 1
      %v6990 = vshll.u32 %v6528, 16
      %v6992 = vrot.slane %v6990, 2
      %v6993 = vor.u32 %v6989, %v6992
      %v6994 = vsel %vm1816, %v6984, %v6993
      %v6996 = vshrl.u32 %v6529, 16
      %v6998 = vrot.slane %v6996, 1
      %v6999 = vshll.u32 %v6529, 16
      %v7001 = vrot.slane %v6999, 2
      %v7002 = vor.u32 %v6998, %v7001
      %v7003 = vsel %vm1816, %v6993, %v7002
      %v7005 = vshrl.u32 %v6530, 16
      %v7007 = vrot.slane %v7005, 1
      %v7008 = vshll.u32 %v6530, 16
      %v7010 = vrot.slane %v7008, 2
      %v7011 = vor.u32 %v7007, %v7010
      %v7012 = vsel %vm1816, %v7002, %v7011
      %v7014 = vshrl.u32 %v6531, 16
      %v7016 = vrot.slane %v7014, 1
      %v7017 = vshll.u32 %v6531, 16
      %v7019 = vrot.slane %v7017, 2
      %v7020 = vor.u32 %v7016, %v7019
      %v7021 = vsel %vm1816, %v7011, %v7020
      %v7023 = vshrl.u32 %v6532, 16
      %v7025 = vrot.slane %v7023, 1
      %v7026 = vshll.u32 %v6532, 16
      %v7028 = vrot.slane %v7026, 2
      %v7029 = vor.u32 %v7025, %v7028
      %v7030 = vsel %vm1816, %v7020, %v7029
      %v7032 = vshrl.u32 %v6869, 16
      %v7034 = vrot.slane %v7032, 1
      %v7035 = vshll.u32 %v6869, 16
      %v7037 = vrot.slane %v7035, 2
      %v7038 = vor.u32 %v7034, %v7037
      %v7039 = vsel %vm1816, %v7029, %v7038
      %v7074 = vunpack.c.l.b16 %v6851
      %v7075 = vunpack.c.l.b16 %v6852
      %v7076 = vunpack.c.l.b16 %v6853
      %v7077 = vunpack.c.l.b16 %v6854
      %v7078 = vunpack.c.l.b16 %v6855
      %v7079 = vunpack.c.l.b16 %v6856
      %v7080 = vunpack.c.l.b16 %v6857
      %v7081 = vunpack.c.l.b16 %v6858
      %v7082 = vunpack.c.l.b16 %v6859
      %v7083 = vunpack.c.l.b16 %v6860
      %v7084 = vunpack.c.l.b16 %v6861
      %v7085 = vunpack.c.l.b16 %v6862
      %v7086 = vunpack.c.l.b16 %v6863
      %v7087 = vunpack.c.l.b16 %v6864
      %v7088 = vunpack.c.l.b16 %v6865
      %v7089 = vunpack.c.l.b16 %v6866
      %v7090 = vpack.c.b16 %v7075, %v7074
      %v7091 = vpack.c.b16 %v7077, %v7076
      %v7092 = vpack.c.b16 %v7079, %v7078
      %v7093 = vpack.c.b16 %v7081, %v7080
      %v7094 = vpack.c.b16 %v7083, %v7082
      %v7095 = vpack.c.b16 %v7085, %v7084
      %v7096 = vpack.c.b16 %v7087, %v7086
      %v7097 = vpack.c.b16 %v7089, %v7088
      %7106 = vmatprep.subr.bf16.mxu0 0
      %7107 = vmatpush1.bf16.msra.mxu0 %v7090
      %7108 = vmatprep.subr.bf16.mxu0 0
      %7109 = vmatpush1.bf16.msra.mxu0 %v7091
      %7110 = vmatprep.subr.bf16.mxu0 0
      %7111 = vmatpush1.bf16.msra.mxu0 %v7092
      %7112 = vmatprep.subr.bf16.mxu0 0
      %7113 = vmatpush1.bf16.msra.mxu0 %v7093
      %7114 = vmatprep.subr.bf16.mxu0 0
      %7115 = vmatpush1.bf16.msra.mxu0 %v7094
      %7116 = vmatprep.subr.bf16.mxu0 0
      %7117 = vmatpush1.bf16.msra.mxu0 %v7095
      %7118 = vmatprep.subr.bf16.mxu0 0
      %7119 = vmatpush1.bf16.msra.mxu0 %v7096
      %7120 = vmatprep.subr.bf16.mxu0 0
      %7121 = vmatpush1.bf16.msra.mxu0 %v7097
      %7122 = vmatprep.subr.bf16.mxu0 0
      %7123 = vmatpush1.bf16.msra.mxu0 0
      %7124 = vmatprep.subr.bf16.mxu0 0
      %7125 = vmatpush1.bf16.msra.mxu0 0
      %7126 = vmatprep.subr.bf16.mxu0 0
      %7127 = vmatpush1.bf16.msra.mxu0 0
      %7128 = vmatprep.subr.bf16.mxu0 0
      %7129 = vmatpush1.bf16.msra.mxu0 0
      %7130 = vmatprep.subr.bf16.mxu0 0
      %7131 = vmatpush1.bf16.msra.mxu0 0
      %7132 = vmatprep.subr.bf16.mxu0 0
      %7133 = vmatpush1.bf16.msra.mxu0 0
      %7134 = vmatprep.subr.bf16.mxu0 0
      %7135 = vmatpush1.bf16.msra.mxu0 0
      %7136 = vmatprep.subr.bf16.mxu0 0
      %7137 = vmatpush1.bf16.msra.mxu0 0
      %7138 = vmatprep.mubr.bf16.mxu0 0
      %7139 = vmatmul.mubr.bf16.gmra.mrb[0].mxu0 %v6886
      %v7140 = vpop.f32.mrb[0].mxu0
      %v7141 = vadd.f32 0.0, %v7140
      %v7142 = vpop.f32.mrb[0].mxu0
      %v7143 = vpop.f32.mrb[0].mxu0
      %v7144 = vadd.f32 0.0, %v7143
      %v7145 = vpop.f32.mrb[0].mxu0
      %7146 = vmatprep.mubr.bf16.mxu0 0
      %7147 = vmatmul.mubr.bf16.gmra.mrb[0].mxu0 %v6895
      %v7148 = vpop.f32.mrb[0].mxu0
      %v7149 = vadd.f32 0.0, %v7148
      %v7150 = vpop.f32.mrb[0].mxu0
      %v7151 = vpop.f32.mrb[0].mxu0
      %v7152 = vadd.f32 0.0, %v7151
      %v7153 = vpop.f32.mrb[0].mxu0
      %7154 = vmatprep.mubr.bf16.mxu0 0
      %7155 = vmatmul.mubr.bf16.gmra.mrb[0].mxu0 %v6904
      %v7156 = vpop.f32.mrb[0].mxu0
      %v7157 = vadd.f32 0.0, %v7156
      %v7158 = vpop.f32.mrb[0].mxu0
      %v7159 = vpop.f32.mrb[0].mxu0
      %v7160 = vadd.f32 0.0, %v7159
      %v7161 = vpop.f32.mrb[0].mxu0
      %7162 = vmatprep.mubr.bf16.mxu0 0
      %7163 = vmatmul.mubr.bf16.gmra.mrb[0].mxu0 %v6913
      %v7164 = vpop.f32.mrb[0].mxu0
      %v7165 = vadd.f32 0.0, %v7164
      %v7166 = vpop.f32.mrb[0].mxu0
      %v7167 = vpop.f32.mrb[0].mxu0
      %v7168 = vadd.f32 0.0, %v7167
      %v7169 = vpop.f32.mrb[0].mxu0
      %7170 = vmatprep.mubr.bf16.mxu0 0
      %7171 = vmatmul.mubr.bf16.gmra.mrb[0].mxu0 %v6922
      %v7172 = vpop.f32.mrb[0].mxu0
      %v7173 = vadd.f32 0.0, %v7172
      %v7174 = vpop.f32.mrb[0].mxu0
      %v7175 = vpop.f32.mrb[0].mxu0
      %v7176 = vadd.f32 0.0, %v7175
      %v7177 = vpop.f32.mrb[0].mxu0
      %7178 = vmatprep.mubr.bf16.mxu0 0
      %7179 = vmatmul.mubr.bf16.gmra.mrb[0].mxu0 %v6931
      %v7180 = vpop.f32.mrb[0].mxu0
      %v7181 = vadd.f32 0.0, %v7180
      %v7182 = vpop.f32.mrb[0].mxu0
      %v7183 = vpop.f32.mrb[0].mxu0
      %v7184 = vadd.f32 0.0, %v7183
      %v7185 = vpop.f32.mrb[0].mxu0
      %7186 = vmatprep.mubr.bf16.mxu0 0
      %7187 = vmatmul.mubr.bf16.gmra.mrb[0].mxu0 %v6940
      %v7188 = vpop.f32.mrb[0].mxu0
      %v7189 = vadd.f32 0.0, %v7188
      %v7190 = vpop.f32.mrb[0].mxu0
      %v7191 = vpop.f32.mrb[0].mxu0
      %v7192 = vadd.f32 0.0, %v7191
      %v7193 = vpop.f32.mrb[0].mxu0
      %7194 = vmatprep.mubr.bf16.mxu0 0
      %7195 = vmatmul.mubr.bf16.gmra.mrb[0].mxu0 %v6949
      %v7196 = vpop.f32.mrb[0].mxu0
      %v7197 = vadd.f32 0.0, %v7196
      %v7198 = vpop.f32.mrb[0].mxu0
      %v7199 = vpop.f32.mrb[0].mxu0
      %v7200 = vadd.f32 0.0, %v7199
      %v7201 = vpop.f32.mrb[0].mxu0
      %7202 = vmatprep.mubr.bf16.mxu0 0
      %7203 = vmatmul.mubr.bf16.gmra.mrb[0].mxu0 %v6958
      %v7204 = vpop.f32.mrb[0].mxu0
      %v7205 = vadd.f32 0.0, %v7204
      %v7206 = vpop.f32.mrb[0].mxu0
      %v7207 = vpop.f32.mrb[0].mxu0
      %v7208 = vadd.f32 0.0, %v7207
      %v7209 = vpop.f32.mrb[0].mxu0
      %7210 = vmatprep.mubr.bf16.mxu0 0
      %7211 = vmatmul.mubr.bf16.gmra.mrb[0].mxu0 %v6967
      %v7212 = vpop.f32.mrb[0].mxu0
      %v7213 = vadd.f32 0.0, %v7212
      %v7214 = vpop.f32.mrb[0].mxu0
      %v7215 = vpop.f32.mrb[0].mxu0
      %v7216 = vadd.f32 0.0, %v7215
      %v7217 = vpop.f32.mrb[0].mxu0
      %7218 = vmatprep.mubr.bf16.mxu0 0
      %7219 = vmatmul.mubr.bf16.gmra.mrb[0].mxu0 %v6976
      %v7220 = vpop.f32.mrb[0].mxu0
      %v7221 = vadd.f32 0.0, %v7220
      %v7222 = vpop.f32.mrb[0].mxu0
      %v7223 = vpop.f32.mrb[0].mxu0
      %v7224 = vadd.f32 0.0, %v7223
      %v7225 = vpop.f32.mrb[0].mxu0
      %7226 = vmatprep.mubr.bf16.mxu0 0
      %7227 = vmatmul.mubr.bf16.gmra.mrb[0].mxu0 %v6985
      %v7228 = vpop.f32.mrb[0].mxu0
      %v7229 = vadd.f32 0.0, %v7228
      %v7230 = vpop.f32.mrb[0].mxu0
      %v7231 = vpop.f32.mrb[0].mxu0
      %v7232 = vadd.f32 0.0, %v7231
      %v7233 = vpop.f32.mrb[0].mxu0
      %7234 = vmatprep.mubr.bf16.mxu0 0
      %7235 = vmatmul.mubr.bf16.gmra.mrb[0].mxu0 %v6994
      %v7236 = vpop.f32.mrb[0].mxu0
      %v7237 = vadd.f32 0.0, %v7236
      %v7238 = vpop.f32.mrb[0].mxu0
      %v7239 = vpop.f32.mrb[0].mxu0
      %v7240 = vadd.f32 0.0, %v7239
      %v7241 = vpop.f32.mrb[0].mxu0
      %7242 = vmatprep.mubr.bf16.mxu0 0
      %7243 = vmatmul.mubr.bf16.gmra.mrb[0].mxu0 %v7003
      %v7244 = vpop.f32.mrb[0].mxu0
      %v7245 = vadd.f32 0.0, %v7244
      %v7246 = vpop.f32.mrb[0].mxu0
      %v7247 = vpop.f32.mrb[0].mxu0
      %v7248 = vadd.f32 0.0, %v7247
      %v7249 = vpop.f32.mrb[0].mxu0
      %7250 = vmatprep.mubr.bf16.mxu0 0
      %7251 = vmatmul.mubr.bf16.gmra.mrb[0].mxu0 %v7012
      %v7252 = vpop.f32.mrb[0].mxu0
      %v7253 = vadd.f32 0.0, %v7252
      %v7254 = vpop.f32.mrb[0].mxu0
      %v7255 = vpop.f32.mrb[0].mxu0
      %v7256 = vadd.f32 0.0, %v7255
      %v7257 = vpop.f32.mrb[0].mxu0
      %7258 = vmatprep.mubr.bf16.mxu0 0
      %7259 = vmatmul.mubr.bf16.gmra.mrb[0].mxu0 %v7021
      %v7260 = vpop.f32.mrb[0].mxu0
      %v7261 = vadd.f32 0.0, %v7260
      %v7262 = vpop.f32.mrb[0].mxu0
      %v7263 = vpop.f32.mrb[0].mxu0
      %v7264 = vadd.f32 0.0, %v7263
      %v7265 = vpop.f32.mrb[0].mxu0
      %7266 = vmatprep.mubr.bf16.mxu0 0
      %7267 = vmatmul.mubr.bf16.gmra.mrb[0].mxu0 %v7030
      %v7268 = vpop.f32.mrb[0].mxu0
      %v7269 = vadd.f32 0.0, %v7268
      %v7270 = vpop.f32.mrb[0].mxu0
      %v7271 = vpop.f32.mrb[0].mxu0
      %v7272 = vadd.f32 0.0, %v7271
      %v7273 = vpop.f32.mrb[0].mxu0
      %7274 = vmatprep.mubr.bf16.mxu0 0
      %7275 = vmatmul.mubr.bf16.gmra.mrb[0].mxu0 %v7039
      %v7276 = vpop.f32.mrb[0].mxu0
      %v7277 = vadd.f32 0.0, %v7276
      %v7278 = vpop.f32.mrb[0].mxu0
      %v7279 = vpop.f32.mrb[0].mxu0
      %v7280 = vadd.f32 0.0, %v7279
      %v7281 = vpop.f32.mrb[0].mxu0
      %7282 = vdwg.mxu0
      %v7283 = vadd.f32 %v6814, %v7141
      %v7284 = vadd.f32 %v6815, %v7144
      %v7285 = vadd.f32 %v6816, %v7149
      %v7286 = vadd.f32 %v6817, %v7152
      %v7287 = vadd.f32 %v6818, %v7157
      %v7288 = vadd.f32 %v6819, %v7160
      %v7289 = vadd.f32 %v6820, %v7165
      %v7290 = vadd.f32 %v6821, %v7168
      %v7291 = vadd.f32 %v6822, %v7173
      %v7292 = vadd.f32 %v6823, %v7176
      %v7293 = vadd.f32 %v6824, %v7181
      %v7294 = vadd.f32 %v6825, %v7184
      %v7295 = vadd.f32 %v6826, %v7189
      %v7296 = vadd.f32 %v6827, %v7192
      %v7297 = vadd.f32 %v6828, %v7197
      %v7298 = vadd.f32 %v6829, %v7200
      %v7299 = vadd.f32 %v6830, %v7205
      %v7300 = vadd.f32 %v6831, %v7208
      %v7301 = vadd.f32 %v6832, %v7213
      %v7302 = vadd.f32 %v6833, %v7216
      %v7303 = vadd.f32 %v6834, %v7221
      %v7304 = vadd.f32 %v6835, %v7224
      %v7305 = vadd.f32 %v6836, %v7229
      %v7306 = vadd.f32 %v6837, %v7232
      %v7307 = vadd.f32 %v6838, %v7237
      %v7308 = vadd.f32 %v6839, %v7240
      %v7309 = vadd.f32 %v6840, %v7245
      %v7310 = vadd.f32 %v6841, %v7248
      %v7311 = vadd.f32 %v6842, %v7253
      %v7312 = vadd.f32 %v6843, %v7256
      %v7313 = vadd.f32 %v6844, %v7261
      %v7314 = vadd.f32 %v6845, %v7264
      %v7315 = vadd.f32 %v6846, %v7269
      %v7316 = vadd.f32 %v6847, %v7272
      %v7317 = vadd.f32 %v6848, %v7277
      %v7318 = vadd.f32 %v6849, %v7280
      %v7319 = vld [vmem:[#allocation2 + $0x8] sm:$0xc]
      %v7320 = vld [vmem:[%s5 + $0x140] sm:$0xf]
      %v7321 = vld [vmem:[%s5 + $0x144] sm:$0xf]
      %v7322 = vld [vmem:[%s5 + $0x148] sm:$0xf]
      %v7323 = vld [vmem:[%s5 + $0x14c] sm:$0xf]
      %v7324 = vld [vmem:[%s5 + $0x150] sm:$0xf]
      %v7325 = vld [vmem:[%s5 + $0x154] sm:$0xf]
      %v7326 = vld [vmem:[%s5 + $0x158] sm:$0xf]
      %v7327 = vld [vmem:[%s5 + $0x15c] sm:$0xf]
      %v7328 = vld [vmem:[%s5 + $0x160] sm:$0xf]
      %v7329 = vld [vmem:[%s5 + $0x164] sm:$0xf]
      %v7330 = vld [vmem:[%s5 + $0x168] sm:$0xf]
      %v7331 = vld [vmem:[%s5 + $0x16c] sm:$0xf]
      %v7332 = vld [vmem:[%s5 + $0x170] sm:$0xf]
      %v7333 = vld [vmem:[%s5 + $0x174] sm:$0xf]
      %v7334 = vld [vmem:[%s5 + $0x178] sm:$0xf]
      %v7335 = vld [vmem:[%s5 + $0x17c] sm:$0xf]
      %v7337 = vunpack.c.l.b16 %v7319
      %v7338 = vpack.c.b16 %v6479, %v7337
      %v7339 = vrot.slane %v7338, 2
      %v7340 = vrot.slane %v6516, 2
      %v7341 = vsel %vm2262, %v7339, %v7340
      %v7342 = vrot.slane %v6517, 2
      %v7343 = vsel %vm2262, %v7340, %v7342
      %v7344 = vrot.slane %v6518, 2
      %v7345 = vsel %vm2262, %v7342, %v7344
      %v7346 = vrot.slane %v6519, 2
      %v7347 = vsel %vm2262, %v7344, %v7346
      %v7348 = vrot.slane %v6520, 2
      %v7349 = vsel %vm2262, %v7346, %v7348
      %v7350 = vrot.slane %v6521, 2
      %v7351 = vsel %vm2262, %v7348, %v7350
      %v7352 = vrot.slane %v6522, 2
      %v7353 = vsel %vm2262, %v7350, %v7352
      %v7354 = vrot.slane %v6523, 2
      %v7355 = vsel %vm2262, %v7352, %v7354
      %v7356 = vrot.slane %v6524, 2
      %v7357 = vsel %vm2262, %v7354, %v7356
      %v7358 = vrot.slane %v6525, 2
      %v7359 = vsel %vm2262, %v7356, %v7358
      %v7360 = vrot.slane %v6526, 2
      %v7361 = vsel %vm2262, %v7358, %v7360
      %v7362 = vrot.slane %v6527, 2
      %v7363 = vsel %vm2262, %v7360, %v7362
      %v7364 = vrot.slane %v6528, 2
      %v7365 = vsel %vm2262, %v7362, %v7364
      %v7366 = vrot.slane %v6529, 2
      %v7367 = vsel %vm2262, %v7364, %v7366
      %v7368 = vrot.slane %v6530, 2
      %v7369 = vsel %vm2262, %v7366, %v7368
      %v7370 = vrot.slane %v6531, 2
      %v7371 = vsel %vm2262, %v7368, %v7370
      %v7372 = vrot.slane %v6532, 2
      %v7373 = vsel %vm2262, %v7370, %v7372
      %v7374 = vrot.slane %v6869, 2
      %v7375 = vsel %vm2262, %v7372, %v7374
      %v7410 = vunpack.c.l.b16 %v7320
      %v7411 = vunpack.c.l.b16 %v7321
      %v7412 = vunpack.c.l.b16 %v7322
      %v7413 = vunpack.c.l.b16 %v7323
      %v7414 = vunpack.c.l.b16 %v7324
      %v7415 = vunpack.c.l.b16 %v7325
      %v7416 = vunpack.c.l.b16 %v7326
      %v7417 = vunpack.c.l.b16 %v7327
      %v7418 = vunpack.c.l.b16 %v7328
      %v7419 = vunpack.c.l.b16 %v7329
      %v7420 = vunpack.c.l.b16 %v7330
      %v7421 = vunpack.c.l.b16 %v7331
      %v7422 = vunpack.c.l.b16 %v7332
      %v7423 = vunpack.c.l.b16 %v7333
      %v7424 = vunpack.c.l.b16 %v7334
      %v7425 = vunpack.c.l.b16 %v7335
      %v7426 = vpack.c.b16 %v7411, %v7410
      %v7427 = vpack.c.b16 %v7413, %v7412
      %v7428 = vpack.c.b16 %v7415, %v7414
      %v7429 = vpack.c.b16 %v7417, %v7416
      %v7430 = vpack.c.b16 %v7419, %v7418
      %v7431 = vpack.c.b16 %v7421, %v7420
      %v7432 = vpack.c.b16 %v7423, %v7422
      %v7433 = vpack.c.b16 %v7425, %v7424
      %7442 = vmatprep.subr.bf16.mxu0 0
      %7443 = vmatpush1.bf16.msra.mxu0 %v7426
      %7444 = vmatprep.subr.bf16.mxu0 0
      %7445 = vmatpush1.bf16.msra.mxu0 %v7427
      %7446 = vmatprep.subr.bf16.mxu0 0
      %7447 = vmatpush1.bf16.msra.mxu0 %v7428
      %7448 = vmatprep.subr.bf16.mxu0 0
      %7449 = vmatpush1.bf16.msra.mxu0 %v7429
      %7450 = vmatprep.subr.bf16.mxu0 0
      %7451 = vmatpush1.bf16.msra.mxu0 %v7430
      %7452 = vmatprep.subr.bf16.mxu0 0
      %7453 = vmatpush1.bf16.msra.mxu0 %v7431
      %7454 = vmatprep.subr.bf16.mxu0 0
      %7455 = vmatpush1.bf16.msra.mxu0 %v7432
      %7456 = vmatprep.subr.bf16.mxu0 0
      %7457 = vmatpush1.bf16.msra.mxu0 %v7433
      %7458 = vmatprep.subr.bf16.mxu0 0
      %7459 = vmatpush1.bf16.msra.mxu0 0
      %7460 = vmatprep.subr.bf16.mxu0 0
      %7461 = vmatpush1.bf16.msra.mxu0 0
      %7462 = vmatprep.subr.bf16.mxu0 0
      %7463 = vmatpush1.bf16.msra.mxu0 0
      %7464 = vmatprep.subr.bf16.mxu0 0
      %7465 = vmatpush1.bf16.msra.mxu0 0
      %7466 = vmatprep.subr.bf16.mxu0 0
      %7467 = vmatpush1.bf16.msra.mxu0 0
      %7468 = vmatprep.subr.bf16.mxu0 0
      %7469 = vmatpush1.bf16.msra.mxu0 0
      %7470 = vmatprep.subr.bf16.mxu0 0
      %7471 = vmatpush1.bf16.msra.mxu0 0
      %7472 = vmatprep.subr.bf16.mxu0 0
      %7473 = vmatpush1.bf16.msra.mxu0 0
      %7474 = vmatprep.mubr.bf16.mxu0 0
      %7475 = vmatmul.mubr.bf16.gmra.mrb[0].mxu0 %v7341
      %v7476 = vpop.f32.mrb[0].mxu0
      %v7477 = vadd.f32 0.0, %v7476
      %v7478 = vpop.f32.mrb[0].mxu0
      %v7479 = vpop.f32.mrb[0].mxu0
      %v7480 = vadd.f32 0.0, %v7479
      %v7481 = vpop.f32.mrb[0].mxu0
      %7482 = vmatprep.mubr.bf16.mxu0 0
      %7483 = vmatmul.mubr.bf16.gmra.mrb[0].mxu0 %v7343
      %v7484 = vpop.f32.mrb[0].mxu0
      %v7485 = vadd.f32 0.0, %v7484
      %v7486 = vpop.f32.mrb[0].mxu0
      %v7487 = vpop.f32.mrb[0].mxu0
      %v7488 = vadd.f32 0.0, %v7487
      %v7489 = vpop.f32.mrb[0].mxu0
      %7490 = vmatprep.mubr.bf16.mxu0 0
      %7491 = vmatmul.mubr.bf16.gmra.mrb[0].mxu0 %v7345
      %v7492 = vpop.f32.mrb[0].mxu0
      %v7493 = vadd.f32 0.0, %v7492
      %v7494 = vpop.f32.mrb[0].mxu0
      %v7495 = vpop.f32.mrb[0].mxu0
      %v7496 = vadd.f32 0.0, %v7495
      %v7497 = vpop.f32.mrb[0].mxu0
      %7498 = vmatprep.mubr.bf16.mxu0 0
      %7499 = vmatmul.mubr.bf16.gmra.mrb[0].mxu0 %v7347
      %v7500 = vpop.f32.mrb[0].mxu0
      %v7501 = vadd.f32 0.0, %v7500
      %v7502 = vpop.f32.mrb[0].mxu0
      %v7503 = vpop.f32.mrb[0].mxu0
      %v7504 = vadd.f32 0.0, %v7503
      %v7505 = vpop.f32.mrb[0].mxu0
      %7506 = vmatprep.mubr.bf16.mxu0 0
      %7507 = vmatmul.mubr.bf16.gmra.mrb[0].mxu0 %v7349
      %v7508 = vpop.f32.mrb[0].mxu0
      %v7509 = vadd.f32 0.0, %v7508
      %v7510 = vpop.f32.mrb[0].mxu0
      %v7511 = vpop.f32.mrb[0].mxu0
      %v7512 = vadd.f32 0.0, %v7511
      %v7513 = vpop.f32.mrb[0].mxu0
      %7514 = vmatprep.mubr.bf16.mxu0 0
      %7515 = vmatmul.mubr.bf16.gmra.mrb[0].mxu0 %v7351
      %v7516 = vpop.f32.mrb[0].mxu0
      %v7517 = vadd.f32 0.0, %v7516
      %v7518 = vpop.f32.mrb[0].mxu0
      %v7519 = vpop.f32.mrb[0].mxu0
      %v7520 = vadd.f32 0.0, %v7519
      %v7521 = vpop.f32.mrb[0].mxu0
      %7522 = vmatprep.mubr.bf16.mxu0 0
      %7523 = vmatmul.mubr.bf16.gmra.mrb[0].mxu0 %v7353
      %v7524 = vpop.f32.mrb[0].mxu0
      %v7525 = vadd.f32 0.0, %v7524
      %v7526 = vpop.f32.mrb[0].mxu0
      %v7527 = vpop.f32.mrb[0].mxu0
      %v7528 = vadd.f32 0.0, %v7527
      %v7529 = vpop.f32.mrb[0].mxu0
      %7530 = vmatprep.mubr.bf16.mxu0 0
      %7531 = vmatmul.mubr.bf16.gmra.mrb[0].mxu0 %v7355
      %v7532 = vpop.f32.mrb[0].mxu0
      %v7533 = vadd.f32 0.0, %v7532
      %v7534 = vpop.f32.mrb[0].mxu0
      %v7535 = vpop.f32.mrb[0].mxu0
      %v7536 = vadd.f32 0.0, %v7535
      %v7537 = vpop.f32.mrb[0].mxu0
      %7538 = vmatprep.mubr.bf16.mxu0 0
      %7539 = vmatmul.mubr.bf16.gmra.mrb[0].mxu0 %v7357
      %v7540 = vpop.f32.mrb[0].mxu0
      %v7541 = vadd.f32 0.0, %v7540
      %v7542 = vpop.f32.mrb[0].mxu0
      %v7543 = vpop.f32.mrb[0].mxu0
      %v7544 = vadd.f32 0.0, %v7543
      %v7545 = vpop.f32.mrb[0].mxu0
      %7546 = vmatprep.mubr.bf16.mxu0 0
      %7547 = vmatmul.mubr.bf16.gmra.mrb[0].mxu0 %v7359
      %v7548 = vpop.f32.mrb[0].mxu0
      %v7549 = vadd.f32 0.0, %v7548
      %v7550 = vpop.f32.mrb[0].mxu0
      %v7551 = vpop.f32.mrb[0].mxu0
      %v7552 = vadd.f32 0.0, %v7551
      %v7553 = vpop.f32.mrb[0].mxu0
      %7554 = vmatprep.mubr.bf16.mxu0 0
      %7555 = vmatmul.mubr.bf16.gmra.mrb[0].mxu0 %v7361
      %v7556 = vpop.f32.mrb[0].mxu0
      %v7557 = vadd.f32 0.0, %v7556
      %v7558 = vpop.f32.mrb[0].mxu0
      %v7559 = vpop.f32.mrb[0].mxu0
      %v7560 = vadd.f32 0.0, %v7559
      %v7561 = vpop.f32.mrb[0].mxu0
      %7562 = vmatprep.mubr.bf16.mxu0 0
      %7563 = vmatmul.mubr.bf16.gmra.mrb[0].mxu0 %v7363
      %v7564 = vpop.f32.mrb[0].mxu0
      %v7565 = vadd.f32 0.0, %v7564
      %v7566 = vpop.f32.mrb[0].mxu0
      %v7567 = vpop.f32.mrb[0].mxu0
      %v7568 = vadd.f32 0.0, %v7567
      %v7569 = vpop.f32.mrb[0].mxu0
      %7570 = vmatprep.mubr.bf16.mxu0 0
      %7571 = vmatmul.mubr.bf16.gmra.mrb[0].mxu0 %v7365
      %v7572 = vpop.f32.mrb[0].mxu0
      %v7573 = vadd.f32 0.0, %v7572
      %v7574 = vpop.f32.mrb[0].mxu0
      %v7575 = vpop.f32.mrb[0].mxu0
      %v7576 = vadd.f32 0.0, %v7575
      %v7577 = vpop.f32.mrb[0].mxu0
      %7578 = vmatprep.mubr.bf16.mxu0 0
      %7579 = vmatmul.mubr.bf16.gmra.mrb[0].mxu0 %v7367
      %v7580 = vpop.f32.mrb[0].mxu0
      %v7581 = vadd.f32 0.0, %v7580
      %v7582 = vpop.f32.mrb[0].mxu0
      %v7583 = vpop.f32.mrb[0].mxu0
      %v7584 = vadd.f32 0.0, %v7583
      %v7585 = vpop.f32.mrb[0].mxu0
      %7586 = vmatprep.mubr.bf16.mxu0 0
      %7587 = vmatmul.mubr.bf16.gmra.mrb[0].mxu0 %v7369
      %v7588 = vpop.f32.mrb[0].mxu0
      %v7589 = vadd.f32 0.0, %v7588
      %v7590 = vpop.f32.mrb[0].mxu0
      %v7591 = vpop.f32.mrb[0].mxu0
      %v7592 = vadd.f32 0.0, %v7591
      %v7593 = vpop.f32.mrb[0].mxu0
      %7594 = vmatprep.mubr.bf16.mxu0 0
      %7595 = vmatmul.mubr.bf16.gmra.mrb[0].mxu0 %v7371
      %v7596 = vpop.f32.mrb[0].mxu0
      %v7597 = vadd.f32 0.0, %v7596
      %v7598 = vpop.f32.mrb[0].mxu0
      %v7599 = vpop.f32.mrb[0].mxu0
      %v7600 = vadd.f32 0.0, %v7599
      %v7601 = vpop.f32.mrb[0].mxu0
      %7602 = vmatprep.mubr.bf16.mxu0 0
      %7603 = vmatmul.mubr.bf16.gmra.mrb[0].mxu0 %v7373
      %v7604 = vpop.f32.mrb[0].mxu0
      %v7605 = vadd.f32 0.0, %v7604
      %v7606 = vpop.f32.mrb[0].mxu0
      %v7607 = vpop.f32.mrb[0].mxu0
      %v7608 = vadd.f32 0.0, %v7607
      %v7609 = vpop.f32.mrb[0].mxu0
      %7610 = vmatprep.mubr.bf16.mxu0 0
      %7611 = vmatmul.mubr.bf16.gmra.mrb[0].mxu0 %v7375
      %v7612 = vpop.f32.mrb[0].mxu0
      %v7613 = vadd.f32 0.0, %v7612
      %v7614 = vpop.f32.mrb[0].mxu0
      %v7615 = vpop.f32.mrb[0].mxu0
      %v7616 = vadd.f32 0.0, %v7615
      %v7617 = vpop.f32.mrb[0].mxu0
      %7618 = vdwg.mxu0
      %v7619 = vadd.f32 %v7283, %v7477
      %v7620 = vadd.f32 %v7284, %v7480
      %v7621 = vadd.f32 %v7285, %v7485
      %v7622 = vadd.f32 %v7286, %v7488
      %v7623 = vadd.f32 %v7287, %v7493
      %v7624 = vadd.f32 %v7288, %v7496
      %v7625 = vadd.f32 %v7289, %v7501
      %v7626 = vadd.f32 %v7290, %v7504
      %v7627 = vadd.f32 %v7291, %v7509
      %v7628 = vadd.f32 %v7292, %v7512
      %v7629 = vadd.f32 %v7293, %v7517
      %v7630 = vadd.f32 %v7294, %v7520
      %v7631 = vadd.f32 %v7295, %v7525
      %v7632 = vadd.f32 %v7296, %v7528
      %v7633 = vadd.f32 %v7297, %v7533
      %v7634 = vadd.f32 %v7298, %v7536
      %v7635 = vadd.f32 %v7299, %v7541
      %v7636 = vadd.f32 %v7300, %v7544
      %v7637 = vadd.f32 %v7301, %v7549
      %v7638 = vadd.f32 %v7302, %v7552
      %v7639 = vadd.f32 %v7303, %v7557
      %v7640 = vadd.f32 %v7304, %v7560
      %v7641 = vadd.f32 %v7305, %v7565
      %v7642 = vadd.f32 %v7306, %v7568
      %v7643 = vadd.f32 %v7307, %v7573
      %v7644 = vadd.f32 %v7308, %v7576
      %v7645 = vadd.f32 %v7309, %v7581
      %v7646 = vadd.f32 %v7310, %v7584
      %v7647 = vadd.f32 %v7311, %v7589
      %v7648 = vadd.f32 %v7312, %v7592
      %v7649 = vadd.f32 %v7313, %v7597
      %v7650 = vadd.f32 %v7314, %v7600
      %v7651 = vadd.f32 %v7315, %v7605
      %v7652 = vadd.f32 %v7316, %v7608
      %v7653 = vadd.f32 %v7317, %v7613
      %v7654 = vadd.f32 %v7318, %v7616
      %v7655 = vld [vmem:[#allocation2 + $0x10] sm:$0xc]
      %v7656 = vld [vmem:[#allocation2 + $0x14] sm:$0xf]
      %v7657 = vld [vmem:[#allocation2 + $0x18] sm:$0xf]
      %v7658 = vld [vmem:[#allocation2 + $0x1c] sm:$0xf]
      %v7659 = vld [vmem:[#allocation2 + $0x20] sm:$0xf]
      %v7660 = vld [vmem:[#allocation2 + $0x24] sm:$0xf]
      %v7661 = vld [vmem:[#allocation2 + $0x28] sm:$0xf]
      %v7662 = vld [vmem:[#allocation2 + $0x2c] sm:$0xf]
      %v7663 = vld [vmem:[#allocation2 + $0x30] sm:$0xf]
      %v7664 = vld [vmem:[#allocation2 + $0x34] sm:$0xf]
      %v7665 = vld [vmem:[#allocation2 + $0x38] sm:$0xf]
      %v7666 = vld [vmem:[#allocation2 + $0x3c] sm:$0xf]
      %v7667 = vld [vmem:[#allocation2 + $0x40] sm:$0xf]
      %v7668 = vld [vmem:[#allocation2 + $0x44] sm:$0xf]
      %v7669 = vld [vmem:[#allocation2 + $0x48] sm:$0xf]
      %v7670 = vld [vmem:[#allocation2 + $0x4c] sm:$0xf]
      %v7671 = vld [vmem:[#allocation2 + $0x50] sm:$0xf]
      %v7672 = vld [vmem:[#allocation2 + $0x54] sm:$0xf]
      %v7673 = vld [vmem:[#allocation2 + $0x58] sm:$0xf]
      %v7674 = vld [vmem:[#allocation2 + $0x5c] sm:$0xf]
      %v7675 = vld [vmem:[#allocation2 + $0x60] sm:$0xf]
      %v7676 = vld [vmem:[#allocation2 + $0x64] sm:$0xf]
      %v7677 = vld [vmem:[#allocation2 + $0x68] sm:$0xf]
      %v7678 = vld [vmem:[#allocation2 + $0x6c] sm:$0xf]
      %v7679 = vld [vmem:[#allocation2 + $0x70] sm:$0xf]
      %v7680 = vld [vmem:[#allocation2 + $0x74] sm:$0xf]
      %v7681 = vld [vmem:[#allocation2 + $0x78] sm:$0xf]
      %v7682 = vld [vmem:[#allocation2 + $0x7c] sm:$0xf]
      %v7683 = vld [vmem:[#allocation2 + $0x80] sm:$0xf]
      %v7684 = vld [vmem:[#allocation2 + $0x84] sm:$0xf]
      %v7685 = vld [vmem:[#allocation2 + $0x88] sm:$0xf]
      %v7686 = vld [vmem:[#allocation2 + $0x8c] sm:$0xf]
      %v7687 = vld [vmem:[#allocation2 + $0x90] sm:$0xf]
      %v7688 = vld [vmem:[#allocation2 + $0x94] sm:$0xf]
      %v7689 = vld [vmem:[#allocation2 + $0x98] sm:$0xf]
      %v7690 = vld [vmem:[#allocation2 + $0x9c] sm:$0xf]
      %v7691 = vld [vmem:[#allocation2 + $0xa0] sm:$0x3]
      %v7692 = vld [vmem:[%s5 + $0x180] sm:$0xf]
      %v7693 = vld [vmem:[%s5 + $0x184] sm:$0xf]
      %v7694 = vld [vmem:[%s5 + $0x188] sm:$0xf]
      %v7695 = vld [vmem:[%s5 + $0x18c] sm:$0xf]
      %v7696 = vld [vmem:[%s5 + $0x190] sm:$0xf]
      %v7697 = vld [vmem:[%s5 + $0x194] sm:$0xf]
      %v7698 = vld [vmem:[%s5 + $0x198] sm:$0xf]
      %v7699 = vld [vmem:[%s5 + $0x19c] sm:$0xf]
      %v7700 = vld [vmem:[%s5 + $0x1a0] sm:$0xf]
      %v7701 = vld [vmem:[%s5 + $0x1a4] sm:$0xf]
      %v7702 = vld [vmem:[%s5 + $0x1a8] sm:$0xf]
      %v7703 = vld [vmem:[%s5 + $0x1ac] sm:$0xf]
      %v7704 = vld [vmem:[%s5 + $0x1b0] sm:$0xf]
      %v7705 = vld [vmem:[%s5 + $0x1b4] sm:$0xf]
      %v7706 = vld [vmem:[%s5 + $0x1b8] sm:$0xf]
      %v7707 = vld [vmem:[%s5 + $0x1bc] sm:$0xf]
      %v7745 = vunpack.c.l.b16 %v7655
      %v7746 = vunpack.c.l.b16 %v7656
      %v7747 = vunpack.c.l.b16 %v7657
      %v7748 = vunpack.c.l.b16 %v7658
      %v7749 = vunpack.c.l.b16 %v7659
      %v7750 = vunpack.c.l.b16 %v7660
      %v7751 = vunpack.c.l.b16 %v7661
      %v7752 = vunpack.c.l.b16 %v7662
      %v7753 = vunpack.c.l.b16 %v7663
      %v7754 = vunpack.c.l.b16 %v7664
      %v7755 = vunpack.c.l.b16 %v7665
      %v7756 = vunpack.c.l.b16 %v7666
      %v7757 = vunpack.c.l.b16 %v7667
      %v7758 = vunpack.c.l.b16 %v7668
      %v7759 = vunpack.c.l.b16 %v7669
      %v7760 = vunpack.c.l.b16 %v7670
      %v7761 = vunpack.c.l.b16 %v7671
      %v7762 = vunpack.c.l.b16 %v7672
      %v7763 = vunpack.c.l.b16 %v7673
      %v7764 = vunpack.c.l.b16 %v7674
      %v7765 = vunpack.c.l.b16 %v7675
      %v7766 = vunpack.c.l.b16 %v7676
      %v7767 = vunpack.c.l.b16 %v7677
      %v7768 = vunpack.c.l.b16 %v7678
      %v7769 = vunpack.c.l.b16 %v7679
      %v7770 = vunpack.c.l.b16 %v7680
      %v7771 = vunpack.c.l.b16 %v7681
      %v7772 = vunpack.c.l.b16 %v7682
      %v7773 = vunpack.c.l.b16 %v7683
      %v7774 = vunpack.c.l.b16 %v7684
      %v7775 = vunpack.c.l.b16 %v7685
      %v7776 = vunpack.c.l.b16 %v7686
      %v7777 = vunpack.c.l.b16 %v7687
      %v7778 = vunpack.c.l.b16 %v7688
      %v7779 = vunpack.c.l.b16 %v7689
      %v7780 = vunpack.c.l.b16 %v7690
      %v7781 = vunpack.c.l.b16 %v7691
      %v7782 = vpack.c.b16 %v7746, %v7745
      %v7783 = vpack.c.b16 %v7748, %v7747
      %v7784 = vpack.c.b16 %v7750, %v7749
      %v7785 = vpack.c.b16 %v7752, %v7751
      %v7786 = vpack.c.b16 %v7754, %v7753
      %v7787 = vpack.c.b16 %v7756, %v7755
      %v7788 = vpack.c.b16 %v7758, %v7757
      %v7789 = vpack.c.b16 %v7760, %v7759
      %v7790 = vpack.c.b16 %v7762, %v7761
      %v7791 = vpack.c.b16 %v7764, %v7763
      %v7792 = vpack.c.b16 %v7766, %v7765
      %v7793 = vpack.c.b16 %v7768, %v7767
      %v7794 = vpack.c.b16 %v7770, %v7769
      %v7795 = vpack.c.b16 %v7772, %v7771
      %v7796 = vpack.c.b16 %v7774, %v7773
      %v7797 = vpack.c.b16 %v7776, %v7775
      %v7798 = vpack.c.b16 %v7778, %v7777
      %v7799 = vpack.c.b16 %v7780, %v7779
      %v7800 = vpack.c.b16 %v7781, %v7781
      %v7801 = vrot.slane %v7782, 2
      %v7802 = vrot.slane %v7783, 2
      %v7803 = vsel %vm2262, %v7801, %v7802
      %v7804 = vrot.slane %v7784, 2
      %v7805 = vsel %vm2262, %v7802, %v7804
      %v7806 = vrot.slane %v7785, 2
      %v7807 = vsel %vm2262, %v7804, %v7806
      %v7808 = vrot.slane %v7786, 2
      %v7809 = vsel %vm2262, %v7806, %v7808
      %v7810 = vrot.slane %v7787, 2
      %v7811 = vsel %vm2262, %v7808, %v7810
      %v7812 = vrot.slane %v7788, 2
      %v7813 = vsel %vm2262, %v7810, %v7812
      %v7814 = vrot.slane %v7789, 2
      %v7815 = vsel %vm2262, %v7812, %v7814
      %v7816 = vrot.slane %v7790, 2
      %v7817 = vsel %vm2262, %v7814, %v7816
      %v7818 = vrot.slane %v7791, 2
      %v7819 = vsel %vm2262, %v7816, %v7818
      %v7820 = vrot.slane %v7792, 2
      %v7821 = vsel %vm2262, %v7818, %v7820
      %v7822 = vrot.slane %v7793, 2
      %v7823 = vsel %vm2262, %v7820, %v7822
      %v7824 = vrot.slane %v7794, 2
      %v7825 = vsel %vm2262, %v7822, %v7824
      %v7826 = vrot.slane %v7795, 2
      %v7827 = vsel %vm2262, %v7824, %v7826
      %v7828 = vrot.slane %v7796, 2
      %v7829 = vsel %vm2262, %v7826, %v7828
      %v7830 = vrot.slane %v7797, 2
      %v7831 = vsel %vm2262, %v7828, %v7830
      %v7832 = vrot.slane %v7798, 2
      %v7833 = vsel %vm2262, %v7830, %v7832
      %v7834 = vrot.slane %v7799, 2
      %v7835 = vsel %vm2262, %v7832, %v7834
      %v7836 = vrot.slane %v7800, 2
      %v7837 = vsel %vm2262, %v7834, %v7836
      %v7872 = vunpack.c.l.b16 %v7692
      %v7873 = vunpack.c.l.b16 %v7693
      %v7874 = vunpack.c.l.b16 %v7694
      %v7875 = vunpack.c.l.b16 %v7695
      %v7876 = vunpack.c.l.b16 %v7696
      %v7877 = vunpack.c.l.b16 %v7697
      %v7878 = vunpack.c.l.b16 %v7698
      %v7879 = vunpack.c.l.b16 %v7699
      %v7880 = vunpack.c.l.b16 %v7700
      %v7881 = vunpack.c.l.b16 %v7701
      %v7882 = vunpack.c.l.b16 %v7702
      %v7883 = vunpack.c.l.b16 %v7703
      %v7884 = vunpack.c.l.b16 %v7704
      %v7885 = vunpack.c.l.b16 %v7705
      %v7886 = vunpack.c.l.b16 %v7706
      %v7887 = vunpack.c.l.b16 %v7707
      %v7888 = vpack.c.b16 %v7873, %v7872
      %v7889 = vpack.c.b16 %v7875, %v7874
      %v7890 = vpack.c.b16 %v7877, %v7876
      %v7891 = vpack.c.b16 %v7879, %v7878
      %v7892 = vpack.c.b16 %v7881, %v7880
      %v7893 = vpack.c.b16 %v7883, %v7882
      %v7894 = vpack.c.b16 %v7885, %v7884
      %v7895 = vpack.c.b16 %v7887, %v7886
      %7904 = vmatprep.subr.bf16.mxu0 0
      %7905 = vmatpush1.bf16.msra.mxu0 %v7888
      %7906 = vmatprep.subr.bf16.mxu0 0
      %7907 = vmatpush1.bf16.msra.mxu0 %v7889
      %7908 = vmatprep.subr.bf16.mxu0 0
      %7909 = vmatpush1.bf16.msra.mxu0 %v7890
      %7910 = vmatprep.subr.bf16.mxu0 0
      %7911 = vmatpush1.bf16.msra.mxu0 %v7891
      %7912 = vmatprep.subr.bf16.mxu0 0
      %7913 = vmatpush1.bf16.msra.mxu0 %v7892
      %7914 = vmatprep.subr.bf16.mxu0 0
      %7915 = vmatpush1.bf16.msra.mxu0 %v7893
      %7916 = vmatprep.subr.bf16.mxu0 0
      %7917 = vmatpush1.bf16.msra.mxu0 %v7894
      %7918 = vmatprep.subr.bf16.mxu0 0
      %7919 = vmatpush1.bf16.msra.mxu0 %v7895
      %7920 = vmatprep.subr.bf16.mxu0 0
      %7921 = vmatpush1.bf16.msra.mxu0 0
      %7922 = vmatprep.subr.bf16.mxu0 0
      %7923 = vmatpush1.bf16.msra.mxu0 0
      %7924 = vmatprep.subr.bf16.mxu0 0
      %7925 = vmatpush1.bf16.msra.mxu0 0
      %7926 = vmatprep.subr.bf16.mxu0 0
      %7927 = vmatpush1.bf16.msra.mxu0 0
      %7928 = vmatprep.subr.bf16.mxu0 0
      %7929 = vmatpush1.bf16.msra.mxu0 0
      %7930 = vmatprep.subr.bf16.mxu0 0
      %7931 = vmatpush1.bf16.msra.mxu0 0
      %7932 = vmatprep.subr.bf16.mxu0 0
      %7933 = vmatpush1.bf16.msra.mxu0 0
      %7934 = vmatprep.subr.bf16.mxu0 0
      %7935 = vmatpush1.bf16.msra.mxu0 0
      %7936 = vmatprep.mubr.bf16.mxu0 0
      %7937 = vmatmul.mubr.bf16.gmra.mrb[0].mxu0 %v7803
      %v7938 = vpop.f32.mrb[0].mxu0
      %v7939 = vadd.f32 0.0, %v7938
      %v7940 = vpop.f32.mrb[0].mxu0
      %v7941 = vpop.f32.mrb[0].mxu0
      %v7942 = vadd.f32 0.0, %v7941
      %v7943 = vpop.f32.mrb[0].mxu0
      %7944 = vmatprep.mubr.bf16.mxu0 0
      %7945 = vmatmul.mubr.bf16.gmra.mrb[0].mxu0 %v7805
      %v7946 = vpop.f32.mrb[0].mxu0
      %v7947 = vadd.f32 0.0, %v7946
      %v7948 = vpop.f32.mrb[0].mxu0
      %v7949 = vpop.f32.mrb[0].mxu0
      %v7950 = vadd.f32 0.0, %v7949
      %v7951 = vpop.f32.mrb[0].mxu0
      %7952 = vmatprep.mubr.bf16.mxu0 0
      %7953 = vmatmul.mubr.bf16.gmra.mrb[0].mxu0 %v7807
      %v7954 = vpop.f32.mrb[0].mxu0
      %v7955 = vadd.f32 0.0, %v7954
      %v7956 = vpop.f32.mrb[0].mxu0
      %v7957 = vpop.f32.mrb[0].mxu0
      %v7958 = vadd.f32 0.0, %v7957
      %v7959 = vpop.f32.mrb[0].mxu0
      %7960 = vmatprep.mubr.bf16.mxu0 0
      %7961 = vmatmul.mubr.bf16.gmra.mrb[0].mxu0 %v7809
      %v7962 = vpop.f32.mrb[0].mxu0
      %v7963 = vadd.f32 0.0, %v7962
      %v7964 = vpop.f32.mrb[0].mxu0
      %v7965 = vpop.f32.mrb[0].mxu0
      %v7966 = vadd.f32 0.0, %v7965
      %v7967 = vpop.f32.mrb[0].mxu0
      %7968 = vmatprep.mubr.bf16.mxu0 0
      %7969 = vmatmul.mubr.bf16.gmra.mrb[0].mxu0 %v7811
      %v7970 = vpop.f32.mrb[0].mxu0
      %v7971 = vadd.f32 0.0, %v7970
      %v7972 = vpop.f32.mrb[0].mxu0
      %v7973 = vpop.f32.mrb[0].mxu0
      %v7974 = vadd.f32 0.0, %v7973
      %v7975 = vpop.f32.mrb[0].mxu0
      %7976 = vmatprep.mubr.bf16.mxu0 0
      %7977 = vmatmul.mubr.bf16.gmra.mrb[0].mxu0 %v7813
      %v7978 = vpop.f32.mrb[0].mxu0
      %v7979 = vadd.f32 0.0, %v7978
      %v7980 = vpop.f32.mrb[0].mxu0
      %v7981 = vpop.f32.mrb[0].mxu0
      %v7982 = vadd.f32 0.0, %v7981
      %v7983 = vpop.f32.mrb[0].mxu0
      %7984 = vmatprep.mubr.bf16.mxu0 0
      %7985 = vmatmul.mubr.bf16.gmra.mrb[0].mxu0 %v7815
      %v7986 = vpop.f32.mrb[0].mxu0
      %v7987 = vadd.f32 0.0, %v7986
      %v7988 = vpop.f32.mrb[0].mxu0
      %v7989 = vpop.f32.mrb[0].mxu0
      %v7990 = vadd.f32 0.0, %v7989
      %v7991 = vpop.f32.mrb[0].mxu0
      %7992 = vmatprep.mubr.bf16.mxu0 0
      %7993 = vmatmul.mubr.bf16.gmra.mrb[0].mxu0 %v7817
      %v7994 = vpop.f32.mrb[0].mxu0
      %v7995 = vadd.f32 0.0, %v7994
      %v7996 = vpop.f32.mrb[0].mxu0
      %v7997 = vpop.f32.mrb[0].mxu0
      %v7998 = vadd.f32 0.0, %v7997
      %v7999 = vpop.f32.mrb[0].mxu0
      %8000 = vmatprep.mubr.bf16.mxu0 0
      %8001 = vmatmul.mubr.bf16.gmra.mrb[0].mxu0 %v7819
      %v8002 = vpop.f32.mrb[0].mxu0
      %v8003 = vadd.f32 0.0, %v8002
      %v8004 = vpop.f32.mrb[0].mxu0
      %v8005 = vpop.f32.mrb[0].mxu0
      %v8006 = vadd.f32 0.0, %v8005
      %v8007 = vpop.f32.mrb[0].mxu0
      %8008 = vmatprep.mubr.bf16.mxu0 0
      %8009 = vmatmul.mubr.bf16.gmra.mrb[0].mxu0 %v7821
      %v8010 = vpop.f32.mrb[0].mxu0
      %v8011 = vadd.f32 0.0, %v8010
      %v8012 = vpop.f32.mrb[0].mxu0
      %v8013 = vpop.f32.mrb[0].mxu0
      %v8014 = vadd.f32 0.0, %v8013
      %v8015 = vpop.f32.mrb[0].mxu0
      %8016 = vmatprep.mubr.bf16.mxu0 0
      %8017 = vmatmul.mubr.bf16.gmra.mrb[0].mxu0 %v7823
      %v8018 = vpop.f32.mrb[0].mxu0
      %v8019 = vadd.f32 0.0, %v8018
      %v8020 = vpop.f32.mrb[0].mxu0
      %v8021 = vpop.f32.mrb[0].mxu0
      %v8022 = vadd.f32 0.0, %v8021
      %v8023 = vpop.f32.mrb[0].mxu0
      %8024 = vmatprep.mubr.bf16.mxu0 0
      %8025 = vmatmul.mubr.bf16.gmra.mrb[0].mxu0 %v7825
      %v8026 = vpop.f32.mrb[0].mxu0
      %v8027 = vadd.f32 0.0, %v8026
      %v8028 = vpop.f32.mrb[0].mxu0
      %v8029 = vpop.f32.mrb[0].mxu0
      %v8030 = vadd.f32 0.0, %v8029
      %v8031 = vpop.f32.mrb[0].mxu0
      %8032 = vmatprep.mubr.bf16.mxu0 0
      %8033 = vmatmul.mubr.bf16.gmra.mrb[0].mxu0 %v7827
      %v8034 = vpop.f32.mrb[0].mxu0
      %v8035 = vadd.f32 0.0, %v8034
      %v8036 = vpop.f32.mrb[0].mxu0
      %v8037 = vpop.f32.mrb[0].mxu0
      %v8038 = vadd.f32 0.0, %v8037
      %v8039 = vpop.f32.mrb[0].mxu0
      %8040 = vmatprep.mubr.bf16.mxu0 0
      %8041 = vmatmul.mubr.bf16.gmra.mrb[0].mxu0 %v7829
      %v8042 = vpop.f32.mrb[0].mxu0
      %v8043 = vadd.f32 0.0, %v8042
      %v8044 = vpop.f32.mrb[0].mxu0
      %v8045 = vpop.f32.mrb[0].mxu0
      %v8046 = vadd.f32 0.0, %v8045
      %v8047 = vpop.f32.mrb[0].mxu0
      %8048 = vmatprep.mubr.bf16.mxu0 0
      %8049 = vmatmul.mubr.bf16.gmra.mrb[0].mxu0 %v7831
      %v8050 = vpop.f32.mrb[0].mxu0
      %v8051 = vadd.f32 0.0, %v8050
      %v8052 = vpop.f32.mrb[0].mxu0
      %v8053 = vpop.f32.mrb[0].mxu0
      %v8054 = vadd.f32 0.0, %v8053
      %v8055 = vpop.f32.mrb[0].mxu0
      %8056 = vmatprep.mubr.bf16.mxu0 0
      %8057 = vmatmul.mubr.bf16.gmra.mrb[0].mxu0 %v7833
      %v8058 = vpop.f32.mrb[0].mxu0
      %v8059 = vadd.f32 0.0, %v8058
      %v8060 = vpop.f32.mrb[0].mxu0
      %v8061 = vpop.f32.mrb[0].mxu0
      %v8062 = vadd.f32 0.0, %v8061
      %v8063 = vpop.f32.mrb[0].mxu0
      %8064 = vmatprep.mubr.bf16.mxu0 0
      %8065 = vmatmul.mubr.bf16.gmra.mrb[0].mxu0 %v7835
      %v8066 = vpop.f32.mrb[0].mxu0
      %v8067 = vadd.f32 0.0, %v8066
      %v8068 = vpop.f32.mrb[0].mxu0
      %v8069 = vpop.f32.mrb[0].mxu0
      %v8070 = vadd.f32 0.0, %v8069
      %v8071 = vpop.f32.mrb[0].mxu0
      %8072 = vmatprep.mubr.bf16.mxu0 0
      %8073 = vmatmul.mubr.bf16.gmra.mrb[0].mxu0 %v7837
      %v8074 = vpop.f32.mrb[0].mxu0
      %v8075 = vadd.f32 0.0, %v8074
      %v8076 = vpop.f32.mrb[0].mxu0
      %v8077 = vpop.f32.mrb[0].mxu0
      %v8078 = vadd.f32 0.0, %v8077
      %v8079 = vpop.f32.mrb[0].mxu0
      %8080 = vdwg.mxu0
      %v8081 = vadd.f32 %v7619, %v7939
      %v8082 = vadd.f32 %v7620, %v7942
      %v8083 = vadd.f32 %v7621, %v7947
      %v8084 = vadd.f32 %v7622, %v7950
      %v8085 = vadd.f32 %v7623, %v7955
      %v8086 = vadd.f32 %v7624, %v7958
      %v8087 = vadd.f32 %v7625, %v7963
      %v8088 = vadd.f32 %v7626, %v7966
      %v8089 = vadd.f32 %v7627, %v7971
      %v8090 = vadd.f32 %v7628, %v7974
      %v8091 = vadd.f32 %v7629, %v7979
      %v8092 = vadd.f32 %v7630, %v7982
      %v8093 = vadd.f32 %v7631, %v7987
      %v8094 = vadd.f32 %v7632, %v7990
      %v8095 = vadd.f32 %v7633, %v7995
      %v8096 = vadd.f32 %v7634, %v7998
      %v8097 = vadd.f32 %v7635, %v8003
      %v8098 = vadd.f32 %v7636, %v8006
      %v8099 = vadd.f32 %v7637, %v8011
      %v8100 = vadd.f32 %v7638, %v8014
      %v8101 = vadd.f32 %v7639, %v8019
      %v8102 = vadd.f32 %v7640, %v8022
      %v8103 = vadd.f32 %v7641, %v8027
      %v8104 = vadd.f32 %v7642, %v8030
      %v8105 = vadd.f32 %v7643, %v8035
      %v8106 = vadd.f32 %v7644, %v8038
      %v8107 = vadd.f32 %v7645, %v8043
      %v8108 = vadd.f32 %v7646, %v8046
      %v8109 = vadd.f32 %v7647, %v8051
      %v8110 = vadd.f32 %v7648, %v8054
      %v8111 = vadd.f32 %v7649, %v8059
      %v8112 = vadd.f32 %v7650, %v8062
      %v8113 = vadd.f32 %v7651, %v8067
      %v8114 = vadd.f32 %v7652, %v8070
      %v8115 = vadd.f32 %v7653, %v8075
      %v8116 = vadd.f32 %v7654, %v8078
      %v8117 = vld [vmem:[#allocation2 + $0xa0] sm:$0x7]
      %v8118 = vld [vmem:[%s5 + $0x1c0] sm:$0xf]
      %v8119 = vld [vmem:[%s5 + $0x1c4] sm:$0xf]
      %v8120 = vld [vmem:[%s5 + $0x1c8] sm:$0xf]
      %v8121 = vld [vmem:[%s5 + $0x1cc] sm:$0xf]
      %v8122 = vld [vmem:[%s5 + $0x1d0] sm:$0xf]
      %v8123 = vld [vmem:[%s5 + $0x1d4] sm:$0xf]
      %v8124 = vld [vmem:[%s5 + $0x1d8] sm:$0xf]
      %v8125 = vld [vmem:[%s5 + $0x1dc] sm:$0xf]
      %v8126 = vld [vmem:[%s5 + $0x1e0] sm:$0xf]
      %v8127 = vld [vmem:[%s5 + $0x1e4] sm:$0xf]
      %v8128 = vld [vmem:[%s5 + $0x1e8] sm:$0xf]
      %v8129 = vld [vmem:[%s5 + $0x1ec] sm:$0xf]
      %v8130 = vld [vmem:[%s5 + $0x1f0] sm:$0xf]
      %v8131 = vld [vmem:[%s5 + $0x1f4] sm:$0xf]
      %v8132 = vld [vmem:[%s5 + $0x1f8] sm:$0xf]
      %v8133 = vld [vmem:[%s5 + $0x1fc] sm:$0xf]
      %v8135 = vunpack.c.l.b16 %v8117
      %v8136 = vpack.c.b16 %v8135, %v8135
      %v8138 = vshrl.u32 %v7782, 16
      %v8140 = vrot.slane %v8138, 2
      %v8141 = vshll.u32 %v7782, 16
      %v8143 = vrot.slane %v8141, 3
      %v8144 = vor.u32 %v8140, %v8143
      %v8146 = vshrl.u32 %v7783, 16
      %v8148 = vrot.slane %v8146, 2
      %v8149 = vshll.u32 %v7783, 16
      %v8151 = vrot.slane %v8149, 3
      %v8152 = vor.u32 %v8148, %v8151
      %v8153 = vsel %vm3013, %v8144, %v8152
      %v8155 = vshrl.u32 %v7784, 16
      %v8157 = vrot.slane %v8155, 2
      %v8158 = vshll.u32 %v7784, 16
      %v8160 = vrot.slane %v8158, 3
      %v8161 = vor.u32 %v8157, %v8160
      %v8162 = vsel %vm3013, %v8152, %v8161
      %v8164 = vshrl.u32 %v7785, 16
      %v8166 = vrot.slane %v8164, 2
      %v8167 = vshll.u32 %v7785, 16
      %v8169 = vrot.slane %v8167, 3
      %v8170 = vor.u32 %v8166, %v8169
      %v8171 = vsel %vm3013, %v8161, %v8170
      %v8173 = vshrl.u32 %v7786, 16
      %v8175 = vrot.slane %v8173, 2
      %v8176 = vshll.u32 %v7786, 16
      %v8178 = vrot.slane %v8176, 3
      %v8179 = vor.u32 %v8175, %v8178
      %v8180 = vsel %vm3013, %v8170, %v8179
      %v8182 = vshrl.u32 %v7787, 16
      %v8184 = vrot.slane %v8182, 2
      %v8185 = vshll.u32 %v7787, 16
      %v8187 = vrot.slane %v8185, 3
      %v8188 = vor.u32 %v8184, %v8187
      %v8189 = vsel %vm3013, %v8179, %v8188
      %v8191 = vshrl.u32 %v7788, 16
      %v8193 = vrot.slane %v8191, 2
      %v8194 = vshll.u32 %v7788, 16
      %v8196 = vrot.slane %v8194, 3
      %v8197 = vor.u32 %v8193, %v8196
      %v8198 = vsel %vm3013, %v8188, %v8197
      %v8200 = vshrl.u32 %v7789, 16
      %v8202 = vrot.slane %v8200, 2
      %v8203 = vshll.u32 %v7789, 16
      %v8205 = vrot.slane %v8203, 3
      %v8206 = vor.u32 %v8202, %v8205
      %v8207 = vsel %vm3013, %v8197, %v8206
      %v8209 = vshrl.u32 %v7790, 16
      %v8211 = vrot.slane %v8209, 2
      %v8212 = vshll.u32 %v7790, 16
      %v8214 = vrot.slane %v8212, 3
      %v8215 = vor.u32 %v8211, %v8214
      %v8216 = vsel %vm3013, %v8206, %v8215
      %v8218 = vshrl.u32 %v7791, 16
      %v8220 = vrot.slane %v8218, 2
      %v8221 = vshll.u32 %v7791, 16
      %v8223 = vrot.slane %v8221, 3
      %v8224 = vor.u32 %v8220, %v8223
      %v8225 = vsel %vm3013, %v8215, %v8224
      %v8227 = vshrl.u32 %v7792, 16
      %v8229 = vrot.slane %v8227, 2
      %v8230 = vshll.u32 %v7792, 16
      %v8232 = vrot.slane %v8230, 3
      %v8233 = vor.u32 %v8229, %v8232
      %v8234 = vsel %vm3013, %v8224, %v8233
      %v8236 = vshrl.u32 %v7793, 16
      %v8238 = vrot.slane %v8236, 2
      %v8239 = vshll.u32 %v7793, 16
      %v8241 = vrot.slane %v8239, 3
      %v8242 = vor.u32 %v8238, %v8241
      %v8243 = vsel %vm3013, %v8233, %v8242
      %v8245 = vshrl.u32 %v7794, 16
      %v8247 = vrot.slane %v8245, 2
      %v8248 = vshll.u32 %v7794, 16
      %v8250 = vrot.slane %v8248, 3
      %v8251 = vor.u32 %v8247, %v8250
      %v8252 = vsel %vm3013, %v8242, %v8251
      %v8254 = vshrl.u32 %v7795, 16
      %v8256 = vrot.slane %v8254, 2
      %v8257 = vshll.u32 %v7795, 16
      %v8259 = vrot.slane %v8257, 3
      %v8260 = vor.u32 %v8256, %v8259
      %v8261 = vsel %vm3013, %v8251, %v8260
      %v8263 = vshrl.u32 %v7796, 16
      %v8265 = vrot.slane %v8263, 2
      %v8266 = vshll.u32 %v7796, 16
      %v8268 = vrot.slane %v8266, 3
      %v8269 = vor.u32 %v8265, %v8268
      %v8270 = vsel %vm3013, %v8260, %v8269
      %v8272 = vshrl.u32 %v7797, 16
      %v8274 = vrot.slane %v8272, 2
      %v8275 = vshll.u32 %v7797, 16
      %v8277 = vrot.slane %v8275, 3
      %v8278 = vor.u32 %v8274, %v8277
      %v8279 = vsel %vm3013, %v8269, %v8278
      %v8281 = vshrl.u32 %v7798, 16
      %v8283 = vrot.slane %v8281, 2
      %v8284 = vshll.u32 %v7798, 16
      %v8286 = vrot.slane %v8284, 3
      %v8287 = vor.u32 %v8283, %v8286
      %v8288 = vsel %vm3013, %v8278, %v8287
      %v8290 = vshrl.u32 %v7799, 16
      %v8292 = vrot.slane %v8290, 2
      %v8293 = vshll.u32 %v7799, 16
      %v8295 = vrot.slane %v8293, 3
      %v8296 = vor.u32 %v8292, %v8295
      %v8297 = vsel %vm3013, %v8287, %v8296
      %v8299 = vshrl.u32 %v8136, 16
      %v8301 = vrot.slane %v8299, 2
      %v8302 = vshll.u32 %v8136, 16
      %v8304 = vrot.slane %v8302, 3
      %v8305 = vor.u32 %v8301, %v8304
      %v8306 = vsel %vm3013, %v8296, %v8305
      %v8341 = vunpack.c.l.b16 %v8118
      %v8342 = vunpack.c.l.b16 %v8119
      %v8343 = vunpack.c.l.b16 %v8120
      %v8344 = vunpack.c.l.b16 %v8121
      %v8345 = vunpack.c.l.b16 %v8122
      %v8346 = vunpack.c.l.b16 %v8123
      %v8347 = vunpack.c.l.b16 %v8124
      %v8348 = vunpack.c.l.b16 %v8125
      %v8349 = vunpack.c.l.b16 %v8126
      %v8350 = vunpack.c.l.b16 %v8127
      %v8351 = vunpack.c.l.b16 %v8128
      %v8352 = vunpack.c.l.b16 %v8129
      %v8353 = vunpack.c.l.b16 %v8130
      %v8354 = vunpack.c.l.b16 %v8131
      %v8355 = vunpack.c.l.b16 %v8132
      %v8356 = vunpack.c.l.b16 %v8133
      %v8357 = vpack.c.b16 %v8342, %v8341
      %v8358 = vpack.c.b16 %v8344, %v8343
      %v8359 = vpack.c.b16 %v8346, %v8345
      %v8360 = vpack.c.b16 %v8348, %v8347
      %v8361 = vpack.c.b16 %v8350, %v8349
      %v8362 = vpack.c.b16 %v8352, %v8351
      %v8363 = vpack.c.b16 %v8354, %v8353
      %v8364 = vpack.c.b16 %v8356, %v8355
      %8373 = vmatprep.subr.bf16.mxu0 0
      %8374 = vmatpush1.bf16.msra.mxu0 %v8357
      %8375 = vmatprep.subr.bf16.mxu0 0
      %8376 = vmatpush1.bf16.msra.mxu0 %v8358
      %8377 = vmatprep.subr.bf16.mxu0 0
      %8378 = vmatpush1.bf16.msra.mxu0 %v8359
      %8379 = vmatprep.subr.bf16.mxu0 0
      %8380 = vmatpush1.bf16.msra.mxu0 %v8360
      %8381 = vmatprep.subr.bf16.mxu0 0
      %8382 = vmatpush1.bf16.msra.mxu0 %v8361
      %8383 = vmatprep.subr.bf16.mxu0 0
      %8384 = vmatpush1.bf16.msra.mxu0 %v8362
      %8385 = vmatprep.subr.bf16.mxu0 0
      %8386 = vmatpush1.bf16.msra.mxu0 %v8363
      %8387 = vmatprep.subr.bf16.mxu0 0
      %8388 = vmatpush1.bf16.msra.mxu0 %v8364
      %8389 = vmatprep.subr.bf16.mxu0 0
      %8390 = vmatpush1.bf16.msra.mxu0 0
      %8391 = vmatprep.subr.bf16.mxu0 0
      %8392 = vmatpush1.bf16.msra.mxu0 0
      %8393 = vmatprep.subr.bf16.mxu0 0
      %8394 = vmatpush1.bf16.msra.mxu0 0
      %8395 = vmatprep.subr.bf16.mxu0 0
      %8396 = vmatpush1.bf16.msra.mxu0 0
      %8397 = vmatprep.subr.bf16.mxu0 0
      %8398 = vmatpush1.bf16.msra.mxu0 0
      %8399 = vmatprep.subr.bf16.mxu0 0
      %8400 = vmatpush1.bf16.msra.mxu0 0
      %8401 = vmatprep.subr.bf16.mxu0 0
      %8402 = vmatpush1.bf16.msra.mxu0 0
      %8403 = vmatprep.subr.bf16.mxu0 0
      %8404 = vmatpush1.bf16.msra.mxu0 0
      %8405 = vmatprep.mubr.bf16.mxu0 0
      %8406 = vmatmul.mubr.bf16.gmra.mrb[0].mxu0 %v8153
      %v8407 = vpop.f32.mrb[0].mxu0
      %v8408 = vadd.f32 0.0, %v8407
      %v8409 = vpop.f32.mrb[0].mxu0
      %v8410 = vpop.f32.mrb[0].mxu0
      %v8411 = vadd.f32 0.0, %v8410
      %v8412 = vpop.f32.mrb[0].mxu0
      %8413 = vmatprep.mubr.bf16.mxu0 0
      %8414 = vmatmul.mubr.bf16.gmra.mrb[0].mxu0 %v8162
      %v8415 = vpop.f32.mrb[0].mxu0
      %v8416 = vadd.f32 0.0, %v8415
      %v8417 = vpop.f32.mrb[0].mxu0
      %v8418 = vpop.f32.mrb[0].mxu0
      %v8419 = vadd.f32 0.0, %v8418
      %v8420 = vpop.f32.mrb[0].mxu0
      %8421 = vmatprep.mubr.bf16.mxu0 0
      %8422 = vmatmul.mubr.bf16.gmra.mrb[0].mxu0 %v8171
      %v8423 = vpop.f32.mrb[0].mxu0
      %v8424 = vadd.f32 0.0, %v8423
      %v8425 = vpop.f32.mrb[0].mxu0
      %v8426 = vpop.f32.mrb[0].mxu0
      %v8427 = vadd.f32 0.0, %v8426
      %v8428 = vpop.f32.mrb[0].mxu0
      %8429 = vmatprep.mubr.bf16.mxu0 0
      %8430 = vmatmul.mubr.bf16.gmra.mrb[0].mxu0 %v8180
      %v8431 = vpop.f32.mrb[0].mxu0
      %v8432 = vadd.f32 0.0, %v8431
      %v8433 = vpop.f32.mrb[0].mxu0
      %v8434 = vpop.f32.mrb[0].mxu0
      %v8435 = vadd.f32 0.0, %v8434
      %v8436 = vpop.f32.mrb[0].mxu0
      %8437 = vmatprep.mubr.bf16.mxu0 0
      %8438 = vmatmul.mubr.bf16.gmra.mrb[0].mxu0 %v8189
      %v8439 = vpop.f32.mrb[0].mxu0
      %v8440 = vadd.f32 0.0, %v8439
      %v8441 = vpop.f32.mrb[0].mxu0
      %v8442 = vpop.f32.mrb[0].mxu0
      %v8443 = vadd.f32 0.0, %v8442
      %v8444 = vpop.f32.mrb[0].mxu0
      %8445 = vmatprep.mubr.bf16.mxu0 0
      %8446 = vmatmul.mubr.bf16.gmra.mrb[0].mxu0 %v8198
      %v8447 = vpop.f32.mrb[0].mxu0
      %v8448 = vadd.f32 0.0, %v8447
      %v8449 = vpop.f32.mrb[0].mxu0
      %v8450 = vpop.f32.mrb[0].mxu0
      %v8451 = vadd.f32 0.0, %v8450
      %v8452 = vpop.f32.mrb[0].mxu0
      %8453 = vmatprep.mubr.bf16.mxu0 0
      %8454 = vmatmul.mubr.bf16.gmra.mrb[0].mxu0 %v8207
      %v8455 = vpop.f32.mrb[0].mxu0
      %v8456 = vadd.f32 0.0, %v8455
      %v8457 = vpop.f32.mrb[0].mxu0
      %v8458 = vpop.f32.mrb[0].mxu0
      %v8459 = vadd.f32 0.0, %v8458
      %v8460 = vpop.f32.mrb[0].mxu0
      %8461 = vmatprep.mubr.bf16.mxu0 0
      %8462 = vmatmul.mubr.bf16.gmra.mrb[0].mxu0 %v8216
      %v8463 = vpop.f32.mrb[0].mxu0
      %v8464 = vadd.f32 0.0, %v8463
      %v8465 = vpop.f32.mrb[0].mxu0
      %v8466 = vpop.f32.mrb[0].mxu0
      %v8467 = vadd.f32 0.0, %v8466
      %v8468 = vpop.f32.mrb[0].mxu0
      %8469 = vmatprep.mubr.bf16.mxu0 0
      %8470 = vmatmul.mubr.bf16.gmra.mrb[0].mxu0 %v8225
      %v8471 = vpop.f32.mrb[0].mxu0
      %v8472 = vadd.f32 0.0, %v8471
      %v8473 = vpop.f32.mrb[0].mxu0
      %v8474 = vpop.f32.mrb[0].mxu0
      %v8475 = vadd.f32 0.0, %v8474
      %v8476 = vpop.f32.mrb[0].mxu0
      %8477 = vmatprep.mubr.bf16.mxu0 0
      %8478 = vmatmul.mubr.bf16.gmra.mrb[0].mxu0 %v8234
      %v8479 = vpop.f32.mrb[0].mxu0
      %v8480 = vadd.f32 0.0, %v8479
      %v8481 = vpop.f32.mrb[0].mxu0
      %v8482 = vpop.f32.mrb[0].mxu0
      %v8483 = vadd.f32 0.0, %v8482
      %v8484 = vpop.f32.mrb[0].mxu0
      %8485 = vmatprep.mubr.bf16.mxu0 0
      %8486 = vmatmul.mubr.bf16.gmra.mrb[0].mxu0 %v8243
      %v8487 = vpop.f32.mrb[0].mxu0
      %v8488 = vadd.f32 0.0, %v8487
      %v8489 = vpop.f32.mrb[0].mxu0
      %v8490 = vpop.f32.mrb[0].mxu0
      %v8491 = vadd.f32 0.0, %v8490
      %v8492 = vpop.f32.mrb[0].mxu0
      %8493 = vmatprep.mubr.bf16.mxu0 0
      %8494 = vmatmul.mubr.bf16.gmra.mrb[0].mxu0 %v8252
      %v8495 = vpop.f32.mrb[0].mxu0
      %v8496 = vadd.f32 0.0, %v8495
      %v8497 = vpop.f32.mrb[0].mxu0
      %v8498 = vpop.f32.mrb[0].mxu0
      %v8499 = vadd.f32 0.0, %v8498
      %v8500 = vpop.f32.mrb[0].mxu0
      %8501 = vmatprep.mubr.bf16.mxu0 0
      %8502 = vmatmul.mubr.bf16.gmra.mrb[0].mxu0 %v8261
      %v8503 = vpop.f32.mrb[0].mxu0
      %v8504 = vadd.f32 0.0, %v8503
      %v8505 = vpop.f32.mrb[0].mxu0
      %v8506 = vpop.f32.mrb[0].mxu0
      %v8507 = vadd.f32 0.0, %v8506
      %v8508 = vpop.f32.mrb[0].mxu0
      %8509 = vmatprep.mubr.bf16.mxu0 0
      %8510 = vmatmul.mubr.bf16.gmra.mrb[0].mxu0 %v8270
      %v8511 = vpop.f32.mrb[0].mxu0
      %v8512 = vadd.f32 0.0, %v8511
      %v8513 = vpop.f32.mrb[0].mxu0
      %v8514 = vpop.f32.mrb[0].mxu0
      %v8515 = vadd.f32 0.0, %v8514
      %v8516 = vpop.f32.mrb[0].mxu0
      %8517 = vmatprep.mubr.bf16.mxu0 0
      %8518 = vmatmul.mubr.bf16.gmra.mrb[0].mxu0 %v8279
      %v8519 = vpop.f32.mrb[0].mxu0
      %v8520 = vadd.f32 0.0, %v8519
      %v8521 = vpop.f32.mrb[0].mxu0
      %v8522 = vpop.f32.mrb[0].mxu0
      %v8523 = vadd.f32 0.0, %v8522
      %v8524 = vpop.f32.mrb[0].mxu0
      %8525 = vmatprep.mubr.bf16.mxu0 0
      %8526 = vmatmul.mubr.bf16.gmra.mrb[0].mxu0 %v8288
      %v8527 = vpop.f32.mrb[0].mxu0
      %v8528 = vadd.f32 0.0, %v8527
      %v8529 = vpop.f32.mrb[0].mxu0
      %v8530 = vpop.f32.mrb[0].mxu0
      %v8531 = vadd.f32 0.0, %v8530
      %v8532 = vpop.f32.mrb[0].mxu0
      %8533 = vmatprep.mubr.bf16.mxu0 0
      %8534 = vmatmul.mubr.bf16.gmra.mrb[0].mxu0 %v8297
      %v8535 = vpop.f32.mrb[0].mxu0
      %v8536 = vadd.f32 0.0, %v8535
      %v8537 = vpop.f32.mrb[0].mxu0
      %v8538 = vpop.f32.mrb[0].mxu0
      %v8539 = vadd.f32 0.0, %v8538
      %v8540 = vpop.f32.mrb[0].mxu0
      %8541 = vmatprep.mubr.bf16.mxu0 0
      %8542 = vmatmul.mubr.bf16.gmra.mrb[0].mxu0 %v8306
      %v8543 = vpop.f32.mrb[0].mxu0
      %v8544 = vadd.f32 0.0, %v8543
      %v8545 = vpop.f32.mrb[0].mxu0
      %v8546 = vpop.f32.mrb[0].mxu0
      %v8547 = vadd.f32 0.0, %v8546
      %v8548 = vpop.f32.mrb[0].mxu0
      %8549 = vdwg.mxu0
      %v8550 = vadd.f32 %v8081, %v8408
      %v8551 = vadd.f32 %v8082, %v8411
      %v8552 = vadd.f32 %v8083, %v8416
      %v8553 = vadd.f32 %v8084, %v8419
      %v8554 = vadd.f32 %v8085, %v8424
      %v8555 = vadd.f32 %v8086, %v8427
      %v8556 = vadd.f32 %v8087, %v8432
      %v8557 = vadd.f32 %v8088, %v8435
      %v8558 = vadd.f32 %v8089, %v8440
      %v8559 = vadd.f32 %v8090, %v8443
      %v8560 = vadd.f32 %v8091, %v8448
      %v8561 = vadd.f32 %v8092, %v8451
      %v8562 = vadd.f32 %v8093, %v8456
      %v8563 = vadd.f32 %v8094, %v8459
      %v8564 = vadd.f32 %v8095, %v8464
      %v8565 = vadd.f32 %v8096, %v8467
      %v8566 = vadd.f32 %v8097, %v8472
      %v8567 = vadd.f32 %v8098, %v8475
      %v8568 = vadd.f32 %v8099, %v8480
      %v8569 = vadd.f32 %v8100, %v8483
      %v8570 = vadd.f32 %v8101, %v8488
      %v8571 = vadd.f32 %v8102, %v8491
      %v8572 = vadd.f32 %v8103, %v8496
      %v8573 = vadd.f32 %v8104, %v8499
      %v8574 = vadd.f32 %v8105, %v8504
      %v8575 = vadd.f32 %v8106, %v8507
      %v8576 = vadd.f32 %v8107, %v8512
      %v8577 = vadd.f32 %v8108, %v8515
      %v8578 = vadd.f32 %v8109, %v8520
      %v8579 = vadd.f32 %v8110, %v8523
      %v8580 = vadd.f32 %v8111, %v8528
      %v8581 = vadd.f32 %v8112, %v8531
      %v8582 = vadd.f32 %v8113, %v8536
      %v8583 = vadd.f32 %v8114, %v8539
      %v8584 = vadd.f32 %v8115, %v8544
      %v8585 = vadd.f32 %v8116, %v8547
      %v8586 = vld [vmem:[#allocation2 + $0x10] sm:$0x8]
      %v8587 = vld [vmem:[%s5 + $0x200] sm:$0xf]
      %v8588 = vld [vmem:[%s5 + $0x204] sm:$0xf]
      %v8589 = vld [vmem:[%s5 + $0x208] sm:$0xf]
      %v8590 = vld [vmem:[%s5 + $0x20c] sm:$0xf]
      %v8591 = vld [vmem:[%s5 + $0x210] sm:$0xf]
      %v8592 = vld [vmem:[%s5 + $0x214] sm:$0xf]
      %v8593 = vld [vmem:[%s5 + $0x218] sm:$0xf]
      %v8594 = vld [vmem:[%s5 + $0x21c] sm:$0xf]
      %v8595 = vld [vmem:[%s5 + $0x220] sm:$0xf]
      %v8596 = vld [vmem:[%s5 + $0x224] sm:$0xf]
      %v8597 = vld [vmem:[%s5 + $0x228] sm:$0xf]
      %v8598 = vld [vmem:[%s5 + $0x22c] sm:$0xf]
      %v8599 = vld [vmem:[%s5 + $0x230] sm:$0xf]
      %v8600 = vld [vmem:[%s5 + $0x234] sm:$0xf]
      %v8601 = vld [vmem:[%s5 + $0x238] sm:$0xf]
      %v8602 = vld [vmem:[%s5 + $0x23c] sm:$0xf]
      %v8604 = vunpack.c.l.b16 %v8586
      %v8605 = vpack.c.b16 %v7746, %v8604
      %v8606 = vrot.slane %v8605, 3
      %v8607 = vrot.slane %v7783, 3
      %v8608 = vsel %vm3459, %v8606, %v8607
      %v8609 = vrot.slane %v7784, 3
      %v8610 = vsel %vm3459, %v8607, %v8609
      %v8611 = vrot.slane %v7785, 3
      %v8612 = vsel %vm3459, %v8609, %v8611
      %v8613 = vrot.slane %v7786, 3
      %v8614 = vsel %vm3459, %v8611, %v8613
      %v8615 = vrot.slane %v7787, 3
      %v8616 = vsel %vm3459, %v8613, %v8615
      %v8617 = vrot.slane %v7788, 3
      %v8618 = vsel %vm3459, %v8615, %v8617
      %v8619 = vrot.slane %v7789, 3
      %v8620 = vsel %vm3459, %v8617, %v8619
      %v8621 = vrot.slane %v7790, 3
      %v8622 = vsel %vm3459, %v8619, %v8621
      %v8623 = vrot.slane %v7791, 3
      %v8624 = vsel %vm3459, %v8621, %v8623
      %v8625 = vrot.slane %v7792, 3
      %v8626 = vsel %vm3459, %v8623, %v8625
      %v8627 = vrot.slane %v7793, 3
      %v8628 = vsel %vm3459, %v8625, %v8627
      %v8629 = vrot.slane %v7794, 3
      %v8630 = vsel %vm3459, %v8627, %v8629
      %v8631 = vrot.slane %v7795, 3
      %v8632 = vsel %vm3459, %v8629, %v8631
      %v8633 = vrot.slane %v7796, 3
      %v8634 = vsel %vm3459, %v8631, %v8633
      %v8635 = vrot.slane %v7797, 3
      %v8636 = vsel %vm3459, %v8633, %v8635
      %v8637 = vrot.slane %v7798, 3
      %v8638 = vsel %vm3459, %v8635, %v8637
      %v8639 = vrot.slane %v7799, 3
      %v8640 = vsel %vm3459, %v8637, %v8639
      %v8641 = vrot.slane %v8136, 3
      %v8642 = vsel %vm3459, %v8639, %v8641
      %v8677 = vunpack.c.l.b16 %v8587
      %v8678 = vunpack.c.l.b16 %v8588
      %v8679 = vunpack.c.l.b16 %v8589
      %v8680 = vunpack.c.l.b16 %v8590
      %v8681 = vunpack.c.l.b16 %v8591
      %v8682 = vunpack.c.l.b16 %v8592
      %v8683 = vunpack.c.l.b16 %v8593
      %v8684 = vunpack.c.l.b16 %v8594
      %v8685 = vunpack.c.l.b16 %v8595
      %v8686 = vunpack.c.l.b16 %v8596
      %v8687 = vunpack.c.l.b16 %v8597
      %v8688 = vunpack.c.l.b16 %v8598
      %v8689 = vunpack.c.l.b16 %v8599
      %v8690 = vunpack.c.l.b16 %v8600
      %v8691 = vunpack.c.l.b16 %v8601
      %v8692 = vunpack.c.l.b16 %v8602
      %v8693 = vpack.c.b16 %v8678, %v8677
      %v8694 = vpack.c.b16 %v8680, %v8679
      %v8695 = vpack.c.b16 %v8682, %v8681
      %v8696 = vpack.c.b16 %v8684, %v8683
      %v8697 = vpack.c.b16 %v8686, %v8685
      %v8698 = vpack.c.b16 %v8688, %v8687
      %v8699 = vpack.c.b16 %v8690, %v8689
      %v8700 = vpack.c.b16 %v8692, %v8691
      %8709 = vmatprep.subr.bf16.mxu0 0
      %8710 = vmatpush1.bf16.msra.mxu0 %v8693
      %8711 = vmatprep.subr.bf16.mxu0 0
      %8712 = vmatpush1.bf16.msra.mxu0 %v8694
      %8713 = vmatprep.subr.bf16.mxu0 0
      %8714 = vmatpush1.bf16.msra.mxu0 %v8695
      %8715 = vmatprep.subr.bf16.mxu0 0
      %8716 = vmatpush1.bf16.msra.mxu0 %v8696
      %8717 = vmatprep.subr.bf16.mxu0 0
      %8718 = vmatpush1.bf16.msra.mxu0 %v8697
      %8719 = vmatprep.subr.bf16.mxu0 0
      %8720 = vmatpush1.bf16.msra.mxu0 %v8698
      %8721 = vmatprep.subr.bf16.mxu0 0
      %8722 = vmatpush1.bf16.msra.mxu0 %v8699
      %8723 = vmatprep.subr.bf16.mxu0 0
      %8724 = vmatpush1.bf16.msra.mxu0 %v8700
      %8725 = vmatprep.subr.bf16.mxu0 0
      %8726 = vmatpush1.bf16.msra.mxu0 0
      %8727 = vmatprep.subr.bf16.mxu0 0
      %8728 = vmatpush1.bf16.msra.mxu0 0
      %8729 = vmatprep.subr.bf16.mxu0 0
      %8730 = vmatpush1.bf16.msra.mxu0 0
      %8731 = vmatprep.subr.bf16.mxu0 0
      %8732 = vmatpush1.bf16.msra.mxu0 0
      %8733 = vmatprep.subr.bf16.mxu0 0
      %8734 = vmatpush1.bf16.msra.mxu0 0
      %8735 = vmatprep.subr.bf16.mxu0 0
      %8736 = vmatpush1.bf16.msra.mxu0 0
      %8737 = vmatprep.subr.bf16.mxu0 0
      %8738 = vmatpush1.bf16.msra.mxu0 0
      %8739 = vmatprep.subr.bf16.mxu0 0
      %8740 = vmatpush1.bf16.msra.mxu0 0
      %8741 = vmatprep.mubr.bf16.mxu0 0
      %8742 = vmatmul.mubr.bf16.gmra.mrb[0].mxu0 %v8608
      %v8743 = vpop.f32.mrb[0].mxu0
      %v8744 = vadd.f32 0.0, %v8743
      %v8745 = vpop.f32.mrb[0].mxu0
      %v8746 = vpop.f32.mrb[0].mxu0
      %v8747 = vadd.f32 0.0, %v8746
      %v8748 = vpop.f32.mrb[0].mxu0
      %8749 = vmatprep.mubr.bf16.mxu0 0
      %8750 = vmatmul.mubr.bf16.gmra.mrb[0].mxu0 %v8610
      %v8751 = vpop.f32.mrb[0].mxu0
      %v8752 = vadd.f32 0.0, %v8751
      %v8753 = vpop.f32.mrb[0].mxu0
      %v8754 = vpop.f32.mrb[0].mxu0
      %v8755 = vadd.f32 0.0, %v8754
      %v8756 = vpop.f32.mrb[0].mxu0
      %8757 = vmatprep.mubr.bf16.mxu0 0
      %8758 = vmatmul.mubr.bf16.gmra.mrb[0].mxu0 %v8612
      %v8759 = vpop.f32.mrb[0].mxu0
      %v8760 = vadd.f32 0.0, %v8759
      %v8761 = vpop.f32.mrb[0].mxu0
      %v8762 = vpop.f32.mrb[0].mxu0
      %v8763 = vadd.f32 0.0, %v8762
      %v8764 = vpop.f32.mrb[0].mxu0
      %8765 = vmatprep.mubr.bf16.mxu0 0
      %8766 = vmatmul.mubr.bf16.gmra.mrb[0].mxu0 %v8614
      %v8767 = vpop.f32.mrb[0].mxu0
      %v8768 = vadd.f32 0.0, %v8767
      %v8769 = vpop.f32.mrb[0].mxu0
      %v8770 = vpop.f32.mrb[0].mxu0
      %v8771 = vadd.f32 0.0, %v8770
      %v8772 = vpop.f32.mrb[0].mxu0
      %8773 = vmatprep.mubr.bf16.mxu0 0
      %8774 = vmatmul.mubr.bf16.gmra.mrb[0].mxu0 %v8616
      %v8775 = vpop.f32.mrb[0].mxu0
      %v8776 = vadd.f32 0.0, %v8775
      %v8777 = vpop.f32.mrb[0].mxu0
      %v8778 = vpop.f32.mrb[0].mxu0
      %v8779 = vadd.f32 0.0, %v8778
      %v8780 = vpop.f32.mrb[0].mxu0
      %8781 = vmatprep.mubr.bf16.mxu0 0
      %8782 = vmatmul.mubr.bf16.gmra.mrb[0].mxu0 %v8618
      %v8783 = vpop.f32.mrb[0].mxu0
      %v8784 = vadd.f32 0.0, %v8783
      %v8785 = vpop.f32.mrb[0].mxu0
      %v8786 = vpop.f32.mrb[0].mxu0
      %v8787 = vadd.f32 0.0, %v8786
      %v8788 = vpop.f32.mrb[0].mxu0
      %8789 = vmatprep.mubr.bf16.mxu0 0
      %8790 = vmatmul.mubr.bf16.gmra.mrb[0].mxu0 %v8620
      %v8791 = vpop.f32.mrb[0].mxu0
      %v8792 = vadd.f32 0.0, %v8791
      %v8793 = vpop.f32.mrb[0].mxu0
      %v8794 = vpop.f32.mrb[0].mxu0
      %v8795 = vadd.f32 0.0, %v8794
      %v8796 = vpop.f32.mrb[0].mxu0
      %8797 = vmatprep.mubr.bf16.mxu0 0
      %8798 = vmatmul.mubr.bf16.gmra.mrb[0].mxu0 %v8622
      %v8799 = vpop.f32.mrb[0].mxu0
      %v8800 = vadd.f32 0.0, %v8799
      %v8801 = vpop.f32.mrb[0].mxu0
      %v8802 = vpop.f32.mrb[0].mxu0
      %v8803 = vadd.f32 0.0, %v8802
      %v8804 = vpop.f32.mrb[0].mxu0
      %8805 = vmatprep.mubr.bf16.mxu0 0
      %8806 = vmatmul.mubr.bf16.gmra.mrb[0].mxu0 %v8624
      %v8807 = vpop.f32.mrb[0].mxu0
      %v8808 = vadd.f32 0.0, %v8807
      %v8809 = vpop.f32.mrb[0].mxu0
      %v8810 = vpop.f32.mrb[0].mxu0
      %v8811 = vadd.f32 0.0, %v8810
      %v8812 = vpop.f32.mrb[0].mxu0
      %8813 = vmatprep.mubr.bf16.mxu0 0
      %8814 = vmatmul.mubr.bf16.gmra.mrb[0].mxu0 %v8626
      %v8815 = vpop.f32.mrb[0].mxu0
      %v8816 = vadd.f32 0.0, %v8815
      %v8817 = vpop.f32.mrb[0].mxu0
      %v8818 = vpop.f32.mrb[0].mxu0
      %v8819 = vadd.f32 0.0, %v8818
      %v8820 = vpop.f32.mrb[0].mxu0
      %8821 = vmatprep.mubr.bf16.mxu0 0
      %8822 = vmatmul.mubr.bf16.gmra.mrb[0].mxu0 %v8628
      %v8823 = vpop.f32.mrb[0].mxu0
      %v8824 = vadd.f32 0.0, %v8823
      %v8825 = vpop.f32.mrb[0].mxu0
      %v8826 = vpop.f32.mrb[0].mxu0
      %v8827 = vadd.f32 0.0, %v8826
      %v8828 = vpop.f32.mrb[0].mxu0
      %8829 = vmatprep.mubr.bf16.mxu0 0
      %8830 = vmatmul.mubr.bf16.gmra.mrb[0].mxu0 %v8630
      %v8831 = vpop.f32.mrb[0].mxu0
      %v8832 = vadd.f32 0.0, %v8831
      %v8833 = vpop.f32.mrb[0].mxu0
      %v8834 = vpop.f32.mrb[0].mxu0
      %v8835 = vadd.f32 0.0, %v8834
      %v8836 = vpop.f32.mrb[0].mxu0
      %8837 = vmatprep.mubr.bf16.mxu0 0
      %8838 = vmatmul.mubr.bf16.gmra.mrb[0].mxu0 %v8632
      %v8839 = vpop.f32.mrb[0].mxu0
      %v8840 = vadd.f32 0.0, %v8839
      %v8841 = vpop.f32.mrb[0].mxu0
      %v8842 = vpop.f32.mrb[0].mxu0
      %v8843 = vadd.f32 0.0, %v8842
      %v8844 = vpop.f32.mrb[0].mxu0
      %8845 = vmatprep.mubr.bf16.mxu0 0
      %8846 = vmatmul.mubr.bf16.gmra.mrb[0].mxu0 %v8634
      %v8847 = vpop.f32.mrb[0].mxu0
      %v8848 = vadd.f32 0.0, %v8847
      %v8849 = vpop.f32.mrb[0].mxu0
      %v8850 = vpop.f32.mrb[0].mxu0
      %v8851 = vadd.f32 0.0, %v8850
      %v8852 = vpop.f32.mrb[0].mxu0
      %8853 = vmatprep.mubr.bf16.mxu0 0
      %8854 = vmatmul.mubr.bf16.gmra.mrb[0].mxu0 %v8636
      %v8855 = vpop.f32.mrb[0].mxu0
      %v8856 = vadd.f32 0.0, %v8855
      %v8857 = vpop.f32.mrb[0].mxu0
      %v8858 = vpop.f32.mrb[0].mxu0
      %v8859 = vadd.f32 0.0, %v8858
      %v8860 = vpop.f32.mrb[0].mxu0
      %8861 = vmatprep.mubr.bf16.mxu0 0
      %8862 = vmatmul.mubr.bf16.gmra.mrb[0].mxu0 %v8638
      %v8863 = vpop.f32.mrb[0].mxu0
      %v8864 = vadd.f32 0.0, %v8863
      %v8865 = vpop.f32.mrb[0].mxu0
      %v8866 = vpop.f32.mrb[0].mxu0
      %v8867 = vadd.f32 0.0, %v8866
      %v8868 = vpop.f32.mrb[0].mxu0
      %8869 = vmatprep.mubr.bf16.mxu0 0
      %8870 = vmatmul.mubr.bf16.gmra.mrb[0].mxu0 %v8640
      %v8871 = vpop.f32.mrb[0].mxu0
      %v8872 = vadd.f32 0.0, %v8871
      %v8873 = vpop.f32.mrb[0].mxu0
      %v8874 = vpop.f32.mrb[0].mxu0
      %v8875 = vadd.f32 0.0, %v8874
      %v8876 = vpop.f32.mrb[0].mxu0
      %8877 = vmatprep.mubr.bf16.mxu0 0
      %8878 = vmatmul.mubr.bf16.gmra.mrb[0].mxu0 %v8642
      %v8879 = vpop.f32.mrb[0].mxu0
      %v8880 = vadd.f32 0.0, %v8879
      %v8881 = vpop.f32.mrb[0].mxu0
      %v8882 = vpop.f32.mrb[0].mxu0
      %v8883 = vadd.f32 0.0, %v8882
      %v8884 = vpop.f32.mrb[0].mxu0
      %8885 = vdwg.mxu0
      %v8886 = vadd.f32 %v8550, %v8744
      %v8887 = vadd.f32 %v8551, %v8747
      %v8888 = vadd.f32 %v8552, %v8752
      %v8889 = vadd.f32 %v8553, %v8755
      %v8890 = vadd.f32 %v8554, %v8760
      %v8891 = vadd.f32 %v8555, %v8763
      %v8892 = vadd.f32 %v8556, %v8768
      %v8893 = vadd.f32 %v8557, %v8771
      %v8894 = vadd.f32 %v8558, %v8776
      %v8895 = vadd.f32 %v8559, %v8779
      %v8896 = vadd.f32 %v8560, %v8784
      %v8897 = vadd.f32 %v8561, %v8787
      %v8898 = vadd.f32 %v8562, %v8792
      %v8899 = vadd.f32 %v8563, %v8795
      %v8900 = vadd.f32 %v8564, %v8800
      %v8901 = vadd.f32 %v8565, %v8803
      %v8902 = vadd.f32 %v8566, %v8808
      %v8903 = vadd.f32 %v8567, %v8811
      %v8904 = vadd.f32 %v8568, %v8816
      %v8905 = vadd.f32 %v8569, %v8819
      %v8906 = vadd.f32 %v8570, %v8824
      %v8907 = vadd.f32 %v8571, %v8827
      %v8908 = vadd.f32 %v8572, %v8832
      %v8909 = vadd.f32 %v8573, %v8835
      %v8910 = vadd.f32 %v8574, %v8840
      %v8911 = vadd.f32 %v8575, %v8843
      %v8912 = vadd.f32 %v8576, %v8848
      %v8913 = vadd.f32 %v8577, %v8851
      %v8914 = vadd.f32 %v8578, %v8856
      %v8915 = vadd.f32 %v8579, %v8859
      %v8916 = vadd.f32 %v8580, %v8864
      %v8917 = vadd.f32 %v8581, %v8867
      %v8918 = vadd.f32 %v8582, %v8872
      %v8919 = vadd.f32 %v8583, %v8875
      %v8920 = vadd.f32 %v8584, %v8880
      %v8921 = vadd.f32 %v8585, %v8883
      %v8922 = vld [vmem:[%s7] sm:$0x1]
      %v8924 = vlaneseq
      %v8925 = vshrl.u32 %v8924, 7
      %v8926 = vsub.s32 0, %v8925
      %v8927 = vrot.slane %v8922, %v8926
      %v8929 = vadd.f32 %v8886, %v8927
      %v8930 = vadd.f32 %v8887, %v8927
      %v8931 = vadd.f32 %v8888, %v8927
      %v8932 = vadd.f32 %v8889, %v8927
      %v8933 = vadd.f32 %v8890, %v8927
      %v8934 = vadd.f32 %v8891, %v8927
      %v8935 = vadd.f32 %v8892, %v8927
      %v8936 = vadd.f32 %v8893, %v8927
      %v8937 = vadd.f32 %v8894, %v8927
      %v8938 = vadd.f32 %v8895, %v8927
      %v8939 = vadd.f32 %v8896, %v8927
      %v8940 = vadd.f32 %v8897, %v8927
      %v8941 = vadd.f32 %v8898, %v8927
      %v8942 = vadd.f32 %v8899, %v8927
      %v8943 = vadd.f32 %v8900, %v8927
      %v8944 = vadd.f32 %v8901, %v8927
      %v8945 = vadd.f32 %v8902, %v8927
      %v8946 = vadd.f32 %v8903, %v8927
      %v8947 = vadd.f32 %v8904, %v8927
      %v8948 = vadd.f32 %v8905, %v8927
      %v8949 = vadd.f32 %v8906, %v8927
      %v8950 = vadd.f32 %v8907, %v8927
      %v8951 = vadd.f32 %v8908, %v8927
      %v8952 = vadd.f32 %v8909, %v8927
      %v8953 = vadd.f32 %v8910, %v8927
      %v8954 = vadd.f32 %v8911, %v8927
      %v8955 = vadd.f32 %v8912, %v8927
      %v8956 = vadd.f32 %v8913, %v8927
      %v8957 = vadd.f32 %v8914, %v8927
      %v8958 = vadd.f32 %v8915, %v8927
      %v8959 = vadd.f32 %v8916, %v8927
      %v8960 = vadd.f32 %v8917, %v8927
      %v8961 = vadd.f32 %v8918, %v8927
      %v8962 = vadd.f32 %v8919, %v8927
      %v8963 = vadd.f32 %v8920, %v8927
      %v8964 = vadd.f32 %v8921, %v8927
      %vm8965 = vcmp.ge.f32.partialorder %v8929, 0.0
      %vm8966 = vcmp.ge.f32.partialorder %v8930, 0.0
      %vm8967 = vcmp.ge.f32.partialorder %v8931, 0.0
      %vm8968 = vcmp.ge.f32.partialorder %v8932, 0.0
      %vm8969 = vcmp.ge.f32.partialorder %v8933, 0.0
      %vm8970 = vcmp.ge.f32.partialorder %v8934, 0.0
      %vm8971 = vcmp.ge.f32.partialorder %v8935, 0.0
      %vm8972 = vcmp.ge.f32.partialorder %v8936, 0.0
      %vm8973 = vcmp.ge.f32.partialorder %v8937, 0.0
      %vm8974 = vcmp.ge.f32.partialorder %v8938, 0.0
      %vm8975 = vcmp.ge.f32.partialorder %v8939, 0.0
      %vm8976 = vcmp.ge.f32.partialorder %v8940, 0.0
      %vm8977 = vcmp.ge.f32.partialorder %v8941, 0.0
      %vm8978 = vcmp.ge.f32.partialorder %v8942, 0.0
      %vm8979 = vcmp.ge.f32.partialorder %v8943, 0.0
      %vm8980 = vcmp.ge.f32.partialorder %v8944, 0.0
      %vm8981 = vcmp.ge.f32.partialorder %v8945, 0.0
      %vm8982 = vcmp.ge.f32.partialorder %v8946, 0.0
      %vm8983 = vcmp.ge.f32.partialorder %v8947, 0.0
      %vm8984 = vcmp.ge.f32.partialorder %v8948, 0.0
      %vm8985 = vcmp.ge.f32.partialorder %v8949, 0.0
      %vm8986 = vcmp.ge.f32.partialorder %v8950, 0.0
      %vm8987 = vcmp.ge.f32.partialorder %v8951, 0.0
      %vm8988 = vcmp.ge.f32.partialorder %v8952, 0.0
      %vm8989 = vcmp.ge.f32.partialorder %v8953, 0.0
      %vm8990 = vcmp.ge.f32.partialorder %v8954, 0.0
      %vm8991 = vcmp.ge.f32.partialorder %v8955, 0.0
      %vm8992 = vcmp.ge.f32.partialorder %v8956, 0.0
      %vm8993 = vcmp.ge.f32.partialorder %v8957, 0.0
      %vm8994 = vcmp.ge.f32.partialorder %v8958, 0.0
      %vm8995 = vcmp.ge.f32.partialorder %v8959, 0.0
      %vm8996 = vcmp.ge.f32.partialorder %v8960, 0.0
      %vm8997 = vcmp.ge.f32.partialorder %v8961, 0.0
      %vm8998 = vcmp.ge.f32.partialorder %v8962, 0.0
      %vm8999 = vcmp.ge.f32.partialorder %v8963, 0.0
      %vm9000 = vcmp.ge.f32.partialorder %v8964, 0.0
      %v9001 = vmul.f32 %v8929, 0.01
      %v9002 = vmul.f32 %v8930, 0.01
      %v9003 = vmul.f32 %v8931, 0.01
      %v9004 = vmul.f32 %v8932, 0.01
      %v9005 = vmul.f32 %v8933, 0.01
      %v9006 = vmul.f32 %v8934, 0.01
      %v9007 = vmul.f32 %v8935, 0.01
      %v9008 = vmul.f32 %v8936, 0.01
      %v9009 = vmul.f32 %v8937, 0.01
      %v9010 = vmul.f32 %v8938, 0.01
      %v9011 = vmul.f32 %v8939, 0.01
      %v9012 = vmul.f32 %v8940, 0.01
      %v9013 = vmul.f32 %v8941, 0.01
      %v9014 = vmul.f32 %v8942, 0.01
      %v9015 = vmul.f32 %v8943, 0.01
      %v9016 = vmul.f32 %v8944, 0.01
      %v9017 = vmul.f32 %v8945, 0.01
      %v9018 = vmul.f32 %v8946, 0.01
      %v9019 = vmul.f32 %v8947, 0.01
      %v9020 = vmul.f32 %v8948, 0.01
      %v9021 = vmul.f32 %v8949, 0.01
      %v9022 = vmul.f32 %v8950, 0.01
      %v9023 = vmul.f32 %v8951, 0.01
      %v9024 = vmul.f32 %v8952, 0.01
      %v9025 = vmul.f32 %v8953, 0.01
      %v9026 = vmul.f32 %v8954, 0.01
      %v9027 = vmul.f32 %v8955, 0.01
      %v9028 = vmul.f32 %v8956, 0.01
      %v9029 = vmul.f32 %v8957, 0.01
      %v9030 = vmul.f32 %v8958, 0.01
      %v9031 = vmul.f32 %v8959, 0.01
      %v9032 = vmul.f32 %v8960, 0.01
      %v9033 = vmul.f32 %v8961, 0.01
      %v9034 = vmul.f32 %v8962, 0.01
      %v9035 = vmul.f32 %v8963, 0.01
      %v9036 = vmul.f32 %v8964, 0.01
      %v9037 = vsel %vm8965, %v8929, %v9001
      %v9038 = vsel %vm8966, %v8930, %v9002
      %v9039 = vsel %vm8967, %v8931, %v9003
      %v9040 = vsel %vm8968, %v8932, %v9004
      %v9041 = vsel %vm8969, %v8933, %v9005
      %v9042 = vsel %vm8970, %v8934, %v9006
      %v9043 = vsel %vm8971, %v8935, %v9007
      %v9044 = vsel %vm8972, %v8936, %v9008
      %v9045 = vsel %vm8973, %v8937, %v9009
      %v9046 = vsel %vm8974, %v8938, %v9010
      %v9047 = vsel %vm8975, %v8939, %v9011
      %v9048 = vsel %vm8976, %v8940, %v9012
      %v9049 = vsel %vm8977, %v8941, %v9013
      %v9050 = vsel %vm8978, %v8942, %v9014
      %v9051 = vsel %vm8979, %v8943, %v9015
      %v9052 = vsel %vm8980, %v8944, %v9016
      %v9053 = vsel %vm8981, %v8945, %v9017
      %v9054 = vsel %vm8982, %v8946, %v9018
      %v9055 = vsel %vm8983, %v8947, %v9019
      %v9056 = vsel %vm8984, %v8948, %v9020
      %v9057 = vsel %vm8985, %v8949, %v9021
      %v9058 = vsel %vm8986, %v8950, %v9022
      %v9059 = vsel %vm8987, %v8951, %v9023
      %v9060 = vsel %vm8988, %v8952, %v9024
      %v9061 = vsel %vm8989, %v8953, %v9025
      %v9062 = vsel %vm8990, %v8954, %v9026
      %v9063 = vsel %vm8991, %v8955, %v9027
      %v9064 = vsel %vm8992, %v8956, %v9028
      %v9065 = vsel %vm8993, %v8957, %v9029
      %v9066 = vsel %vm8994, %v8958, %v9030
      %v9067 = vsel %vm8995, %v8959, %v9031
      %v9068 = vsel %vm8996, %v8960, %v9032
      %v9069 = vsel %vm8997, %v8961, %v9033
      %v9070 = vsel %vm8998, %v8962, %v9034
      %v9071 = vsel %vm8999, %v8963, %v9035
      %v9072 = vsel %vm9000, %v8964, %v9036
      %9073 = vst.msk [vmem:[%s325] sm:$0xff] %vm608, %v9037
      %9074 = vst.msk [vmem:[%s325 + $0x8] sm:$0xff] %vm608, %v9038
      %9075 = vst.msk [vmem:[%s325 + $0x10] sm:$0xff] %vm608, %v9039
      %9076 = vst.msk [vmem:[%s325 + $0x18] sm:$0xff] %vm608, %v9040
      %9077 = vst.msk [vmem:[%s325 + $0x20] sm:$0xff] %vm608, %v9041
      %9078 = vst.msk [vmem:[%s325 + $0x28] sm:$0xff] %vm608, %v9042
      %9079 = vst.msk [vmem:[%s325 + $0x30] sm:$0xff] %vm608, %v9043
      %9080 = vst.msk [vmem:[%s325 + $0x38] sm:$0xff] %vm608, %v9044
      %9081 = vst.msk [vmem:[%s325 + $0x40] sm:$0xff] %vm608, %v9045
      %9082 = vst.msk [vmem:[%s325 + $0x48] sm:$0xff] %vm608, %v9046
      %9083 = vst.msk [vmem:[%s325 + $0x50] sm:$0xff] %vm608, %v9047
      %9084 = vst.msk [vmem:[%s325 + $0x58] sm:$0xff] %vm608, %v9048
      %9085 = vst.msk [vmem:[%s325 + $0x60] sm:$0xff] %vm608, %v9049
      %9086 = vst.msk [vmem:[%s325 + $0x68] sm:$0xff] %vm608, %v9050
      %9087 = vst.msk [vmem:[%s325 + $0x70] sm:$0xff] %vm608, %v9051
      %9088 = vst.msk [vmem:[%s325 + $0x78] sm:$0xff] %vm608, %v9052
      %9089 = vst.msk [vmem:[%s325 + $0x80] sm:$0xff] %vm608, %v9053
      %9090 = vst.msk [vmem:[%s325 + $0x88] sm:$0xff] %vm608, %v9054
      %9091 = vst.msk [vmem:[%s325 + $0x90] sm:$0xff] %vm608, %v9055
      %9092 = vst.msk [vmem:[%s325 + $0x98] sm:$0xff] %vm608, %v9056
      %9093 = vst.msk [vmem:[%s325 + $0xa0] sm:$0xff] %vm608, %v9057
      %9094 = vst.msk [vmem:[%s325 + $0xa8] sm:$0xff] %vm608, %v9058
      %9095 = vst.msk [vmem:[%s325 + $0xb0] sm:$0xff] %vm608, %v9059
      %9096 = vst.msk [vmem:[%s325 + $0xb8] sm:$0xff] %vm608, %v9060
      %9097 = vst.msk [vmem:[%s325 + $0xc0] sm:$0xff] %vm608, %v9061
      %9098 = vst.msk [vmem:[%s325 + $0xc8] sm:$0xff] %vm608, %v9062
      %9099 = vst.msk [vmem:[%s325 + $0xd0] sm:$0xff] %vm608, %v9063
      %9100 = vst.msk [vmem:[%s325 + $0xd8] sm:$0xff] %vm608, %v9064
      %9101 = vst.msk [vmem:[%s325 + $0xe0] sm:$0xff] %vm608, %v9065
      %9102 = vst.msk [vmem:[%s325 + $0xe8] sm:$0xff] %vm608, %v9066
      %9103 = vst.msk [vmem:[%s325 + $0xf0] sm:$0xff] %vm608, %v9067
      %9104 = vst.msk [vmem:[%s325 + $0xf8] sm:$0xff] %vm608, %v9068
      %9105 = vst.msk [vmem:[%s325 + $0x100] sm:$0xff] %vm608, %v9069
      %9106 = vst.msk [vmem:[%s325 + $0x108] sm:$0xff] %vm608, %v9070
      %9107 = vst.msk [vmem:[%s325 + $0x110] sm:$0xff] %vm608, %v9071
      %9108 = vst.msk [vmem:[%s325 + $0x118] sm:$0xff] %vm608, %v9072
      %p9109 = scmp.lt.s32.totalorder %s19, 1
      %s9110 = scalar_select %p9109, %s19, 1
      %s9111 = smul.addr %s9110, 36
      %s9112 = smul.addr %s9111, 8
      %s9113 = scalar_lea.vmem %s8, %s9112
      // Predicated region
      $region53: #{residual_block_forward.1} parent=51 // pred_check
        %p9114 = pneg %p215
      $region54: #{residual_block_forward.1} parent=51 // pred_check_branch
        %9116 = sbr.rel (%p9114) target = $region56
      $region55: #{residual_block_forward.1} parent=51 // pred_region
        _
      $region56: #{residual_block_forward.1} parent=51 // pred_fallthru
        _
    $region52: #{residual_block_forward.1} parent=5 // pred_fallthru
      _
    %p9117 = scmp.le.s32.totalorder 2, %s14
    // Predicated region
    $region57: #{residual_block_forward.1} parent=5 // pred_check
      %p9118 = pneg %p9117
    $region58: #{residual_block_forward.1} parent=5 // pred_check_branch
      %9120 = sbr.rel (%p9118) target = $region60
    $region59: #{residual_block_forward.1} parent=5 // pred_region
      %s9121 = ssub.s32 %s14, 2
      // Predicated region
      $region61: #{residual_block_forward.1} parent=59 // pred_check
        %p9122 = pneg %p221
      $region62: #{residual_block_forward.1} parent=59 // pred_check_branch
        %9124 = sbr.rel (%p9122) target = $region64
      $region63: #{residual_block_forward.1} parent=59 // pred_region
        %p9125 = scmp.lt.s32.totalorder %s20, 1
        %s9126 = scalar_select %p9125, %s20, 1
        %s9127 = smul.addr %s9126, 36
        %s9128 = smul.addr %s9127, 8
        %s9129 = scalar_lea.vmem %s8, %s9128
      $region64: #{residual_block_forward.1} parent=59 // pred_fallthru
        _
    $region60: #{residual_block_forward.1} parent=5 // pred_fallthru
      _
  $region6: #{residual_block_forward.1} parent=0 // loop_footer
    %s18 = sadd.s32 1, %s14
  $region7: #{residual_block_forward.1} parent=0 // loop_footer_branch
    %13 = sbr.rel target = $region3
  $region8: #{residual_block_forward.1} parent=0 // loop_exit
    _

</llo_original>
